<compile_context>
chip_gen: v6e
topology: v6e:2x2x1
jax: 0.10.0
libtpu: 0.0.40
codegen_flags: <defaults>
</compile_context>

<pallas_src>
import functools

import jax
import jax.numpy as jnp
from jax import lax
from jax.experimental import pallas as pl
from jax.experimental.pallas import tpu as pltpu


_LANE = 128   # TPU lane width; each conv-tap slab of the im2col matrix gets a full 128-lane tile
_PADL = 8     # sublane-aligned offset of the interior inside the padded activation scratch


# ----------------------------------------------------------------------------
# Pallas kernel: fused [Conv2d(3x3, stride 1, pad 1) + GroupNorm + ReLU] x L
# for one image of the batch (grid iterates over the batch dimension).
# ----------------------------------------------------------------------------
def _tower_kernel(x_ref, w_ref, b_ref, g_ref, bt_ref, o_ref, xpad_ref, col_ref,
                  *, num_layers, H, W, C, groups, eps):
    # x_ref    : (1, H, W, C)          input feature map (NHWC)
    # w_ref    : (L, 9*_LANE, C)       conv weights, im2col K layout (zero-padded per tap)
    # b_ref    : (L, 1, C)             conv bias
    # g_ref    : (L, 1, C)             GroupNorm gamma
    # bt_ref   : (L, 1, C)             GroupNorm beta
    # o_ref    : (1, C, H*W)           output, channel-major (lane-dense)
    # xpad_ref : (H+2, _PADL+W+8, C)   VMEM scratch: zero-padded activation
    # col_ref  : (H*W, 9*_LANE)        VMEM scratch: im2col matrix
    HW = H * W
    cg = C // groups
    count = float(HW * cg)

    # Zero the scratches once per grid step: provides the conv zero-halo and
    # keeps the unused (weight == 0) lanes of the im2col matrix finite.
    xpad_ref[...] = jnp.zeros_like(xpad_ref)
    col_ref[...] = jnp.zeros_like(col_ref)

    # Place the input in the interior of the padded scratch
    # (sublane offset _PADL is 8-aligned, minor dim is full -> aligned store).
    xpad_ref[1:H + 1, _PADL:_PADL + W, :] = x_ref[0]

    if cg > 1:
        # Group-membership matrix: one tiny MXU matmul does "sum the channels
        # of each group and broadcast the result back per channel" in one shot.
        row_g = lax.broadcasted_iota(jnp.int32, (C, C), 0) // cg
        col_g = lax.broadcasted_iota(jnp.int32, (C, C), 1) // cg
        group_mat = (row_g == col_g).astype(jnp.float32)

    # Identity matrix used to transpose the final activation on the MXU
    # (NT contraction) so the output store is lane-dense (C, H*W).
    eye = (lax.broadcasted_iota(jnp.int32, (C, C), 0) ==
           lax.broadcasted_iota(jnp.int32, (C, C), 1)).astype(jnp.float32)

    for layer in range(num_layers):                       # static unroll, L is small
        # --- im2col: 9 shifted copies into 128-aligned lane slabs ------------
        for idx in range(9):
            dy, dx = idx // 3, idx % 3
            c0 = _PADL - 1 + dx
            patch = xpad_ref[dy:dy + H, c0:c0 + W, :].reshape(HW, C)
            col_ref[:, idx * _LANE:idx * _LANE + C] = patch

        # --- conv: ONE (H*W, 9*128) x (9*128, C) MXU matmul -------------------
        # TODO(synk): cast col/w operands to bfloat16 on v6e/v7x when MXU-bound
        # (kept f32 so the 1e-3 self-check vs. the f32 reference holds).
        acc = jnp.dot(col_ref[...], w_ref[layer],
                      preferred_element_type=jnp.float32)           # (HW, C)

        # --- GroupNorm statistics, conv bias folded in analytically ----------
        bias = b_ref[layer]                                          # (1, C)
        gamma = g_ref[layer]
        beta = bt_ref[layer]
        sc = jnp.sum(acc, axis=0, keepdims=True)                     # (1, C)
        ssq = jnp.sum(acc * acc, axis=0, keepdims=True)              # (1, C)
        s1 = sc + HW * bias                                          # sum  of (acc + b)
        s2 = ssq + 2.0 * bias * sc + HW * bias * bias                # sumsq of (acc + b)
        if cg > 1:
            s1 = jnp.dot(s1, group_mat, preferred_element_type=jnp.float32)
            s2 = jnp.dot(s2, group_mat, preferred_element_type=jnp.float32)
        mean = s1 / count
        var = jnp.maximum(s2 / count - mean * mean, 0.0)
        inv = lax.rsqrt(var + eps)
        scale = inv * gamma                                          # (1, C)
        shift = (bias - mean) * scale + beta                         # (1, C)

        # --- fused affine + ReLU ---------------------------------------------
        y = jnp.maximum(acc * scale + shift, 0.0)                    # (HW, C)

        if layer + 1 < num_layers:
            # Feed forward in VMEM: rewrite only the interior (halo stays zero).
            xpad_ref[1:H + 1, _PADL:_PADL + W, :] = y.reshape(H, W, C)
        else:
            # Transpose via MXU identity (NT contraction) -> (C, H*W):
            # lane-dense store, and NCHW falls out of a free wrapper reshape.
            y_t = lax.dot_general(eye, y, (((1,), (1,)), ((), ())),
                                  preferred_element_type=jnp.float32)
            o_ref[...] = y_t.reshape(1, C, HW)


# ----------------------------------------------------------------------------
# Parameter packing: stack the per-layer conv/GN params into the fused layouts.
# ----------------------------------------------------------------------------
def _prep_params(params):
    L = len(params)
    Cin, Cout = params[0][0].shape[2], params[0][0].shape[3]
    w_all = []
    for (w, _, _, _) in params:
        w9 = w.reshape(9, Cin, Cout)                                 # HWIO -> (tap, Cin, Cout)
        wp = jnp.zeros((9, _LANE, Cout), jnp.float32).at[:, :Cin, :].set(w9)
        w_all.append(wp.reshape(9 * _LANE, Cout))
    w_all = jnp.stack(w_all)                                         # (L, 9*128, C)
    b_all = jnp.stack([p[1] for p in params]).reshape(L, 1, Cout)
    g_all = jnp.stack([p[2] for p in params]).reshape(L, 1, Cout)
    bt_all = jnp.stack([p[3] for p in params]).reshape(L, 1, Cout)
    return w_all, b_all, g_all, bt_all


# ----------------------------------------------------------------------------
# Wrapper: full fused tower over one NCHW feature level -> ONE pallas_call.
# ----------------------------------------------------------------------------
def conv_gn_relu_tower(x_nchw, w_all, b_all, g_all, bt_all, *, groups, eps=1e-5):
    N, C, H, W = x_nchw.shape
    L = int(w_all.shape[0])
    x_nhwc = jnp.transpose(x_nchw, (0, 2, 3, 1))   # single input transpose per level

    kernel = functools.partial(_tower_kernel, num_layers=L, H=H, W=W, C=C,
                               groups=groups, eps=eps)
    out = pl.pallas_call(
        kernel,
        out_shape=jax.ShapeDtypeStruct((N, C, H * W), jnp.float32),
        grid=(N,),
        in_specs=[
            pl.BlockSpec((1, H, W, C), lambda n: (n, 0, 0, 0)),
            pl.BlockSpec((L, 9 * _LANE, C), lambda n: (0, 0, 0)),   # grid-invariant
            pl.BlockSpec((L, 1, C), lambda n: (0, 0, 0)),
            pl.BlockSpec((L, 1, C), lambda n: (0, 0, 0)),
            pl.BlockSpec((L, 1, C), lambda n: (0, 0, 0)),
        ],
        out_specs=pl.BlockSpec((1, C, H * W), lambda n: (n, 0, 0)),
        scratch_shapes=[
            pltpu.VMEM((H + 2, _PADL + W + 8, C), jnp.float32),      # padded activation
            pltpu.VMEM((H * W, 9 * _LANE), jnp.float32),             # im2col matrix
        ],
        compiler_params=pltpu.CompilerParams(
            dimension_semantics=("parallel",)),                      # batch on both v7x TCs
    )(x_nhwc, w_all, b_all, g_all, bt_all)
    # Output is already channel-major: NCHW via a free reshape, no transpose op.
    return out.reshape(N, C, H, W)


# ----------------------------------------------------------------------------
# GRAPHHead forward: apply the middle tower to every feature level.
# ----------------------------------------------------------------------------
def graph_head_forward(features_nchw, params, *, groups, eps=1e-5):
    packed = _prep_params(params)
    return [conv_gn_relu_tower(f, *packed, groups=groups, eps=eps)
            for f in features_nchw]


# ----------------------------------------------------------------------------
# Pure-JAX reference (mirrors the PyTorch module semantics exactly).
# ----------------------------------------------------------------------------
def reference_forward(features_nchw, params, *, groups, eps=1e-5):
    outs = []
    for feat in features_nchw:
        y = feat
        for (w, b, gamma, beta) in params:
            y = lax.conv_general_dilated(
                y, w, window_strides=(1, 1), padding=((1, 1), (1, 1)),
                dimension_numbers=('NCHW', 'HWIO', 'NCHW'))
            y = y + b[None, :, None, None]
            N, C, H, W = y.shape
            yg = y.reshape(N, groups, C // groups, H, W)
            mean = yg.mean(axis=(2, 3, 4), keepdims=True)
            var = ((yg - mean) ** 2).mean(axis=(2, 3, 4), keepdims=True)
            yn = ((yg - mean) / jnp.sqrt(var + eps)).reshape(N, C, H, W)
            y = yn * gamma[None, :, None, None] + beta[None, :, None, None]
            y = jnp.maximum(y, 0.0)
        outs.append(y)
    return outs


if __name__ == "__main__":
    # Config implied by GRAPHHead(mode='in', IN_NORM='GN'):
    #   num_convs layers of [Conv2d(C, C, 3, 1, 1), GroupNorm(32, C), ReLU];
    #   channels must be divisible by 32.
    num_convs = 2
    channels = 32
    groups = 32
    N = 2

    key = jax.random.PRNGKey(0)
    # Deterministic parameter init matching the module:
    #   conv weight ~ N(0, 0.01), conv bias = 0, GN gamma = 1, beta = 0.
    params = []
    for _ in range(num_convs):
        key, wk = jax.random.split(key)
        w = 0.01 * jax.random.normal(wk, (3, 3, channels, channels),
                                     dtype=jnp.float32)      # HWIO
        b = jnp.zeros((channels,), jnp.float32)
        gamma = jnp.ones((channels,), jnp.float32)
        beta = jnp.zeros((channels,), jnp.float32)
        params.append((w, b, gamma, beta))

    # Two FPN-style feature levels (PyTorch NCHW convention), small shapes.
    key, k0, k1 = jax.random.split(key, 3)
    features = [
        jax.random.normal(k0, (N, channels, 16, 16), dtype=jnp.float32),
        jax.random.normal(k1, (N, channels, 8, 8), dtype=jnp.float32),
    ]

    outs = graph_head_forward(features, params, groups=groups)
    outs = [jax.block_until_ready(o) for o in outs]

    refs = reference_forward(features, params, groups=groups)
    for o, r in zip(outs, refs):
        assert o.shape == r.shape and o.dtype == r.dtype
        if not bool(jnp.allclose(o, r, rtol=1e-3, atol=1e-3)):
            raise AssertionError("Pallas output mismatch vs reference")

    print("KERNEL_OK")
</pallas_src>

<mosaic_0001>
module attributes {stable_mosaic.version = 11 : i64} {
  func.func @_tower_kernel(%arg0: i32, %arg1: memref<1x16x16x32xf32, #tpu.memory_space<vmem>>, %arg2: memref<2x1152x32xf32, #tpu.memory_space<vmem>>, %arg3: memref<2x1x32xf32, #tpu.memory_space<vmem>>, %arg4: memref<2x1x32xf32, #tpu.memory_space<vmem>>, %arg5: memref<2x1x32xf32, #tpu.memory_space<vmem>>, %arg6: memref<1x32x256xf32, #tpu.memory_space<vmem>>, %arg7: memref<18x32x32xf32, #tpu.memory_space<vmem>>, %arg8: memref<256x1152xf32, #tpu.memory_space<vmem>>) attributes {dimension_semantics = [#tpu.dimension_semantics<parallel>], iteration_bounds = array<i64: 2>, scalar_prefetch = 0 : i64, scratch_operands = 2 : i64, tpu.core_type = #tpu.core_type<tc>, window_params = [{transform_indices = @transform_0, window_bounds = array<i64: 1, 16, 16, 32>}, {pipeline_mode = #tpu.pipeline_mode<synchronous>, transform_indices = @transform_1, window_bounds = array<i64: 2, 1152, 32>}, {pipeline_mode = #tpu.pipeline_mode<synchronous>, transform_indices = @transform_2, window_bounds = array<i64: 2, 1, 32>}, {pipeline_mode = #tpu.pipeline_mode<synchronous>, transform_indices = @transform_3, window_bounds = array<i64: 2, 1, 32>}, {pipeline_mode = #tpu.pipeline_mode<synchronous>, transform_indices = @transform_4, window_bounds = array<i64: 2, 1, 32>}, {transform_indices = @transform_5, window_bounds = array<i64: 1, 32, 256>}]} {
    %cst = arith.constant 0.000000e+00 : f32
    %0 = vector.broadcast %cst : f32 to vector<18x32x32xf32>
    %c0 = arith.constant 0 : index
    %c0_0 = arith.constant 0 : index
    %c0_1 = arith.constant 0 : index
    %1 = vector.load %arg7[%c0, %c0_0, %c0_1] : memref<18x32x32xf32, #tpu.memory_space<vmem>>, vector<18x32x32xf32>
    tpu.vector_store %arg7[%c0, %c0_0, %c0_1], %0 {strides = array<i32>} : memref<18x32x32xf32, #tpu.memory_space<vmem>>, vector<18x32x32xf32>,
    %cst_2 = arith.constant 0.000000e+00 : f32
    %2 = vector.broadcast %cst_2 : f32 to vector<256x1152xf32>
    %c0_3 = arith.constant 0 : index
    %c0_4 = arith.constant 0 : index
    %3 = vector.load %arg8[%c0_3, %c0_4] : memref<256x1152xf32, #tpu.memory_space<vmem>>, vector<256x1152xf32>
    tpu.vector_store %arg8[%c0_3, %c0_4], %2 {strides = array<i32>} : memref<256x1152xf32, #tpu.memory_space<vmem>>, vector<256x1152xf32>,
    %c0_5 = arith.constant 0 : index
    %c0_6 = arith.constant 0 : index
    %c0_7 = arith.constant 0 : index
    %c0_8 = arith.constant 0 : index
    %4 = vector.load %arg1[%c0_5, %c0_6, %c0_7, %c0_8] : memref<1x16x16x32xf32, #tpu.memory_space<vmem>>, vector<1x16x16x32xf32>
    %5 = vector.shape_cast %4 : vector<1x16x16x32xf32> to vector<16x16x32xf32>
    %c1 = arith.constant 1 : index
    %c8 = arith.constant 8 : index
    %c0_9 = arith.constant 0 : index
    %6 = vector.load %arg7[%c1, %c8, %c0_9] : memref<18x32x32xf32, #tpu.memory_space<vmem>>, vector<16x16x32xf32>
    tpu.vector_store %arg7[%c1, %c8, %c0_9], %5 {strides = array<i32>} : memref<18x32x32xf32, #tpu.memory_space<vmem>>, vector<16x16x32xf32>,
    %7 = tpu.iota {dimensions = array<i32: 0>} : vector<32x32xi32>
    %8 = tpu.iota {dimensions = array<i32: 1>} : vector<32x32xi32>
    %9 = arith.cmpi eq, %7, %8 : vector<32x32xi32>
    %10 = arith.extui %9 : vector<32x32xi1> to vector<32x32xi32>
    %11 = arith.sitofp %10 : vector<32x32xi32> to vector<32x32xf32>
    %c0_10 = arith.constant 0 : index
    %c7 = arith.constant 7 : index
    %c0_11 = arith.constant 0 : index
    %12 = vector.load %arg7[%c0_10, %c7, %c0_11] : memref<18x32x32xf32, #tpu.memory_space<vmem>>, vector<16x16x32xf32>
    %13 = vector.shape_cast %12 : vector<16x16x32xf32> to vector<256x32xf32>
    %c0_12 = arith.constant 0 : index
    %c0_13 = arith.constant 0 : index
    %14 = vector.load %arg8[%c0_12, %c0_13] : memref<256x1152xf32, #tpu.memory_space<vmem>>, vector<256x32xf32>
    tpu.vector_store %arg8[%c0_12, %c0_13], %13 {strides = array<i32>} : memref<256x1152xf32, #tpu.memory_space<vmem>>, vector<256x32xf32>,
    %c0_14 = arith.constant 0 : index
    %c8_15 = arith.constant 8 : index
    %c0_16 = arith.constant 0 : index
    %15 = vector.load %arg7[%c0_14, %c8_15, %c0_16] : memref<18x32x32xf32, #tpu.memory_space<vmem>>, vector<16x16x32xf32>
    %16 = vector.shape_cast %15 : vector<16x16x32xf32> to vector<256x32xf32>
    %c0_17 = arith.constant 0 : index
    %c128 = arith.constant 128 : index
    %17 = vector.load %arg8[%c0_17, %c128] : memref<256x1152xf32, #tpu.memory_space<vmem>>, vector<256x32xf32>
    tpu.vector_store %arg8[%c0_17, %c128], %16 {strides = array<i32>} : memref<256x1152xf32, #tpu.memory_space<vmem>>, vector<256x32xf32>,
    %c0_18 = arith.constant 0 : index
    %c9 = arith.constant 9 : index
    %c0_19 = arith.constant 0 : index
    %18 = vector.load %arg7[%c0_18, %c9, %c0_19] : memref<18x32x32xf32, #tpu.memory_space<vmem>>, vector<16x16x32xf32>
    %19 = vector.shape_cast %18 : vector<16x16x32xf32> to vector<256x32xf32>
    %c0_20 = arith.constant 0 : index
    %c256 = arith.constant 256 : index
    %20 = vector.load %arg8[%c0_20, %c256] : memref<256x1152xf32, #tpu.memory_space<vmem>>, vector<256x32xf32>
    tpu.vector_store %arg8[%c0_20, %c256], %19 {strides = array<i32>} : memref<256x1152xf32, #tpu.memory_space<vmem>>, vector<256x32xf32>,
    %c1_21 = arith.constant 1 : index
    %c7_22 = arith.constant 7 : index
    %c0_23 = arith.constant 0 : index
    %21 = vector.load %arg7[%c1_21, %c7_22, %c0_23] : memref<18x32x32xf32, #tpu.memory_space<vmem>>, vector<16x16x32xf32>
    %22 = vector.shape_cast %21 : vector<16x16x32xf32> to vector<256x32xf32>
    %c0_24 = arith.constant 0 : index
    %c384 = arith.constant 384 : index
    %23 = vector.load %arg8[%c0_24, %c384] : memref<256x1152xf32, #tpu.memory_space<vmem>>, vector<256x32xf32>
    tpu.vector_store %arg8[%c0_24, %c384], %22 {strides = array<i32>} : memref<256x1152xf32, #tpu.memory_space<vmem>>, vector<256x32xf32>,
    %c1_25 = arith.constant 1 : index
    %c8_26 = arith.constant 8 : index
    %c0_27 = arith.constant 0 : index
    %24 = vector.load %arg7[%c1_25, %c8_26, %c0_27] : memref<18x32x32xf32, #tpu.memory_space<vmem>>, vector<16x16x32xf32>
    %25 = vector.shape_cast %24 : vector<16x16x32xf32> to vector<256x32xf32>
    %c0_28 = arith.constant 0 : index
    %c512 = arith.constant 512 : index
    %26 = vector.load %arg8[%c0_28, %c512] : memref<256x1152xf32, #tpu.memory_space<vmem>>, vector<256x32xf32>
    tpu.vector_store %arg8[%c0_28, %c512], %25 {strides = array<i32>} : memref<256x1152xf32, #tpu.memory_space<vmem>>, vector<256x32xf32>,
    %c1_29 = arith.constant 1 : index
    %c9_30 = arith.constant 9 : index
    %c0_31 = arith.constant 0 : index
    %27 = vector.load %arg7[%c1_29, %c9_30, %c0_31] : memref<18x32x32xf32, #tpu.memory_space<vmem>>, vector<16x16x32xf32>
    %28 = vector.shape_cast %27 : vector<16x16x32xf32> to vector<256x32xf32>
    %c0_32 = arith.constant 0 : index
    %c640 = arith.constant 640 : index
    %29 = vector.load %arg8[%c0_32, %c640] : memref<256x1152xf32, #tpu.memory_space<vmem>>, vector<256x32xf32>
    tpu.vector_store %arg8[%c0_32, %c640], %28 {strides = array<i32>} : memref<256x1152xf32, #tpu.memory_space<vmem>>, vector<256x32xf32>,
    %c2 = arith.constant 2 : index
    %c7_33 = arith.constant 7 : index
    %c0_34 = arith.constant 0 : index
    %30 = vector.load %arg7[%c2, %c7_33, %c0_34] : memref<18x32x32xf32, #tpu.memory_space<vmem>>, vector<16x16x32xf32>
    %31 = vector.shape_cast %30 : vector<16x16x32xf32> to vector<256x32xf32>
    %c0_35 = arith.constant 0 : index
    %c768 = arith.constant 768 : index
    %32 = vector.load %arg8[%c0_35, %c768] : memref<256x1152xf32, #tpu.memory_space<vmem>>, vector<256x32xf32>
    tpu.vector_store %arg8[%c0_35, %c768], %31 {strides = array<i32>} : memref<256x1152xf32, #tpu.memory_space<vmem>>, vector<256x32xf32>,
    %c2_36 = arith.constant 2 : index
    %c8_37 = arith.constant 8 : index
    %c0_38 = arith.constant 0 : index
    %33 = vector.load %arg7[%c2_36, %c8_37, %c0_38] : memref<18x32x32xf32, #tpu.memory_space<vmem>>, vector<16x16x32xf32>
    %34 = vector.shape_cast %33 : vector<16x16x32xf32> to vector<256x32xf32>
    %c0_39 = arith.constant 0 : index
    %c896 = arith.constant 896 : index
    %35 = vector.load %arg8[%c0_39, %c896] : memref<256x1152xf32, #tpu.memory_space<vmem>>, vector<256x32xf32>
    tpu.vector_store %arg8[%c0_39, %c896], %34 {strides = array<i32>} : memref<256x1152xf32, #tpu.memory_space<vmem>>, vector<256x32xf32>,
    %c2_40 = arith.constant 2 : index
    %c9_41 = arith.constant 9 : index
    %c0_42 = arith.constant 0 : index
    %36 = vector.load %arg7[%c2_40, %c9_41, %c0_42] : memref<18x32x32xf32, #tpu.memory_space<vmem>>, vector<16x16x32xf32>
    %37 = vector.shape_cast %36 : vector<16x16x32xf32> to vector<256x32xf32>
    %c0_43 = arith.constant 0 : index
    %c1024 = arith.constant 1024 : index
    %38 = vector.load %arg8[%c0_43, %c1024] : memref<256x1152xf32, #tpu.memory_space<vmem>>, vector<256x32xf32>
    tpu.vector_store %arg8[%c0_43, %c1024], %37 {strides = array<i32>} : memref<256x1152xf32, #tpu.memory_space<vmem>>, vector<256x32xf32>,
    %c0_44 = arith.constant 0 : index
    %c0_45 = arith.constant 0 : index
    %39 = vector.load %arg8[%c0_44, %c0_45] : memref<256x1152xf32, #tpu.memory_space<vmem>>, vector<256x1152xf32>
    %c0_46 = arith.constant 0 : index
    %c0_47 = arith.constant 0 : index
    %c0_48 = arith.constant 0 : index
    %40 = vector.load %arg2[%c0_46, %c0_47, %c0_48] : memref<2x1152x32xf32, #tpu.memory_space<vmem>>, vector<1x1152x32xf32>
    %41 = vector.shape_cast %40 : vector<1x1152x32xf32> to vector<1152x32xf32>
    %cst_49 = arith.constant dense<0.000000e+00> : vector<256x32xf32>
    %42 = tpu.matmul %39, %41, %cst_49 {dimension_numbers = #tpu.dot_dimension_numbers<[1], [0], [0], [1], [0, 0, 1, 1], [], []>} : vector<256x1152xf32>, vector<1152x32xf32>, vector<256x32xf32> -> vector<256x32xf32>
    %c0_50 = arith.constant 0 : index
    %c0_51 = arith.constant 0 : index
    %c0_52 = arith.constant 0 : index
    %43 = vector.load %arg3[%c0_50, %c0_51, %c0_52] : memref<2x1x32xf32, #tpu.memory_space<vmem>>, vector<1x1x32xf32>
    %44 = vector.shape_cast %43 : vector<1x1x32xf32> to vector<1x32xf32>
    %c0_53 = arith.constant 0 : index
    %c0_54 = arith.constant 0 : index
    %c0_55 = arith.constant 0 : index
    %45 = vector.load %arg4[%c0_53, %c0_54, %c0_55] : memref<2x1x32xf32, #tpu.memory_space<vmem>>, vector<1x1x32xf32>
    %46 = vector.shape_cast %45 : vector<1x1x32xf32> to vector<1x32xf32>
    %c0_56 = arith.constant 0 : index
    %c0_57 = arith.constant 0 : index
    %c0_58 = arith.constant 0 : index
    %47 = vector.load %arg5[%c0_56, %c0_57, %c0_58] : memref<2x1x32xf32, #tpu.memory_space<vmem>>, vector<1x1x32xf32>
    %48 = vector.shape_cast %47 : vector<1x1x32xf32> to vector<1x32xf32>
    %cst_59 = arith.constant dense<0.000000e+00> : vector<32xf32>
    %49 = vector.multi_reduction <add>, %42, %cst_59 [0] : vector<256x32xf32> to vector<32xf32>
    %50 = vector.shape_cast %49 : vector<32xf32> to vector<1x32xf32>
    %51 = arith.mulf %42, %42 : vector<256x32xf32>
    %cst_60 = arith.constant dense<0.000000e+00> : vector<32xf32>
    %52 = vector.multi_reduction <add>, %51, %cst_60 [0] : vector<256x32xf32> to vector<32xf32>
    %53 = vector.shape_cast %52 : vector<32xf32> to vector<1x32xf32>
    %cst_61 = arith.constant 2.560000e+02 : f32
    %54 = vector.broadcast %cst_61 : f32 to vector<1x32xf32>
    %55 = arith.mulf %54, %44 : vector<1x32xf32>
    %56 = arith.addf %50, %55 : vector<1x32xf32>
    %cst_62 = arith.constant 2.000000e+00 : f32
    %57 = vector.broadcast %cst_62 : f32 to vector<1x32xf32>
    %58 = arith.mulf %57, %44 : vector<1x32xf32>
    %59 = arith.mulf %58, %50 : vector<1x32xf32>
    %60 = arith.addf %53, %59 : vector<1x32xf32>
    %cst_63 = arith.constant 2.560000e+02 : f32
    %61 = vector.broadcast %cst_63 : f32 to vector<1x32xf32>
    %62 = arith.mulf %61, %44 : vector<1x32xf32>
    %63 = arith.mulf %62, %44 : vector<1x32xf32>
    %64 = arith.addf %60, %63 : vector<1x32xf32>
    %cst_64 = arith.constant 2.560000e+02 : f32
    %65 = vector.broadcast %cst_64 : f32 to vector<1x32xf32>
    %66 = arith.divf %56, %65 : vector<1x32xf32>
    %cst_65 = arith.constant 2.560000e+02 : f32
    %67 = vector.broadcast %cst_65 : f32 to vector<1x32xf32>
    %68 = arith.divf %64, %67 : vector<1x32xf32>
    %69 = arith.mulf %66, %66 : vector<1x32xf32>
    %70 = arith.subf %68, %69 : vector<1x32xf32>
    %cst_66 = arith.constant 0.000000e+00 : f32
    %71 = vector.broadcast %cst_66 : f32 to vector<1x32xf32>
    %72 = arith.maximumf %70, %71 : vector<1x32xf32>
    %cst_67 = arith.constant 9.99999974E-6 : f32
    %73 = vector.broadcast %cst_67 : f32 to vector<1x32xf32>
    %74 = arith.addf %72, %73 : vector<1x32xf32>
    %75 = math.rsqrt %74 : vector<1x32xf32>
    %76 = arith.mulf %75, %46 : vector<1x32xf32>
    %77 = arith.subf %44, %66 : vector<1x32xf32>
    %78 = arith.mulf %77, %76 : vector<1x32xf32>
    %79 = arith.addf %78, %48 : vector<1x32xf32>
    %80 = vector.broadcast %76 : vector<1x32xf32> to vector<256x32xf32>
    %81 = arith.mulf %42, %80 : vector<256x32xf32>
    %82 = vector.broadcast %79 : vector<1x32xf32> to vector<256x32xf32>
    %83 = arith.addf %81, %82 : vector<256x32xf32>
    %cst_68 = arith.constant 0.000000e+00 : f32
    %84 = vector.broadcast %cst_68 : f32 to vector<256x32xf32>
    %85 = arith.maximumf %83, %84 : vector<256x32xf32>
    %86 = vector.shape_cast %85 : vector<256x32xf32> to vector<16x16x32xf32>
    %c1_69 = arith.constant 1 : index
    %c8_70 = arith.constant 8 : index
    %c0_71 = arith.constant 0 : index
    %87 = vector.load %arg7[%c1_69, %c8_70, %c0_71] : memref<18x32x32xf32, #tpu.memory_space<vmem>>, vector<16x16x32xf32>
    tpu.vector_store %arg7[%c1_69, %c8_70, %c0_71], %86 {strides = array<i32>} : memref<18x32x32xf32, #tpu.memory_space<vmem>>, vector<16x16x32xf32>,
    %c0_72 = arith.constant 0 : index
    %c7_73 = arith.constant 7 : index
    %c0_74 = arith.constant 0 : index
    %88 = vector.load %arg7[%c0_72, %c7_73, %c0_74] : memref<18x32x32xf32, #tpu.memory_space<vmem>>, vector<16x16x32xf32>
    %89 = vector.shape_cast %88 : vector<16x16x32xf32> to vector<256x32xf32>
    %c0_75 = arith.constant 0 : index
    %c0_76 = arith.constant 0 : index
    %90 = vector.load %arg8[%c0_75, %c0_76] : memref<256x1152xf32, #tpu.memory_space<vmem>>, vector<256x32xf32>
    tpu.vector_store %arg8[%c0_75, %c0_76], %89 {strides = array<i32>} : memref<256x1152xf32, #tpu.memory_space<vmem>>, vector<256x32xf32>,
    %c0_77 = arith.constant 0 : index
    %c8_78 = arith.constant 8 : index
    %c0_79 = arith.constant 0 : index
    %91 = vector.load %arg7[%c0_77, %c8_78, %c0_79] : memref<18x32x32xf32, #tpu.memory_space<vmem>>, vector<16x16x32xf32>
    %92 = vector.shape_cast %91 : vector<16x16x32xf32> to vector<256x32xf32>
    %c0_80 = arith.constant 0 : index
    %c128_81 = arith.constant 128 : index
    %93 = vector.load %arg8[%c0_80, %c128_81] : memref<256x1152xf32, #tpu.memory_space<vmem>>, vector<256x32xf32>
    tpu.vector_store %arg8[%c0_80, %c128_81], %92 {strides = array<i32>} : memref<256x1152xf32, #tpu.memory_space<vmem>>, vector<256x32xf32>,
    %c0_82 = arith.constant 0 : index
    %c9_83 = arith.constant 9 : index
    %c0_84 = arith.constant 0 : index
    %94 = vector.load %arg7[%c0_82, %c9_83, %c0_84] : memref<18x32x32xf32, #tpu.memory_space<vmem>>, vector<16x16x32xf32>
    %95 = vector.shape_cast %94 : vector<16x16x32xf32> to vector<256x32xf32>
    %c0_85 = arith.constant 0 : index
    %c256_86 = arith.constant 256 : index
    %96 = vector.load %arg8[%c0_85, %c256_86] : memref<256x1152xf32, #tpu.memory_space<vmem>>, vector<256x32xf32>
    tpu.vector_store %arg8[%c0_85, %c256_86], %95 {strides = array<i32>} : memref<256x1152xf32, #tpu.memory_space<vmem>>, vector<256x32xf32>,
    %c1_87 = arith.constant 1 : index
    %c7_88 = arith.constant 7 : index
    %c0_89 = arith.constant 0 : index
    %97 = vector.load %arg7[%c1_87, %c7_88, %c0_89] : memref<18x32x32xf32, #tpu.memory_space<vmem>>, vector<16x16x32xf32>
    %98 = vector.shape_cast %97 : vector<16x16x32xf32> to vector<256x32xf32>
    %c0_90 = arith.constant 0 : index
    %c384_91 = arith.constant 384 : index
    %99 = vector.load %arg8[%c0_90, %c384_91] : memref<256x1152xf32, #tpu.memory_space<vmem>>, vector<256x32xf32>
    tpu.vector_store %arg8[%c0_90, %c384_91], %98 {strides = array<i32>} : memref<256x1152xf32, #tpu.memory_space<vmem>>, vector<256x32xf32>,
    %c1_92 = arith.constant 1 : index
    %c8_93 = arith.constant 8 : index
    %c0_94 = arith.constant 0 : index
    %100 = vector.load %arg7[%c1_92, %c8_93, %c0_94] : memref<18x32x32xf32, #tpu.memory_space<vmem>>, vector<16x16x32xf32>
    %101 = vector.shape_cast %100 : vector<16x16x32xf32> to vector<256x32xf32>
    %c0_95 = arith.constant 0 : index
    %c512_96 = arith.constant 512 : index
    %102 = vector.load %arg8[%c0_95, %c512_96] : memref<256x1152xf32, #tpu.memory_space<vmem>>, vector<256x32xf32>
    tpu.vector_store %arg8[%c0_95, %c512_96], %101 {strides = array<i32>} : memref<256x1152xf32, #tpu.memory_space<vmem>>, vector<256x32xf32>,
    %c1_97 = arith.constant 1 : index
    %c9_98 = arith.constant 9 : index
    %c0_99 = arith.constant 0 : index
    %103 = vector.load %arg7[%c1_97, %c9_98, %c0_99] : memref<18x32x32xf32, #tpu.memory_space<vmem>>, vector<16x16x32xf32>
    %104 = vector.shape_cast %103 : vector<16x16x32xf32> to vector<256x32xf32>
    %c0_100 = arith.constant 0 : index
    %c640_101 = arith.constant 640 : index
    %105 = vector.load %arg8[%c0_100, %c640_101] : memref<256x1152xf32, #tpu.memory_space<vmem>>, vector<256x32xf32>
    tpu.vector_store %arg8[%c0_100, %c640_101], %104 {strides = array<i32>} : memref<256x1152xf32, #tpu.memory_space<vmem>>, vector<256x32xf32>,
    %c2_102 = arith.constant 2 : index
    %c7_103 = arith.constant 7 : index
    %c0_104 = arith.constant 0 : index
    %106 = vector.load %arg7[%c2_102, %c7_103, %c0_104] : memref<18x32x32xf32, #tpu.memory_space<vmem>>, vector<16x16x32xf32>
    %107 = vector.shape_cast %106 : vector<16x16x32xf32> to vector<256x32xf32>
    %c0_105 = arith.constant 0 : index
    %c768_106 = arith.constant 768 : index
    %108 = vector.load %arg8[%c0_105, %c768_106] : memref<256x1152xf32, #tpu.memory_space<vmem>>, vector<256x32xf32>
    tpu.vector_store %arg8[%c0_105, %c768_106], %107 {strides = array<i32>} : memref<256x1152xf32, #tpu.memory_space<vmem>>, vector<256x32xf32>,
    %c2_107 = arith.constant 2 : index
    %c8_108 = arith.constant 8 : index
    %c0_109 = arith.constant 0 : index
    %109 = vector.load %arg7[%c2_107, %c8_108, %c0_109] : memref<18x32x32xf32, #tpu.memory_space<vmem>>, vector<16x16x32xf32>
    %110 = vector.shape_cast %109 : vector<16x16x32xf32> to vector<256x32xf32>
    %c0_110 = arith.constant 0 : index
    %c896_111 = arith.constant 896 : index
    %111 = vector.load %arg8[%c0_110, %c896_111] : memref<256x1152xf32, #tpu.memory_space<vmem>>, vector<256x32xf32>
    tpu.vector_store %arg8[%c0_110, %c896_111], %110 {strides = array<i32>} : memref<256x1152xf32, #tpu.memory_space<vmem>>, vector<256x32xf32>,
    %c2_112 = arith.constant 2 : index
    %c9_113 = arith.constant 9 : index
    %c0_114 = arith.constant 0 : index
    %112 = vector.load %arg7[%c2_112, %c9_113, %c0_114] : memref<18x32x32xf32, #tpu.memory_space<vmem>>, vector<16x16x32xf32>
    %113 = vector.shape_cast %112 : vector<16x16x32xf32> to vector<256x32xf32>
    %c0_115 = arith.constant 0 : index
    %c1024_116 = arith.constant 1024 : index
    %114 = vector.load %arg8[%c0_115, %c1024_116] : memref<256x1152xf32, #tpu.memory_space<vmem>>, vector<256x32xf32>
    tpu.vector_store %arg8[%c0_115, %c1024_116], %113 {strides = array<i32>} : memref<256x1152xf32, #tpu.memory_space<vmem>>, vector<256x32xf32>,
    %c0_117 = arith.constant 0 : index
    %c0_118 = arith.constant 0 : index
    %115 = vector.load %arg8[%c0_117, %c0_118] : memref<256x1152xf32, #tpu.memory_space<vmem>>, vector<256x1152xf32>
    %c1_119 = arith.constant 1 : index
    %c0_120 = arith.constant 0 : index
    %c0_121 = arith.constant 0 : index
    %116 = vector.load %arg2[%c1_119, %c0_120, %c0_121] : memref<2x1152x32xf32, #tpu.memory_space<vmem>>, vector<1x1152x32xf32>
    %117 = vector.shape_cast %116 : vector<1x1152x32xf32> to vector<1152x32xf32>
    %cst_122 = arith.constant dense<0.000000e+00> : vector<256x32xf32>
    %118 = tpu.matmul %115, %117, %cst_122 {dimension_numbers = #tpu.dot_dimension_numbers<[1], [0], [0], [1], [0, 0, 1, 1], [], []>} : vector<256x1152xf32>, vector<1152x32xf32>, vector<256x32xf32> -> vector<256x32xf32>
    %c1_123 = arith.constant 1 : index
    %c0_124 = arith.constant 0 : index
    %c0_125 = arith.constant 0 : index
    %119 = vector.load %arg3[%c1_123, %c0_124, %c0_125] : memref<2x1x32xf32, #tpu.memory_space<vmem>>, vector<1x1x32xf32>
    %120 = vector.shape_cast %119 : vector<1x1x32xf32> to vector<1x32xf32>
    %c1_126 = arith.constant 1 : index
    %c0_127 = arith.constant 0 : index
    %c0_128 = arith.constant 0 : index
    %121 = vector.load %arg4[%c1_126, %c0_127, %c0_128] : memref<2x1x32xf32, #tpu.memory_space<vmem>>, vector<1x1x32xf32>
    %122 = vector.shape_cast %121 : vector<1x1x32xf32> to vector<1x32xf32>
    %c1_129 = arith.constant 1 : index
    %c0_130 = arith.constant 0 : index
    %c0_131 = arith.constant 0 : index
    %123 = vector.load %arg5[%c1_129, %c0_130, %c0_131] : memref<2x1x32xf32, #tpu.memory_space<vmem>>, vector<1x1x32xf32>
    %124 = vector.shape_cast %123 : vector<1x1x32xf32> to vector<1x32xf32>
    %cst_132 = arith.constant dense<0.000000e+00> : vector<32xf32>
    %125 = vector.multi_reduction <add>, %118, %cst_132 [0] : vector<256x32xf32> to vector<32xf32>
    %126 = vector.shape_cast %125 : vector<32xf32> to vector<1x32xf32>
    %127 = arith.mulf %118, %118 : vector<256x32xf32>
    %cst_133 = arith.constant dense<0.000000e+00> : vector<32xf32>
    %128 = vector.multi_reduction <add>, %127, %cst_133 [0] : vector<256x32xf32> to vector<32xf32>
    %129 = vector.shape_cast %128 : vector<32xf32> to vector<1x32xf32>
    %cst_134 = arith.constant 2.560000e+02 : f32
    %130 = vector.broadcast %cst_134 : f32 to vector<1x32xf32>
    %131 = arith.mulf %130, %120 : vector<1x32xf32>
    %132 = arith.addf %126, %131 : vector<1x32xf32>
    %cst_135 = arith.constant 2.000000e+00 : f32
    %133 = vector.broadcast %cst_135 : f32 to vector<1x32xf32>
    %134 = arith.mulf %133, %120 : vector<1x32xf32>
    %135 = arith.mulf %134, %126 : vector<1x32xf32>
    %136 = arith.addf %129, %135 : vector<1x32xf32>
    %cst_136 = arith.constant 2.560000e+02 : f32
    %137 = vector.broadcast %cst_136 : f32 to vector<1x32xf32>
    %138 = arith.mulf %137, %120 : vector<1x32xf32>
    %139 = arith.mulf %138, %120 : vector<1x32xf32>
    %140 = arith.addf %136, %139 : vector<1x32xf32>
    %cst_137 = arith.constant 2.560000e+02 : f32
    %141 = vector.broadcast %cst_137 : f32 to vector<1x32xf32>
    %142 = arith.divf %132, %141 : vector<1x32xf32>
    %cst_138 = arith.constant 2.560000e+02 : f32
    %143 = vector.broadcast %cst_138 : f32 to vector<1x32xf32>
    %144 = arith.divf %140, %143 : vector<1x32xf32>
    %145 = arith.mulf %142, %142 : vector<1x32xf32>
    %146 = arith.subf %144, %145 : vector<1x32xf32>
    %cst_139 = arith.constant 0.000000e+00 : f32
    %147 = vector.broadcast %cst_139 : f32 to vector<1x32xf32>
    %148 = arith.maximumf %146, %147 : vector<1x32xf32>
    %cst_140 = arith.constant 9.99999974E-6 : f32
    %149 = vector.broadcast %cst_140 : f32 to vector<1x32xf32>
    %150 = arith.addf %148, %149 : vector<1x32xf32>
    %151 = math.rsqrt %150 : vector<1x32xf32>
    %152 = arith.mulf %151, %122 : vector<1x32xf32>
    %153 = arith.subf %120, %142 : vector<1x32xf32>
    %154 = arith.mulf %153, %152 : vector<1x32xf32>
    %155 = arith.addf %154, %124 : vector<1x32xf32>
    %156 = vector.broadcast %152 : vector<1x32xf32> to vector<256x32xf32>
    %157 = arith.mulf %118, %156 : vector<256x32xf32>
    %158 = vector.broadcast %155 : vector<1x32xf32> to vector<256x32xf32>
    %159 = arith.addf %157, %158 : vector<256x32xf32>
    %cst_141 = arith.constant 0.000000e+00 : f32
    %160 = vector.broadcast %cst_141 : f32 to vector<256x32xf32>
    %161 = arith.maximumf %159, %160 : vector<256x32xf32>
    %cst_142 = arith.constant dense<0.000000e+00> : vector<32x256xf32>
    %162 = tpu.matmul %11, %161, %cst_142 {dimension_numbers = #tpu.dot_dimension_numbers<[1], [1], [0], [0], [0, 0, 1, 0], [], []>} : vector<32x32xf32>, vector<256x32xf32>, vector<32x256xf32> -> vector<32x256xf32>
    %163 = vector.shape_cast %162 : vector<32x256xf32> to vector<1x32x256xf32>
    %c0_143 = arith.constant 0 : index
    %c0_144 = arith.constant 0 : index
    %c0_145 = arith.constant 0 : index
    %164 = vector.load %arg6[%c0_143, %c0_144, %c0_145] : memref<1x32x256xf32, #tpu.memory_space<vmem>>, vector<1x32x256xf32>
    tpu.vector_store %arg6[%c0_143, %c0_144, %c0_145], %163 {strides = array<i32>} : memref<1x32x256xf32, #tpu.memory_space<vmem>>, vector<1x32x256xf32>,
    return
  }
  func.func @transform_0(%arg0: i32) -> (i32, i32, i32, i32) {
    %c0_i32 = arith.constant 0 : i32
    %c0_i32_0 = arith.constant 0 : i32
    %c0_i32_1 = arith.constant 0 : i32
    %c0_i32_2 = arith.constant 0 : i32
    return %arg0, %c0_i32, %c0_i32_0, %c0_i32_1 : i32, i32, i32, i32
  }
  func.func @transform_1(%arg0: i32) -> (i32, i32, i32) {
    %c0_i32 = arith.constant 0 : i32
    %c0_i32_0 = arith.constant 0 : i32
    %c0_i32_1 = arith.constant 0 : i32
    %c0_i32_2 = arith.constant 0 : i32
    return %c0_i32, %c0_i32_0, %c0_i32_1 : i32, i32, i32
  }
  func.func @transform_2(%arg0: i32) -> (i32, i32, i32) {
    %c0_i32 = arith.constant 0 : i32
    %c0_i32_0 = arith.constant 0 : i32
    %c0_i32_1 = arith.constant 0 : i32
    %c0_i32_2 = arith.constant 0 : i32
    return %c0_i32, %c0_i32_0, %c0_i32_1 : i32, i32, i32
  }
  func.func @transform_3(%arg0: i32) -> (i32, i32, i32) {
    %c0_i32 = arith.constant 0 : i32
    %c0_i32_0 = arith.constant 0 : i32
    %c0_i32_1 = arith.constant 0 : i32
    %c0_i32_2 = arith.constant 0 : i32
    return %c0_i32, %c0_i32_0, %c0_i32_1 : i32, i32, i32
  }
  func.func @transform_4(%arg0: i32) -> (i32, i32, i32) {
    %c0_i32 = arith.constant 0 : i32
    %c0_i32_0 = arith.constant 0 : i32
    %c0_i32_1 = arith.constant 0 : i32
    %c0_i32_2 = arith.constant 0 : i32
    return %c0_i32, %c0_i32_0, %c0_i32_1 : i32, i32, i32
  }
  func.func @transform_5(%arg0: i32) -> (i32, i32, i32) {
    %c0_i32 = arith.constant 0 : i32
    %c0_i32_0 = arith.constant 0 : i32
    %c0_i32_1 = arith.constant 0 : i32
    return %arg0, %c0_i32, %c0_i32_0 : i32, i32, i32
  }
}

</mosaic_0001>

<llo_original>
// kernel: tpu_custom_call.1
$region0: #{tpu_custom_call.1}
  #allocation0 [shape = 'u32[]', space=smem, size = 0x4, offset = 0x4, fixed_abs, tag = 'smem constant byte address 0x4 - core index']
  #allocation1 [shape = 'u32[144,128]{1,0:T(1,128)}', space=vmem, size = 0x12000, scoped, tag = 'internal scratch']
  #allocation2 [shape = 'f32[18,32,32]{2,1,0:T(8,128)}', space=vmem, size = 0x48000, scoped, tag = 'scratch operand']
  #allocation3 [shape = 'f32[256,1152]{1,0:T(8,128)}', space=vmem, size = 0x120000, scoped, tag = 'scratch operand']
  %s0 = inlined_call_operand.vmem [shape: f32[2,16,16,32], index: 0, kind: input, shape index: {}]
  %s1 = inlined_call_operand.vmem [shape: f32[2,1152,32], index: 1, kind: input, shape index: {}]
  %s2 = inlined_call_operand.vmem [shape: f32[2,1,32], index: 2, kind: input, shape index: {}]
  %s3 = inlined_call_operand.vmem [shape: f32[2,1,32], index: 3, kind: input, shape index: {}]
  %s4 = inlined_call_operand.vmem [shape: f32[2,1,32], index: 4, kind: input, shape index: {}]
  %s5 = inlined_call_operand.hbm [shape: f32[2,32,256], index: 5, kind: output, shape index: {}]
  %s6 = sld [smem:[#allocation0]]
  $region53: #{tpu_custom_call.1} parent=0
    _
  %s8 = ssub.s32 1, %s6
  %s9 = scalar_select 0, %s8, %s6
  $region1: #{tpu_custom_call.1} parent=0
    #allocation4 [shape = 'u8[65536]{0}', space=vmem, size = 0x10000, scoped, tag = 'output window, operand 0']
    #allocation5 [shape = 's32[2]{0}', space=sflag, size = 0x8, scoped, tag = 'scoped memory for tpu_custom_call.1']
    %10 = vsyncpa [#allocation5], 0
    %s11 = scalar_lea.sflag [#allocation5], 1
    %12 = vsyncpa %s11, 0
    loop: start=0, step=1, limit=4
    $region2: #{tpu_custom_call.1} parent=1 // loop_pre_header
      _
    $region3: #{tpu_custom_call.1} parent=1 // loop_header
      %s14 = sphi 0, %s18
      %p15 = scmp.ge.s32.totalorder %s14, 4
      %s24 = sphi 0, %s26
      %s27 = sphi 0, %s24
      %s28 = sphi 0, %s27
      %s44 = sphi 0, %s28
      %s48 = sphi 0, %s48
      %s50 = sphi 0, %s48
      %s51 = sphi 0, %s50
      %s65 = sphi 0, %s51
      %s69 = sphi 0, %s69
      %s71 = sphi 0, %s69
      %s72 = sphi 0, %s71
      %s86 = sphi 0, %s72
      %s90 = sphi 0, %s90
      %s92 = sphi 0, %s90
      %s93 = sphi 0, %s92
      %s107 = sphi 0, %s93
      %s111 = sphi 0, %s111
      %s113 = sphi 0, %s111
      %s114 = sphi 0, %s113
      %s128 = sphi 0, %s114
      %s134 = sphi 0, %s136
      %s137 = sphi 0, %s134
      %s138 = sphi 0, %s137
      %s154 = sphi 0, %s138
    $region4: #{tpu_custom_call.1} parent=1 // loop_header_branch
      %17 = sbr.rel (%p15) target = $region8
    $region5: #{tpu_custom_call.1} parent=1 // loop_body
      %s19 = ssub.s32 %s14, 1
      %s20 = ssub.s32 %s14, 2
      %s21 = sadd.s32 %s14, 1
      %s22 = ssub.s32 %s14, %s21
      %p23 = scmp.eq.s32.totalorder %s22, 0
      %s25 = sadd.s32 %s24, 1
      %s26 = scalar_select %p23, %s24, %s25
      %p29 = pneg %p23
      %p30 = scmp.eq.s32.totalorder %s14, 1
      %p31 = por %p29, %p30
      %p32 = scmp.ne.s32.totalorder %s24, %s27
      %p33 = scmp.eq.s32.totalorder %s14, 0
      %p34 = por %p32, %p33
      %p35 = scmp.ne.s32.totalorder %s24, %s27
      %p36 = scmp.eq.s32.totalorder %s19, 1
      %p37 = por %p35, %p36
      %p38 = scmp.ne.s32.totalorder %s27, %s28
      %p39 = scmp.eq.s32.totalorder %s19, 0
      %p40 = por %p38, %p39
      %p41 = scmp.ne.s32.totalorder %s27, %s28
      %p42 = scmp.eq.s32.totalorder %s20, 1
      %p43 = por %p41, %p42
      %p45 = scmp.ne.s32.totalorder %s28, %s44
      %p46 = scmp.eq.s32.totalorder %s20, 0
      %p47 = por %p45, %p46
      %s49 = sadd.s32 %s48, 1
      %p52 = scmp.eq.s32.totalorder %s14, 1
      %p53 = scmp.ne.s32.totalorder %s48, %s50
      %p54 = scmp.eq.s32.totalorder %s14, 0
      %p55 = por %p53, %p54
      %p56 = scmp.ne.s32.totalorder %s48, %s50
      %p57 = scmp.eq.s32.totalorder %s19, 1
      %p58 = por %p56, %p57
      %p59 = scmp.ne.s32.totalorder %s50, %s51
      %p60 = scmp.eq.s32.totalorder %s19, 0
      %p61 = por %p59, %p60
      %p62 = scmp.ne.s32.totalorder %s50, %s51
      %p63 = scmp.eq.s32.totalorder %s20, 1
      %p64 = por %p62, %p63
      %p66 = scmp.ne.s32.totalorder %s51, %s65
      %p67 = scmp.eq.s32.totalorder %s20, 0
      %p68 = por %p66, %p67
      %s70 = sadd.s32 %s69, 1
      %p73 = scmp.eq.s32.totalorder %s14, 1
      %p74 = scmp.ne.s32.totalorder %s69, %s71
      %p75 = scmp.eq.s32.totalorder %s14, 0
      %p76 = por %p74, %p75
      %p77 = scmp.ne.s32.totalorder %s69, %s71
      %p78 = scmp.eq.s32.totalorder %s19, 1
      %p79 = por %p77, %p78
      %p80 = scmp.ne.s32.totalorder %s71, %s72
      %p81 = scmp.eq.s32.totalorder %s19, 0
      %p82 = por %p80, %p81
      %p83 = scmp.ne.s32.totalorder %s71, %s72
      %p84 = scmp.eq.s32.totalorder %s20, 1
      %p85 = por %p83, %p84
      %p87 = scmp.ne.s32.totalorder %s72, %s86
      %p88 = scmp.eq.s32.totalorder %s20, 0
      %p89 = por %p87, %p88
      %s91 = sadd.s32 %s90, 1
      %p94 = scmp.eq.s32.totalorder %s14, 1
      %p95 = scmp.ne.s32.totalorder %s90, %s92
      %p96 = scmp.eq.s32.totalorder %s14, 0
      %p97 = por %p95, %p96
      %p98 = scmp.ne.s32.totalorder %s90, %s92
      %p99 = scmp.eq.s32.totalorder %s19, 1
      %p100 = por %p98, %p99
      %p101 = scmp.ne.s32.totalorder %s92, %s93
      %p102 = scmp.eq.s32.totalorder %s19, 0
      %p103 = por %p101, %p102
      %p104 = scmp.ne.s32.totalorder %s92, %s93
      %p105 = scmp.eq.s32.totalorder %s20, 1
      %p106 = por %p104, %p105
      %p108 = scmp.ne.s32.totalorder %s93, %s107
      %p109 = scmp.eq.s32.totalorder %s20, 0
      %p110 = por %p108, %p109
      %s112 = sadd.s32 %s111, 1
      %p115 = scmp.eq.s32.totalorder %s14, 1
      %p116 = scmp.ne.s32.totalorder %s111, %s113
      %p117 = scmp.eq.s32.totalorder %s14, 0
      %p118 = por %p116, %p117
      %p119 = scmp.ne.s32.totalorder %s111, %s113
      %p120 = scmp.eq.s32.totalorder %s19, 1
      %p121 = por %p119, %p120
      %p122 = scmp.ne.s32.totalorder %s113, %s114
      %p123 = scmp.eq.s32.totalorder %s19, 0
      %p124 = por %p122, %p123
      %p125 = scmp.ne.s32.totalorder %s113, %s114
      %p126 = scmp.eq.s32.totalorder %s20, 1
      %p127 = por %p125, %p126
      %p129 = scmp.ne.s32.totalorder %s114, %s128
      %p130 = scmp.eq.s32.totalorder %s20, 0
      %p131 = por %p129, %p130
      %s132 = ssub.s32 %s14, %s21
      %p133 = scmp.eq.s32.totalorder %s132, 0
      %s135 = sadd.s32 %s134, 1
      %s136 = scalar_select %p133, %s134, %s135
      %p139 = pneg %p133
      %p140 = scmp.eq.s32.totalorder %s14, 1
      %p141 = por %p139, %p140
      %p142 = scmp.ne.s32.totalorder %s134, %s137
      %p143 = scmp.eq.s32.totalorder %s14, 0
      %p144 = por %p142, %p143
      %p145 = scmp.ne.s32.totalorder %s134, %s137
      %p146 = scmp.eq.s32.totalorder %s19, 1
      %p147 = por %p145, %p146
      %p148 = scmp.ne.s32.totalorder %s137, %s138
      %p149 = scmp.eq.s32.totalorder %s19, 0
      %p150 = por %p148, %p149
      %p151 = scmp.ne.s32.totalorder %s137, %s138
      %p152 = scmp.eq.s32.totalorder %s20, 1
      %p153 = por %p151, %p152
      %p155 = scmp.ne.s32.totalorder %s138, %s154
      %p156 = scmp.eq.s32.totalorder %s20, 0
      %p157 = por %p155, %p156
      %p158 = scmp.le.s32.totalorder 1, %s14
      %p159 = scmp.lt.s32.totalorder %s14, 3
      %p160 = pnand %p158, %p159
      %p161 = pneg %p160
      // Predicated region
      $region9: #{tpu_custom_call.1} parent=5 // pred_check
        _
      $region10: #{tpu_custom_call.1} parent=5 // pred_check_branch
        %163 = sbr.rel (%p160) target = $region12
      $region11: #{tpu_custom_call.1} parent=5 // pred_region
        %s164 = ssub.s32 %s14, 1
        // Predicated region
        $region13: #{tpu_custom_call.1} parent=11 // pred_check
          %p165 = pneg %p61
        $region14: #{tpu_custom_call.1} parent=11 // pred_check_branch
          %167 = sbr.rel (%p165) target = $region16
        $region15: #{tpu_custom_call.1} parent=11 // pred_region
          _
        $region16: #{tpu_custom_call.1} parent=11 // pred_fallthru
          _
        // Predicated region
        $region17: #{tpu_custom_call.1} parent=11 // pred_check
          %p168 = pneg %p82
        $region18: #{tpu_custom_call.1} parent=11 // pred_check_branch
          %170 = sbr.rel (%p168) target = $region20
        $region19: #{tpu_custom_call.1} parent=11 // pred_region
          _
        $region20: #{tpu_custom_call.1} parent=11 // pred_fallthru
          _
        // Predicated region
        $region21: #{tpu_custom_call.1} parent=11 // pred_check
          %p171 = pneg %p103
        $region22: #{tpu_custom_call.1} parent=11 // pred_check_branch
          %173 = sbr.rel (%p171) target = $region24
        $region23: #{tpu_custom_call.1} parent=11 // pred_region
          _
        $region24: #{tpu_custom_call.1} parent=11 // pred_fallthru
          _
        // Predicated region
        $region25: #{tpu_custom_call.1} parent=11 // pred_check
          %p174 = pneg %p124
        $region26: #{tpu_custom_call.1} parent=11 // pred_check_branch
          %176 = sbr.rel (%p174) target = $region28
        $region27: #{tpu_custom_call.1} parent=11 // pred_region
          _
        $region28: #{tpu_custom_call.1} parent=11 // pred_fallthru
          _
      $region12: #{tpu_custom_call.1} parent=5 // pred_fallthru
        _
      %p177 = scmp.lt.s32.totalorder %s14, 2
      // Predicated region
      $region29: #{tpu_custom_call.1} parent=5 // pred_check
        %p178 = pneg %p177
      $region30: #{tpu_custom_call.1} parent=5 // pred_check_branch
        %180 = sbr.rel (%p178) target = $region32
      $region31: #{tpu_custom_call.1} parent=5 // pred_region
        // Predicated region
        $region33: #{tpu_custom_call.1} parent=31 // pred_check
          %p181 = pneg %p34
        $region34: #{tpu_custom_call.1} parent=31 // pred_check_branch
          %183 = sbr.rel (%p181) target = $region36
        $region35: #{tpu_custom_call.1} parent=31 // pred_region
          %p184 = scmp.lt.s32.totalorder %s14, 1
          %s185 = scalar_select %p184, %s14, 1
          %s186 = smul.addr %s185, 32
          %s187 = smul.addr %s186, 8
          %s188 = scalar_lea.vmem %s0, %s187
        $region36: #{tpu_custom_call.1} parent=31 // pred_fallthru
          _
      $region32: #{tpu_custom_call.1} parent=5 // pred_fallthru
        _
      %p189 = scmp.le.s32.totalorder 1, %s14
      %p190 = scmp.lt.s32.totalorder %s14, 3
      %p191 = pnand %p189, %p190
      %p192 = pneg %p191
      // Predicated region
      $region37: #{tpu_custom_call.1} parent=5 // pred_check
        _
      $region38: #{tpu_custom_call.1} parent=5 // pred_check_branch
        %194 = sbr.rel (%p191) target = $region40
      $region39: #{tpu_custom_call.1} parent=5 // pred_region
        %s195 = ssub.s32 %s14, 1
        %p196 = scmp.lt.s32.totalorder %s19, 1
        %s197 = scalar_select %p196, %s19, 1
        %s198 = smul.addr %s197, 32
        %s199 = smul.addr %s198, 8
        %s200 = scalar_lea.vmem %s0, %s199
        %p201 = pneg %p40
        %p202 = pneg %p37
        %p203 = pneg %p61
        %p204 = pneg %p58
        %p205 = pneg %p82
        %p206 = pneg %p79
        %p207 = pneg %p103
        %p208 = pneg %p100
        %p209 = pneg %p124
        %p210 = pneg %p121
        %p211 = pneg %p150
        %p212 = pneg %p147
        %s213 = sand.u32 %s137, 1
        %s214 = scalar_lea.sflag [#allocation5], %s213
        %s215 = sand.u32 %s137, 1
        %s216 = smul.addr %s215, 64
        %s217 = scalar_lea.vmem [#allocation4], %s216
        %p218 = scmp.lt.s32.totalorder %s19, 1
        %s219 = scalar_select %p218, %s19, 1
        %s220 = smul.addr %s219, 32
        %s221 = smul.addr %s220, 8
        %s222 = scalar_lea.vmem %s0, %s221
        %vm223 = vcmask 261120
        %224 = vst.msk [vmem:[#allocation2] sm:$0xff] %vm223, 0.0
        %225 = vst.msk [vmem:[#allocation2 + $0x8] sm:$0xff] %vm223, 0.0
        %226 = vst.msk [vmem:[#allocation2 + $0x10] sm:$0xff] %vm223, 0.0
        %227 = vst.msk [vmem:[#allocation2 + $0x18] sm:$0xff] %vm223, 0.0
        %228 = vst.msk [vmem:[#allocation2 + $0x20] sm:$0xff] %vm223, 0.0
        %229 = vst.msk [vmem:[#allocation2 + $0x28] sm:$0xff] %vm223, 0.0
        %230 = vst.msk [vmem:[#allocation2 + $0x30] sm:$0xff] %vm223, 0.0
        %231 = vst.msk [vmem:[#allocation2 + $0x38] sm:$0xff] %vm223, 0.0
        %232 = vst.msk [vmem:[#allocation2 + $0x40] sm:$0xff] %vm223, 0.0
        %233 = vst.msk [vmem:[#allocation2 + $0x48] sm:$0xff] %vm223, 0.0
        %234 = vst.msk [vmem:[#allocation2 + $0x50] sm:$0xff] %vm223, 0.0
        %235 = vst.msk [vmem:[#allocation2 + $0x58] sm:$0xff] %vm223, 0.0
        %236 = vst.msk [vmem:[#allocation2 + $0x60] sm:$0xff] %vm223, 0.0
        %237 = vst.msk [vmem:[#allocation2 + $0x68] sm:$0xff] %vm223, 0.0
        %238 = vst.msk [vmem:[#allocation2 + $0x70] sm:$0xff] %vm223, 0.0
        %239 = vst.msk [vmem:[#allocation2 + $0x78] sm:$0xff] %vm223, 0.0
        %240 = vst.msk [vmem:[#allocation2 + $0x80] sm:$0xff] %vm223, 0.0
        %241 = vst.msk [vmem:[#allocation2 + $0x88] sm:$0xff] %vm223, 0.0
        %242 = vst.msk [vmem:[#allocation2 + $0x90] sm:$0xff] %vm223, 0.0
        %243 = vst.msk [vmem:[#allocation2 + $0x98] sm:$0xff] %vm223, 0.0
        %244 = vst.msk [vmem:[#allocation2 + $0xa0] sm:$0xff] %vm223, 0.0
        %245 = vst.msk [vmem:[#allocation2 + $0xa8] sm:$0xff] %vm223, 0.0
        %246 = vst.msk [vmem:[#allocation2 + $0xb0] sm:$0xff] %vm223, 0.0
        %247 = vst.msk [vmem:[#allocation2 + $0xb8] sm:$0xff] %vm223, 0.0
        %248 = vst.msk [vmem:[#allocation2 + $0xc0] sm:$0xff] %vm223, 0.0
        %249 = vst.msk [vmem:[#allocation2 + $0xc8] sm:$0xff] %vm223, 0.0
        %250 = vst.msk [vmem:[#allocation2 + $0xd0] sm:$0xff] %vm223, 0.0
        %251 = vst.msk [vmem:[#allocation2 + $0xd8] sm:$0xff] %vm223, 0.0
        %252 = vst.msk [vmem:[#allocation2 + $0xe0] sm:$0xff] %vm223, 0.0
        %253 = vst.msk [vmem:[#allocation2 + $0xe8] sm:$0xff] %vm223, 0.0
        %254 = vst.msk [vmem:[#allocation2 + $0xf0] sm:$0xff] %vm223, 0.0
        %255 = vst.msk [vmem:[#allocation2 + $0xf8] sm:$0xff] %vm223, 0.0
        %256 = vst.msk [vmem:[#allocation2 + $0x100] sm:$0xff] %vm223, 0.0
        %257 = vst.msk [vmem:[#allocation2 + $0x108] sm:$0xff] %vm223, 0.0
        %258 = vst.msk [vmem:[#allocation2 + $0x110] sm:$0xff] %vm223, 0.0
        %259 = vst.msk [vmem:[#allocation2 + $0x118] sm:$0xff] %vm223, 0.0
        %260 = vst.msk [vmem:[#allocation2 + $0x120] sm:$0xff] %vm223, 0.0
        %261 = vst.msk [vmem:[#allocation2 + $0x128] sm:$0xff] %vm223, 0.0
        %262 = vst.msk [vmem:[#allocation2 + $0x130] sm:$0xff] %vm223, 0.0
        %263 = vst.msk [vmem:[#allocation2 + $0x138] sm:$0xff] %vm223, 0.0
        %264 = vst.msk [vmem:[#allocation2 + $0x140] sm:$0xff] %vm223, 0.0
        %265 = vst.msk [vmem:[#allocation2 + $0x148] sm:$0xff] %vm223, 0.0
        %266 = vst.msk [vmem:[#allocation2 + $0x150] sm:$0xff] %vm223, 0.0
        %267 = vst.msk [vmem:[#allocation2 + $0x158] sm:$0xff] %vm223, 0.0
        %268 = vst.msk [vmem:[#allocation2 + $0x160] sm:$0xff] %vm223, 0.0
        %269 = vst.msk [vmem:[#allocation2 + $0x168] sm:$0xff] %vm223, 0.0
        %270 = vst.msk [vmem:[#allocation2 + $0x170] sm:$0xff] %vm223, 0.0
        %271 = vst.msk [vmem:[#allocation2 + $0x178] sm:$0xff] %vm223, 0.0
        %272 = vst.msk [vmem:[#allocation2 + $0x180] sm:$0xff] %vm223, 0.0
        %273 = vst.msk [vmem:[#allocation2 + $0x188] sm:$0xff] %vm223, 0.0
        %274 = vst.msk [vmem:[#allocation2 + $0x190] sm:$0xff] %vm223, 0.0
        %275 = vst.msk [vmem:[#allocation2 + $0x198] sm:$0xff] %vm223, 0.0
        %276 = vst.msk [vmem:[#allocation2 + $0x1a0] sm:$0xff] %vm223, 0.0
        %277 = vst.msk [vmem:[#allocation2 + $0x1a8] sm:$0xff] %vm223, 0.0
        %278 = vst.msk [vmem:[#allocation2 + $0x1b0] sm:$0xff] %vm223, 0.0
        %279 = vst.msk [vmem:[#allocation2 + $0x1b8] sm:$0xff] %vm223, 0.0
        %280 = vst.msk [vmem:[#allocation2 + $0x1c0] sm:$0xff] %vm223, 0.0
        %281 = vst.msk [vmem:[#allocation2 + $0x1c8] sm:$0xff] %vm223, 0.0
        %282 = vst.msk [vmem:[#allocation2 + $0x1d0] sm:$0xff] %vm223, 0.0
        %283 = vst.msk [vmem:[#allocation2 + $0x1d8] sm:$0xff] %vm223, 0.0
        %284 = vst.msk [vmem:[#allocation2 + $0x1e0] sm:$0xff] %vm223, 0.0
        %285 = vst.msk [vmem:[#allocation2 + $0x1e8] sm:$0xff] %vm223, 0.0
        %286 = vst.msk [vmem:[#allocation2 + $0x1f0] sm:$0xff] %vm223, 0.0
        %287 = vst.msk [vmem:[#allocation2 + $0x1f8] sm:$0xff] %vm223, 0.0
        %288 = vst.msk [vmem:[#allocation2 + $0x200] sm:$0xff] %vm223, 0.0
        %289 = vst.msk [vmem:[#allocation2 + $0x208] sm:$0xff] %vm223, 0.0
        %290 = vst.msk [vmem:[#allocation2 + $0x210] sm:$0xff] %vm223, 0.0
        %291 = vst.msk [vmem:[#allocation2 + $0x218] sm:$0xff] %vm223, 0.0
        %292 = vst.msk [vmem:[#allocation2 + $0x220] sm:$0xff] %vm223, 0.0
        %293 = vst.msk [vmem:[#allocation2 + $0x228] sm:$0xff] %vm223, 0.0
        %294 = vst.msk [vmem:[#allocation2 + $0x230] sm:$0xff] %vm223, 0.0
        %295 = vst.msk [vmem:[#allocation2 + $0x238] sm:$0xff] %vm223, 0.0
        %296 = vst [vmem:[#allocation3] sm:$0xff] 0.0
        %297 = vst [vmem:[#allocation3 + $0x8] sm:$0xff] 0.0
        %298 = vst [vmem:[#allocation3 + $0x10] sm:$0xff] 0.0
        %299 = vst [vmem:[#allocation3 + $0x18] sm:$0xff] 0.0
        %300 = vst [vmem:[#allocation3 + $0x20] sm:$0xff] 0.0
        %301 = vst [vmem:[#allocation3 + $0x28] sm:$0xff] 0.0
        %302 = vst [vmem:[#allocation3 + $0x30] sm:$0xff] 0.0
        %303 = vst [vmem:[#allocation3 + $0x38] sm:$0xff] 0.0
        %304 = vst [vmem:[#allocation3 + $0x40] sm:$0xff] 0.0
        %305 = vst [vmem:[#allocation3 + $0x48] sm:$0xff] 0.0
        %306 = vst [vmem:[#allocation3 + $0x50] sm:$0xff] 0.0
        %307 = vst [vmem:[#allocation3 + $0x58] sm:$0xff] 0.0
        %308 = vst [vmem:[#allocation3 + $0x60] sm:$0xff] 0.0
        %309 = vst [vmem:[#allocation3 + $0x68] sm:$0xff] 0.0
        %310 = vst [vmem:[#allocation3 + $0x70] sm:$0xff] 0.0
        %311 = vst [vmem:[#allocation3 + $0x78] sm:$0xff] 0.0
        %312 = vst [vmem:[#allocation3 + $0x80] sm:$0xff] 0.0
        %313 = vst [vmem:[#allocation3 + $0x88] sm:$0xff] 0.0
        %314 = vst [vmem:[#allocation3 + $0x90] sm:$0xff] 0.0
        %315 = vst [vmem:[#allocation3 + $0x98] sm:$0xff] 0.0
        %316 = vst [vmem:[#allocation3 + $0xa0] sm:$0xff] 0.0
        %317 = vst [vmem:[#allocation3 + $0xa8] sm:$0xff] 0.0
        %318 = vst [vmem:[#allocation3 + $0xb0] sm:$0xff] 0.0
        %319 = vst [vmem:[#allocation3 + $0xb8] sm:$0xff] 0.0
        %320 = vst [vmem:[#allocation3 + $0xc0] sm:$0xff] 0.0
        %321 = vst [vmem:[#allocation3 + $0xc8] sm:$0xff] 0.0
        %322 = vst [vmem:[#allocation3 + $0xd0] sm:$0xff] 0.0
        %323 = vst [vmem:[#allocation3 + $0xd8] sm:$0xff] 0.0
        %324 = vst [vmem:[#allocation3 + $0xe0] sm:$0xff] 0.0
        %325 = vst [vmem:[#allocation3 + $0xe8] sm:$0xff] 0.0
        %326 = vst [vmem:[#allocation3 + $0xf0] sm:$0xff] 0.0
        %327 = vst [vmem:[#allocation3 + $0xf8] sm:$0xff] 0.0
        %328 = vst [vmem:[#allocation3 + $0x100] sm:$0xff] 0.0
        %329 = vst [vmem:[#allocation3 + $0x108] sm:$0xff] 0.0
        %330 = vst [vmem:[#allocation3 + $0x110] sm:$0xff] 0.0
        %331 = vst [vmem:[#allocation3 + $0x118] sm:$0xff] 0.0
        %332 = vst [vmem:[#allocation3 + $0x120] sm:$0xff] 0.0
        %333 = vst [vmem:[#allocation3 + $0x128] sm:$0xff] 0.0
        %334 = vst [vmem:[#allocation3 + $0x130] sm:$0xff] 0.0
        %335 = vst [vmem:[#allocation3 + $0x138] sm:$0xff] 0.0
        %336 = vst [vmem:[#allocation3 + $0x140] sm:$0xff] 0.0
        %337 = vst [vmem:[#allocation3 + $0x148] sm:$0xff] 0.0
        %338 = vst [vmem:[#allocation3 + $0x150] sm:$0xff] 0.0
        %339 = vst [vmem:[#allocation3 + $0x158] sm:$0xff] 0.0
        %340 = vst [vmem:[#allocation3 + $0x160] sm:$0xff] 0.0
        %341 = vst [vmem:[#allocation3 + $0x168] sm:$0xff] 0.0
        %342 = vst [vmem:[#allocation3 + $0x170] sm:$0xff] 0.0
        %343 = vst [vmem:[#allocation3 + $0x178] sm:$0xff] 0.0
        %344 = vst [vmem:[#allocation3 + $0x180] sm:$0xff] 0.0
        %345 = vst [vmem:[#allocation3 + $0x188] sm:$0xff] 0.0
        %346 = vst [vmem:[#allocation3 + $0x190] sm:$0xff] 0.0
        %347 = vst [vmem:[#allocation3 + $0x198] sm:$0xff] 0.0
        %348 = vst [vmem:[#allocation3 + $0x1a0] sm:$0xff] 0.0
        %349 = vst [vmem:[#allocation3 + $0x1a8] sm:$0xff] 0.0
        %350 = vst [vmem:[#allocation3 + $0x1b0] sm:$0xff] 0.0
        %351 = vst [vmem:[#allocation3 + $0x1b8] sm:$0xff] 0.0
        %352 = vst [vmem:[#allocation3 + $0x1c0] sm:$0xff] 0.0
        %353 = vst [vmem:[#allocation3 + $0x1c8] sm:$0xff] 0.0
        %354 = vst [vmem:[#allocation3 + $0x1d0] sm:$0xff] 0.0
        %355 = vst [vmem:[#allocation3 + $0x1d8] sm:$0xff] 0.0
        %356 = vst [vmem:[#allocation3 + $0x1e0] sm:$0xff] 0.0
        %357 = vst [vmem:[#allocation3 + $0x1e8] sm:$0xff] 0.0
        %358 = vst [vmem:[#allocation3 + $0x1f0] sm:$0xff] 0.0
        %359 = vst [vmem:[#allocation3 + $0x1f8] sm:$0xff] 0.0
        %360 = vst [vmem:[#allocation3 + $0x200] sm:$0xff] 0.0
        %361 = vst [vmem:[#allocation3 + $0x208] sm:$0xff] 0.0
        %362 = vst [vmem:[#allocation3 + $0x210] sm:$0xff] 0.0
        %363 = vst [vmem:[#allocation3 + $0x218] sm:$0xff] 0.0
        %364 = vst [vmem:[#allocation3 + $0x220] sm:$0xff] 0.0
        %365 = vst [vmem:[#allocation3 + $0x228] sm:$0xff] 0.0
        %366 = vst [vmem:[#allocation3 + $0x230] sm:$0xff] 0.0
        %367 = vst [vmem:[#allocation3 + $0x238] sm:$0xff] 0.0
        %368 = vst [vmem:[#allocation3 + $0x240] sm:$0xff] 0.0
        %369 = vst [vmem:[#allocation3 + $0x248] sm:$0xff] 0.0
        %370 = vst [vmem:[#allocation3 + $0x250] sm:$0xff] 0.0
        %371 = vst [vmem:[#allocation3 + $0x258] sm:$0xff] 0.0
        %372 = vst [vmem:[#allocation3 + $0x260] sm:$0xff] 0.0
        %373 = vst [vmem:[#allocation3 + $0x268] sm:$0xff] 0.0
        %374 = vst [vmem:[#allocation3 + $0x270] sm:$0xff] 0.0
        %375 = vst [vmem:[#allocation3 + $0x278] sm:$0xff] 0.0
        %376 = vst [vmem:[#allocation3 + $0x280] sm:$0xff] 0.0
        %377 = vst [vmem:[#allocation3 + $0x288] sm:$0xff] 0.0
        %378 = vst [vmem:[#allocation3 + $0x290] sm:$0xff] 0.0
        %379 = vst [vmem:[#allocation3 + $0x298] sm:$0xff] 0.0
        %380 = vst [vmem:[#allocation3 + $0x2a0] sm:$0xff] 0.0
        %381 = vst [vmem:[#allocation3 + $0x2a8] sm:$0xff] 0.0
        %382 = vst [vmem:[#allocation3 + $0x2b0] sm:$0xff] 0.0
        %383 = vst [vmem:[#allocation3 + $0x2b8] sm:$0xff] 0.0
        %384 = vst [vmem:[#allocation3 + $0x2c0] sm:$0xff] 0.0
        %385 = vst [vmem:[#allocation3 + $0x2c8] sm:$0xff] 0.0
        %386 = vst [vmem:[#allocation3 + $0x2d0] sm:$0xff] 0.0
        %387 = vst [vmem:[#allocation3 + $0x2d8] sm:$0xff] 0.0
        %388 = vst [vmem:[#allocation3 + $0x2e0] sm:$0xff] 0.0
        %389 = vst [vmem:[#allocation3 + $0x2e8] sm:$0xff] 0.0
        %390 = vst [vmem:[#allocation3 + $0x2f0] sm:$0xff] 0.0
        %391 = vst [vmem:[#allocation3 + $0x2f8] sm:$0xff] 0.0
        %392 = vst [vmem:[#allocation3 + $0x300] sm:$0xff] 0.0
        %393 = vst [vmem:[#allocation3 + $0x308] sm:$0xff] 0.0
        %394 = vst [vmem:[#allocation3 + $0x310] sm:$0xff] 0.0
        %395 = vst [vmem:[#allocation3 + $0x318] sm:$0xff] 0.0
        %396 = vst [vmem:[#allocation3 + $0x320] sm:$0xff] 0.0
        %397 = vst [vmem:[#allocation3 + $0x328] sm:$0xff] 0.0
        %398 = vst [vmem:[#allocation3 + $0x330] sm:$0xff] 0.0
        %399 = vst [vmem:[#allocation3 + $0x338] sm:$0xff] 0.0
        %400 = vst [vmem:[#allocation3 + $0x340] sm:$0xff] 0.0
        %401 = vst [vmem:[#allocation3 + $0x348] sm:$0xff] 0.0
        %402 = vst [vmem:[#allocation3 + $0x350] sm:$0xff] 0.0
        %403 = vst [vmem:[#allocation3 + $0x358] sm:$0xff] 0.0
        %404 = vst [vmem:[#allocation3 + $0x360] sm:$0xff] 0.0
        %405 = vst [vmem:[#allocation3 + $0x368] sm:$0xff] 0.0
        %406 = vst [vmem:[#allocation3 + $0x370] sm:$0xff] 0.0
        %407 = vst [vmem:[#allocation3 + $0x378] sm:$0xff] 0.0
        %408 = vst [vmem:[#allocation3 + $0x380] sm:$0xff] 0.0
        %409 = vst [vmem:[#allocation3 + $0x388] sm:$0xff] 0.0
        %410 = vst [vmem:[#allocation3 + $0x390] sm:$0xff] 0.0
        %411 = vst [vmem:[#allocation3 + $0x398] sm:$0xff] 0.0
        %412 = vst [vmem:[#allocation3 + $0x3a0] sm:$0xff] 0.0
        %413 = vst [vmem:[#allocation3 + $0x3a8] sm:$0xff] 0.0
        %414 = vst [vmem:[#allocation3 + $0x3b0] sm:$0xff] 0.0
        %415 = vst [vmem:[#allocation3 + $0x3b8] sm:$0xff] 0.0
        %416 = vst [vmem:[#allocation3 + $0x3c0] sm:$0xff] 0.0
        %417 = vst [vmem:[#allocation3 + $0x3c8] sm:$0xff] 0.0
        %418 = vst [vmem:[#allocation3 + $0x3d0] sm:$0xff] 0.0
        %419 = vst [vmem:[#allocation3 + $0x3d8] sm:$0xff] 0.0
        %420 = vst [vmem:[#allocation3 + $0x3e0] sm:$0xff] 0.0
        %421 = vst [vmem:[#allocation3 + $0x3e8] sm:$0xff] 0.0
        %422 = vst [vmem:[#allocation3 + $0x3f0] sm:$0xff] 0.0
        %423 = vst [vmem:[#allocation3 + $0x3f8] sm:$0xff] 0.0
        %424 = vst [vmem:[#allocation3 + $0x400] sm:$0xff] 0.0
        %425 = vst [vmem:[#allocation3 + $0x408] sm:$0xff] 0.0
        %426 = vst [vmem:[#allocation3 + $0x410] sm:$0xff] 0.0
        %427 = vst [vmem:[#allocation3 + $0x418] sm:$0xff] 0.0
        %428 = vst [vmem:[#allocation3 + $0x420] sm:$0xff] 0.0
        %429 = vst [vmem:[#allocation3 + $0x428] sm:$0xff] 0.0
        %430 = vst [vmem:[#allocation3 + $0x430] sm:$0xff] 0.0
        %431 = vst [vmem:[#allocation3 + $0x438] sm:$0xff] 0.0
        %432 = vst [vmem:[#allocation3 + $0x440] sm:$0xff] 0.0
        %433 = vst [vmem:[#allocation3 + $0x448] sm:$0xff] 0.0
        %434 = vst [vmem:[#allocation3 + $0x450] sm:$0xff] 0.0
        %435 = vst [vmem:[#allocation3 + $0x458] sm:$0xff] 0.0
        %436 = vst [vmem:[#allocation3 + $0x460] sm:$0xff] 0.0
        %437 = vst [vmem:[#allocation3 + $0x468] sm:$0xff] 0.0
        %438 = vst [vmem:[#allocation3 + $0x470] sm:$0xff] 0.0
        %439 = vst [vmem:[#allocation3 + $0x478] sm:$0xff] 0.0
        %440 = vst [vmem:[#allocation3 + $0x480] sm:$0xff] 0.0
        %441 = vst [vmem:[#allocation3 + $0x488] sm:$0xff] 0.0
        %442 = vst [vmem:[#allocation3 + $0x490] sm:$0xff] 0.0
        %443 = vst [vmem:[#allocation3 + $0x498] sm:$0xff] 0.0
        %444 = vst [vmem:[#allocation3 + $0x4a0] sm:$0xff] 0.0
        %445 = vst [vmem:[#allocation3 + $0x4a8] sm:$0xff] 0.0
        %446 = vst [vmem:[#allocation3 + $0x4b0] sm:$0xff] 0.0
        %447 = vst [vmem:[#allocation3 + $0x4b8] sm:$0xff] 0.0
        %448 = vst [vmem:[#allocation3 + $0x4c0] sm:$0xff] 0.0
        %449 = vst [vmem:[#allocation3 + $0x4c8] sm:$0xff] 0.0
        %450 = vst [vmem:[#allocation3 + $0x4d0] sm:$0xff] 0.0
        %451 = vst [vmem:[#allocation3 + $0x4d8] sm:$0xff] 0.0
        %452 = vst [vmem:[#allocation3 + $0x4e0] sm:$0xff] 0.0
        %453 = vst [vmem:[#allocation3 + $0x4e8] sm:$0xff] 0.0
        %454 = vst [vmem:[#allocation3 + $0x4f0] sm:$0xff] 0.0
        %455 = vst [vmem:[#allocation3 + $0x4f8] sm:$0xff] 0.0
        %456 = vst [vmem:[#allocation3 + $0x500] sm:$0xff] 0.0
        %457 = vst [vmem:[#allocation3 + $0x508] sm:$0xff] 0.0
        %458 = vst [vmem:[#allocation3 + $0x510] sm:$0xff] 0.0
        %459 = vst [vmem:[#allocation3 + $0x518] sm:$0xff] 0.0
        %460 = vst [vmem:[#allocation3 + $0x520] sm:$0xff] 0.0
        %461 = vst [vmem:[#allocation3 + $0x528] sm:$0xff] 0.0
        %462 = vst [vmem:[#allocation3 + $0x530] sm:$0xff] 0.0
        %463 = vst [vmem:[#allocation3 + $0x538] sm:$0xff] 0.0
        %464 = vst [vmem:[#allocation3 + $0x540] sm:$0xff] 0.0
        %465 = vst [vmem:[#allocation3 + $0x548] sm:$0xff] 0.0
        %466 = vst [vmem:[#allocation3 + $0x550] sm:$0xff] 0.0
        %467 = vst [vmem:[#allocation3 + $0x558] sm:$0xff] 0.0
        %468 = vst [vmem:[#allocation3 + $0x560] sm:$0xff] 0.0
        %469 = vst [vmem:[#allocation3 + $0x568] sm:$0xff] 0.0
        %470 = vst [vmem:[#allocation3 + $0x570] sm:$0xff] 0.0
        %471 = vst [vmem:[#allocation3 + $0x578] sm:$0xff] 0.0
        %472 = vst [vmem:[#allocation3 + $0x580] sm:$0xff] 0.0
        %473 = vst [vmem:[#allocation3 + $0x588] sm:$0xff] 0.0
        %474 = vst [vmem:[#allocation3 + $0x590] sm:$0xff] 0.0
        %475 = vst [vmem:[#allocation3 + $0x598] sm:$0xff] 0.0
        %476 = vst [vmem:[#allocation3 + $0x5a0] sm:$0xff] 0.0
        %477 = vst [vmem:[#allocation3 + $0x5a8] sm:$0xff] 0.0
        %478 = vst [vmem:[#allocation3 + $0x5b0] sm:$0xff] 0.0
        %479 = vst [vmem:[#allocation3 + $0x5b8] sm:$0xff] 0.0
        %480 = vst [vmem:[#allocation3 + $0x5c0] sm:$0xff] 0.0
        %481 = vst [vmem:[#allocation3 + $0x5c8] sm:$0xff] 0.0
        %482 = vst [vmem:[#allocation3 + $0x5d0] sm:$0xff] 0.0
        %483 = vst [vmem:[#allocation3 + $0x5d8] sm:$0xff] 0.0
        %484 = vst [vmem:[#allocation3 + $0x5e0] sm:$0xff] 0.0
        %485 = vst [vmem:[#allocation3 + $0x5e8] sm:$0xff] 0.0
        %486 = vst [vmem:[#allocation3 + $0x5f0] sm:$0xff] 0.0
        %487 = vst [vmem:[#allocation3 + $0x5f8] sm:$0xff] 0.0
        %488 = vst [vmem:[#allocation3 + $0x600] sm:$0xff] 0.0
        %489 = vst [vmem:[#allocation3 + $0x608] sm:$0xff] 0.0
        %490 = vst [vmem:[#allocation3 + $0x610] sm:$0xff] 0.0
        %491 = vst [vmem:[#allocation3 + $0x618] sm:$0xff] 0.0
        %492 = vst [vmem:[#allocation3 + $0x620] sm:$0xff] 0.0
        %493 = vst [vmem:[#allocation3 + $0x628] sm:$0xff] 0.0
        %494 = vst [vmem:[#allocation3 + $0x630] sm:$0xff] 0.0
        %495 = vst [vmem:[#allocation3 + $0x638] sm:$0xff] 0.0
        %496 = vst [vmem:[#allocation3 + $0x640] sm:$0xff] 0.0
        %497 = vst [vmem:[#allocation3 + $0x648] sm:$0xff] 0.0
        %498 = vst [vmem:[#allocation3 + $0x650] sm:$0xff] 0.0
        %499 = vst [vmem:[#allocation3 + $0x658] sm:$0xff] 0.0
        %500 = vst [vmem:[#allocation3 + $0x660] sm:$0xff] 0.0
        %501 = vst [vmem:[#allocation3 + $0x668] sm:$0xff] 0.0
        %502 = vst [vmem:[#allocation3 + $0x670] sm:$0xff] 0.0
        %503 = vst [vmem:[#allocation3 + $0x678] sm:$0xff] 0.0
        %504 = vst [vmem:[#allocation3 + $0x680] sm:$0xff] 0.0
        %505 = vst [vmem:[#allocation3 + $0x688] sm:$0xff] 0.0
        %506 = vst [vmem:[#allocation3 + $0x690] sm:$0xff] 0.0
        %507 = vst [vmem:[#allocation3 + $0x698] sm:$0xff] 0.0
        %508 = vst [vmem:[#allocation3 + $0x6a0] sm:$0xff] 0.0
        %509 = vst [vmem:[#allocation3 + $0x6a8] sm:$0xff] 0.0
        %510 = vst [vmem:[#allocation3 + $0x6b0] sm:$0xff] 0.0
        %511 = vst [vmem:[#allocation3 + $0x6b8] sm:$0xff] 0.0
        %512 = vst [vmem:[#allocation3 + $0x6c0] sm:$0xff] 0.0
        %513 = vst [vmem:[#allocation3 + $0x6c8] sm:$0xff] 0.0
        %514 = vst [vmem:[#allocation3 + $0x6d0] sm:$0xff] 0.0
        %515 = vst [vmem:[#allocation3 + $0x6d8] sm:$0xff] 0.0
        %516 = vst [vmem:[#allocation3 + $0x6e0] sm:$0xff] 0.0
        %517 = vst [vmem:[#allocation3 + $0x6e8] sm:$0xff] 0.0
        %518 = vst [vmem:[#allocation3 + $0x6f0] sm:$0xff] 0.0
        %519 = vst [vmem:[#allocation3 + $0x6f8] sm:$0xff] 0.0
        %520 = vst [vmem:[#allocation3 + $0x700] sm:$0xff] 0.0
        %521 = vst [vmem:[#allocation3 + $0x708] sm:$0xff] 0.0
        %522 = vst [vmem:[#allocation3 + $0x710] sm:$0xff] 0.0
        %523 = vst [vmem:[#allocation3 + $0x718] sm:$0xff] 0.0
        %524 = vst [vmem:[#allocation3 + $0x720] sm:$0xff] 0.0
        %525 = vst [vmem:[#allocation3 + $0x728] sm:$0xff] 0.0
        %526 = vst [vmem:[#allocation3 + $0x730] sm:$0xff] 0.0
        %527 = vst [vmem:[#allocation3 + $0x738] sm:$0xff] 0.0
        %528 = vst [vmem:[#allocation3 + $0x740] sm:$0xff] 0.0
        %529 = vst [vmem:[#allocation3 + $0x748] sm:$0xff] 0.0
        %530 = vst [vmem:[#allocation3 + $0x750] sm:$0xff] 0.0
        %531 = vst [vmem:[#allocation3 + $0x758] sm:$0xff] 0.0
        %532 = vst [vmem:[#allocation3 + $0x760] sm:$0xff] 0.0
        %533 = vst [vmem:[#allocation3 + $0x768] sm:$0xff] 0.0
        %534 = vst [vmem:[#allocation3 + $0x770] sm:$0xff] 0.0
        %535 = vst [vmem:[#allocation3 + $0x778] sm:$0xff] 0.0
        %536 = vst [vmem:[#allocation3 + $0x780] sm:$0xff] 0.0
        %537 = vst [vmem:[#allocation3 + $0x788] sm:$0xff] 0.0
        %538 = vst [vmem:[#allocation3 + $0x790] sm:$0xff] 0.0
        %539 = vst [vmem:[#allocation3 + $0x798] sm:$0xff] 0.0
        %540 = vst [vmem:[#allocation3 + $0x7a0] sm:$0xff] 0.0
        %541 = vst [vmem:[#allocation3 + $0x7a8] sm:$0xff] 0.0
        %542 = vst [vmem:[#allocation3 + $0x7b0] sm:$0xff] 0.0
        %543 = vst [vmem:[#allocation3 + $0x7b8] sm:$0xff] 0.0
        %544 = vst [vmem:[#allocation3 + $0x7c0] sm:$0xff] 0.0
        %545 = vst [vmem:[#allocation3 + $0x7c8] sm:$0xff] 0.0
        %546 = vst [vmem:[#allocation3 + $0x7d0] sm:$0xff] 0.0
        %547 = vst [vmem:[#allocation3 + $0x7d8] sm:$0xff] 0.0
        %548 = vst [vmem:[#allocation3 + $0x7e0] sm:$0xff] 0.0
        %549 = vst [vmem:[#allocation3 + $0x7e8] sm:$0xff] 0.0
        %550 = vst [vmem:[#allocation3 + $0x7f0] sm:$0xff] 0.0
        %551 = vst [vmem:[#allocation3 + $0x7f8] sm:$0xff] 0.0
        %552 = vst [vmem:[#allocation3 + $0x800] sm:$0xff] 0.0
        %553 = vst [vmem:[#allocation3 + $0x808] sm:$0xff] 0.0
        %554 = vst [vmem:[#allocation3 + $0x810] sm:$0xff] 0.0
        %555 = vst [vmem:[#allocation3 + $0x818] sm:$0xff] 0.0
        %556 = vst [vmem:[#allocation3 + $0x820] sm:$0xff] 0.0
        %557 = vst [vmem:[#allocation3 + $0x828] sm:$0xff] 0.0
        %558 = vst [vmem:[#allocation3 + $0x830] sm:$0xff] 0.0
        %559 = vst [vmem:[#allocation3 + $0x838] sm:$0xff] 0.0
        %560 = vst [vmem:[#allocation3 + $0x840] sm:$0xff] 0.0
        %561 = vst [vmem:[#allocation3 + $0x848] sm:$0xff] 0.0
        %562 = vst [vmem:[#allocation3 + $0x850] sm:$0xff] 0.0
        %563 = vst [vmem:[#allocation3 + $0x858] sm:$0xff] 0.0
        %564 = vst [vmem:[#allocation3 + $0x860] sm:$0xff] 0.0
        %565 = vst [vmem:[#allocation3 + $0x868] sm:$0xff] 0.0
        %566 = vst [vmem:[#allocation3 + $0x870] sm:$0xff] 0.0
        %567 = vst [vmem:[#allocation3 + $0x878] sm:$0xff] 0.0
        %568 = vst [vmem:[#allocation3 + $0x880] sm:$0xff] 0.0
        %569 = vst [vmem:[#allocation3 + $0x888] sm:$0xff] 0.0
        %570 = vst [vmem:[#allocation3 + $0x890] sm:$0xff] 0.0
        %571 = vst [vmem:[#allocation3 + $0x898] sm:$0xff] 0.0
        %572 = vst [vmem:[#allocation3 + $0x8a0] sm:$0xff] 0.0
        %573 = vst [vmem:[#allocation3 + $0x8a8] sm:$0xff] 0.0
        %574 = vst [vmem:[#allocation3 + $0x8b0] sm:$0xff] 0.0
        %575 = vst [vmem:[#allocation3 + $0x8b8] sm:$0xff] 0.0
        %576 = vst [vmem:[#allocation3 + $0x8c0] sm:$0xff] 0.0
        %577 = vst [vmem:[#allocation3 + $0x8c8] sm:$0xff] 0.0
        %578 = vst [vmem:[#allocation3 + $0x8d0] sm:$0xff] 0.0
        %579 = vst [vmem:[#allocation3 + $0x8d8] sm:$0xff] 0.0
        %580 = vst [vmem:[#allocation3 + $0x8e0] sm:$0xff] 0.0
        %581 = vst [vmem:[#allocation3 + $0x8e8] sm:$0xff] 0.0
        %582 = vst [vmem:[#allocation3 + $0x8f0] sm:$0xff] 0.0
        %583 = vst [vmem:[#allocation3 + $0x8f8] sm:$0xff] 0.0
        %v584 = vld [vmem:[%s222] sm:$0xff]
        %v585 = vld [vmem:[%s222 + $0x8] sm:$0xff]
        %v586 = vld [vmem:[%s222 + $0x10] sm:$0xff]
        %v587 = vld [vmem:[%s222 + $0x18] sm:$0xff]
        %v588 = vld [vmem:[%s222 + $0x20] sm:$0xff]
        %v589 = vld [vmem:[%s222 + $0x28] sm:$0xff]
        %v590 = vld [vmem:[%s222 + $0x30] sm:$0xff]
        %v591 = vld [vmem:[%s222 + $0x38] sm:$0xff]
        %v592 = vld [vmem:[%s222 + $0x40] sm:$0xff]
        %v593 = vld [vmem:[%s222 + $0x48] sm:$0xff]
        %v594 = vld [vmem:[%s222 + $0x50] sm:$0xff]
        %v595 = vld [vmem:[%s222 + $0x58] sm:$0xff]
        %v596 = vld [vmem:[%s222 + $0x60] sm:$0xff]
        %v597 = vld [vmem:[%s222 + $0x68] sm:$0xff]
        %v598 = vld [vmem:[%s222 + $0x70] sm:$0xff]
        %v599 = vld [vmem:[%s222 + $0x78] sm:$0xff]
        %v600 = vld [vmem:[%s222 + $0x80] sm:$0xff]
        %v601 = vld [vmem:[%s222 + $0x88] sm:$0xff]
        %v602 = vld [vmem:[%s222 + $0x90] sm:$0xff]
        %v603 = vld [vmem:[%s222 + $0x98] sm:$0xff]
        %v604 = vld [vmem:[%s222 + $0xa0] sm:$0xff]
        %v605 = vld [vmem:[%s222 + $0xa8] sm:$0xff]
        %v606 = vld [vmem:[%s222 + $0xb0] sm:$0xff]
        %v607 = vld [vmem:[%s222 + $0xb8] sm:$0xff]
        %v608 = vld [vmem:[%s222 + $0xc0] sm:$0xff]
        %v609 = vld [vmem:[%s222 + $0xc8] sm:$0xff]
        %v610 = vld [vmem:[%s222 + $0xd0] sm:$0xff]
        %v611 = vld [vmem:[%s222 + $0xd8] sm:$0xff]
        %v612 = vld [vmem:[%s222 + $0xe0] sm:$0xff]
        %v613 = vld [vmem:[%s222 + $0xe8] sm:$0xff]
        %v614 = vld [vmem:[%s222 + $0xf0] sm:$0xff]
        %v615 = vld [vmem:[%s222 + $0xf8] sm:$0xff]
        %s616 = scalar_lea.vmem [#allocation2], 32
        %617 = vst.msk [vmem:[%s616 + $0x8] sm:$0xff] %vm223, %v584
        %618 = vst.msk [vmem:[%s616 + $0x10] sm:$0xff] %vm223, %v585
        %619 = vst.msk [vmem:[%s616 + $0x28] sm:$0xff] %vm223, %v586
        %620 = vst.msk [vmem:[%s616 + $0x30] sm:$0xff] %vm223, %v587
        %621 = vst.msk [vmem:[%s616 + $0x48] sm:$0xff] %vm223, %v588
        %622 = vst.msk [vmem:[%s616 + $0x50] sm:$0xff] %vm223, %v589
        %623 = vst.msk [vmem:[%s616 + $0x68] sm:$0xff] %vm223, %v590
        %624 = vst.msk [vmem:[%s616 + $0x70] sm:$0xff] %vm223, %v591
        %625 = vst.msk [vmem:[%s616 + $0x88] sm:$0xff] %vm223, %v592
        %626 = vst.msk [vmem:[%s616 + $0x90] sm:$0xff] %vm223, %v593
        %627 = vst.msk [vmem:[%s616 + $0xa8] sm:$0xff] %vm223, %v594
        %628 = vst.msk [vmem:[%s616 + $0xb0] sm:$0xff] %vm223, %v595
        %629 = vst.msk [vmem:[%s616 + $0xc8] sm:$0xff] %vm223, %v596
        %630 = vst.msk [vmem:[%s616 + $0xd0] sm:$0xff] %vm223, %v597
        %631 = vst.msk [vmem:[%s616 + $0xe8] sm:$0xff] %vm223, %v598
        %632 = vst.msk [vmem:[%s616 + $0xf0] sm:$0xff] %vm223, %v599
        %633 = vst.msk [vmem:[%s616 + $0x108] sm:$0xff] %vm223, %v600
        %634 = vst.msk [vmem:[%s616 + $0x110] sm:$0xff] %vm223, %v601
        %635 = vst.msk [vmem:[%s616 + $0x128] sm:$0xff] %vm223, %v602
        %636 = vst.msk [vmem:[%s616 + $0x130] sm:$0xff] %vm223, %v603
        %637 = vst.msk [vmem:[%s616 + $0x148] sm:$0xff] %vm223, %v604
        %638 = vst.msk [vmem:[%s616 + $0x150] sm:$0xff] %vm223, %v605
        %639 = vst.msk [vmem:[%s616 + $0x168] sm:$0xff] %vm223, %v606
        %640 = vst.msk [vmem:[%s616 + $0x170] sm:$0xff] %vm223, %v607
        %641 = vst.msk [vmem:[%s616 + $0x188] sm:$0xff] %vm223, %v608
        %642 = vst.msk [vmem:[%s616 + $0x190] sm:$0xff] %vm223, %v609
        %643 = vst.msk [vmem:[%s616 + $0x1a8] sm:$0xff] %vm223, %v610
        %644 = vst.msk [vmem:[%s616 + $0x1b0] sm:$0xff] %vm223, %v611
        %645 = vst.msk [vmem:[%s616 + $0x1c8] sm:$0xff] %vm223, %v612
        %646 = vst.msk [vmem:[%s616 + $0x1d0] sm:$0xff] %vm223, %v613
        %647 = vst.msk [vmem:[%s616 + $0x1e8] sm:$0xff] %vm223, %v614
        %648 = vst.msk [vmem:[%s616 + $0x1f0] sm:$0xff] %vm223, %v615
        %v649 = vlaneseq
        %v650 = vshrl.u32 %v649, 7
        %v651 = vadd.s32 %v650, 8
        %v652 = vadd.s32 %v650, 16
        %v653 = vadd.s32 %v650, 24
        %v654 = vlaneseq
        %v655 = vand.u32 %v654, 127
        %vm656 = vcmp.eq.s32.totalorder %v650, %v655
        %vm657 = vcmp.eq.s32.totalorder %v651, %v655
        %vm658 = vcmp.eq.s32.totalorder %v652, %v655
        %vm659 = vcmp.eq.s32.totalorder %v653, %v655
        %v660 = vsel %vm656, 1, 0
        %v661 = vsel %vm657, 1, 0
        %v662 = vsel %vm658, 1, 0
        %v663 = vsel %vm659, 1, 0
        %v664 = vcvt.s32.f32 %v660
        %v665 = vcvt.s32.f32 %v661
        %v666 = vcvt.s32.f32 %v662
        %v667 = vcvt.s32.f32 %v663
        %v668 = vld [vmem:[#allocation2 + $0x7] sm:$0xff]
        %v669 = vld [vmem:[#allocation2 + $0xf] sm:$0xff]
        %v670 = vld [vmem:[#allocation2 + $0x27] sm:$0xff]
        %v671 = vld [vmem:[#allocation2 + $0x2f] sm:$0xff]
        %v672 = vld [vmem:[#allocation2 + $0x47] sm:$0xff]
        %v673 = vld [vmem:[#allocation2 + $0x4f] sm:$0xff]
        %v674 = vld [vmem:[#allocation2 + $0x67] sm:$0xff]
        %v675 = vld [vmem:[#allocation2 + $0x6f] sm:$0xff]
        %v676 = vld [vmem:[#allocation2 + $0x87] sm:$0xff]
        %v677 = vld [vmem:[#allocation2 + $0x8f] sm:$0xff]
        %v678 = vld [vmem:[#allocation2 + $0xa7] sm:$0xff]
        %v679 = vld [vmem:[#allocation2 + $0xaf] sm:$0xff]
        %v680 = vld [vmem:[#allocation2 + $0xc7] sm:$0xff]
        %v681 = vld [vmem:[#allocation2 + $0xcf] sm:$0xff]
        %v682 = vld [vmem:[#allocation2 + $0xe7] sm:$0xff]
        %v683 = vld [vmem:[#allocation2 + $0xef] sm:$0xff]
        %v684 = vld [vmem:[#allocation2 + $0x107] sm:$0xff]
        %v685 = vld [vmem:[#allocation2 + $0x10f] sm:$0xff]
        %v686 = vld [vmem:[#allocation2 + $0x127] sm:$0xff]
        %v687 = vld [vmem:[#allocation2 + $0x12f] sm:$0xff]
        %v688 = vld [vmem:[#allocation2 + $0x147] sm:$0xff]
        %v689 = vld [vmem:[#allocation2 + $0x14f] sm:$0xff]
        %v690 = vld [vmem:[#allocation2 + $0x167] sm:$0xff]
        %v691 = vld [vmem:[#allocation2 + $0x16f] sm:$0xff]
        %v692 = vld [vmem:[#allocation2 + $0x187] sm:$0xff]
        %v693 = vld [vmem:[#allocation2 + $0x18f] sm:$0xff]
        %v694 = vld [vmem:[#allocation2 + $0x1a7] sm:$0xff]
        %v695 = vld [vmem:[#allocation2 + $0x1af] sm:$0xff]
        %v696 = vld [vmem:[#allocation2 + $0x1c7] sm:$0xff]
        %v697 = vld [vmem:[#allocation2 + $0x1cf] sm:$0xff]
        %v698 = vld [vmem:[#allocation2 + $0x1e7] sm:$0xff]
        %v699 = vld [vmem:[#allocation2 + $0x1ef] sm:$0xff]
        %700 = vst.msk [vmem:[#allocation3] sm:$0xff] %vm223, %v668
        %701 = vst.msk [vmem:[#allocation3 + $0x48] sm:$0xff] %vm223, %v669
        %702 = vst.msk [vmem:[#allocation3 + $0x90] sm:$0xff] %vm223, %v670
        %703 = vst.msk [vmem:[#allocation3 + $0xd8] sm:$0xff] %vm223, %v671
        %704 = vst.msk [vmem:[#allocation3 + $0x120] sm:$0xff] %vm223, %v672
        %705 = vst.msk [vmem:[#allocation3 + $0x168] sm:$0xff] %vm223, %v673
        %706 = vst.msk [vmem:[#allocation3 + $0x1b0] sm:$0xff] %vm223, %v674
        %707 = vst.msk [vmem:[#allocation3 + $0x1f8] sm:$0xff] %vm223, %v675
        %708 = vst.msk [vmem:[#allocation3 + $0x240] sm:$0xff] %vm223, %v676
        %709 = vst.msk [vmem:[#allocation3 + $0x288] sm:$0xff] %vm223, %v677
        %710 = vst.msk [vmem:[#allocation3 + $0x2d0] sm:$0xff] %vm223, %v678
        %711 = vst.msk [vmem:[#allocation3 + $0x318] sm:$0xff] %vm223, %v679
        %712 = vst.msk [vmem:[#allocation3 + $0x360] sm:$0xff] %vm223, %v680
        %713 = vst.msk [vmem:[#allocation3 + $0x3a8] sm:$0xff] %vm223, %v681
        %714 = vst.msk [vmem:[#allocation3 + $0x3f0] sm:$0xff] %vm223, %v682
        %715 = vst.msk [vmem:[#allocation3 + $0x438] sm:$0xff] %vm223, %v683
        %716 = vst.msk [vmem:[#allocation3 + $0x480] sm:$0xff] %vm223, %v684
        %717 = vst.msk [vmem:[#allocation3 + $0x4c8] sm:$0xff] %vm223, %v685
        %718 = vst.msk [vmem:[#allocation3 + $0x510] sm:$0xff] %vm223, %v686
        %719 = vst.msk [vmem:[#allocation3 + $0x558] sm:$0xff] %vm223, %v687
        %720 = vst.msk [vmem:[#allocation3 + $0x5a0] sm:$0xff] %vm223, %v688
        %721 = vst.msk [vmem:[#allocation3 + $0x5e8] sm:$0xff] %vm223, %v689
        %722 = vst.msk [vmem:[#allocation3 + $0x630] sm:$0xff] %vm223, %v690
        %723 = vst.msk [vmem:[#allocation3 + $0x678] sm:$0xff] %vm223, %v691
        %724 = vst.msk [vmem:[#allocation3 + $0x6c0] sm:$0xff] %vm223, %v692
        %725 = vst.msk [vmem:[#allocation3 + $0x708] sm:$0xff] %vm223, %v693
        %726 = vst.msk [vmem:[#allocation3 + $0x750] sm:$0xff] %vm223, %v694
        %727 = vst.msk [vmem:[#allocation3 + $0x798] sm:$0xff] %vm223, %v695
        %728 = vst.msk [vmem:[#allocation3 + $0x7e0] sm:$0xff] %vm223, %v696
        %729 = vst.msk [vmem:[#allocation3 + $0x828] sm:$0xff] %vm223, %v697
        %730 = vst.msk [vmem:[#allocation3 + $0x870] sm:$0xff] %vm223, %v698
        %731 = vst.msk [vmem:[#allocation3 + $0x8b8] sm:$0xff] %vm223, %v699
        %v732 = vld [vmem:[#allocation2 + $0x8] sm:$0xff]
        %v733 = vld [vmem:[#allocation2 + $0x10] sm:$0xff]
        %v734 = vld [vmem:[#allocation2 + $0x28] sm:$0xff]
        %v735 = vld [vmem:[#allocation2 + $0x30] sm:$0xff]
        %v736 = vld [vmem:[#allocation2 + $0x48] sm:$0xff]
        %v737 = vld [vmem:[#allocation2 + $0x50] sm:$0xff]
        %v738 = vld [vmem:[#allocation2 + $0x68] sm:$0xff]
        %v739 = vld [vmem:[#allocation2 + $0x70] sm:$0xff]
        %v740 = vld [vmem:[#allocation2 + $0x88] sm:$0xff]
        %v741 = vld [vmem:[#allocation2 + $0x90] sm:$0xff]
        %v742 = vld [vmem:[#allocation2 + $0xa8] sm:$0xff]
        %v743 = vld [vmem:[#allocation2 + $0xb0] sm:$0xff]
        %v744 = vld [vmem:[#allocation2 + $0xc8] sm:$0xff]
        %v745 = vld [vmem:[#allocation2 + $0xd0] sm:$0xff]
        %v746 = vld [vmem:[#allocation2 + $0xe8] sm:$0xff]
        %v747 = vld [vmem:[#allocation2 + $0xf0] sm:$0xff]
        %v748 = vld [vmem:[#allocation2 + $0x108] sm:$0xff]
        %v749 = vld [vmem:[#allocation2 + $0x110] sm:$0xff]
        %v750 = vld [vmem:[#allocation2 + $0x128] sm:$0xff]
        %v751 = vld [vmem:[#allocation2 + $0x130] sm:$0xff]
        %v752 = vld [vmem:[#allocation2 + $0x148] sm:$0xff]
        %v753 = vld [vmem:[#allocation2 + $0x150] sm:$0xff]
        %v754 = vld [vmem:[#allocation2 + $0x168] sm:$0xff]
        %v755 = vld [vmem:[#allocation2 + $0x170] sm:$0xff]
        %v756 = vld [vmem:[#allocation2 + $0x188] sm:$0xff]
        %v757 = vld [vmem:[#allocation2 + $0x190] sm:$0xff]
        %v758 = vld [vmem:[#allocation2 + $0x1a8] sm:$0xff]
        %v759 = vld [vmem:[#allocation2 + $0x1b0] sm:$0xff]
        %v760 = vld [vmem:[#allocation2 + $0x1c8] sm:$0xff]
        %v761 = vld [vmem:[#allocation2 + $0x1d0] sm:$0xff]
        %v762 = vld [vmem:[#allocation2 + $0x1e8] sm:$0xff]
        %v763 = vld [vmem:[#allocation2 + $0x1f0] sm:$0xff]
        %764 = vst.msk [vmem:[#allocation3 + $0x8] sm:$0xff] %vm223, %v732
        %765 = vst.msk [vmem:[#allocation3 + $0x50] sm:$0xff] %vm223, %v733
        %766 = vst.msk [vmem:[#allocation3 + $0x98] sm:$0xff] %vm223, %v734
        %767 = vst.msk [vmem:[#allocation3 + $0xe0] sm:$0xff] %vm223, %v735
        %768 = vst.msk [vmem:[#allocation3 + $0x128] sm:$0xff] %vm223, %v736
        %769 = vst.msk [vmem:[#allocation3 + $0x170] sm:$0xff] %vm223, %v737
        %770 = vst.msk [vmem:[#allocation3 + $0x1b8] sm:$0xff] %vm223, %v738
        %771 = vst.msk [vmem:[#allocation3 + $0x200] sm:$0xff] %vm223, %v739
        %772 = vst.msk [vmem:[#allocation3 + $0x248] sm:$0xff] %vm223, %v740
        %773 = vst.msk [vmem:[#allocation3 + $0x290] sm:$0xff] %vm223, %v741
        %774 = vst.msk [vmem:[#allocation3 + $0x2d8] sm:$0xff] %vm223, %v742
        %775 = vst.msk [vmem:[#allocation3 + $0x320] sm:$0xff] %vm223, %v743
        %776 = vst.msk [vmem:[#allocation3 + $0x368] sm:$0xff] %vm223, %v744
        %777 = vst.msk [vmem:[#allocation3 + $0x3b0] sm:$0xff] %vm223, %v745
        %778 = vst.msk [vmem:[#allocation3 + $0x3f8] sm:$0xff] %vm223, %v746
        %779 = vst.msk [vmem:[#allocation3 + $0x440] sm:$0xff] %vm223, %v747
        %780 = vst.msk [vmem:[#allocation3 + $0x488] sm:$0xff] %vm223, %v748
        %781 = vst.msk [vmem:[#allocation3 + $0x4d0] sm:$0xff] %vm223, %v749
        %782 = vst.msk [vmem:[#allocation3 + $0x518] sm:$0xff] %vm223, %v750
        %783 = vst.msk [vmem:[#allocation3 + $0x560] sm:$0xff] %vm223, %v751
        %784 = vst.msk [vmem:[#allocation3 + $0x5a8] sm:$0xff] %vm223, %v752
        %785 = vst.msk [vmem:[#allocation3 + $0x5f0] sm:$0xff] %vm223, %v753
        %786 = vst.msk [vmem:[#allocation3 + $0x638] sm:$0xff] %vm223, %v754
        %787 = vst.msk [vmem:[#allocation3 + $0x680] sm:$0xff] %vm223, %v755
        %788 = vst.msk [vmem:[#allocation3 + $0x6c8] sm:$0xff] %vm223, %v756
        %789 = vst.msk [vmem:[#allocation3 + $0x710] sm:$0xff] %vm223, %v757
        %790 = vst.msk [vmem:[#allocation3 + $0x758] sm:$0xff] %vm223, %v758
        %791 = vst.msk [vmem:[#allocation3 + $0x7a0] sm:$0xff] %vm223, %v759
        %792 = vst.msk [vmem:[#allocation3 + $0x7e8] sm:$0xff] %vm223, %v760
        %793 = vst.msk [vmem:[#allocation3 + $0x830] sm:$0xff] %vm223, %v761
        %794 = vst.msk [vmem:[#allocation3 + $0x878] sm:$0xff] %vm223, %v762
        %795 = vst.msk [vmem:[#allocation3 + $0x8c0] sm:$0xff] %vm223, %v763
        %v796 = vld [vmem:[#allocation2 + $0x9] sm:$0xff]
        %v797 = vld [vmem:[#allocation2 + $0x11] sm:$0xff]
        %v798 = vld [vmem:[#allocation2 + $0x29] sm:$0xff]
        %v799 = vld [vmem:[#allocation2 + $0x31] sm:$0xff]
        %v800 = vld [vmem:[#allocation2 + $0x49] sm:$0xff]
        %v801 = vld [vmem:[#allocation2 + $0x51] sm:$0xff]
        %v802 = vld [vmem:[#allocation2 + $0x69] sm:$0xff]
        %v803 = vld [vmem:[#allocation2 + $0x71] sm:$0xff]
        %v804 = vld [vmem:[#allocation2 + $0x89] sm:$0xff]
        %v805 = vld [vmem:[#allocation2 + $0x91] sm:$0xff]
        %v806 = vld [vmem:[#allocation2 + $0xa9] sm:$0xff]
        %v807 = vld [vmem:[#allocation2 + $0xb1] sm:$0xff]
        %v808 = vld [vmem:[#allocation2 + $0xc9] sm:$0xff]
        %v809 = vld [vmem:[#allocation2 + $0xd1] sm:$0xff]
        %v810 = vld [vmem:[#allocation2 + $0xe9] sm:$0xff]
        %v811 = vld [vmem:[#allocation2 + $0xf1] sm:$0xff]
        %v812 = vld [vmem:[#allocation2 + $0x109] sm:$0xff]
        %v813 = vld [vmem:[#allocation2 + $0x111] sm:$0xff]
        %v814 = vld [vmem:[#allocation2 + $0x129] sm:$0xff]
        %v815 = vld [vmem:[#allocation2 + $0x131] sm:$0xff]
        %v816 = vld [vmem:[#allocation2 + $0x149] sm:$0xff]
        %v817 = vld [vmem:[#allocation2 + $0x151] sm:$0xff]
        %v818 = vld [vmem:[#allocation2 + $0x169] sm:$0xff]
        %v819 = vld [vmem:[#allocation2 + $0x171] sm:$0xff]
        %v820 = vld [vmem:[#allocation2 + $0x189] sm:$0xff]
        %v821 = vld [vmem:[#allocation2 + $0x191] sm:$0xff]
        %v822 = vld [vmem:[#allocation2 + $0x1a9] sm:$0xff]
        %v823 = vld [vmem:[#allocation2 + $0x1b1] sm:$0xff]
        %v824 = vld [vmem:[#allocation2 + $0x1c9] sm:$0xff]
        %v825 = vld [vmem:[#allocation2 + $0x1d1] sm:$0xff]
        %v826 = vld [vmem:[#allocation2 + $0x1e9] sm:$0xff]
        %v827 = vld [vmem:[#allocation2 + $0x1f1] sm:$0xff]
        %828 = vst.msk [vmem:[#allocation3 + $0x10] sm:$0xff] %vm223, %v796
        %829 = vst.msk [vmem:[#allocation3 + $0x58] sm:$0xff] %vm223, %v797
        %830 = vst.msk [vmem:[#allocation3 + $0xa0] sm:$0xff] %vm223, %v798
        %831 = vst.msk [vmem:[#allocation3 + $0xe8] sm:$0xff] %vm223, %v799
        %832 = vst.msk [vmem:[#allocation3 + $0x130] sm:$0xff] %vm223, %v800
        %833 = vst.msk [vmem:[#allocation3 + $0x178] sm:$0xff] %vm223, %v801
        %834 = vst.msk [vmem:[#allocation3 + $0x1c0] sm:$0xff] %vm223, %v802
        %835 = vst.msk [vmem:[#allocation3 + $0x208] sm:$0xff] %vm223, %v803
        %836 = vst.msk [vmem:[#allocation3 + $0x250] sm:$0xff] %vm223, %v804
        %837 = vst.msk [vmem:[#allocation3 + $0x298] sm:$0xff] %vm223, %v805
        %838 = vst.msk [vmem:[#allocation3 + $0x2e0] sm:$0xff] %vm223, %v806
        %839 = vst.msk [vmem:[#allocation3 + $0x328] sm:$0xff] %vm223, %v807
        %840 = vst.msk [vmem:[#allocation3 + $0x370] sm:$0xff] %vm223, %v808
        %841 = vst.msk [vmem:[#allocation3 + $0x3b8] sm:$0xff] %vm223, %v809
        %842 = vst.msk [vmem:[#allocation3 + $0x400] sm:$0xff] %vm223, %v810
        %843 = vst.msk [vmem:[#allocation3 + $0x448] sm:$0xff] %vm223, %v811
        %844 = vst.msk [vmem:[#allocation3 + $0x490] sm:$0xff] %vm223, %v812
        %845 = vst.msk [vmem:[#allocation3 + $0x4d8] sm:$0xff] %vm223, %v813
        %846 = vst.msk [vmem:[#allocation3 + $0x520] sm:$0xff] %vm223, %v814
        %847 = vst.msk [vmem:[#allocation3 + $0x568] sm:$0xff] %vm223, %v815
        %848 = vst.msk [vmem:[#allocation3 + $0x5b0] sm:$0xff] %vm223, %v816
        %849 = vst.msk [vmem:[#allocation3 + $0x5f8] sm:$0xff] %vm223, %v817
        %850 = vst.msk [vmem:[#allocation3 + $0x640] sm:$0xff] %vm223, %v818
        %851 = vst.msk [vmem:[#allocation3 + $0x688] sm:$0xff] %vm223, %v819
        %852 = vst.msk [vmem:[#allocation3 + $0x6d0] sm:$0xff] %vm223, %v820
        %853 = vst.msk [vmem:[#allocation3 + $0x718] sm:$0xff] %vm223, %v821
        %854 = vst.msk [vmem:[#allocation3 + $0x760] sm:$0xff] %vm223, %v822
        %855 = vst.msk [vmem:[#allocation3 + $0x7a8] sm:$0xff] %vm223, %v823
        %856 = vst.msk [vmem:[#allocation3 + $0x7f0] sm:$0xff] %vm223, %v824
        %857 = vst.msk [vmem:[#allocation3 + $0x838] sm:$0xff] %vm223, %v825
        %858 = vst.msk [vmem:[#allocation3 + $0x880] sm:$0xff] %vm223, %v826
        %859 = vst.msk [vmem:[#allocation3 + $0x8c8] sm:$0xff] %vm223, %v827
        %v860 = vld [vmem:[%s616 + $0x7] sm:$0xff]
        %v861 = vld [vmem:[%s616 + $0xf] sm:$0xff]
        %v862 = vld [vmem:[%s616 + $0x27] sm:$0xff]
        %v863 = vld [vmem:[%s616 + $0x2f] sm:$0xff]
        %v864 = vld [vmem:[%s616 + $0x47] sm:$0xff]
        %v865 = vld [vmem:[%s616 + $0x4f] sm:$0xff]
        %v866 = vld [vmem:[%s616 + $0x67] sm:$0xff]
        %v867 = vld [vmem:[%s616 + $0x6f] sm:$0xff]
        %v868 = vld [vmem:[%s616 + $0x87] sm:$0xff]
        %v869 = vld [vmem:[%s616 + $0x8f] sm:$0xff]
        %v870 = vld [vmem:[%s616 + $0xa7] sm:$0xff]
        %v871 = vld [vmem:[%s616 + $0xaf] sm:$0xff]
        %v872 = vld [vmem:[%s616 + $0xc7] sm:$0xff]
        %v873 = vld [vmem:[%s616 + $0xcf] sm:$0xff]
        %v874 = vld [vmem:[%s616 + $0xe7] sm:$0xff]
        %v875 = vld [vmem:[%s616 + $0xef] sm:$0xff]
        %v876 = vld [vmem:[%s616 + $0x107] sm:$0xff]
        %v877 = vld [vmem:[%s616 + $0x10f] sm:$0xff]
        %v878 = vld [vmem:[%s616 + $0x127] sm:$0xff]
        %v879 = vld [vmem:[%s616 + $0x12f] sm:$0xff]
        %v880 = vld [vmem:[%s616 + $0x147] sm:$0xff]
        %v881 = vld [vmem:[%s616 + $0x14f] sm:$0xff]
        %v882 = vld [vmem:[%s616 + $0x167] sm:$0xff]
        %v883 = vld [vmem:[%s616 + $0x16f] sm:$0xff]
        %v884 = vld [vmem:[%s616 + $0x187] sm:$0xff]
        %v885 = vld [vmem:[%s616 + $0x18f] sm:$0xff]
        %v886 = vld [vmem:[%s616 + $0x1a7] sm:$0xff]
        %v887 = vld [vmem:[%s616 + $0x1af] sm:$0xff]
        %v888 = vld [vmem:[%s616 + $0x1c7] sm:$0xff]
        %v889 = vld [vmem:[%s616 + $0x1cf] sm:$0xff]
        %v890 = vld [vmem:[%s616 + $0x1e7] sm:$0xff]
        %v891 = vld [vmem:[%s616 + $0x1ef] sm:$0xff]
        %892 = vst.msk [vmem:[#allocation3 + $0x18] sm:$0xff] %vm223, %v860
        %893 = vst.msk [vmem:[#allocation3 + $0x60] sm:$0xff] %vm223, %v861
        %894 = vst.msk [vmem:[#allocation3 + $0xa8] sm:$0xff] %vm223, %v862
        %895 = vst.msk [vmem:[#allocation3 + $0xf0] sm:$0xff] %vm223, %v863
        %896 = vst.msk [vmem:[#allocation3 + $0x138] sm:$0xff] %vm223, %v864
        %897 = vst.msk [vmem:[#allocation3 + $0x180] sm:$0xff] %vm223, %v865
        %898 = vst.msk [vmem:[#allocation3 + $0x1c8] sm:$0xff] %vm223, %v866
        %899 = vst.msk [vmem:[#allocation3 + $0x210] sm:$0xff] %vm223, %v867
        %900 = vst.msk [vmem:[#allocation3 + $0x258] sm:$0xff] %vm223, %v868
        %901 = vst.msk [vmem:[#allocation3 + $0x2a0] sm:$0xff] %vm223, %v869
        %902 = vst.msk [vmem:[#allocation3 + $0x2e8] sm:$0xff] %vm223, %v870
        %903 = vst.msk [vmem:[#allocation3 + $0x330] sm:$0xff] %vm223, %v871
        %904 = vst.msk [vmem:[#allocation3 + $0x378] sm:$0xff] %vm223, %v872
        %905 = vst.msk [vmem:[#allocation3 + $0x3c0] sm:$0xff] %vm223, %v873
        %906 = vst.msk [vmem:[#allocation3 + $0x408] sm:$0xff] %vm223, %v874
        %907 = vst.msk [vmem:[#allocation3 + $0x450] sm:$0xff] %vm223, %v875
        %908 = vst.msk [vmem:[#allocation3 + $0x498] sm:$0xff] %vm223, %v876
        %909 = vst.msk [vmem:[#allocation3 + $0x4e0] sm:$0xff] %vm223, %v877
        %910 = vst.msk [vmem:[#allocation3 + $0x528] sm:$0xff] %vm223, %v878
        %911 = vst.msk [vmem:[#allocation3 + $0x570] sm:$0xff] %vm223, %v879
        %912 = vst.msk [vmem:[#allocation3 + $0x5b8] sm:$0xff] %vm223, %v880
        %913 = vst.msk [vmem:[#allocation3 + $0x600] sm:$0xff] %vm223, %v881
        %914 = vst.msk [vmem:[#allocation3 + $0x648] sm:$0xff] %vm223, %v882
        %915 = vst.msk [vmem:[#allocation3 + $0x690] sm:$0xff] %vm223, %v883
        %916 = vst.msk [vmem:[#allocation3 + $0x6d8] sm:$0xff] %vm223, %v884
        %917 = vst.msk [vmem:[#allocation3 + $0x720] sm:$0xff] %vm223, %v885
        %918 = vst.msk [vmem:[#allocation3 + $0x768] sm:$0xff] %vm223, %v886
        %919 = vst.msk [vmem:[#allocation3 + $0x7b0] sm:$0xff] %vm223, %v887
        %920 = vst.msk [vmem:[#allocation3 + $0x7f8] sm:$0xff] %vm223, %v888
        %921 = vst.msk [vmem:[#allocation3 + $0x840] sm:$0xff] %vm223, %v889
        %922 = vst.msk [vmem:[#allocation3 + $0x888] sm:$0xff] %vm223, %v890
        %923 = vst.msk [vmem:[#allocation3 + $0x8d0] sm:$0xff] %vm223, %v891
        %v924 = vld [vmem:[%s616 + $0x8] sm:$0xff]
        %v925 = vld [vmem:[%s616 + $0x10] sm:$0xff]
        %v926 = vld [vmem:[%s616 + $0x28] sm:$0xff]
        %v927 = vld [vmem:[%s616 + $0x30] sm:$0xff]
        %v928 = vld [vmem:[%s616 + $0x48] sm:$0xff]
        %v929 = vld [vmem:[%s616 + $0x50] sm:$0xff]
        %v930 = vld [vmem:[%s616 + $0x68] sm:$0xff]
        %v931 = vld [vmem:[%s616 + $0x70] sm:$0xff]
        %v932 = vld [vmem:[%s616 + $0x88] sm:$0xff]
        %v933 = vld [vmem:[%s616 + $0x90] sm:$0xff]
        %v934 = vld [vmem:[%s616 + $0xa8] sm:$0xff]
        %v935 = vld [vmem:[%s616 + $0xb0] sm:$0xff]
        %v936 = vld [vmem:[%s616 + $0xc8] sm:$0xff]
        %v937 = vld [vmem:[%s616 + $0xd0] sm:$0xff]
        %v938 = vld [vmem:[%s616 + $0xe8] sm:$0xff]
        %v939 = vld [vmem:[%s616 + $0xf0] sm:$0xff]
        %v940 = vld [vmem:[%s616 + $0x108] sm:$0xff]
        %v941 = vld [vmem:[%s616 + $0x110] sm:$0xff]
        %v942 = vld [vmem:[%s616 + $0x128] sm:$0xff]
        %v943 = vld [vmem:[%s616 + $0x130] sm:$0xff]
        %v944 = vld [vmem:[%s616 + $0x148] sm:$0xff]
        %v945 = vld [vmem:[%s616 + $0x150] sm:$0xff]
        %v946 = vld [vmem:[%s616 + $0x168] sm:$0xff]
        %v947 = vld [vmem:[%s616 + $0x170] sm:$0xff]
        %v948 = vld [vmem:[%s616 + $0x188] sm:$0xff]
        %v949 = vld [vmem:[%s616 + $0x190] sm:$0xff]
        %v950 = vld [vmem:[%s616 + $0x1a8] sm:$0xff]
        %v951 = vld [vmem:[%s616 + $0x1b0] sm:$0xff]
        %v952 = vld [vmem:[%s616 + $0x1c8] sm:$0xff]
        %v953 = vld [vmem:[%s616 + $0x1d0] sm:$0xff]
        %v954 = vld [vmem:[%s616 + $0x1e8] sm:$0xff]
        %v955 = vld [vmem:[%s616 + $0x1f0] sm:$0xff]
        %956 = vst.msk [vmem:[#allocation3 + $0x20] sm:$0xff] %vm223, %v924
        %957 = vst.msk [vmem:[#allocation3 + $0x68] sm:$0xff] %vm223, %v925
        %958 = vst.msk [vmem:[#allocation3 + $0xb0] sm:$0xff] %vm223, %v926
        %959 = vst.msk [vmem:[#allocation3 + $0xf8] sm:$0xff] %vm223, %v927
        %960 = vst.msk [vmem:[#allocation3 + $0x140] sm:$0xff] %vm223, %v928
        %961 = vst.msk [vmem:[#allocation3 + $0x188] sm:$0xff] %vm223, %v929
        %962 = vst.msk [vmem:[#allocation3 + $0x1d0] sm:$0xff] %vm223, %v930
        %963 = vst.msk [vmem:[#allocation3 + $0x218] sm:$0xff] %vm223, %v931
        %964 = vst.msk [vmem:[#allocation3 + $0x260] sm:$0xff] %vm223, %v932
        %965 = vst.msk [vmem:[#allocation3 + $0x2a8] sm:$0xff] %vm223, %v933
        %966 = vst.msk [vmem:[#allocation3 + $0x2f0] sm:$0xff] %vm223, %v934
        %967 = vst.msk [vmem:[#allocation3 + $0x338] sm:$0xff] %vm223, %v935
        %968 = vst.msk [vmem:[#allocation3 + $0x380] sm:$0xff] %vm223, %v936
        %969 = vst.msk [vmem:[#allocation3 + $0x3c8] sm:$0xff] %vm223, %v937
        %970 = vst.msk [vmem:[#allocation3 + $0x410] sm:$0xff] %vm223, %v938
        %971 = vst.msk [vmem:[#allocation3 + $0x458] sm:$0xff] %vm223, %v939
        %972 = vst.msk [vmem:[#allocation3 + $0x4a0] sm:$0xff] %vm223, %v940
        %973 = vst.msk [vmem:[#allocation3 + $0x4e8] sm:$0xff] %vm223, %v941
        %974 = vst.msk [vmem:[#allocation3 + $0x530] sm:$0xff] %vm223, %v942
        %975 = vst.msk [vmem:[#allocation3 + $0x578] sm:$0xff] %vm223, %v943
        %976 = vst.msk [vmem:[#allocation3 + $0x5c0] sm:$0xff] %vm223, %v944
        %977 = vst.msk [vmem:[#allocation3 + $0x608] sm:$0xff] %vm223, %v945
        %978 = vst.msk [vmem:[#allocation3 + $0x650] sm:$0xff] %vm223, %v946
        %979 = vst.msk [vmem:[#allocation3 + $0x698] sm:$0xff] %vm223, %v947
        %980 = vst.msk [vmem:[#allocation3 + $0x6e0] sm:$0xff] %vm223, %v948
        %981 = vst.msk [vmem:[#allocation3 + $0x728] sm:$0xff] %vm223, %v949
        %982 = vst.msk [vmem:[#allocation3 + $0x770] sm:$0xff] %vm223, %v950
        %983 = vst.msk [vmem:[#allocation3 + $0x7b8] sm:$0xff] %vm223, %v951
        %984 = vst.msk [vmem:[#allocation3 + $0x800] sm:$0xff] %vm223, %v952
        %985 = vst.msk [vmem:[#allocation3 + $0x848] sm:$0xff] %vm223, %v953
        %986 = vst.msk [vmem:[#allocation3 + $0x890] sm:$0xff] %vm223, %v954
        %987 = vst.msk [vmem:[#allocation3 + $0x8d8] sm:$0xff] %vm223, %v955
        %v988 = vld [vmem:[%s616 + $0x9] sm:$0xff]
        %v989 = vld [vmem:[%s616 + $0x11] sm:$0xff]
        %v990 = vld [vmem:[%s616 + $0x29] sm:$0xff]
        %v991 = vld [vmem:[%s616 + $0x31] sm:$0xff]
        %v992 = vld [vmem:[%s616 + $0x49] sm:$0xff]
        %v993 = vld [vmem:[%s616 + $0x51] sm:$0xff]
        %v994 = vld [vmem:[%s616 + $0x69] sm:$0xff]
        %v995 = vld [vmem:[%s616 + $0x71] sm:$0xff]
        %v996 = vld [vmem:[%s616 + $0x89] sm:$0xff]
        %v997 = vld [vmem:[%s616 + $0x91] sm:$0xff]
        %v998 = vld [vmem:[%s616 + $0xa9] sm:$0xff]
        %v999 = vld [vmem:[%s616 + $0xb1] sm:$0xff]
        %v1000 = vld [vmem:[%s616 + $0xc9] sm:$0xff]
        %v1001 = vld [vmem:[%s616 + $0xd1] sm:$0xff]
        %v1002 = vld [vmem:[%s616 + $0xe9] sm:$0xff]
        %v1003 = vld [vmem:[%s616 + $0xf1] sm:$0xff]
        %v1004 = vld [vmem:[%s616 + $0x109] sm:$0xff]
        %v1005 = vld [vmem:[%s616 + $0x111] sm:$0xff]
        %v1006 = vld [vmem:[%s616 + $0x129] sm:$0xff]
        %v1007 = vld [vmem:[%s616 + $0x131] sm:$0xff]
        %v1008 = vld [vmem:[%s616 + $0x149] sm:$0xff]
        %v1009 = vld [vmem:[%s616 + $0x151] sm:$0xff]
        %v1010 = vld [vmem:[%s616 + $0x169] sm:$0xff]
        %v1011 = vld [vmem:[%s616 + $0x171] sm:$0xff]
        %v1012 = vld [vmem:[%s616 + $0x189] sm:$0xff]
        %v1013 = vld [vmem:[%s616 + $0x191] sm:$0xff]
        %v1014 = vld [vmem:[%s616 + $0x1a9] sm:$0xff]
        %v1015 = vld [vmem:[%s616 + $0x1b1] sm:$0xff]
        %v1016 = vld [vmem:[%s616 + $0x1c9] sm:$0xff]
        %v1017 = vld [vmem:[%s616 + $0x1d1] sm:$0xff]
        %v1018 = vld [vmem:[%s616 + $0x1e9] sm:$0xff]
        %v1019 = vld [vmem:[%s616 + $0x1f1] sm:$0xff]
        %1020 = vst.msk [vmem:[#allocation3 + $0x28] sm:$0xff] %vm223, %v988
        %1021 = vst.msk [vmem:[#allocation3 + $0x70] sm:$0xff] %vm223, %v989
        %1022 = vst.msk [vmem:[#allocation3 + $0xb8] sm:$0xff] %vm223, %v990
        %1023 = vst.msk [vmem:[#allocation3 + $0x100] sm:$0xff] %vm223, %v991
        %1024 = vst.msk [vmem:[#allocation3 + $0x148] sm:$0xff] %vm223, %v992
        %1025 = vst.msk [vmem:[#allocation3 + $0x190] sm:$0xff] %vm223, %v993
        %1026 = vst.msk [vmem:[#allocation3 + $0x1d8] sm:$0xff] %vm223, %v994
        %1027 = vst.msk [vmem:[#allocation3 + $0x220] sm:$0xff] %vm223, %v995
        %1028 = vst.msk [vmem:[#allocation3 + $0x268] sm:$0xff] %vm223, %v996
        %1029 = vst.msk [vmem:[#allocation3 + $0x2b0] sm:$0xff] %vm223, %v997
        %1030 = vst.msk [vmem:[#allocation3 + $0x2f8] sm:$0xff] %vm223, %v998
        %1031 = vst.msk [vmem:[#allocation3 + $0x340] sm:$0xff] %vm223, %v999
        %1032 = vst.msk [vmem:[#allocation3 + $0x388] sm:$0xff] %vm223, %v1000
        %1033 = vst.msk [vmem:[#allocation3 + $0x3d0] sm:$0xff] %vm223, %v1001
        %1034 = vst.msk [vmem:[#allocation3 + $0x418] sm:$0xff] %vm223, %v1002
        %1035 = vst.msk [vmem:[#allocation3 + $0x460] sm:$0xff] %vm223, %v1003
        %1036 = vst.msk [vmem:[#allocation3 + $0x4a8] sm:$0xff] %vm223, %v1004
        %1037 = vst.msk [vmem:[#allocation3 + $0x4f0] sm:$0xff] %vm223, %v1005
        %1038 = vst.msk [vmem:[#allocation3 + $0x538] sm:$0xff] %vm223, %v1006
        %1039 = vst.msk [vmem:[#allocation3 + $0x580] sm:$0xff] %vm223, %v1007
        %1040 = vst.msk [vmem:[#allocation3 + $0x5c8] sm:$0xff] %vm223, %v1008
        %1041 = vst.msk [vmem:[#allocation3 + $0x610] sm:$0xff] %vm223, %v1009
        %1042 = vst.msk [vmem:[#allocation3 + $0x658] sm:$0xff] %vm223, %v1010
        %1043 = vst.msk [vmem:[#allocation3 + $0x6a0] sm:$0xff] %vm223, %v1011
        %1044 = vst.msk [vmem:[#allocation3 + $0x6e8] sm:$0xff] %vm223, %v1012
        %1045 = vst.msk [vmem:[#allocation3 + $0x730] sm:$0xff] %vm223, %v1013
        %1046 = vst.msk [vmem:[#allocation3 + $0x778] sm:$0xff] %vm223, %v1014
        %1047 = vst.msk [vmem:[#allocation3 + $0x7c0] sm:$0xff] %vm223, %v1015
        %1048 = vst.msk [vmem:[#allocation3 + $0x808] sm:$0xff] %vm223, %v1016
        %1049 = vst.msk [vmem:[#allocation3 + $0x850] sm:$0xff] %vm223, %v1017
        %1050 = vst.msk [vmem:[#allocation3 + $0x898] sm:$0xff] %vm223, %v1018
        %1051 = vst.msk [vmem:[#allocation3 + $0x8e0] sm:$0xff] %vm223, %v1019
        %s1052 = scalar_lea.vmem [#allocation2], 64
        %v1053 = vld [vmem:[%s1052 + $0x7] sm:$0xff]
        %v1054 = vld [vmem:[%s1052 + $0xf] sm:$0xff]
        %v1055 = vld [vmem:[%s1052 + $0x27] sm:$0xff]
        %v1056 = vld [vmem:[%s1052 + $0x2f] sm:$0xff]
        %v1057 = vld [vmem:[%s1052 + $0x47] sm:$0xff]
        %v1058 = vld [vmem:[%s1052 + $0x4f] sm:$0xff]
        %v1059 = vld [vmem:[%s1052 + $0x67] sm:$0xff]
        %v1060 = vld [vmem:[%s1052 + $0x6f] sm:$0xff]
        %v1061 = vld [vmem:[%s1052 + $0x87] sm:$0xff]
        %v1062 = vld [vmem:[%s1052 + $0x8f] sm:$0xff]
        %v1063 = vld [vmem:[%s1052 + $0xa7] sm:$0xff]
        %v1064 = vld [vmem:[%s1052 + $0xaf] sm:$0xff]
        %v1065 = vld [vmem:[%s1052 + $0xc7] sm:$0xff]
        %v1066 = vld [vmem:[%s1052 + $0xcf] sm:$0xff]
        %v1067 = vld [vmem:[%s1052 + $0xe7] sm:$0xff]
        %v1068 = vld [vmem:[%s1052 + $0xef] sm:$0xff]
        %v1069 = vld [vmem:[%s1052 + $0x107] sm:$0xff]
        %v1070 = vld [vmem:[%s1052 + $0x10f] sm:$0xff]
        %v1071 = vld [vmem:[%s1052 + $0x127] sm:$0xff]
        %v1072 = vld [vmem:[%s1052 + $0x12f] sm:$0xff]
        %v1073 = vld [vmem:[%s1052 + $0x147] sm:$0xff]
        %v1074 = vld [vmem:[%s1052 + $0x14f] sm:$0xff]
        %v1075 = vld [vmem:[%s1052 + $0x167] sm:$0xff]
        %v1076 = vld [vmem:[%s1052 + $0x16f] sm:$0xff]
        %v1077 = vld [vmem:[%s1052 + $0x187] sm:$0xff]
        %v1078 = vld [vmem:[%s1052 + $0x18f] sm:$0xff]
        %v1079 = vld [vmem:[%s1052 + $0x1a7] sm:$0xff]
        %v1080 = vld [vmem:[%s1052 + $0x1af] sm:$0xff]
        %v1081 = vld [vmem:[%s1052 + $0x1c7] sm:$0xff]
        %v1082 = vld [vmem:[%s1052 + $0x1cf] sm:$0xff]
        %v1083 = vld [vmem:[%s1052 + $0x1e7] sm:$0xff]
        %v1084 = vld [vmem:[%s1052 + $0x1ef] sm:$0xff]
        %1085 = vst.msk [vmem:[#allocation3 + $0x30] sm:$0xff] %vm223, %v1053
        %1086 = vst.msk [vmem:[#allocation3 + $0x78] sm:$0xff] %vm223, %v1054
        %1087 = vst.msk [vmem:[#allocation3 + $0xc0] sm:$0xff] %vm223, %v1055
        %1088 = vst.msk [vmem:[#allocation3 + $0x108] sm:$0xff] %vm223, %v1056
        %1089 = vst.msk [vmem:[#allocation3 + $0x150] sm:$0xff] %vm223, %v1057
        %1090 = vst.msk [vmem:[#allocation3 + $0x198] sm:$0xff] %vm223, %v1058
        %1091 = vst.msk [vmem:[#allocation3 + $0x1e0] sm:$0xff] %vm223, %v1059
        %1092 = vst.msk [vmem:[#allocation3 + $0x228] sm:$0xff] %vm223, %v1060
        %1093 = vst.msk [vmem:[#allocation3 + $0x270] sm:$0xff] %vm223, %v1061
        %1094 = vst.msk [vmem:[#allocation3 + $0x2b8] sm:$0xff] %vm223, %v1062
        %1095 = vst.msk [vmem:[#allocation3 + $0x300] sm:$0xff] %vm223, %v1063
        %1096 = vst.msk [vmem:[#allocation3 + $0x348] sm:$0xff] %vm223, %v1064
        %1097 = vst.msk [vmem:[#allocation3 + $0x390] sm:$0xff] %vm223, %v1065
        %1098 = vst.msk [vmem:[#allocation3 + $0x3d8] sm:$0xff] %vm223, %v1066
        %1099 = vst.msk [vmem:[#allocation3 + $0x420] sm:$0xff] %vm223, %v1067
        %1100 = vst.msk [vmem:[#allocation3 + $0x468] sm:$0xff] %vm223, %v1068
        %1101 = vst.msk [vmem:[#allocation3 + $0x4b0] sm:$0xff] %vm223, %v1069
        %1102 = vst.msk [vmem:[#allocation3 + $0x4f8] sm:$0xff] %vm223, %v1070
        %1103 = vst.msk [vmem:[#allocation3 + $0x540] sm:$0xff] %vm223, %v1071
        %1104 = vst.msk [vmem:[#allocation3 + $0x588] sm:$0xff] %vm223, %v1072
        %1105 = vst.msk [vmem:[#allocation3 + $0x5d0] sm:$0xff] %vm223, %v1073
        %1106 = vst.msk [vmem:[#allocation3 + $0x618] sm:$0xff] %vm223, %v1074
        %1107 = vst.msk [vmem:[#allocation3 + $0x660] sm:$0xff] %vm223, %v1075
        %1108 = vst.msk [vmem:[#allocation3 + $0x6a8] sm:$0xff] %vm223, %v1076
        %1109 = vst.msk [vmem:[#allocation3 + $0x6f0] sm:$0xff] %vm223, %v1077
        %1110 = vst.msk [vmem:[#allocation3 + $0x738] sm:$0xff] %vm223, %v1078
        %1111 = vst.msk [vmem:[#allocation3 + $0x780] sm:$0xff] %vm223, %v1079
        %1112 = vst.msk [vmem:[#allocation3 + $0x7c8] sm:$0xff] %vm223, %v1080
        %1113 = vst.msk [vmem:[#allocation3 + $0x810] sm:$0xff] %vm223, %v1081
        %1114 = vst.msk [vmem:[#allocation3 + $0x858] sm:$0xff] %vm223, %v1082
        %1115 = vst.msk [vmem:[#allocation3 + $0x8a0] sm:$0xff] %vm223, %v1083
        %1116 = vst.msk [vmem:[#allocation3 + $0x8e8] sm:$0xff] %vm223, %v1084
        %v1117 = vld [vmem:[%s1052 + $0x8] sm:$0xff]
        %v1118 = vld [vmem:[%s1052 + $0x10] sm:$0xff]
        %v1119 = vld [vmem:[%s1052 + $0x28] sm:$0xff]
        %v1120 = vld [vmem:[%s1052 + $0x30] sm:$0xff]
        %v1121 = vld [vmem:[%s1052 + $0x48] sm:$0xff]
        %v1122 = vld [vmem:[%s1052 + $0x50] sm:$0xff]
        %v1123 = vld [vmem:[%s1052 + $0x68] sm:$0xff]
        %v1124 = vld [vmem:[%s1052 + $0x70] sm:$0xff]
        %v1125 = vld [vmem:[%s1052 + $0x88] sm:$0xff]
        %v1126 = vld [vmem:[%s1052 + $0x90] sm:$0xff]
        %v1127 = vld [vmem:[%s1052 + $0xa8] sm:$0xff]
        %v1128 = vld [vmem:[%s1052 + $0xb0] sm:$0xff]
        %v1129 = vld [vmem:[%s1052 + $0xc8] sm:$0xff]
        %v1130 = vld [vmem:[%s1052 + $0xd0] sm:$0xff]
        %v1131 = vld [vmem:[%s1052 + $0xe8] sm:$0xff]
        %v1132 = vld [vmem:[%s1052 + $0xf0] sm:$0xff]
        %v1133 = vld [vmem:[%s1052 + $0x108] sm:$0xff]
        %v1134 = vld [vmem:[%s1052 + $0x110] sm:$0xff]
        %v1135 = vld [vmem:[%s1052 + $0x128] sm:$0xff]
        %v1136 = vld [vmem:[%s1052 + $0x130] sm:$0xff]
        %v1137 = vld [vmem:[%s1052 + $0x148] sm:$0xff]
        %v1138 = vld [vmem:[%s1052 + $0x150] sm:$0xff]
        %v1139 = vld [vmem:[%s1052 + $0x168] sm:$0xff]
        %v1140 = vld [vmem:[%s1052 + $0x170] sm:$0xff]
        %v1141 = vld [vmem:[%s1052 + $0x188] sm:$0xff]
        %v1142 = vld [vmem:[%s1052 + $0x190] sm:$0xff]
        %v1143 = vld [vmem:[%s1052 + $0x1a8] sm:$0xff]
        %v1144 = vld [vmem:[%s1052 + $0x1b0] sm:$0xff]
        %v1145 = vld [vmem:[%s1052 + $0x1c8] sm:$0xff]
        %v1146 = vld [vmem:[%s1052 + $0x1d0] sm:$0xff]
        %v1147 = vld [vmem:[%s1052 + $0x1e8] sm:$0xff]
        %v1148 = vld [vmem:[%s1052 + $0x1f0] sm:$0xff]
        %1149 = vst.msk [vmem:[#allocation3 + $0x38] sm:$0xff] %vm223, %v1117
        %1150 = vst.msk [vmem:[#allocation3 + $0x80] sm:$0xff] %vm223, %v1118
        %1151 = vst.msk [vmem:[#allocation3 + $0xc8] sm:$0xff] %vm223, %v1119
        %1152 = vst.msk [vmem:[#allocation3 + $0x110] sm:$0xff] %vm223, %v1120
        %1153 = vst.msk [vmem:[#allocation3 + $0x158] sm:$0xff] %vm223, %v1121
        %1154 = vst.msk [vmem:[#allocation3 + $0x1a0] sm:$0xff] %vm223, %v1122
        %1155 = vst.msk [vmem:[#allocation3 + $0x1e8] sm:$0xff] %vm223, %v1123
        %1156 = vst.msk [vmem:[#allocation3 + $0x230] sm:$0xff] %vm223, %v1124
        %1157 = vst.msk [vmem:[#allocation3 + $0x278] sm:$0xff] %vm223, %v1125
        %1158 = vst.msk [vmem:[#allocation3 + $0x2c0] sm:$0xff] %vm223, %v1126
        %1159 = vst.msk [vmem:[#allocation3 + $0x308] sm:$0xff] %vm223, %v1127
        %1160 = vst.msk [vmem:[#allocation3 + $0x350] sm:$0xff] %vm223, %v1128
        %1161 = vst.msk [vmem:[#allocation3 + $0x398] sm:$0xff] %vm223, %v1129
        %1162 = vst.msk [vmem:[#allocation3 + $0x3e0] sm:$0xff] %vm223, %v1130
        %1163 = vst.msk [vmem:[#allocation3 + $0x428] sm:$0xff] %vm223, %v1131
        %1164 = vst.msk [vmem:[#allocation3 + $0x470] sm:$0xff] %vm223, %v1132
        %1165 = vst.msk [vmem:[#allocation3 + $0x4b8] sm:$0xff] %vm223, %v1133
        %1166 = vst.msk [vmem:[#allocation3 + $0x500] sm:$0xff] %vm223, %v1134
        %1167 = vst.msk [vmem:[#allocation3 + $0x548] sm:$0xff] %vm223, %v1135
        %1168 = vst.msk [vmem:[#allocation3 + $0x590] sm:$0xff] %vm223, %v1136
        %1169 = vst.msk [vmem:[#allocation3 + $0x5d8] sm:$0xff] %vm223, %v1137
        %1170 = vst.msk [vmem:[#allocation3 + $0x620] sm:$0xff] %vm223, %v1138
        %1171 = vst.msk [vmem:[#allocation3 + $0x668] sm:$0xff] %vm223, %v1139
        %1172 = vst.msk [vmem:[#allocation3 + $0x6b0] sm:$0xff] %vm223, %v1140
        %1173 = vst.msk [vmem:[#allocation3 + $0x6f8] sm:$0xff] %vm223, %v1141
        %1174 = vst.msk [vmem:[#allocation3 + $0x740] sm:$0xff] %vm223, %v1142
        %1175 = vst.msk [vmem:[#allocation3 + $0x788] sm:$0xff] %vm223, %v1143
        %1176 = vst.msk [vmem:[#allocation3 + $0x7d0] sm:$0xff] %vm223, %v1144
        %1177 = vst.msk [vmem:[#allocation3 + $0x818] sm:$0xff] %vm223, %v1145
        %1178 = vst.msk [vmem:[#allocation3 + $0x860] sm:$0xff] %vm223, %v1146
        %1179 = vst.msk [vmem:[#allocation3 + $0x8a8] sm:$0xff] %vm223, %v1147
        %1180 = vst.msk [vmem:[#allocation3 + $0x8f0] sm:$0xff] %vm223, %v1148
        %v1181 = vld [vmem:[%s1052 + $0x9] sm:$0xff]
        %v1182 = vld [vmem:[%s1052 + $0x11] sm:$0xff]
        %v1183 = vld [vmem:[%s1052 + $0x29] sm:$0xff]
        %v1184 = vld [vmem:[%s1052 + $0x31] sm:$0xff]
        %v1185 = vld [vmem:[%s1052 + $0x49] sm:$0xff]
        %v1186 = vld [vmem:[%s1052 + $0x51] sm:$0xff]
        %v1187 = vld [vmem:[%s1052 + $0x69] sm:$0xff]
        %v1188 = vld [vmem:[%s1052 + $0x71] sm:$0xff]
        %v1189 = vld [vmem:[%s1052 + $0x89] sm:$0xff]
        %v1190 = vld [vmem:[%s1052 + $0x91] sm:$0xff]
        %v1191 = vld [vmem:[%s1052 + $0xa9] sm:$0xff]
        %v1192 = vld [vmem:[%s1052 + $0xb1] sm:$0xff]
        %v1193 = vld [vmem:[%s1052 + $0xc9] sm:$0xff]
        %v1194 = vld [vmem:[%s1052 + $0xd1] sm:$0xff]
        %v1195 = vld [vmem:[%s1052 + $0xe9] sm:$0xff]
        %v1196 = vld [vmem:[%s1052 + $0xf1] sm:$0xff]
        %v1197 = vld [vmem:[%s1052 + $0x109] sm:$0xff]
        %v1198 = vld [vmem:[%s1052 + $0x111] sm:$0xff]
        %v1199 = vld [vmem:[%s1052 + $0x129] sm:$0xff]
        %v1200 = vld [vmem:[%s1052 + $0x131] sm:$0xff]
        %v1201 = vld [vmem:[%s1052 + $0x149] sm:$0xff]
        %v1202 = vld [vmem:[%s1052 + $0x151] sm:$0xff]
        %v1203 = vld [vmem:[%s1052 + $0x169] sm:$0xff]
        %v1204 = vld [vmem:[%s1052 + $0x171] sm:$0xff]
        %v1205 = vld [vmem:[%s1052 + $0x189] sm:$0xff]
        %v1206 = vld [vmem:[%s1052 + $0x191] sm:$0xff]
        %v1207 = vld [vmem:[%s1052 + $0x1a9] sm:$0xff]
        %v1208 = vld [vmem:[%s1052 + $0x1b1] sm:$0xff]
        %v1209 = vld [vmem:[%s1052 + $0x1c9] sm:$0xff]
        %v1210 = vld [vmem:[%s1052 + $0x1d1] sm:$0xff]
        %v1211 = vld [vmem:[%s1052 + $0x1e9] sm:$0xff]
        %v1212 = vld [vmem:[%s1052 + $0x1f1] sm:$0xff]
        %1213 = vst.msk [vmem:[#allocation3 + $0x40] sm:$0xff] %vm223, %v1181
        %1214 = vst.msk [vmem:[#allocation3 + $0x88] sm:$0xff] %vm223, %v1182
        %1215 = vst.msk [vmem:[#allocation3 + $0xd0] sm:$0xff] %vm223, %v1183
        %1216 = vst.msk [vmem:[#allocation3 + $0x118] sm:$0xff] %vm223, %v1184
        %1217 = vst.msk [vmem:[#allocation3 + $0x160] sm:$0xff] %vm223, %v1185
        %1218 = vst.msk [vmem:[#allocation3 + $0x1a8] sm:$0xff] %vm223, %v1186
        %1219 = vst.msk [vmem:[#allocation3 + $0x1f0] sm:$0xff] %vm223, %v1187
        %1220 = vst.msk [vmem:[#allocation3 + $0x238] sm:$0xff] %vm223, %v1188
        %1221 = vst.msk [vmem:[#allocation3 + $0x280] sm:$0xff] %vm223, %v1189
        %1222 = vst.msk [vmem:[#allocation3 + $0x2c8] sm:$0xff] %vm223, %v1190
        %1223 = vst.msk [vmem:[#allocation3 + $0x310] sm:$0xff] %vm223, %v1191
        %1224 = vst.msk [vmem:[#allocation3 + $0x358] sm:$0xff] %vm223, %v1192
        %1225 = vst.msk [vmem:[#allocation3 + $0x3a0] sm:$0xff] %vm223, %v1193
        %1226 = vst.msk [vmem:[#allocation3 + $0x3e8] sm:$0xff] %vm223, %v1194
        %1227 = vst.msk [vmem:[#allocation3 + $0x430] sm:$0xff] %vm223, %v1195
        %1228 = vst.msk [vmem:[#allocation3 + $0x478] sm:$0xff] %vm223, %v1196
        %1229 = vst.msk [vmem:[#allocation3 + $0x4c0] sm:$0xff] %vm223, %v1197
        %1230 = vst.msk [vmem:[#allocation3 + $0x508] sm:$0xff] %vm223, %v1198
        %1231 = vst.msk [vmem:[#allocation3 + $0x550] sm:$0xff] %vm223, %v1199
        %1232 = vst.msk [vmem:[#allocation3 + $0x598] sm:$0xff] %vm223, %v1200
        %1233 = vst.msk [vmem:[#allocation3 + $0x5e0] sm:$0xff] %vm223, %v1201
        %1234 = vst.msk [vmem:[#allocation3 + $0x628] sm:$0xff] %vm223, %v1202
        %1235 = vst.msk [vmem:[#allocation3 + $0x670] sm:$0xff] %vm223, %v1203
        %1236 = vst.msk [vmem:[#allocation3 + $0x6b8] sm:$0xff] %vm223, %v1204
        %1237 = vst.msk [vmem:[#allocation3 + $0x700] sm:$0xff] %vm223, %v1205
        %1238 = vst.msk [vmem:[#allocation3 + $0x748] sm:$0xff] %vm223, %v1206
        %1239 = vst.msk [vmem:[#allocation3 + $0x790] sm:$0xff] %vm223, %v1207
        %1240 = vst.msk [vmem:[#allocation3 + $0x7d8] sm:$0xff] %vm223, %v1208
        %1241 = vst.msk [vmem:[#allocation3 + $0x820] sm:$0xff] %vm223, %v1209
        %1242 = vst.msk [vmem:[#allocation3 + $0x868] sm:$0xff] %vm223, %v1210
        %1243 = vst.msk [vmem:[#allocation3 + $0x8b0] sm:$0xff] %vm223, %v1211
        %1244 = vst.msk [vmem:[#allocation3 + $0x8f8] sm:$0xff] %vm223, %v1212
        %v1245 = vld [vmem:[#allocation3] sm:$0xff]
        %v1246 = vld [vmem:[#allocation3 + $0x8] sm:$0xff]
        %v1247 = vld [vmem:[#allocation3 + $0x10] sm:$0xff]
        %v1248 = vld [vmem:[#allocation3 + $0x18] sm:$0xff]
        %v1249 = vld [vmem:[#allocation3 + $0x20] sm:$0xff]
        %v1250 = vld [vmem:[#allocation3 + $0x28] sm:$0xff]
        %v1251 = vld [vmem:[#allocation3 + $0x30] sm:$0xff]
        %v1252 = vld [vmem:[#allocation3 + $0x38] sm:$0xff]
        %v1253 = vld [vmem:[#allocation3 + $0x40] sm:$0xff]
        %v1254 = vld [vmem:[#allocation3 + $0x48] sm:$0xff]
        %v1255 = vld [vmem:[#allocation3 + $0x50] sm:$0xff]
        %v1256 = vld [vmem:[#allocation3 + $0x58] sm:$0xff]
        %v1257 = vld [vmem:[#allocation3 + $0x60] sm:$0xff]
        %v1258 = vld [vmem:[#allocation3 + $0x68] sm:$0xff]
        %v1259 = vld [vmem:[#allocation3 + $0x70] sm:$0xff]
        %v1260 = vld [vmem:[#allocation3 + $0x78] sm:$0xff]
        %v1261 = vld [vmem:[#allocation3 + $0x80] sm:$0xff]
        %v1262 = vld [vmem:[#allocation3 + $0x88] sm:$0xff]
        %v1263 = vld [vmem:[#allocation3 + $0x90] sm:$0xff]
        %v1264 = vld [vmem:[#allocation3 + $0x98] sm:$0xff]
        %v1265 = vld [vmem:[#allocation3 + $0xa0] sm:$0xff]
        %v1266 = vld [vmem:[#allocation3 + $0xa8] sm:$0xff]
        %v1267 = vld [vmem:[#allocation3 + $0xb0] sm:$0xff]
        %v1268 = vld [vmem:[#allocation3 + $0xb8] sm:$0xff]
        %v1269 = vld [vmem:[#allocation3 + $0xc0] sm:$0xff]
        %v1270 = vld [vmem:[#allocation3 + $0xc8] sm:$0xff]
        %v1271 = vld [vmem:[#allocation3 + $0xd0] sm:$0xff]
        %v1272 = vld [vmem:[#allocation3 + $0xd8] sm:$0xff]
        %v1273 = vld [vmem:[#allocation3 + $0xe0] sm:$0xff]
        %v1274 = vld [vmem:[#allocation3 + $0xe8] sm:$0xff]
        %v1275 = vld [vmem:[#allocation3 + $0xf0] sm:$0xff]
        %v1276 = vld [vmem:[#allocation3 + $0xf8] sm:$0xff]
        %v1277 = vld [vmem:[#allocation3 + $0x100] sm:$0xff]
        %v1278 = vld [vmem:[#allocation3 + $0x108] sm:$0xff]
        %v1279 = vld [vmem:[#allocation3 + $0x110] sm:$0xff]
        %v1280 = vld [vmem:[#allocation3 + $0x118] sm:$0xff]
        %v1281 = vld [vmem:[#allocation3 + $0x120] sm:$0xff]
        %v1282 = vld [vmem:[#allocation3 + $0x128] sm:$0xff]
        %v1283 = vld [vmem:[#allocation3 + $0x130] sm:$0xff]
        %v1284 = vld [vmem:[#allocation3 + $0x138] sm:$0xff]
        %v1285 = vld [vmem:[#allocation3 + $0x140] sm:$0xff]
        %v1286 = vld [vmem:[#allocation3 + $0x148] sm:$0xff]
        %v1287 = vld [vmem:[#allocation3 + $0x150] sm:$0xff]
        %v1288 = vld [vmem:[#allocation3 + $0x158] sm:$0xff]
        %v1289 = vld [vmem:[#allocation3 + $0x160] sm:$0xff]
        %v1290 = vld [vmem:[#allocation3 + $0x168] sm:$0xff]
        %v1291 = vld [vmem:[#allocation3 + $0x170] sm:$0xff]
        %v1292 = vld [vmem:[#allocation3 + $0x178] sm:$0xff]
        %v1293 = vld [vmem:[#allocation3 + $0x180] sm:$0xff]
        %v1294 = vld [vmem:[#allocation3 + $0x188] sm:$0xff]
        %v1295 = vld [vmem:[#allocation3 + $0x190] sm:$0xff]
        %v1296 = vld [vmem:[#allocation3 + $0x198] sm:$0xff]
        %v1297 = vld [vmem:[#allocation3 + $0x1a0] sm:$0xff]
        %v1298 = vld [vmem:[#allocation3 + $0x1a8] sm:$0xff]
        %v1299 = vld [vmem:[#allocation3 + $0x1b0] sm:$0xff]
        %v1300 = vld [vmem:[#allocation3 + $0x1b8] sm:$0xff]
        %v1301 = vld [vmem:[#allocation3 + $0x1c0] sm:$0xff]
        %v1302 = vld [vmem:[#allocation3 + $0x1c8] sm:$0xff]
        %v1303 = vld [vmem:[#allocation3 + $0x1d0] sm:$0xff]
        %v1304 = vld [vmem:[#allocation3 + $0x1d8] sm:$0xff]
        %v1305 = vld [vmem:[#allocation3 + $0x1e0] sm:$0xff]
        %v1306 = vld [vmem:[#allocation3 + $0x1e8] sm:$0xff]
        %v1307 = vld [vmem:[#allocation3 + $0x1f0] sm:$0xff]
        %v1308 = vld [vmem:[#allocation3 + $0x1f8] sm:$0xff]
        %v1309 = vld [vmem:[#allocation3 + $0x200] sm:$0xff]
        %v1310 = vld [vmem:[#allocation3 + $0x208] sm:$0xff]
        %v1311 = vld [vmem:[#allocation3 + $0x210] sm:$0xff]
        %v1312 = vld [vmem:[#allocation3 + $0x218] sm:$0xff]
        %v1313 = vld [vmem:[#allocation3 + $0x220] sm:$0xff]
        %v1314 = vld [vmem:[#allocation3 + $0x228] sm:$0xff]
        %v1315 = vld [vmem:[#allocation3 + $0x230] sm:$0xff]
        %v1316 = vld [vmem:[#allocation3 + $0x238] sm:$0xff]
        %v1317 = vld [vmem:[#allocation3 + $0x240] sm:$0xff]
        %v1318 = vld [vmem:[#allocation3 + $0x248] sm:$0xff]
        %v1319 = vld [vmem:[#allocation3 + $0x250] sm:$0xff]
        %v1320 = vld [vmem:[#allocation3 + $0x258] sm:$0xff]
        %v1321 = vld [vmem:[#allocation3 + $0x260] sm:$0xff]
        %v1322 = vld [vmem:[#allocation3 + $0x268] sm:$0xff]
        %v1323 = vld [vmem:[#allocation3 + $0x270] sm:$0xff]
        %v1324 = vld [vmem:[#allocation3 + $0x278] sm:$0xff]
        %v1325 = vld [vmem:[#allocation3 + $0x280] sm:$0xff]
        %v1326 = vld [vmem:[#allocation3 + $0x288] sm:$0xff]
        %v1327 = vld [vmem:[#allocation3 + $0x290] sm:$0xff]
        %v1328 = vld [vmem:[#allocation3 + $0x298] sm:$0xff]
        %v1329 = vld [vmem:[#allocation3 + $0x2a0] sm:$0xff]
        %v1330 = vld [vmem:[#allocation3 + $0x2a8] sm:$0xff]
        %v1331 = vld [vmem:[#allocation3 + $0x2b0] sm:$0xff]
        %v1332 = vld [vmem:[#allocation3 + $0x2b8] sm:$0xff]
        %v1333 = vld [vmem:[#allocation3 + $0x2c0] sm:$0xff]
        %v1334 = vld [vmem:[#allocation3 + $0x2c8] sm:$0xff]
        %v1335 = vld [vmem:[#allocation3 + $0x2d0] sm:$0xff]
        %v1336 = vld [vmem:[#allocation3 + $0x2d8] sm:$0xff]
        %v1337 = vld [vmem:[#allocation3 + $0x2e0] sm:$0xff]
        %v1338 = vld [vmem:[#allocation3 + $0x2e8] sm:$0xff]
        %v1339 = vld [vmem:[#allocation3 + $0x2f0] sm:$0xff]
        %v1340 = vld [vmem:[#allocation3 + $0x2f8] sm:$0xff]
        %v1341 = vld [vmem:[#allocation3 + $0x300] sm:$0xff]
        %v1342 = vld [vmem:[#allocation3 + $0x308] sm:$0xff]
        %v1343 = vld [vmem:[#allocation3 + $0x310] sm:$0xff]
        %v1344 = vld [vmem:[#allocation3 + $0x318] sm:$0xff]
        %v1345 = vld [vmem:[#allocation3 + $0x320] sm:$0xff]
        %v1346 = vld [vmem:[#allocation3 + $0x328] sm:$0xff]
        %v1347 = vld [vmem:[#allocation3 + $0x330] sm:$0xff]
        %v1348 = vld [vmem:[#allocation3 + $0x338] sm:$0xff]
        %v1349 = vld [vmem:[#allocation3 + $0x340] sm:$0xff]
        %v1350 = vld [vmem:[#allocation3 + $0x348] sm:$0xff]
        %v1351 = vld [vmem:[#allocation3 + $0x350] sm:$0xff]
        %v1352 = vld [vmem:[#allocation3 + $0x358] sm:$0xff]
        %v1353 = vld [vmem:[#allocation3 + $0x360] sm:$0xff]
        %v1354 = vld [vmem:[#allocation3 + $0x368] sm:$0xff]
        %v1355 = vld [vmem:[#allocation3 + $0x370] sm:$0xff]
        %v1356 = vld [vmem:[#allocation3 + $0x378] sm:$0xff]
        %v1357 = vld [vmem:[#allocation3 + $0x380] sm:$0xff]
        %v1358 = vld [vmem:[#allocation3 + $0x388] sm:$0xff]
        %v1359 = vld [vmem:[#allocation3 + $0x390] sm:$0xff]
        %v1360 = vld [vmem:[#allocation3 + $0x398] sm:$0xff]
        %v1361 = vld [vmem:[#allocation3 + $0x3a0] sm:$0xff]
        %v1362 = vld [vmem:[#allocation3 + $0x3a8] sm:$0xff]
        %v1363 = vld [vmem:[#allocation3 + $0x3b0] sm:$0xff]
        %v1364 = vld [vmem:[#allocation3 + $0x3b8] sm:$0xff]
        %v1365 = vld [vmem:[#allocation3 + $0x3c0] sm:$0xff]
        %v1366 = vld [vmem:[#allocation3 + $0x3c8] sm:$0xff]
        %v1367 = vld [vmem:[#allocation3 + $0x3d0] sm:$0xff]
        %v1368 = vld [vmem:[#allocation3 + $0x3d8] sm:$0xff]
        %v1369 = vld [vmem:[#allocation3 + $0x3e0] sm:$0xff]
        %v1370 = vld [vmem:[#allocation3 + $0x3e8] sm:$0xff]
        %v1371 = vld [vmem:[#allocation3 + $0x3f0] sm:$0xff]
        %v1372 = vld [vmem:[#allocation3 + $0x3f8] sm:$0xff]
        %v1373 = vld [vmem:[#allocation3 + $0x400] sm:$0xff]
        %v1374 = vld [vmem:[#allocation3 + $0x408] sm:$0xff]
        %v1375 = vld [vmem:[#allocation3 + $0x410] sm:$0xff]
        %v1376 = vld [vmem:[#allocation3 + $0x418] sm:$0xff]
        %v1377 = vld [vmem:[#allocation3 + $0x420] sm:$0xff]
        %v1378 = vld [vmem:[#allocation3 + $0x428] sm:$0xff]
        %v1379 = vld [vmem:[#allocation3 + $0x430] sm:$0xff]
        %v1380 = vld [vmem:[#allocation3 + $0x438] sm:$0xff]
        %v1381 = vld [vmem:[#allocation3 + $0x440] sm:$0xff]
        %v1382 = vld [vmem:[#allocation3 + $0x448] sm:$0xff]
        %v1383 = vld [vmem:[#allocation3 + $0x450] sm:$0xff]
        %v1384 = vld [vmem:[#allocation3 + $0x458] sm:$0xff]
        %v1385 = vld [vmem:[#allocation3 + $0x460] sm:$0xff]
        %v1386 = vld [vmem:[#allocation3 + $0x468] sm:$0xff]
        %v1387 = vld [vmem:[#allocation3 + $0x470] sm:$0xff]
        %v1388 = vld [vmem:[#allocation3 + $0x478] sm:$0xff]
        %v1389 = vld [vmem:[#allocation3 + $0x480] sm:$0xff]
        %v1390 = vld [vmem:[#allocation3 + $0x488] sm:$0xff]
        %v1391 = vld [vmem:[#allocation3 + $0x490] sm:$0xff]
        %v1392 = vld [vmem:[#allocation3 + $0x498] sm:$0xff]
        %v1393 = vld [vmem:[#allocation3 + $0x4a0] sm:$0xff]
        %v1394 = vld [vmem:[#allocation3 + $0x4a8] sm:$0xff]
        %v1395 = vld [vmem:[#allocation3 + $0x4b0] sm:$0xff]
        %v1396 = vld [vmem:[#allocation3 + $0x4b8] sm:$0xff]
        %v1397 = vld [vmem:[#allocation3 + $0x4c0] sm:$0xff]
        %v1398 = vld [vmem:[#allocation3 + $0x4c8] sm:$0xff]
        %v1399 = vld [vmem:[#allocation3 + $0x4d0] sm:$0xff]
        %v1400 = vld [vmem:[#allocation3 + $0x4d8] sm:$0xff]
        %v1401 = vld [vmem:[#allocation3 + $0x4e0] sm:$0xff]
        %v1402 = vld [vmem:[#allocation3 + $0x4e8] sm:$0xff]
        %v1403 = vld [vmem:[#allocation3 + $0x4f0] sm:$0xff]
        %v1404 = vld [vmem:[#allocation3 + $0x4f8] sm:$0xff]
        %v1405 = vld [vmem:[#allocation3 + $0x500] sm:$0xff]
        %v1406 = vld [vmem:[#allocation3 + $0x508] sm:$0xff]
        %v1407 = vld [vmem:[#allocation3 + $0x510] sm:$0xff]
        %v1408 = vld [vmem:[#allocation3 + $0x518] sm:$0xff]
        %v1409 = vld [vmem:[#allocation3 + $0x520] sm:$0xff]
        %v1410 = vld [vmem:[#allocation3 + $0x528] sm:$0xff]
        %v1411 = vld [vmem:[#allocation3 + $0x530] sm:$0xff]
        %v1412 = vld [vmem:[#allocation3 + $0x538] sm:$0xff]
        %v1413 = vld [vmem:[#allocation3 + $0x540] sm:$0xff]
        %v1414 = vld [vmem:[#allocation3 + $0x548] sm:$0xff]
        %v1415 = vld [vmem:[#allocation3 + $0x550] sm:$0xff]
        %v1416 = vld [vmem:[#allocation3 + $0x558] sm:$0xff]
        %v1417 = vld [vmem:[#allocation3 + $0x560] sm:$0xff]
        %v1418 = vld [vmem:[#allocation3 + $0x568] sm:$0xff]
        %v1419 = vld [vmem:[#allocation3 + $0x570] sm:$0xff]
        %v1420 = vld [vmem:[#allocation3 + $0x578] sm:$0xff]
        %v1421 = vld [vmem:[#allocation3 + $0x580] sm:$0xff]
        %v1422 = vld [vmem:[#allocation3 + $0x588] sm:$0xff]
        %v1423 = vld [vmem:[#allocation3 + $0x590] sm:$0xff]
        %v1424 = vld [vmem:[#allocation3 + $0x598] sm:$0xff]
        %v1425 = vld [vmem:[#allocation3 + $0x5a0] sm:$0xff]
        %v1426 = vld [vmem:[#allocation3 + $0x5a8] sm:$0xff]
        %v1427 = vld [vmem:[#allocation3 + $0x5b0] sm:$0xff]
        %v1428 = vld [vmem:[#allocation3 + $0x5b8] sm:$0xff]
        %v1429 = vld [vmem:[#allocation3 + $0x5c0] sm:$0xff]
        %v1430 = vld [vmem:[#allocation3 + $0x5c8] sm:$0xff]
        %v1431 = vld [vmem:[#allocation3 + $0x5d0] sm:$0xff]
        %v1432 = vld [vmem:[#allocation3 + $0x5d8] sm:$0xff]
        %v1433 = vld [vmem:[#allocation3 + $0x5e0] sm:$0xff]
        %v1434 = vld [vmem:[#allocation3 + $0x5e8] sm:$0xff]
        %v1435 = vld [vmem:[#allocation3 + $0x5f0] sm:$0xff]
        %v1436 = vld [vmem:[#allocation3 + $0x5f8] sm:$0xff]
        %v1437 = vld [vmem:[#allocation3 + $0x600] sm:$0xff]
        %v1438 = vld [vmem:[#allocation3 + $0x608] sm:$0xff]
        %v1439 = vld [vmem:[#allocation3 + $0x610] sm:$0xff]
        %v1440 = vld [vmem:[#allocation3 + $0x618] sm:$0xff]
        %v1441 = vld [vmem:[#allocation3 + $0x620] sm:$0xff]
        %v1442 = vld [vmem:[#allocation3 + $0x628] sm:$0xff]
        %v1443 = vld [vmem:[#allocation3 + $0x630] sm:$0xff]
        %v1444 = vld [vmem:[#allocation3 + $0x638] sm:$0xff]
        %v1445 = vld [vmem:[#allocation3 + $0x640] sm:$0xff]
        %v1446 = vld [vmem:[#allocation3 + $0x648] sm:$0xff]
        %v1447 = vld [vmem:[#allocation3 + $0x650] sm:$0xff]
        %v1448 = vld [vmem:[#allocation3 + $0x658] sm:$0xff]
        %v1449 = vld [vmem:[#allocation3 + $0x660] sm:$0xff]
        %v1450 = vld [vmem:[#allocation3 + $0x668] sm:$0xff]
        %v1451 = vld [vmem:[#allocation3 + $0x670] sm:$0xff]
        %v1452 = vld [vmem:[#allocation3 + $0x678] sm:$0xff]
        %v1453 = vld [vmem:[#allocation3 + $0x680] sm:$0xff]
        %v1454 = vld [vmem:[#allocation3 + $0x688] sm:$0xff]
        %v1455 = vld [vmem:[#allocation3 + $0x690] sm:$0xff]
        %v1456 = vld [vmem:[#allocation3 + $0x698] sm:$0xff]
        %v1457 = vld [vmem:[#allocation3 + $0x6a0] sm:$0xff]
        %v1458 = vld [vmem:[#allocation3 + $0x6a8] sm:$0xff]
        %v1459 = vld [vmem:[#allocation3 + $0x6b0] sm:$0xff]
        %v1460 = vld [vmem:[#allocation3 + $0x6b8] sm:$0xff]
        %v1461 = vld [vmem:[#allocation3 + $0x6c0] sm:$0xff]
        %v1462 = vld [vmem:[#allocation3 + $0x6c8] sm:$0xff]
        %v1463 = vld [vmem:[#allocation3 + $0x6d0] sm:$0xff]
        %v1464 = vld [vmem:[#allocation3 + $0x6d8] sm:$0xff]
        %v1465 = vld [vmem:[#allocation3 + $0x6e0] sm:$0xff]
        %v1466 = vld [vmem:[#allocation3 + $0x6e8] sm:$0xff]
        %v1467 = vld [vmem:[#allocation3 + $0x6f0] sm:$0xff]
        %v1468 = vld [vmem:[#allocation3 + $0x6f8] sm:$0xff]
        %v1469 = vld [vmem:[#allocation3 + $0x700] sm:$0xff]
        %v1470 = vld [vmem:[#allocation3 + $0x708] sm:$0xff]
        %v1471 = vld [vmem:[#allocation3 + $0x710] sm:$0xff]
        %v1472 = vld [vmem:[#allocation3 + $0x718] sm:$0xff]
        %v1473 = vld [vmem:[#allocation3 + $0x720] sm:$0xff]
        %v1474 = vld [vmem:[#allocation3 + $0x728] sm:$0xff]
        %v1475 = vld [vmem:[#allocation3 + $0x730] sm:$0xff]
        %v1476 = vld [vmem:[#allocation3 + $0x738] sm:$0xff]
        %v1477 = vld [vmem:[#allocation3 + $0x740] sm:$0xff]
        %v1478 = vld [vmem:[#allocation3 + $0x748] sm:$0xff]
        %v1479 = vld [vmem:[#allocation3 + $0x750] sm:$0xff]
        %v1480 = vld [vmem:[#allocation3 + $0x758] sm:$0xff]
        %v1481 = vld [vmem:[#allocation3 + $0x760] sm:$0xff]
        %v1482 = vld [vmem:[#allocation3 + $0x768] sm:$0xff]
        %v1483 = vld [vmem:[#allocation3 + $0x770] sm:$0xff]
        %v1484 = vld [vmem:[#allocation3 + $0x778] sm:$0xff]
        %v1485 = vld [vmem:[#allocation3 + $0x780] sm:$0xff]
        %v1486 = vld [vmem:[#allocation3 + $0x788] sm:$0xff]
        %v1487 = vld [vmem:[#allocation3 + $0x790] sm:$0xff]
        %v1488 = vld [vmem:[#allocation3 + $0x798] sm:$0xff]
        %v1489 = vld [vmem:[#allocation3 + $0x7a0] sm:$0xff]
        %v1490 = vld [vmem:[#allocation3 + $0x7a8] sm:$0xff]
        %v1491 = vld [vmem:[#allocation3 + $0x7b0] sm:$0xff]
        %v1492 = vld [vmem:[#allocation3 + $0x7b8] sm:$0xff]
        %v1493 = vld [vmem:[#allocation3 + $0x7c0] sm:$0xff]
        %v1494 = vld [vmem:[#allocation3 + $0x7c8] sm:$0xff]
        %v1495 = vld [vmem:[#allocation3 + $0x7d0] sm:$0xff]
        %v1496 = vld [vmem:[#allocation3 + $0x7d8] sm:$0xff]
        %v1497 = vld [vmem:[#allocation3 + $0x7e0] sm:$0xff]
        %v1498 = vld [vmem:[#allocation3 + $0x7e8] sm:$0xff]
        %v1499 = vld [vmem:[#allocation3 + $0x7f0] sm:$0xff]
        %v1500 = vld [vmem:[#allocation3 + $0x7f8] sm:$0xff]
        %v1501 = vld [vmem:[#allocation3 + $0x800] sm:$0xff]
        %v1502 = vld [vmem:[#allocation3 + $0x808] sm:$0xff]
        %v1503 = vld [vmem:[#allocation3 + $0x810] sm:$0xff]
        %v1504 = vld [vmem:[#allocation3 + $0x818] sm:$0xff]
        %v1505 = vld [vmem:[#allocation3 + $0x820] sm:$0xff]
        %v1506 = vld [vmem:[#allocation3 + $0x828] sm:$0xff]
        %v1507 = vld [vmem:[#allocation3 + $0x830] sm:$0xff]
        %v1508 = vld [vmem:[#allocation3 + $0x838] sm:$0xff]
        %v1509 = vld [vmem:[#allocation3 + $0x840] sm:$0xff]
        %v1510 = vld [vmem:[#allocation3 + $0x848] sm:$0xff]
        %v1511 = vld [vmem:[#allocation3 + $0x850] sm:$0xff]
        %v1512 = vld [vmem:[#allocation3 + $0x858] sm:$0xff]
        %v1513 = vld [vmem:[#allocation3 + $0x860] sm:$0xff]
        %v1514 = vld [vmem:[#allocation3 + $0x868] sm:$0xff]
        %v1515 = vld [vmem:[#allocation3 + $0x870] sm:$0xff]
        %v1516 = vld [vmem:[#allocation3 + $0x878] sm:$0xff]
        %v1517 = vld [vmem:[#allocation3 + $0x880] sm:$0xff]
        %v1518 = vld [vmem:[#allocation3 + $0x888] sm:$0xff]
        %v1519 = vld [vmem:[#allocation3 + $0x890] sm:$0xff]
        %v1520 = vld [vmem:[#allocation3 + $0x898] sm:$0xff]
        %v1521 = vld [vmem:[#allocation3 + $0x8a0] sm:$0xff]
        %v1522 = vld [vmem:[#allocation3 + $0x8a8] sm:$0xff]
        %v1523 = vld [vmem:[#allocation3 + $0x8b0] sm:$0xff]
        %v1524 = vld [vmem:[#allocation3 + $0x8b8] sm:$0xff]
        %v1525 = vld [vmem:[#allocation3 + $0x8c0] sm:$0xff]
        %v1526 = vld [vmem:[#allocation3 + $0x8c8] sm:$0xff]
        %v1527 = vld [vmem:[#allocation3 + $0x8d0] sm:$0xff]
        %v1528 = vld [vmem:[#allocation3 + $0x8d8] sm:$0xff]
        %v1529 = vld [vmem:[#allocation3 + $0x8e0] sm:$0xff]
        %v1530 = vld [vmem:[#allocation3 + $0x8e8] sm:$0xff]
        %v1531 = vld [vmem:[#allocation3 + $0x8f0] sm:$0xff]
        %v1532 = vld [vmem:[#allocation3 + $0x8f8] sm:$0xff]
        %v1533 = vld [vmem:[%s1] sm:$0xff]
        %v1534 = vld [vmem:[%s1 + $0x8] sm:$0xff]
        %v1535 = vld [vmem:[%s1 + $0x10] sm:$0xff]
        %v1536 = vld [vmem:[%s1 + $0x18] sm:$0xff]
        %v1537 = vld [vmem:[%s1 + $0x20] sm:$0xff]
        %v1538 = vld [vmem:[%s1 + $0x28] sm:$0xff]
        %v1539 = vld [vmem:[%s1 + $0x30] sm:$0xff]
        %v1540 = vld [vmem:[%s1 + $0x38] sm:$0xff]
        %v1541 = vld [vmem:[%s1 + $0x40] sm:$0xff]
        %v1542 = vld [vmem:[%s1 + $0x48] sm:$0xff]
        %v1543 = vld [vmem:[%s1 + $0x50] sm:$0xff]
        %v1544 = vld [vmem:[%s1 + $0x58] sm:$0xff]
        %v1545 = vld [vmem:[%s1 + $0x60] sm:$0xff]
        %v1546 = vld [vmem:[%s1 + $0x68] sm:$0xff]
        %v1547 = vld [vmem:[%s1 + $0x70] sm:$0xff]
        %v1548 = vld [vmem:[%s1 + $0x78] sm:$0xff]
        %v1549 = vld [vmem:[%s1 + $0x80] sm:$0xff]
        %v1550 = vld [vmem:[%s1 + $0x88] sm:$0xff]
        %v1551 = vld [vmem:[%s1 + $0x90] sm:$0xff]
        %v1552 = vld [vmem:[%s1 + $0x98] sm:$0xff]
        %v1553 = vld [vmem:[%s1 + $0xa0] sm:$0xff]
        %v1554 = vld [vmem:[%s1 + $0xa8] sm:$0xff]
        %v1555 = vld [vmem:[%s1 + $0xb0] sm:$0xff]
        %v1556 = vld [vmem:[%s1 + $0xb8] sm:$0xff]
        %v1557 = vld [vmem:[%s1 + $0xc0] sm:$0xff]
        %v1558 = vld [vmem:[%s1 + $0xc8] sm:$0xff]
        %v1559 = vld [vmem:[%s1 + $0xd0] sm:$0xff]
        %v1560 = vld [vmem:[%s1 + $0xd8] sm:$0xff]
        %v1561 = vld [vmem:[%s1 + $0xe0] sm:$0xff]
        %v1562 = vld [vmem:[%s1 + $0xe8] sm:$0xff]
        %v1563 = vld [vmem:[%s1 + $0xf0] sm:$0xff]
        %v1564 = vld [vmem:[%s1 + $0xf8] sm:$0xff]
        %v1565 = vld [vmem:[%s1 + $0x100] sm:$0xff]
        %v1566 = vld [vmem:[%s1 + $0x108] sm:$0xff]
        %v1567 = vld [vmem:[%s1 + $0x110] sm:$0xff]
        %v1568 = vld [vmem:[%s1 + $0x118] sm:$0xff]
        %v1569 = vld [vmem:[%s1 + $0x120] sm:$0xff]
        %v1570 = vld [vmem:[%s1 + $0x128] sm:$0xff]
        %v1571 = vld [vmem:[%s1 + $0x130] sm:$0xff]
        %v1572 = vld [vmem:[%s1 + $0x138] sm:$0xff]
        %v1573 = vld [vmem:[%s1 + $0x140] sm:$0xff]
        %v1574 = vld [vmem:[%s1 + $0x148] sm:$0xff]
        %v1575 = vld [vmem:[%s1 + $0x150] sm:$0xff]
        %v1576 = vld [vmem:[%s1 + $0x158] sm:$0xff]
        %v1577 = vld [vmem:[%s1 + $0x160] sm:$0xff]
        %v1578 = vld [vmem:[%s1 + $0x168] sm:$0xff]
        %v1579 = vld [vmem:[%s1 + $0x170] sm:$0xff]
        %v1580 = vld [vmem:[%s1 + $0x178] sm:$0xff]
        %v1581 = vld [vmem:[%s1 + $0x180] sm:$0xff]
        %v1582 = vld [vmem:[%s1 + $0x188] sm:$0xff]
        %v1583 = vld [vmem:[%s1 + $0x190] sm:$0xff]
        %v1584 = vld [vmem:[%s1 + $0x198] sm:$0xff]
        %v1585 = vld [vmem:[%s1 + $0x1a0] sm:$0xff]
        %v1586 = vld [vmem:[%s1 + $0x1a8] sm:$0xff]
        %v1587 = vld [vmem:[%s1 + $0x1b0] sm:$0xff]
        %v1588 = vld [vmem:[%s1 + $0x1b8] sm:$0xff]
        %v1589 = vld [vmem:[%s1 + $0x1c0] sm:$0xff]
        %v1590 = vld [vmem:[%s1 + $0x1c8] sm:$0xff]
        %v1591 = vld [vmem:[%s1 + $0x1d0] sm:$0xff]
        %v1592 = vld [vmem:[%s1 + $0x1d8] sm:$0xff]
        %v1593 = vld [vmem:[%s1 + $0x1e0] sm:$0xff]
        %v1594 = vld [vmem:[%s1 + $0x1e8] sm:$0xff]
        %v1595 = vld [vmem:[%s1 + $0x1f0] sm:$0xff]
        %v1596 = vld [vmem:[%s1 + $0x1f8] sm:$0xff]
        %v1597 = vld [vmem:[%s1 + $0x200] sm:$0xff]
        %v1598 = vld [vmem:[%s1 + $0x208] sm:$0xff]
        %v1599 = vld [vmem:[%s1 + $0x210] sm:$0xff]
        %v1600 = vld [vmem:[%s1 + $0x218] sm:$0xff]
        %v1601 = vld [vmem:[%s1 + $0x220] sm:$0xff]
        %v1602 = vld [vmem:[%s1 + $0x228] sm:$0xff]
        %v1603 = vld [vmem:[%s1 + $0x230] sm:$0xff]
        %v1604 = vld [vmem:[%s1 + $0x238] sm:$0xff]
        %v1605 = vld [vmem:[%s1 + $0x240] sm:$0xff]
        %v1606 = vld [vmem:[%s1 + $0x248] sm:$0xff]
        %v1607 = vld [vmem:[%s1 + $0x250] sm:$0xff]
        %v1608 = vld [vmem:[%s1 + $0x258] sm:$0xff]
        %v1609 = vld [vmem:[%s1 + $0x260] sm:$0xff]
        %v1610 = vld [vmem:[%s1 + $0x268] sm:$0xff]
        %v1611 = vld [vmem:[%s1 + $0x270] sm:$0xff]
        %v1612 = vld [vmem:[%s1 + $0x278] sm:$0xff]
        %v1613 = vld [vmem:[%s1 + $0x280] sm:$0xff]
        %v1614 = vld [vmem:[%s1 + $0x288] sm:$0xff]
        %v1615 = vld [vmem:[%s1 + $0x290] sm:$0xff]
        %v1616 = vld [vmem:[%s1 + $0x298] sm:$0xff]
        %v1617 = vld [vmem:[%s1 + $0x2a0] sm:$0xff]
        %v1618 = vld [vmem:[%s1 + $0x2a8] sm:$0xff]
        %v1619 = vld [vmem:[%s1 + $0x2b0] sm:$0xff]
        %v1620 = vld [vmem:[%s1 + $0x2b8] sm:$0xff]
        %v1621 = vld [vmem:[%s1 + $0x2c0] sm:$0xff]
        %v1622 = vld [vmem:[%s1 + $0x2c8] sm:$0xff]
        %v1623 = vld [vmem:[%s1 + $0x2d0] sm:$0xff]
        %v1624 = vld [vmem:[%s1 + $0x2d8] sm:$0xff]
        %v1625 = vld [vmem:[%s1 + $0x2e0] sm:$0xff]
        %v1626 = vld [vmem:[%s1 + $0x2e8] sm:$0xff]
        %v1627 = vld [vmem:[%s1 + $0x2f0] sm:$0xff]
        %v1628 = vld [vmem:[%s1 + $0x2f8] sm:$0xff]
        %v1629 = vld [vmem:[%s1 + $0x300] sm:$0xff]
        %v1630 = vld [vmem:[%s1 + $0x308] sm:$0xff]
        %v1631 = vld [vmem:[%s1 + $0x310] sm:$0xff]
        %v1632 = vld [vmem:[%s1 + $0x318] sm:$0xff]
        %v1633 = vld [vmem:[%s1 + $0x320] sm:$0xff]
        %v1634 = vld [vmem:[%s1 + $0x328] sm:$0xff]
        %v1635 = vld [vmem:[%s1 + $0x330] sm:$0xff]
        %v1636 = vld [vmem:[%s1 + $0x338] sm:$0xff]
        %v1637 = vld [vmem:[%s1 + $0x340] sm:$0xff]
        %v1638 = vld [vmem:[%s1 + $0x348] sm:$0xff]
        %v1639 = vld [vmem:[%s1 + $0x350] sm:$0xff]
        %v1640 = vld [vmem:[%s1 + $0x358] sm:$0xff]
        %v1641 = vld [vmem:[%s1 + $0x360] sm:$0xff]
        %v1642 = vld [vmem:[%s1 + $0x368] sm:$0xff]
        %v1643 = vld [vmem:[%s1 + $0x370] sm:$0xff]
        %v1644 = vld [vmem:[%s1 + $0x378] sm:$0xff]
        %v1645 = vld [vmem:[%s1 + $0x380] sm:$0xff]
        %v1646 = vld [vmem:[%s1 + $0x388] sm:$0xff]
        %v1647 = vld [vmem:[%s1 + $0x390] sm:$0xff]
        %v1648 = vld [vmem:[%s1 + $0x398] sm:$0xff]
        %v1649 = vld [vmem:[%s1 + $0x3a0] sm:$0xff]
        %v1650 = vld [vmem:[%s1 + $0x3a8] sm:$0xff]
        %v1651 = vld [vmem:[%s1 + $0x3b0] sm:$0xff]
        %v1652 = vld [vmem:[%s1 + $0x3b8] sm:$0xff]
        %v1653 = vld [vmem:[%s1 + $0x3c0] sm:$0xff]
        %v1654 = vld [vmem:[%s1 + $0x3c8] sm:$0xff]
        %v1655 = vld [vmem:[%s1 + $0x3d0] sm:$0xff]
        %v1656 = vld [vmem:[%s1 + $0x3d8] sm:$0xff]
        %v1657 = vld [vmem:[%s1 + $0x3e0] sm:$0xff]
        %v1658 = vld [vmem:[%s1 + $0x3e8] sm:$0xff]
        %v1659 = vld [vmem:[%s1 + $0x3f0] sm:$0xff]
        %v1660 = vld [vmem:[%s1 + $0x3f8] sm:$0xff]
        %v1661 = vld [vmem:[%s1 + $0x400] sm:$0xff]
        %v1662 = vld [vmem:[%s1 + $0x408] sm:$0xff]
        %v1663 = vld [vmem:[%s1 + $0x410] sm:$0xff]
        %v1664 = vld [vmem:[%s1 + $0x418] sm:$0xff]
        %v1665 = vld [vmem:[%s1 + $0x420] sm:$0xff]
        %v1666 = vld [vmem:[%s1 + $0x428] sm:$0xff]
        %v1667 = vld [vmem:[%s1 + $0x430] sm:$0xff]
        %v1668 = vld [vmem:[%s1 + $0x438] sm:$0xff]
        %v1669 = vld [vmem:[%s1 + $0x440] sm:$0xff]
        %v1670 = vld [vmem:[%s1 + $0x448] sm:$0xff]
        %v1671 = vld [vmem:[%s1 + $0x450] sm:$0xff]
        %v1672 = vld [vmem:[%s1 + $0x458] sm:$0xff]
        %v1673 = vld [vmem:[%s1 + $0x460] sm:$0xff]
        %v1674 = vld [vmem:[%s1 + $0x468] sm:$0xff]
        %v1675 = vld [vmem:[%s1 + $0x470] sm:$0xff]
        %v1676 = vld [vmem:[%s1 + $0x478] sm:$0xff]
        %1677 = vmatprep.subr.mxu0 0.0
        %1678 = vmatpush1.msra.mxu0 %v1548
        %1679 = vmatprep.subr.mxu0 0.0
        %1680 = vmatpush1.msra.mxu0 %v1547
        %1681 = vmatprep.subr.mxu0 0.0
        %1682 = vmatpush1.msra.mxu0 %v1546
        %1683 = vmatprep.subr.mxu0 0.0
        %1684 = vmatpush1.msra.mxu0 %v1545
        %1685 = vmatprep.subr.mxu0 0.0
        %1686 = vmatpush1.msra.mxu0 %v1544
        %1687 = vmatprep.subr.mxu0 0.0
        %1688 = vmatpush1.msra.mxu0 %v1543
        %1689 = vmatprep.subr.mxu0 0.0
        %1690 = vmatpush1.msra.mxu0 %v1542
        %1691 = vmatprep.subr.mxu0 0.0
        %1692 = vmatpush1.msra.mxu0 %v1541
        %1693 = vmatprep.subr.mxu0 0.0
        %1694 = vmatpush1.msra.mxu0 %v1540
        %1695 = vmatprep.subr.mxu0 0.0
        %1696 = vmatpush1.msra.mxu0 %v1539
        %1697 = vmatprep.subr.mxu0 0.0
        %1698 = vmatpush1.msra.mxu0 %v1538
        %1699 = vmatprep.subr.mxu0 0.0
        %1700 = vmatpush1.msra.mxu0 %v1537
        %1701 = vmatprep.subr.mxu0 0.0
        %1702 = vmatpush1.msra.mxu0 %v1536
        %1703 = vmatprep.subr.mxu0 0.0
        %1704 = vmatpush1.msra.mxu0 %v1535
        %1705 = vmatprep.subr.mxu0 0.0
        %1706 = vmatpush1.msra.mxu0 %v1534
        %1707 = vmatprep.subr.mxu0 0.0
        %1708 = vmatpush1.msra.mxu0 %v1533
        %1709 = vmatprep.subr.mxu0 0.0
        %1710 = vmatpush2.msra.mxu0 %v1564
        %1711 = vmatprep.subr.mxu0 0.0
        %1712 = vmatpush2.msra.mxu0 %v1563
        %1713 = vmatprep.subr.mxu0 0.0
        %1714 = vmatpush2.msra.mxu0 %v1562
        %1715 = vmatprep.subr.mxu0 0.0
        %1716 = vmatpush2.msra.mxu0 %v1561
        %1717 = vmatprep.subr.mxu0 0.0
        %1718 = vmatpush2.msra.mxu0 %v1560
        %1719 = vmatprep.subr.mxu0 0.0
        %1720 = vmatpush2.msra.mxu0 %v1559
        %1721 = vmatprep.subr.mxu0 0.0
        %1722 = vmatpush2.msra.mxu0 %v1558
        %1723 = vmatprep.subr.mxu0 0.0
        %1724 = vmatpush2.msra.mxu0 %v1557
        %1725 = vmatprep.subr.mxu0 0.0
        %1726 = vmatpush2.msra.mxu0 %v1556
        %1727 = vmatprep.subr.mxu0 0.0
        %1728 = vmatpush2.msra.mxu0 %v1555
        %1729 = vmatprep.subr.mxu0 0.0
        %1730 = vmatpush2.msra.mxu0 %v1554
        %1731 = vmatprep.subr.mxu0 0.0
        %1732 = vmatpush2.msra.mxu0 %v1553
        %1733 = vmatprep.subr.mxu0 0.0
        %1734 = vmatpush2.msra.mxu0 %v1552
        %1735 = vmatprep.subr.mxu0 0.0
        %1736 = vmatpush2.msra.mxu0 %v1551
        %1737 = vmatprep.subr.mxu0 0.0
        %1738 = vmatpush2.msra.mxu0 %v1550
        %1739 = vmatprep.subr.mxu0 0.0
        %1740 = vmatpush2.msra.mxu0 %v1549
        %1741 = vmatprep.mubr.f32.mxu0 %v1246
        %1742 = vmatmul.mubr.f32.gmra.mxu0 %v1245
        %v1743 = vpop.f32.mrf.mxu0
        %v1744 = vadd.f32 0.0, %v1743
        %v1745 = vpop.f32.mrf.mxu0
        %1746 = vmatprep.mubr.f32.mxu0 %v1255
        %1747 = vmatmul.mubr.f32.gmra.mxu0 %v1254
        %v1748 = vpop.f32.mrf.mxu0
        %v1749 = vadd.f32 0.0, %v1748
        %v1750 = vpop.f32.mrf.mxu0
        %1751 = vmatprep.mubr.f32.mxu0 %v1264
        %1752 = vmatmul.mubr.f32.gmra.mxu0 %v1263
        %v1753 = vpop.f32.mrf.mxu0
        %v1754 = vadd.f32 0.0, %v1753
        %v1755 = vpop.f32.mrf.mxu0
        %1756 = vmatprep.mubr.f32.mxu0 %v1273
        %1757 = vmatmul.mubr.f32.gmra.mxu0 %v1272
        %v1758 = vpop.f32.mrf.mxu0
        %v1759 = vadd.f32 0.0, %v1758
        %v1760 = vpop.f32.mrf.mxu0
        %1761 = vmatprep.mubr.f32.mxu0 %v1282
        %1762 = vmatmul.mubr.f32.gmra.mxu0 %v1281
        %v1763 = vpop.f32.mrf.mxu0
        %v1764 = vadd.f32 0.0, %v1763
        %v1765 = vpop.f32.mrf.mxu0
        %1766 = vmatprep.mubr.f32.mxu0 %v1291
        %1767 = vmatmul.mubr.f32.gmra.mxu0 %v1290
        %v1768 = vpop.f32.mrf.mxu0
        %v1769 = vadd.f32 0.0, %v1768
        %v1770 = vpop.f32.mrf.mxu0
        %1771 = vmatprep.mubr.f32.mxu0 %v1300
        %1772 = vmatmul.mubr.f32.gmra.mxu0 %v1299
        %v1773 = vpop.f32.mrf.mxu0
        %v1774 = vadd.f32 0.0, %v1773
        %v1775 = vpop.f32.mrf.mxu0
        %1776 = vmatprep.mubr.f32.mxu0 %v1309
        %1777 = vmatmul.mubr.f32.gmra.mxu0 %v1308
        %v1778 = vpop.f32.mrf.mxu0
        %v1779 = vadd.f32 0.0, %v1778
        %v1780 = vpop.f32.mrf.mxu0
        %1781 = vmatprep.mubr.f32.mxu0 %v1318
        %1782 = vmatmul.mubr.f32.gmra.mxu0 %v1317
        %v1783 = vpop.f32.mrf.mxu0
        %v1784 = vadd.f32 0.0, %v1783
        %v1785 = vpop.f32.mrf.mxu0
        %1786 = vmatprep.mubr.f32.mxu0 %v1327
        %1787 = vmatmul.mubr.f32.gmra.mxu0 %v1326
        %v1788 = vpop.f32.mrf.mxu0
        %v1789 = vadd.f32 0.0, %v1788
        %v1790 = vpop.f32.mrf.mxu0
        %1791 = vmatprep.mubr.f32.mxu0 %v1336
        %1792 = vmatmul.mubr.f32.gmra.mxu0 %v1335
        %v1793 = vpop.f32.mrf.mxu0
        %v1794 = vadd.f32 0.0, %v1793
        %v1795 = vpop.f32.mrf.mxu0
        %1796 = vmatprep.mubr.f32.mxu0 %v1345
        %1797 = vmatmul.mubr.f32.gmra.mxu0 %v1344
        %v1798 = vpop.f32.mrf.mxu0
        %v1799 = vadd.f32 0.0, %v1798
        %v1800 = vpop.f32.mrf.mxu0
        %1801 = vmatprep.mubr.f32.mxu0 %v1354
        %1802 = vmatmul.mubr.f32.gmra.mxu0 %v1353
        %v1803 = vpop.f32.mrf.mxu0
        %v1804 = vadd.f32 0.0, %v1803
        %v1805 = vpop.f32.mrf.mxu0
        %1806 = vmatprep.mubr.f32.mxu0 %v1363
        %1807 = vmatmul.mubr.f32.gmra.mxu0 %v1362
        %v1808 = vpop.f32.mrf.mxu0
        %v1809 = vadd.f32 0.0, %v1808
        %v1810 = vpop.f32.mrf.mxu0
        %1811 = vmatprep.mubr.f32.mxu0 %v1372
        %1812 = vmatmul.mubr.f32.gmra.mxu0 %v1371
        %v1813 = vpop.f32.mrf.mxu0
        %v1814 = vadd.f32 0.0, %v1813
        %v1815 = vpop.f32.mrf.mxu0
        %1816 = vmatprep.mubr.f32.mxu0 %v1381
        %1817 = vmatmul.mubr.f32.gmra.mxu0 %v1380
        %v1818 = vpop.f32.mrf.mxu0
        %v1819 = vadd.f32 0.0, %v1818
        %v1820 = vpop.f32.mrf.mxu0
        %1821 = vmatprep.mubr.f32.mxu0 %v1390
        %1822 = vmatmul.mubr.f32.gmra.mxu0 %v1389
        %v1823 = vpop.f32.mrf.mxu0
        %v1824 = vadd.f32 0.0, %v1823
        %v1825 = vpop.f32.mrf.mxu0
        %1826 = vmatprep.mubr.f32.mxu0 %v1399
        %1827 = vmatmul.mubr.f32.gmra.mxu0 %v1398
        %v1828 = vpop.f32.mrf.mxu0
        %v1829 = vadd.f32 0.0, %v1828
        %v1830 = vpop.f32.mrf.mxu0
        %1831 = vmatprep.mubr.f32.mxu0 %v1408
        %1832 = vmatmul.mubr.f32.gmra.mxu0 %v1407
        %v1833 = vpop.f32.mrf.mxu0
        %v1834 = vadd.f32 0.0, %v1833
        %v1835 = vpop.f32.mrf.mxu0
        %1836 = vmatprep.mubr.f32.mxu0 %v1417
        %1837 = vmatmul.mubr.f32.gmra.mxu0 %v1416
        %v1838 = vpop.f32.mrf.mxu0
        %v1839 = vadd.f32 0.0, %v1838
        %v1840 = vpop.f32.mrf.mxu0
        %1841 = vmatprep.mubr.f32.mxu0 %v1426
        %1842 = vmatmul.mubr.f32.gmra.mxu0 %v1425
        %v1843 = vpop.f32.mrf.mxu0
        %v1844 = vadd.f32 0.0, %v1843
        %v1845 = vpop.f32.mrf.mxu0
        %1846 = vmatprep.mubr.f32.mxu0 %v1435
        %1847 = vmatmul.mubr.f32.gmra.mxu0 %v1434
        %v1848 = vpop.f32.mrf.mxu0
        %v1849 = vadd.f32 0.0, %v1848
        %v1850 = vpop.f32.mrf.mxu0
        %1851 = vmatprep.mubr.f32.mxu0 %v1444
        %1852 = vmatmul.mubr.f32.gmra.mxu0 %v1443
        %v1853 = vpop.f32.mrf.mxu0
        %v1854 = vadd.f32 0.0, %v1853
        %v1855 = vpop.f32.mrf.mxu0
        %1856 = vmatprep.mubr.f32.mxu0 %v1453
        %1857 = vmatmul.mubr.f32.gmra.mxu0 %v1452
        %v1858 = vpop.f32.mrf.mxu0
        %v1859 = vadd.f32 0.0, %v1858
        %v1860 = vpop.f32.mrf.mxu0
        %1861 = vmatprep.mubr.f32.mxu0 %v1462
        %1862 = vmatmul.mubr.f32.gmra.mxu0 %v1461
        %v1863 = vpop.f32.mrf.mxu0
        %v1864 = vadd.f32 0.0, %v1863
        %v1865 = vpop.f32.mrf.mxu0
        %1866 = vmatprep.mubr.f32.mxu0 %v1471
        %1867 = vmatmul.mubr.f32.gmra.mxu0 %v1470
        %v1868 = vpop.f32.mrf.mxu0
        %v1869 = vadd.f32 0.0, %v1868
        %v1870 = vpop.f32.mrf.mxu0
        %1871 = vmatprep.mubr.f32.mxu0 %v1480
        %1872 = vmatmul.mubr.f32.gmra.mxu0 %v1479
        %v1873 = vpop.f32.mrf.mxu0
        %v1874 = vadd.f32 0.0, %v1873
        %v1875 = vpop.f32.mrf.mxu0
        %1876 = vmatprep.mubr.f32.mxu0 %v1489
        %1877 = vmatmul.mubr.f32.gmra.mxu0 %v1488
        %v1878 = vpop.f32.mrf.mxu0
        %v1879 = vadd.f32 0.0, %v1878
        %v1880 = vpop.f32.mrf.mxu0
        %1881 = vmatprep.mubr.f32.mxu0 %v1498
        %1882 = vmatmul.mubr.f32.gmra.mxu0 %v1497
        %v1883 = vpop.f32.mrf.mxu0
        %v1884 = vadd.f32 0.0, %v1883
        %v1885 = vpop.f32.mrf.mxu0
        %1886 = vmatprep.mubr.f32.mxu0 %v1507
        %1887 = vmatmul.mubr.f32.gmra.mxu0 %v1506
        %v1888 = vpop.f32.mrf.mxu0
        %v1889 = vadd.f32 0.0, %v1888
        %v1890 = vpop.f32.mrf.mxu0
        %1891 = vmatprep.mubr.f32.mxu0 %v1516
        %1892 = vmatmul.mubr.f32.gmra.mxu0 %v1515
        %v1893 = vpop.f32.mrf.mxu0
        %v1894 = vadd.f32 0.0, %v1893
        %v1895 = vpop.f32.mrf.mxu0
        %1896 = vmatprep.mubr.f32.mxu0 %v1525
        %1897 = vmatmul.mubr.f32.gmra.mxu0 %v1524
        %v1898 = vpop.f32.mrf.mxu0
        %v1899 = vadd.f32 0.0, %v1898
        %v1900 = vpop.f32.mrf.mxu0
        %1901 = vdwg.mxu0
        %1902 = vmatprep.subr.mxu0 0.0
        %1903 = vmatpush1.msra.mxu0 %v1580
        %1904 = vmatprep.subr.mxu0 0.0
        %1905 = vmatpush1.msra.mxu0 %v1579
        %1906 = vmatprep.subr.mxu0 0.0
        %1907 = vmatpush1.msra.mxu0 %v1578
        %1908 = vmatprep.subr.mxu0 0.0
        %1909 = vmatpush1.msra.mxu0 %v1577
        %1910 = vmatprep.subr.mxu0 0.0
        %1911 = vmatpush1.msra.mxu0 %v1576
        %1912 = vmatprep.subr.mxu0 0.0
        %1913 = vmatpush1.msra.mxu0 %v1575
        %1914 = vmatprep.subr.mxu0 0.0
        %1915 = vmatpush1.msra.mxu0 %v1574
        %1916 = vmatprep.subr.mxu0 0.0
        %1917 = vmatpush1.msra.mxu0 %v1573
        %1918 = vmatprep.subr.mxu0 0.0
        %1919 = vmatpush1.msra.mxu0 %v1572
        %1920 = vmatprep.subr.mxu0 0.0
        %1921 = vmatpush1.msra.mxu0 %v1571
        %1922 = vmatprep.subr.mxu0 0.0
        %1923 = vmatpush1.msra.mxu0 %v1570
        %1924 = vmatprep.subr.mxu0 0.0
        %1925 = vmatpush1.msra.mxu0 %v1569
        %1926 = vmatprep.subr.mxu0 0.0
        %1927 = vmatpush1.msra.mxu0 %v1568
        %1928 = vmatprep.subr.mxu0 0.0
        %1929 = vmatpush1.msra.mxu0 %v1567
        %1930 = vmatprep.subr.mxu0 0.0
        %1931 = vmatpush1.msra.mxu0 %v1566
        %1932 = vmatprep.subr.mxu0 0.0
        %1933 = vmatpush1.msra.mxu0 %v1565
        %1934 = vmatprep.subr.mxu0 0.0
        %1935 = vmatpush2.msra.mxu0 %v1596
        %1936 = vmatprep.subr.mxu0 0.0
        %1937 = vmatpush2.msra.mxu0 %v1595
        %1938 = vmatprep.subr.mxu0 0.0
        %1939 = vmatpush2.msra.mxu0 %v1594
        %1940 = vmatprep.subr.mxu0 0.0
        %1941 = vmatpush2.msra.mxu0 %v1593
        %1942 = vmatprep.subr.mxu0 0.0
        %1943 = vmatpush2.msra.mxu0 %v1592
        %1944 = vmatprep.subr.mxu0 0.0
        %1945 = vmatpush2.msra.mxu0 %v1591
        %1946 = vmatprep.subr.mxu0 0.0
        %1947 = vmatpush2.msra.mxu0 %v1590
        %1948 = vmatprep.subr.mxu0 0.0
        %1949 = vmatpush2.msra.mxu0 %v1589
        %1950 = vmatprep.subr.mxu0 0.0
        %1951 = vmatpush2.msra.mxu0 %v1588
        %1952 = vmatprep.subr.mxu0 0.0
        %1953 = vmatpush2.msra.mxu0 %v1587
        %1954 = vmatprep.subr.mxu0 0.0
        %1955 = vmatpush2.msra.mxu0 %v1586
        %1956 = vmatprep.subr.mxu0 0.0
        %1957 = vmatpush2.msra.mxu0 %v1585
        %1958 = vmatprep.subr.mxu0 0.0
        %1959 = vmatpush2.msra.mxu0 %v1584
        %1960 = vmatprep.subr.mxu0 0.0
        %1961 = vmatpush2.msra.mxu0 %v1583
        %1962 = vmatprep.subr.mxu0 0.0
        %1963 = vmatpush2.msra.mxu0 %v1582
        %1964 = vmatprep.subr.mxu0 0.0
        %1965 = vmatpush2.msra.mxu0 %v1581
        %1966 = vmatprep.mubr.f32.mxu0 %v1248
        %1967 = vmatmul.mubr.f32.gmra.mxu0 %v1247
        %v1968 = vpop.f32.mrf.mxu0
        %v1969 = vadd.f32 %v1744, %v1968
        %v1970 = vpop.f32.mrf.mxu0
        %1971 = vmatprep.mubr.f32.mxu0 %v1257
        %1972 = vmatmul.mubr.f32.gmra.mxu0 %v1256
        %v1973 = vpop.f32.mrf.mxu0
        %v1974 = vadd.f32 %v1749, %v1973
        %v1975 = vpop.f32.mrf.mxu0
        %1976 = vmatprep.mubr.f32.mxu0 %v1266
        %1977 = vmatmul.mubr.f32.gmra.mxu0 %v1265
        %v1978 = vpop.f32.mrf.mxu0
        %v1979 = vadd.f32 %v1754, %v1978
        %v1980 = vpop.f32.mrf.mxu0
        %1981 = vmatprep.mubr.f32.mxu0 %v1275
        %1982 = vmatmul.mubr.f32.gmra.mxu0 %v1274
        %v1983 = vpop.f32.mrf.mxu0
        %v1984 = vadd.f32 %v1759, %v1983
        %v1985 = vpop.f32.mrf.mxu0
        %1986 = vmatprep.mubr.f32.mxu0 %v1284
        %1987 = vmatmul.mubr.f32.gmra.mxu0 %v1283
        %v1988 = vpop.f32.mrf.mxu0
        %v1989 = vadd.f32 %v1764, %v1988
        %v1990 = vpop.f32.mrf.mxu0
        %1991 = vmatprep.mubr.f32.mxu0 %v1293
        %1992 = vmatmul.mubr.f32.gmra.mxu0 %v1292
        %v1993 = vpop.f32.mrf.mxu0
        %v1994 = vadd.f32 %v1769, %v1993
        %v1995 = vpop.f32.mrf.mxu0
        %1996 = vmatprep.mubr.f32.mxu0 %v1302
        %1997 = vmatmul.mubr.f32.gmra.mxu0 %v1301
        %v1998 = vpop.f32.mrf.mxu0
        %v1999 = vadd.f32 %v1774, %v1998
        %v2000 = vpop.f32.mrf.mxu0
        %2001 = vmatprep.mubr.f32.mxu0 %v1311
        %2002 = vmatmul.mubr.f32.gmra.mxu0 %v1310
        %v2003 = vpop.f32.mrf.mxu0
        %v2004 = vadd.f32 %v1779, %v2003
        %v2005 = vpop.f32.mrf.mxu0
        %2006 = vmatprep.mubr.f32.mxu0 %v1320
        %2007 = vmatmul.mubr.f32.gmra.mxu0 %v1319
        %v2008 = vpop.f32.mrf.mxu0
        %v2009 = vadd.f32 %v1784, %v2008
        %v2010 = vpop.f32.mrf.mxu0
        %2011 = vmatprep.mubr.f32.mxu0 %v1329
        %2012 = vmatmul.mubr.f32.gmra.mxu0 %v1328
        %v2013 = vpop.f32.mrf.mxu0
        %v2014 = vadd.f32 %v1789, %v2013
        %v2015 = vpop.f32.mrf.mxu0
        %2016 = vmatprep.mubr.f32.mxu0 %v1338
        %2017 = vmatmul.mubr.f32.gmra.mxu0 %v1337
        %v2018 = vpop.f32.mrf.mxu0
        %v2019 = vadd.f32 %v1794, %v2018
        %v2020 = vpop.f32.mrf.mxu0
        %2021 = vmatprep.mubr.f32.mxu0 %v1347
        %2022 = vmatmul.mubr.f32.gmra.mxu0 %v1346
        %v2023 = vpop.f32.mrf.mxu0
        %v2024 = vadd.f32 %v1799, %v2023
        %v2025 = vpop.f32.mrf.mxu0
        %2026 = vmatprep.mubr.f32.mxu0 %v1356
        %2027 = vmatmul.mubr.f32.gmra.mxu0 %v1355
        %v2028 = vpop.f32.mrf.mxu0
        %v2029 = vadd.f32 %v1804, %v2028
        %v2030 = vpop.f32.mrf.mxu0
        %2031 = vmatprep.mubr.f32.mxu0 %v1365
        %2032 = vmatmul.mubr.f32.gmra.mxu0 %v1364
        %v2033 = vpop.f32.mrf.mxu0
        %v2034 = vadd.f32 %v1809, %v2033
        %v2035 = vpop.f32.mrf.mxu0
        %2036 = vmatprep.mubr.f32.mxu0 %v1374
        %2037 = vmatmul.mubr.f32.gmra.mxu0 %v1373
        %v2038 = vpop.f32.mrf.mxu0
        %v2039 = vadd.f32 %v1814, %v2038
        %v2040 = vpop.f32.mrf.mxu0
        %2041 = vmatprep.mubr.f32.mxu0 %v1383
        %2042 = vmatmul.mubr.f32.gmra.mxu0 %v1382
        %v2043 = vpop.f32.mrf.mxu0
        %v2044 = vadd.f32 %v1819, %v2043
        %v2045 = vpop.f32.mrf.mxu0
        %2046 = vmatprep.mubr.f32.mxu0 %v1392
        %2047 = vmatmul.mubr.f32.gmra.mxu0 %v1391
        %v2048 = vpop.f32.mrf.mxu0
        %v2049 = vadd.f32 %v1824, %v2048
        %v2050 = vpop.f32.mrf.mxu0
        %2051 = vmatprep.mubr.f32.mxu0 %v1401
        %2052 = vmatmul.mubr.f32.gmra.mxu0 %v1400
        %v2053 = vpop.f32.mrf.mxu0
        %v2054 = vadd.f32 %v1829, %v2053
        %v2055 = vpop.f32.mrf.mxu0
        %2056 = vmatprep.mubr.f32.mxu0 %v1410
        %2057 = vmatmul.mubr.f32.gmra.mxu0 %v1409
        %v2058 = vpop.f32.mrf.mxu0
        %v2059 = vadd.f32 %v1834, %v2058
        %v2060 = vpop.f32.mrf.mxu0
        %2061 = vmatprep.mubr.f32.mxu0 %v1419
        %2062 = vmatmul.mubr.f32.gmra.mxu0 %v1418
        %v2063 = vpop.f32.mrf.mxu0
        %v2064 = vadd.f32 %v1839, %v2063
        %v2065 = vpop.f32.mrf.mxu0
        %2066 = vmatprep.mubr.f32.mxu0 %v1428
        %2067 = vmatmul.mubr.f32.gmra.mxu0 %v1427
        %v2068 = vpop.f32.mrf.mxu0
        %v2069 = vadd.f32 %v1844, %v2068
        %v2070 = vpop.f32.mrf.mxu0
        %2071 = vmatprep.mubr.f32.mxu0 %v1437
        %2072 = vmatmul.mubr.f32.gmra.mxu0 %v1436
        %v2073 = vpop.f32.mrf.mxu0
        %v2074 = vadd.f32 %v1849, %v2073
        %v2075 = vpop.f32.mrf.mxu0
        %2076 = vmatprep.mubr.f32.mxu0 %v1446
        %2077 = vmatmul.mubr.f32.gmra.mxu0 %v1445
        %v2078 = vpop.f32.mrf.mxu0
        %v2079 = vadd.f32 %v1854, %v2078
        %v2080 = vpop.f32.mrf.mxu0
        %2081 = vmatprep.mubr.f32.mxu0 %v1455
        %2082 = vmatmul.mubr.f32.gmra.mxu0 %v1454
        %v2083 = vpop.f32.mrf.mxu0
        %v2084 = vadd.f32 %v1859, %v2083
        %v2085 = vpop.f32.mrf.mxu0
        %2086 = vmatprep.mubr.f32.mxu0 %v1464
        %2087 = vmatmul.mubr.f32.gmra.mxu0 %v1463
        %v2088 = vpop.f32.mrf.mxu0
        %v2089 = vadd.f32 %v1864, %v2088
        %v2090 = vpop.f32.mrf.mxu0
        %2091 = vmatprep.mubr.f32.mxu0 %v1473
        %2092 = vmatmul.mubr.f32.gmra.mxu0 %v1472
        %v2093 = vpop.f32.mrf.mxu0
        %v2094 = vadd.f32 %v1869, %v2093
        %v2095 = vpop.f32.mrf.mxu0
        %2096 = vmatprep.mubr.f32.mxu0 %v1482
        %2097 = vmatmul.mubr.f32.gmra.mxu0 %v1481
        %v2098 = vpop.f32.mrf.mxu0
        %v2099 = vadd.f32 %v1874, %v2098
        %v2100 = vpop.f32.mrf.mxu0
        %2101 = vmatprep.mubr.f32.mxu0 %v1491
        %2102 = vmatmul.mubr.f32.gmra.mxu0 %v1490
        %v2103 = vpop.f32.mrf.mxu0
        %v2104 = vadd.f32 %v1879, %v2103
        %v2105 = vpop.f32.mrf.mxu0
        %2106 = vmatprep.mubr.f32.mxu0 %v1500
        %2107 = vmatmul.mubr.f32.gmra.mxu0 %v1499
        %v2108 = vpop.f32.mrf.mxu0
        %v2109 = vadd.f32 %v1884, %v2108
        %v2110 = vpop.f32.mrf.mxu0
        %2111 = vmatprep.mubr.f32.mxu0 %v1509
        %2112 = vmatmul.mubr.f32.gmra.mxu0 %v1508
        %v2113 = vpop.f32.mrf.mxu0
        %v2114 = vadd.f32 %v1889, %v2113
        %v2115 = vpop.f32.mrf.mxu0
        %2116 = vmatprep.mubr.f32.mxu0 %v1518
        %2117 = vmatmul.mubr.f32.gmra.mxu0 %v1517
        %v2118 = vpop.f32.mrf.mxu0
        %v2119 = vadd.f32 %v1894, %v2118
        %v2120 = vpop.f32.mrf.mxu0
        %2121 = vmatprep.mubr.f32.mxu0 %v1527
        %2122 = vmatmul.mubr.f32.gmra.mxu0 %v1526
        %v2123 = vpop.f32.mrf.mxu0
        %v2124 = vadd.f32 %v1899, %v2123
        %v2125 = vpop.f32.mrf.mxu0
        %2126 = vdwg.mxu0
        %2127 = vmatprep.subr.mxu0 0.0
        %2128 = vmatpush1.msra.mxu0 %v1612
        %2129 = vmatprep.subr.mxu0 0.0
        %2130 = vmatpush1.msra.mxu0 %v1611
        %2131 = vmatprep.subr.mxu0 0.0
        %2132 = vmatpush1.msra.mxu0 %v1610
        %2133 = vmatprep.subr.mxu0 0.0
        %2134 = vmatpush1.msra.mxu0 %v1609
        %2135 = vmatprep.subr.mxu0 0.0
        %2136 = vmatpush1.msra.mxu0 %v1608
        %2137 = vmatprep.subr.mxu0 0.0
        %2138 = vmatpush1.msra.mxu0 %v1607
        %2139 = vmatprep.subr.mxu0 0.0
        %2140 = vmatpush1.msra.mxu0 %v1606
        %2141 = vmatprep.subr.mxu0 0.0
        %2142 = vmatpush1.msra.mxu0 %v1605
        %2143 = vmatprep.subr.mxu0 0.0
        %2144 = vmatpush1.msra.mxu0 %v1604
        %2145 = vmatprep.subr.mxu0 0.0
        %2146 = vmatpush1.msra.mxu0 %v1603
        %2147 = vmatprep.subr.mxu0 0.0
        %2148 = vmatpush1.msra.mxu0 %v1602
        %2149 = vmatprep.subr.mxu0 0.0
        %2150 = vmatpush1.msra.mxu0 %v1601
        %2151 = vmatprep.subr.mxu0 0.0
        %2152 = vmatpush1.msra.mxu0 %v1600
        %2153 = vmatprep.subr.mxu0 0.0
        %2154 = vmatpush1.msra.mxu0 %v1599
        %2155 = vmatprep.subr.mxu0 0.0
        %2156 = vmatpush1.msra.mxu0 %v1598
        %2157 = vmatprep.subr.mxu0 0.0
        %2158 = vmatpush1.msra.mxu0 %v1597
        %2159 = vmatprep.subr.mxu0 0.0
        %2160 = vmatpush2.msra.mxu0 %v1628
        %2161 = vmatprep.subr.mxu0 0.0
        %2162 = vmatpush2.msra.mxu0 %v1627
        %2163 = vmatprep.subr.mxu0 0.0
        %2164 = vmatpush2.msra.mxu0 %v1626
        %2165 = vmatprep.subr.mxu0 0.0
        %2166 = vmatpush2.msra.mxu0 %v1625
        %2167 = vmatprep.subr.mxu0 0.0
        %2168 = vmatpush2.msra.mxu0 %v1624
        %2169 = vmatprep.subr.mxu0 0.0
        %2170 = vmatpush2.msra.mxu0 %v1623
        %2171 = vmatprep.subr.mxu0 0.0
        %2172 = vmatpush2.msra.mxu0 %v1622
        %2173 = vmatprep.subr.mxu0 0.0
        %2174 = vmatpush2.msra.mxu0 %v1621
        %2175 = vmatprep.subr.mxu0 0.0
        %2176 = vmatpush2.msra.mxu0 %v1620
        %2177 = vmatprep.subr.mxu0 0.0
        %2178 = vmatpush2.msra.mxu0 %v1619
        %2179 = vmatprep.subr.mxu0 0.0
        %2180 = vmatpush2.msra.mxu0 %v1618
        %2181 = vmatprep.subr.mxu0 0.0
        %2182 = vmatpush2.msra.mxu0 %v1617
        %2183 = vmatprep.subr.mxu0 0.0
        %2184 = vmatpush2.msra.mxu0 %v1616
        %2185 = vmatprep.subr.mxu0 0.0
        %2186 = vmatpush2.msra.mxu0 %v1615
        %2187 = vmatprep.subr.mxu0 0.0
        %2188 = vmatpush2.msra.mxu0 %v1614
        %2189 = vmatprep.subr.mxu0 0.0
        %2190 = vmatpush2.msra.mxu0 %v1613
        %2191 = vmatprep.mubr.f32.mxu0 %v1250
        %2192 = vmatmul.mubr.f32.gmra.mxu0 %v1249
        %v2193 = vpop.f32.mrf.mxu0
        %v2194 = vadd.f32 %v1969, %v2193
        %v2195 = vpop.f32.mrf.mxu0
        %2196 = vmatprep.mubr.f32.mxu0 %v1259
        %2197 = vmatmul.mubr.f32.gmra.mxu0 %v1258
        %v2198 = vpop.f32.mrf.mxu0
        %v2199 = vadd.f32 %v1974, %v2198
        %v2200 = vpop.f32.mrf.mxu0
        %2201 = vmatprep.mubr.f32.mxu0 %v1268
        %2202 = vmatmul.mubr.f32.gmra.mxu0 %v1267
        %v2203 = vpop.f32.mrf.mxu0
        %v2204 = vadd.f32 %v1979, %v2203
        %v2205 = vpop.f32.mrf.mxu0
        %2206 = vmatprep.mubr.f32.mxu0 %v1277
        %2207 = vmatmul.mubr.f32.gmra.mxu0 %v1276
        %v2208 = vpop.f32.mrf.mxu0
        %v2209 = vadd.f32 %v1984, %v2208
        %v2210 = vpop.f32.mrf.mxu0
        %2211 = vmatprep.mubr.f32.mxu0 %v1286
        %2212 = vmatmul.mubr.f32.gmra.mxu0 %v1285
        %v2213 = vpop.f32.mrf.mxu0
        %v2214 = vadd.f32 %v1989, %v2213
        %v2215 = vpop.f32.mrf.mxu0
        %2216 = vmatprep.mubr.f32.mxu0 %v1295
        %2217 = vmatmul.mubr.f32.gmra.mxu0 %v1294
        %v2218 = vpop.f32.mrf.mxu0
        %v2219 = vadd.f32 %v1994, %v2218
        %v2220 = vpop.f32.mrf.mxu0
        %2221 = vmatprep.mubr.f32.mxu0 %v1304
        %2222 = vmatmul.mubr.f32.gmra.mxu0 %v1303
        %v2223 = vpop.f32.mrf.mxu0
        %v2224 = vadd.f32 %v1999, %v2223
        %v2225 = vpop.f32.mrf.mxu0
        %2226 = vmatprep.mubr.f32.mxu0 %v1313
        %2227 = vmatmul.mubr.f32.gmra.mxu0 %v1312
        %v2228 = vpop.f32.mrf.mxu0
        %v2229 = vadd.f32 %v2004, %v2228
        %v2230 = vpop.f32.mrf.mxu0
        %2231 = vmatprep.mubr.f32.mxu0 %v1322
        %2232 = vmatmul.mubr.f32.gmra.mxu0 %v1321
        %v2233 = vpop.f32.mrf.mxu0
        %v2234 = vadd.f32 %v2009, %v2233
        %v2235 = vpop.f32.mrf.mxu0
        %2236 = vmatprep.mubr.f32.mxu0 %v1331
        %2237 = vmatmul.mubr.f32.gmra.mxu0 %v1330
        %v2238 = vpop.f32.mrf.mxu0
        %v2239 = vadd.f32 %v2014, %v2238
        %v2240 = vpop.f32.mrf.mxu0
        %2241 = vmatprep.mubr.f32.mxu0 %v1340
        %2242 = vmatmul.mubr.f32.gmra.mxu0 %v1339
        %v2243 = vpop.f32.mrf.mxu0
        %v2244 = vadd.f32 %v2019, %v2243
        %v2245 = vpop.f32.mrf.mxu0
        %2246 = vmatprep.mubr.f32.mxu0 %v1349
        %2247 = vmatmul.mubr.f32.gmra.mxu0 %v1348
        %v2248 = vpop.f32.mrf.mxu0
        %v2249 = vadd.f32 %v2024, %v2248
        %v2250 = vpop.f32.mrf.mxu0
        %2251 = vmatprep.mubr.f32.mxu0 %v1358
        %2252 = vmatmul.mubr.f32.gmra.mxu0 %v1357
        %v2253 = vpop.f32.mrf.mxu0
        %v2254 = vadd.f32 %v2029, %v2253
        %v2255 = vpop.f32.mrf.mxu0
        %2256 = vmatprep.mubr.f32.mxu0 %v1367
        %2257 = vmatmul.mubr.f32.gmra.mxu0 %v1366
        %v2258 = vpop.f32.mrf.mxu0
        %v2259 = vadd.f32 %v2034, %v2258
        %v2260 = vpop.f32.mrf.mxu0
        %2261 = vmatprep.mubr.f32.mxu0 %v1376
        %2262 = vmatmul.mubr.f32.gmra.mxu0 %v1375
        %v2263 = vpop.f32.mrf.mxu0
        %v2264 = vadd.f32 %v2039, %v2263
        %v2265 = vpop.f32.mrf.mxu0
        %2266 = vmatprep.mubr.f32.mxu0 %v1385
        %2267 = vmatmul.mubr.f32.gmra.mxu0 %v1384
        %v2268 = vpop.f32.mrf.mxu0
        %v2269 = vadd.f32 %v2044, %v2268
        %v2270 = vpop.f32.mrf.mxu0
        %2271 = vmatprep.mubr.f32.mxu0 %v1394
        %2272 = vmatmul.mubr.f32.gmra.mxu0 %v1393
        %v2273 = vpop.f32.mrf.mxu0
        %v2274 = vadd.f32 %v2049, %v2273
        %v2275 = vpop.f32.mrf.mxu0
        %2276 = vmatprep.mubr.f32.mxu0 %v1403
        %2277 = vmatmul.mubr.f32.gmra.mxu0 %v1402
        %v2278 = vpop.f32.mrf.mxu0
        %v2279 = vadd.f32 %v2054, %v2278
        %v2280 = vpop.f32.mrf.mxu0
        %2281 = vmatprep.mubr.f32.mxu0 %v1412
        %2282 = vmatmul.mubr.f32.gmra.mxu0 %v1411
        %v2283 = vpop.f32.mrf.mxu0
        %v2284 = vadd.f32 %v2059, %v2283
        %v2285 = vpop.f32.mrf.mxu0
        %2286 = vmatprep.mubr.f32.mxu0 %v1421
        %2287 = vmatmul.mubr.f32.gmra.mxu0 %v1420
        %v2288 = vpop.f32.mrf.mxu0
        %v2289 = vadd.f32 %v2064, %v2288
        %v2290 = vpop.f32.mrf.mxu0
        %2291 = vmatprep.mubr.f32.mxu0 %v1430
        %2292 = vmatmul.mubr.f32.gmra.mxu0 %v1429
        %v2293 = vpop.f32.mrf.mxu0
        %v2294 = vadd.f32 %v2069, %v2293
        %v2295 = vpop.f32.mrf.mxu0
        %2296 = vmatprep.mubr.f32.mxu0 %v1439
        %2297 = vmatmul.mubr.f32.gmra.mxu0 %v1438
        %v2298 = vpop.f32.mrf.mxu0
        %v2299 = vadd.f32 %v2074, %v2298
        %v2300 = vpop.f32.mrf.mxu0
        %2301 = vmatprep.mubr.f32.mxu0 %v1448
        %2302 = vmatmul.mubr.f32.gmra.mxu0 %v1447
        %v2303 = vpop.f32.mrf.mxu0
        %v2304 = vadd.f32 %v2079, %v2303
        %v2305 = vpop.f32.mrf.mxu0
        %2306 = vmatprep.mubr.f32.mxu0 %v1457
        %2307 = vmatmul.mubr.f32.gmra.mxu0 %v1456
        %v2308 = vpop.f32.mrf.mxu0
        %v2309 = vadd.f32 %v2084, %v2308
        %v2310 = vpop.f32.mrf.mxu0
        %2311 = vmatprep.mubr.f32.mxu0 %v1466
        %2312 = vmatmul.mubr.f32.gmra.mxu0 %v1465
        %v2313 = vpop.f32.mrf.mxu0
        %v2314 = vadd.f32 %v2089, %v2313
        %v2315 = vpop.f32.mrf.mxu0
        %2316 = vmatprep.mubr.f32.mxu0 %v1475
        %2317 = vmatmul.mubr.f32.gmra.mxu0 %v1474
        %v2318 = vpop.f32.mrf.mxu0
        %v2319 = vadd.f32 %v2094, %v2318
        %v2320 = vpop.f32.mrf.mxu0
        %2321 = vmatprep.mubr.f32.mxu0 %v1484
        %2322 = vmatmul.mubr.f32.gmra.mxu0 %v1483
        %v2323 = vpop.f32.mrf.mxu0
        %v2324 = vadd.f32 %v2099, %v2323
        %v2325 = vpop.f32.mrf.mxu0
        %2326 = vmatprep.mubr.f32.mxu0 %v1493
        %2327 = vmatmul.mubr.f32.gmra.mxu0 %v1492
        %v2328 = vpop.f32.mrf.mxu0
        %v2329 = vadd.f32 %v2104, %v2328
        %v2330 = vpop.f32.mrf.mxu0
        %2331 = vmatprep.mubr.f32.mxu0 %v1502
        %2332 = vmatmul.mubr.f32.gmra.mxu0 %v1501
        %v2333 = vpop.f32.mrf.mxu0
        %v2334 = vadd.f32 %v2109, %v2333
        %v2335 = vpop.f32.mrf.mxu0
        %2336 = vmatprep.mubr.f32.mxu0 %v1511
        %2337 = vmatmul.mubr.f32.gmra.mxu0 %v1510
        %v2338 = vpop.f32.mrf.mxu0
        %v2339 = vadd.f32 %v2114, %v2338
        %v2340 = vpop.f32.mrf.mxu0
        %2341 = vmatprep.mubr.f32.mxu0 %v1520
        %2342 = vmatmul.mubr.f32.gmra.mxu0 %v1519
        %v2343 = vpop.f32.mrf.mxu0
        %v2344 = vadd.f32 %v2119, %v2343
        %v2345 = vpop.f32.mrf.mxu0
        %2346 = vmatprep.mubr.f32.mxu0 %v1529
        %2347 = vmatmul.mubr.f32.gmra.mxu0 %v1528
        %v2348 = vpop.f32.mrf.mxu0
        %v2349 = vadd.f32 %v2124, %v2348
        %v2350 = vpop.f32.mrf.mxu0
        %2351 = vdwg.mxu0
        %2352 = vmatprep.subr.mxu0 0.0
        %2353 = vmatpush1.msra.mxu0 %v1644
        %2354 = vmatprep.subr.mxu0 0.0
        %2355 = vmatpush1.msra.mxu0 %v1643
        %2356 = vmatprep.subr.mxu0 0.0
        %2357 = vmatpush1.msra.mxu0 %v1642
        %2358 = vmatprep.subr.mxu0 0.0
        %2359 = vmatpush1.msra.mxu0 %v1641
        %2360 = vmatprep.subr.mxu0 0.0
        %2361 = vmatpush1.msra.mxu0 %v1640
        %2362 = vmatprep.subr.mxu0 0.0
        %2363 = vmatpush1.msra.mxu0 %v1639
        %2364 = vmatprep.subr.mxu0 0.0
        %2365 = vmatpush1.msra.mxu0 %v1638
        %2366 = vmatprep.subr.mxu0 0.0
        %2367 = vmatpush1.msra.mxu0 %v1637
        %2368 = vmatprep.subr.mxu0 0.0
        %2369 = vmatpush1.msra.mxu0 %v1636
        %2370 = vmatprep.subr.mxu0 0.0
        %2371 = vmatpush1.msra.mxu0 %v1635
        %2372 = vmatprep.subr.mxu0 0.0
        %2373 = vmatpush1.msra.mxu0 %v1634
        %2374 = vmatprep.subr.mxu0 0.0
        %2375 = vmatpush1.msra.mxu0 %v1633
        %2376 = vmatprep.subr.mxu0 0.0
        %2377 = vmatpush1.msra.mxu0 %v1632
        %2378 = vmatprep.subr.mxu0 0.0
        %2379 = vmatpush1.msra.mxu0 %v1631
        %2380 = vmatprep.subr.mxu0 0.0
        %2381 = vmatpush1.msra.mxu0 %v1630
        %2382 = vmatprep.subr.mxu0 0.0
        %2383 = vmatpush1.msra.mxu0 %v1629
        %2384 = vmatprep.subr.mxu0 0.0
        %2385 = vmatpush2.msra.mxu0 %v1660
        %2386 = vmatprep.subr.mxu0 0.0
        %2387 = vmatpush2.msra.mxu0 %v1659
        %2388 = vmatprep.subr.mxu0 0.0
        %2389 = vmatpush2.msra.mxu0 %v1658
        %2390 = vmatprep.subr.mxu0 0.0
        %2391 = vmatpush2.msra.mxu0 %v1657
        %2392 = vmatprep.subr.mxu0 0.0
        %2393 = vmatpush2.msra.mxu0 %v1656
        %2394 = vmatprep.subr.mxu0 0.0
        %2395 = vmatpush2.msra.mxu0 %v1655
        %2396 = vmatprep.subr.mxu0 0.0
        %2397 = vmatpush2.msra.mxu0 %v1654
        %2398 = vmatprep.subr.mxu0 0.0
        %2399 = vmatpush2.msra.mxu0 %v1653
        %2400 = vmatprep.subr.mxu0 0.0
        %2401 = vmatpush2.msra.mxu0 %v1652
        %2402 = vmatprep.subr.mxu0 0.0
        %2403 = vmatpush2.msra.mxu0 %v1651
        %2404 = vmatprep.subr.mxu0 0.0
        %2405 = vmatpush2.msra.mxu0 %v1650
        %2406 = vmatprep.subr.mxu0 0.0
        %2407 = vmatpush2.msra.mxu0 %v1649
        %2408 = vmatprep.subr.mxu0 0.0
        %2409 = vmatpush2.msra.mxu0 %v1648
        %2410 = vmatprep.subr.mxu0 0.0
        %2411 = vmatpush2.msra.mxu0 %v1647
        %2412 = vmatprep.subr.mxu0 0.0
        %2413 = vmatpush2.msra.mxu0 %v1646
        %2414 = vmatprep.subr.mxu0 0.0
        %2415 = vmatpush2.msra.mxu0 %v1645
        %2416 = vmatprep.mubr.f32.mxu0 %v1252
        %2417 = vmatmul.mubr.f32.gmra.mxu0 %v1251
        %v2418 = vpop.f32.mrf.mxu0
        %v2419 = vadd.f32 %v2194, %v2418
        %v2420 = vpop.f32.mrf.mxu0
        %2421 = vmatprep.mubr.f32.mxu0 %v1261
        %2422 = vmatmul.mubr.f32.gmra.mxu0 %v1260
        %v2423 = vpop.f32.mrf.mxu0
        %v2424 = vadd.f32 %v2199, %v2423
        %v2425 = vpop.f32.mrf.mxu0
        %2426 = vmatprep.mubr.f32.mxu0 %v1270
        %2427 = vmatmul.mubr.f32.gmra.mxu0 %v1269
        %v2428 = vpop.f32.mrf.mxu0
        %v2429 = vadd.f32 %v2204, %v2428
        %v2430 = vpop.f32.mrf.mxu0
        %2431 = vmatprep.mubr.f32.mxu0 %v1279
        %2432 = vmatmul.mubr.f32.gmra.mxu0 %v1278
        %v2433 = vpop.f32.mrf.mxu0
        %v2434 = vadd.f32 %v2209, %v2433
        %v2435 = vpop.f32.mrf.mxu0
        %2436 = vmatprep.mubr.f32.mxu0 %v1288
        %2437 = vmatmul.mubr.f32.gmra.mxu0 %v1287
        %v2438 = vpop.f32.mrf.mxu0
        %v2439 = vadd.f32 %v2214, %v2438
        %v2440 = vpop.f32.mrf.mxu0
        %2441 = vmatprep.mubr.f32.mxu0 %v1297
        %2442 = vmatmul.mubr.f32.gmra.mxu0 %v1296
        %v2443 = vpop.f32.mrf.mxu0
        %v2444 = vadd.f32 %v2219, %v2443
        %v2445 = vpop.f32.mrf.mxu0
        %2446 = vmatprep.mubr.f32.mxu0 %v1306
        %2447 = vmatmul.mubr.f32.gmra.mxu0 %v1305
        %v2448 = vpop.f32.mrf.mxu0
        %v2449 = vadd.f32 %v2224, %v2448
        %v2450 = vpop.f32.mrf.mxu0
        %2451 = vmatprep.mubr.f32.mxu0 %v1315
        %2452 = vmatmul.mubr.f32.gmra.mxu0 %v1314
        %v2453 = vpop.f32.mrf.mxu0
        %v2454 = vadd.f32 %v2229, %v2453
        %v2455 = vpop.f32.mrf.mxu0
        %2456 = vmatprep.mubr.f32.mxu0 %v1324
        %2457 = vmatmul.mubr.f32.gmra.mxu0 %v1323
        %v2458 = vpop.f32.mrf.mxu0
        %v2459 = vadd.f32 %v2234, %v2458
        %v2460 = vpop.f32.mrf.mxu0
        %2461 = vmatprep.mubr.f32.mxu0 %v1333
        %2462 = vmatmul.mubr.f32.gmra.mxu0 %v1332
        %v2463 = vpop.f32.mrf.mxu0
        %v2464 = vadd.f32 %v2239, %v2463
        %v2465 = vpop.f32.mrf.mxu0
        %2466 = vmatprep.mubr.f32.mxu0 %v1342
        %2467 = vmatmul.mubr.f32.gmra.mxu0 %v1341
        %v2468 = vpop.f32.mrf.mxu0
        %v2469 = vadd.f32 %v2244, %v2468
        %v2470 = vpop.f32.mrf.mxu0
        %2471 = vmatprep.mubr.f32.mxu0 %v1351
        %2472 = vmatmul.mubr.f32.gmra.mxu0 %v1350
        %v2473 = vpop.f32.mrf.mxu0
        %v2474 = vadd.f32 %v2249, %v2473
        %v2475 = vpop.f32.mrf.mxu0
        %2476 = vmatprep.mubr.f32.mxu0 %v1360
        %2477 = vmatmul.mubr.f32.gmra.mxu0 %v1359
        %v2478 = vpop.f32.mrf.mxu0
        %v2479 = vadd.f32 %v2254, %v2478
        %v2480 = vpop.f32.mrf.mxu0
        %2481 = vmatprep.mubr.f32.mxu0 %v1369
        %2482 = vmatmul.mubr.f32.gmra.mxu0 %v1368
        %v2483 = vpop.f32.mrf.mxu0
        %v2484 = vadd.f32 %v2259, %v2483
        %v2485 = vpop.f32.mrf.mxu0
        %2486 = vmatprep.mubr.f32.mxu0 %v1378
        %2487 = vmatmul.mubr.f32.gmra.mxu0 %v1377
        %v2488 = vpop.f32.mrf.mxu0
        %v2489 = vadd.f32 %v2264, %v2488
        %v2490 = vpop.f32.mrf.mxu0
        %2491 = vmatprep.mubr.f32.mxu0 %v1387
        %2492 = vmatmul.mubr.f32.gmra.mxu0 %v1386
        %v2493 = vpop.f32.mrf.mxu0
        %v2494 = vadd.f32 %v2269, %v2493
        %v2495 = vpop.f32.mrf.mxu0
        %2496 = vmatprep.mubr.f32.mxu0 %v1396
        %2497 = vmatmul.mubr.f32.gmra.mxu0 %v1395
        %v2498 = vpop.f32.mrf.mxu0
        %v2499 = vadd.f32 %v2274, %v2498
        %v2500 = vpop.f32.mrf.mxu0
        %2501 = vmatprep.mubr.f32.mxu0 %v1405
        %2502 = vmatmul.mubr.f32.gmra.mxu0 %v1404
        %v2503 = vpop.f32.mrf.mxu0
        %v2504 = vadd.f32 %v2279, %v2503
        %v2505 = vpop.f32.mrf.mxu0
        %2506 = vmatprep.mubr.f32.mxu0 %v1414
        %2507 = vmatmul.mubr.f32.gmra.mxu0 %v1413
        %v2508 = vpop.f32.mrf.mxu0
        %v2509 = vadd.f32 %v2284, %v2508
        %v2510 = vpop.f32.mrf.mxu0
        %2511 = vmatprep.mubr.f32.mxu0 %v1423
        %2512 = vmatmul.mubr.f32.gmra.mxu0 %v1422
        %v2513 = vpop.f32.mrf.mxu0
        %v2514 = vadd.f32 %v2289, %v2513
        %v2515 = vpop.f32.mrf.mxu0
        %2516 = vmatprep.mubr.f32.mxu0 %v1432
        %2517 = vmatmul.mubr.f32.gmra.mxu0 %v1431
        %v2518 = vpop.f32.mrf.mxu0
        %v2519 = vadd.f32 %v2294, %v2518
        %v2520 = vpop.f32.mrf.mxu0
        %2521 = vmatprep.mubr.f32.mxu0 %v1441
        %2522 = vmatmul.mubr.f32.gmra.mxu0 %v1440
        %v2523 = vpop.f32.mrf.mxu0
        %v2524 = vadd.f32 %v2299, %v2523
        %v2525 = vpop.f32.mrf.mxu0
        %2526 = vmatprep.mubr.f32.mxu0 %v1450
        %2527 = vmatmul.mubr.f32.gmra.mxu0 %v1449
        %v2528 = vpop.f32.mrf.mxu0
        %v2529 = vadd.f32 %v2304, %v2528
        %v2530 = vpop.f32.mrf.mxu0
        %2531 = vmatprep.mubr.f32.mxu0 %v1459
        %2532 = vmatmul.mubr.f32.gmra.mxu0 %v1458
        %v2533 = vpop.f32.mrf.mxu0
        %v2534 = vadd.f32 %v2309, %v2533
        %v2535 = vpop.f32.mrf.mxu0
        %2536 = vmatprep.mubr.f32.mxu0 %v1468
        %2537 = vmatmul.mubr.f32.gmra.mxu0 %v1467
        %v2538 = vpop.f32.mrf.mxu0
        %v2539 = vadd.f32 %v2314, %v2538
        %v2540 = vpop.f32.mrf.mxu0
        %2541 = vmatprep.mubr.f32.mxu0 %v1477
        %2542 = vmatmul.mubr.f32.gmra.mxu0 %v1476
        %v2543 = vpop.f32.mrf.mxu0
        %v2544 = vadd.f32 %v2319, %v2543
        %v2545 = vpop.f32.mrf.mxu0
        %2546 = vmatprep.mubr.f32.mxu0 %v1486
        %2547 = vmatmul.mubr.f32.gmra.mxu0 %v1485
        %v2548 = vpop.f32.mrf.mxu0
        %v2549 = vadd.f32 %v2324, %v2548
        %v2550 = vpop.f32.mrf.mxu0
        %2551 = vmatprep.mubr.f32.mxu0 %v1495
        %2552 = vmatmul.mubr.f32.gmra.mxu0 %v1494
        %v2553 = vpop.f32.mrf.mxu0
        %v2554 = vadd.f32 %v2329, %v2553
        %v2555 = vpop.f32.mrf.mxu0
        %2556 = vmatprep.mubr.f32.mxu0 %v1504
        %2557 = vmatmul.mubr.f32.gmra.mxu0 %v1503
        %v2558 = vpop.f32.mrf.mxu0
        %v2559 = vadd.f32 %v2334, %v2558
        %v2560 = vpop.f32.mrf.mxu0
        %2561 = vmatprep.mubr.f32.mxu0 %v1513
        %2562 = vmatmul.mubr.f32.gmra.mxu0 %v1512
        %v2563 = vpop.f32.mrf.mxu0
        %v2564 = vadd.f32 %v2339, %v2563
        %v2565 = vpop.f32.mrf.mxu0
        %2566 = vmatprep.mubr.f32.mxu0 %v1522
        %2567 = vmatmul.mubr.f32.gmra.mxu0 %v1521
        %v2568 = vpop.f32.mrf.mxu0
        %v2569 = vadd.f32 %v2344, %v2568
        %v2570 = vpop.f32.mrf.mxu0
        %2571 = vmatprep.mubr.f32.mxu0 %v1531
        %2572 = vmatmul.mubr.f32.gmra.mxu0 %v1530
        %v2573 = vpop.f32.mrf.mxu0
        %v2574 = vadd.f32 %v2349, %v2573
        %v2575 = vpop.f32.mrf.mxu0
        %2576 = vdwg.mxu0
        %2577 = vmatprep.subr.mxu0 0.0
        %2578 = vmatpush1.msra.mxu0 %v1676
        %2579 = vmatprep.subr.mxu0 0.0
        %2580 = vmatpush1.msra.mxu0 %v1675
        %2581 = vmatprep.subr.mxu0 0.0
        %2582 = vmatpush1.msra.mxu0 %v1674
        %2583 = vmatprep.subr.mxu0 0.0
        %2584 = vmatpush1.msra.mxu0 %v1673
        %2585 = vmatprep.subr.mxu0 0.0
        %2586 = vmatpush1.msra.mxu0 %v1672
        %2587 = vmatprep.subr.mxu0 0.0
        %2588 = vmatpush1.msra.mxu0 %v1671
        %2589 = vmatprep.subr.mxu0 0.0
        %2590 = vmatpush1.msra.mxu0 %v1670
        %2591 = vmatprep.subr.mxu0 0.0
        %2592 = vmatpush1.msra.mxu0 %v1669
        %2593 = vmatprep.subr.mxu0 0.0
        %2594 = vmatpush1.msra.mxu0 %v1668
        %2595 = vmatprep.subr.mxu0 0.0
        %2596 = vmatpush1.msra.mxu0 %v1667
        %2597 = vmatprep.subr.mxu0 0.0
        %2598 = vmatpush1.msra.mxu0 %v1666
        %2599 = vmatprep.subr.mxu0 0.0
        %2600 = vmatpush1.msra.mxu0 %v1665
        %2601 = vmatprep.subr.mxu0 0.0
        %2602 = vmatpush1.msra.mxu0 %v1664
        %2603 = vmatprep.subr.mxu0 0.0
        %2604 = vmatpush1.msra.mxu0 %v1663
        %2605 = vmatprep.subr.mxu0 0.0
        %2606 = vmatpush1.msra.mxu0 %v1662
        %2607 = vmatprep.subr.mxu0 0.0
        %2608 = vmatpush1.msra.mxu0 %v1661
        %2609 = vmatprep.subr.mxu0 0.0
        %2610 = vmatpush2.msra.mxu0 0.0
        %2611 = vmatprep.subr.mxu0 0.0
        %2612 = vmatpush2.msra.mxu0 0.0
        %2613 = vmatprep.subr.mxu0 0.0
        %2614 = vmatpush2.msra.mxu0 0.0
        %2615 = vmatprep.subr.mxu0 0.0
        %2616 = vmatpush2.msra.mxu0 0.0
        %2617 = vmatprep.subr.mxu0 0.0
        %2618 = vmatpush2.msra.mxu0 0.0
        %2619 = vmatprep.subr.mxu0 0.0
        %2620 = vmatpush2.msra.mxu0 0.0
        %2621 = vmatprep.subr.mxu0 0.0
        %2622 = vmatpush2.msra.mxu0 0.0
        %2623 = vmatprep.subr.mxu0 0.0
        %2624 = vmatpush2.msra.mxu0 0.0
        %2625 = vmatprep.subr.mxu0 0.0
        %2626 = vmatpush2.msra.mxu0 0.0
        %2627 = vmatprep.subr.mxu0 0.0
        %2628 = vmatpush2.msra.mxu0 0.0
        %2629 = vmatprep.subr.mxu0 0.0
        %2630 = vmatpush2.msra.mxu0 0.0
        %2631 = vmatprep.subr.mxu0 0.0
        %2632 = vmatpush2.msra.mxu0 0.0
        %2633 = vmatprep.subr.mxu0 0.0
        %2634 = vmatpush2.msra.mxu0 0.0
        %2635 = vmatprep.subr.mxu0 0.0
        %2636 = vmatpush2.msra.mxu0 0.0
        %2637 = vmatprep.subr.mxu0 0.0
        %2638 = vmatpush2.msra.mxu0 0.0
        %2639 = vmatprep.subr.mxu0 0.0
        %2640 = vmatpush2.msra.mxu0 0.0
        %2641 = vmatprep.mubr.f32.mxu0 0.0
        %2642 = vmatmul.mubr.f32.gmra.mxu0 %v1253
        %v2643 = vpop.f32.mrf.mxu0
        %v2644 = vadd.f32 %v2419, %v2643
        %v2645 = vpop.f32.mrf.mxu0
        %2646 = vmatprep.mubr.f32.mxu0 0.0
        %2647 = vmatmul.mubr.f32.gmra.mxu0 %v1262
        %v2648 = vpop.f32.mrf.mxu0
        %v2649 = vadd.f32 %v2424, %v2648
        %v2650 = vpop.f32.mrf.mxu0
        %2651 = vmatprep.mubr.f32.mxu0 0.0
        %2652 = vmatmul.mubr.f32.gmra.mxu0 %v1271
        %v2653 = vpop.f32.mrf.mxu0
        %v2654 = vadd.f32 %v2429, %v2653
        %v2655 = vpop.f32.mrf.mxu0
        %2656 = vmatprep.mubr.f32.mxu0 0.0
        %2657 = vmatmul.mubr.f32.gmra.mxu0 %v1280
        %v2658 = vpop.f32.mrf.mxu0
        %v2659 = vadd.f32 %v2434, %v2658
        %v2660 = vpop.f32.mrf.mxu0
        %2661 = vmatprep.mubr.f32.mxu0 0.0
        %2662 = vmatmul.mubr.f32.gmra.mxu0 %v1289
        %v2663 = vpop.f32.mrf.mxu0
        %v2664 = vadd.f32 %v2439, %v2663
        %v2665 = vpop.f32.mrf.mxu0
        %2666 = vmatprep.mubr.f32.mxu0 0.0
        %2667 = vmatmul.mubr.f32.gmra.mxu0 %v1298
        %v2668 = vpop.f32.mrf.mxu0
        %v2669 = vadd.f32 %v2444, %v2668
        %v2670 = vpop.f32.mrf.mxu0
        %2671 = vmatprep.mubr.f32.mxu0 0.0
        %2672 = vmatmul.mubr.f32.gmra.mxu0 %v1307
        %v2673 = vpop.f32.mrf.mxu0
        %v2674 = vadd.f32 %v2449, %v2673
        %v2675 = vpop.f32.mrf.mxu0
        %2676 = vmatprep.mubr.f32.mxu0 0.0
        %2677 = vmatmul.mubr.f32.gmra.mxu0 %v1316
        %v2678 = vpop.f32.mrf.mxu0
        %v2679 = vadd.f32 %v2454, %v2678
        %v2680 = vpop.f32.mrf.mxu0
        %2681 = vmatprep.mubr.f32.mxu0 0.0
        %2682 = vmatmul.mubr.f32.gmra.mxu0 %v1325
        %v2683 = vpop.f32.mrf.mxu0
        %v2684 = vadd.f32 %v2459, %v2683
        %v2685 = vpop.f32.mrf.mxu0
        %2686 = vmatprep.mubr.f32.mxu0 0.0
        %2687 = vmatmul.mubr.f32.gmra.mxu0 %v1334
        %v2688 = vpop.f32.mrf.mxu0
        %v2689 = vadd.f32 %v2464, %v2688
        %v2690 = vpop.f32.mrf.mxu0
        %2691 = vmatprep.mubr.f32.mxu0 0.0
        %2692 = vmatmul.mubr.f32.gmra.mxu0 %v1343
        %v2693 = vpop.f32.mrf.mxu0
        %v2694 = vadd.f32 %v2469, %v2693
        %v2695 = vpop.f32.mrf.mxu0
        %2696 = vmatprep.mubr.f32.mxu0 0.0
        %2697 = vmatmul.mubr.f32.gmra.mxu0 %v1352
        %v2698 = vpop.f32.mrf.mxu0
        %v2699 = vadd.f32 %v2474, %v2698
        %v2700 = vpop.f32.mrf.mxu0
        %2701 = vmatprep.mubr.f32.mxu0 0.0
        %2702 = vmatmul.mubr.f32.gmra.mxu0 %v1361
        %v2703 = vpop.f32.mrf.mxu0
        %v2704 = vadd.f32 %v2479, %v2703
        %v2705 = vpop.f32.mrf.mxu0
        %2706 = vmatprep.mubr.f32.mxu0 0.0
        %2707 = vmatmul.mubr.f32.gmra.mxu0 %v1370
        %v2708 = vpop.f32.mrf.mxu0
        %v2709 = vadd.f32 %v2484, %v2708
        %v2710 = vpop.f32.mrf.mxu0
        %2711 = vmatprep.mubr.f32.mxu0 0.0
        %2712 = vmatmul.mubr.f32.gmra.mxu0 %v1379
        %v2713 = vpop.f32.mrf.mxu0
        %v2714 = vadd.f32 %v2489, %v2713
        %v2715 = vpop.f32.mrf.mxu0
        %2716 = vmatprep.mubr.f32.mxu0 0.0
        %2717 = vmatmul.mubr.f32.gmra.mxu0 %v1388
        %v2718 = vpop.f32.mrf.mxu0
        %v2719 = vadd.f32 %v2494, %v2718
        %v2720 = vpop.f32.mrf.mxu0
        %2721 = vmatprep.mubr.f32.mxu0 0.0
        %2722 = vmatmul.mubr.f32.gmra.mxu0 %v1397
        %v2723 = vpop.f32.mrf.mxu0
        %v2724 = vadd.f32 %v2499, %v2723
        %v2725 = vpop.f32.mrf.mxu0
        %2726 = vmatprep.mubr.f32.mxu0 0.0
        %2727 = vmatmul.mubr.f32.gmra.mxu0 %v1406
        %v2728 = vpop.f32.mrf.mxu0
        %v2729 = vadd.f32 %v2504, %v2728
        %v2730 = vpop.f32.mrf.mxu0
        %2731 = vmatprep.mubr.f32.mxu0 0.0
        %2732 = vmatmul.mubr.f32.gmra.mxu0 %v1415
        %v2733 = vpop.f32.mrf.mxu0
        %v2734 = vadd.f32 %v2509, %v2733
        %v2735 = vpop.f32.mrf.mxu0
        %2736 = vmatprep.mubr.f32.mxu0 0.0
        %2737 = vmatmul.mubr.f32.gmra.mxu0 %v1424
        %v2738 = vpop.f32.mrf.mxu0
        %v2739 = vadd.f32 %v2514, %v2738
        %v2740 = vpop.f32.mrf.mxu0
        %2741 = vmatprep.mubr.f32.mxu0 0.0
        %2742 = vmatmul.mubr.f32.gmra.mxu0 %v1433
        %v2743 = vpop.f32.mrf.mxu0
        %v2744 = vadd.f32 %v2519, %v2743
        %v2745 = vpop.f32.mrf.mxu0
        %2746 = vmatprep.mubr.f32.mxu0 0.0
        %2747 = vmatmul.mubr.f32.gmra.mxu0 %v1442
        %v2748 = vpop.f32.mrf.mxu0
        %v2749 = vadd.f32 %v2524, %v2748
        %v2750 = vpop.f32.mrf.mxu0
        %2751 = vmatprep.mubr.f32.mxu0 0.0
        %2752 = vmatmul.mubr.f32.gmra.mxu0 %v1451
        %v2753 = vpop.f32.mrf.mxu0
        %v2754 = vadd.f32 %v2529, %v2753
        %v2755 = vpop.f32.mrf.mxu0
        %2756 = vmatprep.mubr.f32.mxu0 0.0
        %2757 = vmatmul.mubr.f32.gmra.mxu0 %v1460
        %v2758 = vpop.f32.mrf.mxu0
        %v2759 = vadd.f32 %v2534, %v2758
        %v2760 = vpop.f32.mrf.mxu0
        %2761 = vmatprep.mubr.f32.mxu0 0.0
        %2762 = vmatmul.mubr.f32.gmra.mxu0 %v1469
        %v2763 = vpop.f32.mrf.mxu0
        %v2764 = vadd.f32 %v2539, %v2763
        %v2765 = vpop.f32.mrf.mxu0
        %2766 = vmatprep.mubr.f32.mxu0 0.0
        %2767 = vmatmul.mubr.f32.gmra.mxu0 %v1478
        %v2768 = vpop.f32.mrf.mxu0
        %v2769 = vadd.f32 %v2544, %v2768
        %v2770 = vpop.f32.mrf.mxu0
        %2771 = vmatprep.mubr.f32.mxu0 0.0
        %2772 = vmatmul.mubr.f32.gmra.mxu0 %v1487
        %v2773 = vpop.f32.mrf.mxu0
        %v2774 = vadd.f32 %v2549, %v2773
        %v2775 = vpop.f32.mrf.mxu0
        %2776 = vmatprep.mubr.f32.mxu0 0.0
        %2777 = vmatmul.mubr.f32.gmra.mxu0 %v1496
        %v2778 = vpop.f32.mrf.mxu0
        %v2779 = vadd.f32 %v2554, %v2778
        %v2780 = vpop.f32.mrf.mxu0
        %2781 = vmatprep.mubr.f32.mxu0 0.0
        %2782 = vmatmul.mubr.f32.gmra.mxu0 %v1505
        %v2783 = vpop.f32.mrf.mxu0
        %v2784 = vadd.f32 %v2559, %v2783
        %v2785 = vpop.f32.mrf.mxu0
        %2786 = vmatprep.mubr.f32.mxu0 0.0
        %2787 = vmatmul.mubr.f32.gmra.mxu0 %v1514
        %v2788 = vpop.f32.mrf.mxu0
        %v2789 = vadd.f32 %v2564, %v2788
        %v2790 = vpop.f32.mrf.mxu0
        %2791 = vmatprep.mubr.f32.mxu0 0.0
        %2792 = vmatmul.mubr.f32.gmra.mxu0 %v1523
        %v2793 = vpop.f32.mrf.mxu0
        %v2794 = vadd.f32 %v2569, %v2793
        %v2795 = vpop.f32.mrf.mxu0
        %2796 = vmatprep.mubr.f32.mxu0 0.0
        %2797 = vmatmul.mubr.f32.gmra.mxu0 %v1532
        %v2798 = vpop.f32.mrf.mxu0
        %v2799 = vadd.f32 %v2574, %v2798
        %v2800 = vpop.f32.mrf.mxu0
        %2801 = vdwg.mxu0
        %v2802 = vld [vmem:[%s2] sm:$0x1]
        %v2803 = vld [vmem:[%s3] sm:$0x1]
        %v2804 = vld [vmem:[%s4] sm:$0x1]
        %v2805 = vsel %vm223, %v2644, 0.0
        %v2806 = vsel %vm223, %v2649, 0.0
        %v2807 = vadd.f32 %v2805, %v2806
        %v2808 = vsel %vm223, %v2654, 0.0
        %v2809 = vadd.f32 %v2807, %v2808
        %v2810 = vsel %vm223, %v2659, 0.0
        %v2811 = vadd.f32 %v2809, %v2810
        %v2812 = vsel %vm223, %v2664, 0.0
        %v2813 = vadd.f32 %v2811, %v2812
        %v2814 = vsel %vm223, %v2669, 0.0
        %v2815 = vadd.f32 %v2813, %v2814
        %v2816 = vsel %vm223, %v2674, 0.0
        %v2817 = vadd.f32 %v2815, %v2816
        %v2818 = vsel %vm223, %v2679, 0.0
        %v2819 = vadd.f32 %v2817, %v2818
        %v2820 = vsel %vm223, %v2684, 0.0
        %v2821 = vadd.f32 %v2819, %v2820
        %v2822 = vsel %vm223, %v2689, 0.0
        %v2823 = vadd.f32 %v2821, %v2822
        %v2824 = vsel %vm223, %v2694, 0.0
        %v2825 = vadd.f32 %v2823, %v2824
        %v2826 = vsel %vm223, %v2699, 0.0
        %v2827 = vadd.f32 %v2825, %v2826
        %v2828 = vsel %vm223, %v2704, 0.0
        %v2829 = vadd.f32 %v2827, %v2828
        %v2830 = vsel %vm223, %v2709, 0.0
        %v2831 = vadd.f32 %v2829, %v2830
        %v2832 = vsel %vm223, %v2714, 0.0
        %v2833 = vadd.f32 %v2831, %v2832
        %v2834 = vsel %vm223, %v2719, 0.0
        %v2835 = vadd.f32 %v2833, %v2834
        %v2836 = vsel %vm223, %v2724, 0.0
        %v2837 = vadd.f32 %v2835, %v2836
        %v2838 = vsel %vm223, %v2729, 0.0
        %v2839 = vadd.f32 %v2837, %v2838
        %v2840 = vsel %vm223, %v2734, 0.0
        %v2841 = vadd.f32 %v2839, %v2840
        %v2842 = vsel %vm223, %v2739, 0.0
        %v2843 = vadd.f32 %v2841, %v2842
        %v2844 = vsel %vm223, %v2744, 0.0
        %v2845 = vadd.f32 %v2843, %v2844
        %v2846 = vsel %vm223, %v2749, 0.0
        %v2847 = vadd.f32 %v2845, %v2846
        %v2848 = vsel %vm223, %v2754, 0.0
        %v2849 = vadd.f32 %v2847, %v2848
        %v2850 = vsel %vm223, %v2759, 0.0
        %v2851 = vadd.f32 %v2849, %v2850
        %v2852 = vsel %vm223, %v2764, 0.0
        %v2853 = vadd.f32 %v2851, %v2852
        %v2854 = vsel %vm223, %v2769, 0.0
        %v2855 = vadd.f32 %v2853, %v2854
        %v2856 = vsel %vm223, %v2774, 0.0
        %v2857 = vadd.f32 %v2855, %v2856
        %v2858 = vsel %vm223, %v2779, 0.0
        %v2859 = vadd.f32 %v2857, %v2858
        %v2860 = vsel %vm223, %v2784, 0.0
        %v2861 = vadd.f32 %v2859, %v2860
        %v2862 = vsel %vm223, %v2789, 0.0
        %v2863 = vadd.f32 %v2861, %v2862
        %v2864 = vsel %vm223, %v2794, 0.0
        %v2865 = vadd.f32 %v2863, %v2864
        %v2866 = vsel %vm223, %v2799, 0.0
        %v2867 = vadd.f32 %v2865, %v2866
        %v2868 = vrot.slane %v2867, 4
        %v2869 = vadd.f32 %v2867, %v2868
        %v2870 = vrot.slane %v2869, 2
        %v2871 = vadd.f32 %v2869, %v2870
        %v2872 = vrot.slane %v2871, 1
        %v2873 = vadd.f32 %v2871, %v2872
        %v2874 = vmul.f32 %v2644, %v2644
        %v2875 = vmul.f32 %v2649, %v2649
        %v2876 = vmul.f32 %v2654, %v2654
        %v2877 = vmul.f32 %v2659, %v2659
        %v2878 = vmul.f32 %v2664, %v2664
        %v2879 = vmul.f32 %v2669, %v2669
        %v2880 = vmul.f32 %v2674, %v2674
        %v2881 = vmul.f32 %v2679, %v2679
        %v2882 = vmul.f32 %v2684, %v2684
        %v2883 = vmul.f32 %v2689, %v2689
        %v2884 = vmul.f32 %v2694, %v2694
        %v2885 = vmul.f32 %v2699, %v2699
        %v2886 = vmul.f32 %v2704, %v2704
        %v2887 = vmul.f32 %v2709, %v2709
        %v2888 = vmul.f32 %v2714, %v2714
        %v2889 = vmul.f32 %v2719, %v2719
        %v2890 = vmul.f32 %v2724, %v2724
        %v2891 = vmul.f32 %v2729, %v2729
        %v2892 = vmul.f32 %v2734, %v2734
        %v2893 = vmul.f32 %v2739, %v2739
        %v2894 = vmul.f32 %v2744, %v2744
        %v2895 = vmul.f32 %v2749, %v2749
        %v2896 = vmul.f32 %v2754, %v2754
        %v2897 = vmul.f32 %v2759, %v2759
        %v2898 = vmul.f32 %v2764, %v2764
        %v2899 = vmul.f32 %v2769, %v2769
        %v2900 = vmul.f32 %v2774, %v2774
        %v2901 = vmul.f32 %v2779, %v2779
        %v2902 = vmul.f32 %v2784, %v2784
        %v2903 = vmul.f32 %v2789, %v2789
        %v2904 = vmul.f32 %v2794, %v2794
        %v2905 = vmul.f32 %v2799, %v2799
        %v2906 = vsel %vm223, %v2874, 0.0
        %v2907 = vsel %vm223, %v2875, 0.0
        %v2908 = vadd.f32 %v2906, %v2907
        %v2909 = vsel %vm223, %v2876, 0.0
        %v2910 = vadd.f32 %v2908, %v2909
        %v2911 = vsel %vm223, %v2877, 0.0
        %v2912 = vadd.f32 %v2910, %v2911
        %v2913 = vsel %vm223, %v2878, 0.0
        %v2914 = vadd.f32 %v2912, %v2913
        %v2915 = vsel %vm223, %v2879, 0.0
        %v2916 = vadd.f32 %v2914, %v2915
        %v2917 = vsel %vm223, %v2880, 0.0
        %v2918 = vadd.f32 %v2916, %v2917
        %v2919 = vsel %vm223, %v2881, 0.0
        %v2920 = vadd.f32 %v2918, %v2919
        %v2921 = vsel %vm223, %v2882, 0.0
        %v2922 = vadd.f32 %v2920, %v2921
        %v2923 = vsel %vm223, %v2883, 0.0
        %v2924 = vadd.f32 %v2922, %v2923
        %v2925 = vsel %vm223, %v2884, 0.0
        %v2926 = vadd.f32 %v2924, %v2925
        %v2927 = vsel %vm223, %v2885, 0.0
        %v2928 = vadd.f32 %v2926, %v2927
        %v2929 = vsel %vm223, %v2886, 0.0
        %v2930 = vadd.f32 %v2928, %v2929
        %v2931 = vsel %vm223, %v2887, 0.0
        %v2932 = vadd.f32 %v2930, %v2931
        %v2933 = vsel %vm223, %v2888, 0.0
        %v2934 = vadd.f32 %v2932, %v2933
        %v2935 = vsel %vm223, %v2889, 0.0
        %v2936 = vadd.f32 %v2934, %v2935
        %v2937 = vsel %vm223, %v2890, 0.0
        %v2938 = vadd.f32 %v2936, %v2937
        %v2939 = vsel %vm223, %v2891, 0.0
        %v2940 = vadd.f32 %v2938, %v2939
        %v2941 = vsel %vm223, %v2892, 0.0
        %v2942 = vadd.f32 %v2940, %v2941
        %v2943 = vsel %vm223, %v2893, 0.0
        %v2944 = vadd.f32 %v2942, %v2943
        %v2945 = vsel %vm223, %v2894, 0.0
        %v2946 = vadd.f32 %v2944, %v2945
        %v2947 = vsel %vm223, %v2895, 0.0
        %v2948 = vadd.f32 %v2946, %v2947
        %v2949 = vsel %vm223, %v2896, 0.0
        %v2950 = vadd.f32 %v2948, %v2949
        %v2951 = vsel %vm223, %v2897, 0.0
        %v2952 = vadd.f32 %v2950, %v2951
        %v2953 = vsel %vm223, %v2898, 0.0
        %v2954 = vadd.f32 %v2952, %v2953
        %v2955 = vsel %vm223, %v2899, 0.0
        %v2956 = vadd.f32 %v2954, %v2955
        %v2957 = vsel %vm223, %v2900, 0.0
        %v2958 = vadd.f32 %v2956, %v2957
        %v2959 = vsel %vm223, %v2901, 0.0
        %v2960 = vadd.f32 %v2958, %v2959
        %v2961 = vsel %vm223, %v2902, 0.0
        %v2962 = vadd.f32 %v2960, %v2961
        %v2963 = vsel %vm223, %v2903, 0.0
        %v2964 = vadd.f32 %v2962, %v2963
        %v2965 = vsel %vm223, %v2904, 0.0
        %v2966 = vadd.f32 %v2964, %v2965
        %v2967 = vsel %vm223, %v2905, 0.0
        %v2968 = vadd.f32 %v2966, %v2967
        %v2969 = vrot.slane %v2968, 4
        %v2970 = vadd.f32 %v2968, %v2969
        %v2971 = vrot.slane %v2970, 2
        %v2972 = vadd.f32 %v2970, %v2971
        %v2973 = vrot.slane %v2972, 1
        %v2974 = vadd.f32 %v2972, %v2973
        %v2975 = vmul.f32 %v2802, 256.0
        %v2976 = vadd.f32 %v2873, %v2975
        %v2977 = vmul.f32 %v2802, 2.0
        %v2978 = vmul.f32 %v2977, %v2873
        %v2979 = vadd.f32 %v2974, %v2978
        %v2980 = vmul.f32 %v2975, %v2802
        %v2981 = vadd.f32 %v2979, %v2980
        %v2982 = vrcp.pop 256.0
        %v2983 = vmul.f32 %v2976, %v2982
        %v2984 = vmul.f32 %v2981, %v2982
        %v2985 = vmul.f32 %v2983, %v2983
        %v2986 = vsub.f32 %v2984, %v2985
        %v2987 = vmax.f32 %v2986, 0.0
        %v2988 = vadd.f32 %v2987, 1e-05
        %v2989 = vrsqrt.pop %v2988
        %v2990 = vmul.f32 %v2989, %v2803
        %v2991 = vsub.f32 %v2802, %v2983
        %v2992 = vmul.f32 %v2991, %v2990
        %v2993 = vadd.f32 %v2992, %v2804
        %v2994 = vlaneseq
        %v2995 = vshrl.u32 %v2994, 7
        %v2996 = vsub.s32 0, %v2995
        %v2997 = vrot.slane %v2990, %v2996
        %v2998 = vmul.f32 %v2644, %v2997
        %v2999 = vmul.f32 %v2649, %v2997
        %v3000 = vmul.f32 %v2654, %v2997
        %v3001 = vmul.f32 %v2659, %v2997
        %v3002 = vmul.f32 %v2664, %v2997
        %v3003 = vmul.f32 %v2669, %v2997
        %v3004 = vmul.f32 %v2674, %v2997
        %v3005 = vmul.f32 %v2679, %v2997
        %v3006 = vmul.f32 %v2684, %v2997
        %v3007 = vmul.f32 %v2689, %v2997
        %v3008 = vmul.f32 %v2694, %v2997
        %v3009 = vmul.f32 %v2699, %v2997
        %v3010 = vmul.f32 %v2704, %v2997
        %v3011 = vmul.f32 %v2709, %v2997
        %v3012 = vmul.f32 %v2714, %v2997
        %v3013 = vmul.f32 %v2719, %v2997
        %v3014 = vmul.f32 %v2724, %v2997
        %v3015 = vmul.f32 %v2729, %v2997
        %v3016 = vmul.f32 %v2734, %v2997
        %v3017 = vmul.f32 %v2739, %v2997
        %v3018 = vmul.f32 %v2744, %v2997
        %v3019 = vmul.f32 %v2749, %v2997
        %v3020 = vmul.f32 %v2754, %v2997
        %v3021 = vmul.f32 %v2759, %v2997
        %v3022 = vmul.f32 %v2764, %v2997
        %v3023 = vmul.f32 %v2769, %v2997
        %v3024 = vmul.f32 %v2774, %v2997
        %v3025 = vmul.f32 %v2779, %v2997
        %v3026 = vmul.f32 %v2784, %v2997
        %v3027 = vmul.f32 %v2789, %v2997
        %v3028 = vmul.f32 %v2794, %v2997
        %v3029 = vmul.f32 %v2799, %v2997
        %v3031 = vlaneseq
        %v3032 = vshrl.u32 %v3031, 7
        %v3033 = vsub.s32 0, %v3032
        %v3034 = vrot.slane %v2993, %v3033
        %v3036 = vadd.f32 %v2998, %v3034
        %v3037 = vadd.f32 %v2999, %v3034
        %v3038 = vadd.f32 %v3000, %v3034
        %v3039 = vadd.f32 %v3001, %v3034
        %v3040 = vadd.f32 %v3002, %v3034
        %v3041 = vadd.f32 %v3003, %v3034
        %v3042 = vadd.f32 %v3004, %v3034
        %v3043 = vadd.f32 %v3005, %v3034
        %v3044 = vadd.f32 %v3006, %v3034
        %v3045 = vadd.f32 %v3007, %v3034
        %v3046 = vadd.f32 %v3008, %v3034
        %v3047 = vadd.f32 %v3009, %v3034
        %v3048 = vadd.f32 %v3010, %v3034
        %v3049 = vadd.f32 %v3011, %v3034
        %v3050 = vadd.f32 %v3012, %v3034
        %v3051 = vadd.f32 %v3013, %v3034
        %v3052 = vadd.f32 %v3014, %v3034
        %v3053 = vadd.f32 %v3015, %v3034
        %v3054 = vadd.f32 %v3016, %v3034
        %v3055 = vadd.f32 %v3017, %v3034
        %v3056 = vadd.f32 %v3018, %v3034
        %v3057 = vadd.f32 %v3019, %v3034
        %v3058 = vadd.f32 %v3020, %v3034
        %v3059 = vadd.f32 %v3021, %v3034
        %v3060 = vadd.f32 %v3022, %v3034
        %v3061 = vadd.f32 %v3023, %v3034
        %v3062 = vadd.f32 %v3024, %v3034
        %v3063 = vadd.f32 %v3025, %v3034
        %v3064 = vadd.f32 %v3026, %v3034
        %v3065 = vadd.f32 %v3027, %v3034
        %v3066 = vadd.f32 %v3028, %v3034
        %v3067 = vadd.f32 %v3029, %v3034
        %v3068 = vmax.f32 %v3036, 0.0
        %v3069 = vmax.f32 %v3037, 0.0
        %v3070 = vmax.f32 %v3038, 0.0
        %v3071 = vmax.f32 %v3039, 0.0
        %v3072 = vmax.f32 %v3040, 0.0
        %v3073 = vmax.f32 %v3041, 0.0
        %v3074 = vmax.f32 %v3042, 0.0
        %v3075 = vmax.f32 %v3043, 0.0
        %v3076 = vmax.f32 %v3044, 0.0
        %v3077 = vmax.f32 %v3045, 0.0
        %v3078 = vmax.f32 %v3046, 0.0
        %v3079 = vmax.f32 %v3047, 0.0
        %v3080 = vmax.f32 %v3048, 0.0
        %v3081 = vmax.f32 %v3049, 0.0
        %v3082 = vmax.f32 %v3050, 0.0
        %v3083 = vmax.f32 %v3051, 0.0
        %v3084 = vmax.f32 %v3052, 0.0
        %v3085 = vmax.f32 %v3053, 0.0
        %v3086 = vmax.f32 %v3054, 0.0
        %v3087 = vmax.f32 %v3055, 0.0
        %v3088 = vmax.f32 %v3056, 0.0
        %v3089 = vmax.f32 %v3057, 0.0
        %v3090 = vmax.f32 %v3058, 0.0
        %v3091 = vmax.f32 %v3059, 0.0
        %v3092 = vmax.f32 %v3060, 0.0
        %v3093 = vmax.f32 %v3061, 0.0
        %v3094 = vmax.f32 %v3062, 0.0
        %v3095 = vmax.f32 %v3063, 0.0
        %v3096 = vmax.f32 %v3064, 0.0
        %v3097 = vmax.f32 %v3065, 0.0
        %v3098 = vmax.f32 %v3066, 0.0
        %v3099 = vmax.f32 %v3067, 0.0
        %3100 = vst.msk [vmem:[%s616 + $0x8] sm:$0xff] %vm223, %v3068
        %3101 = vst.msk [vmem:[%s616 + $0x10] sm:$0xff] %vm223, %v3069
        %3102 = vst.msk [vmem:[%s616 + $0x28] sm:$0xff] %vm223, %v3070
        %3103 = vst.msk [vmem:[%s616 + $0x30] sm:$0xff] %vm223, %v3071
        %3104 = vst.msk [vmem:[%s616 + $0x48] sm:$0xff] %vm223, %v3072
        %3105 = vst.msk [vmem:[%s616 + $0x50] sm:$0xff] %vm223, %v3073
        %3106 = vst.msk [vmem:[%s616 + $0x68] sm:$0xff] %vm223, %v3074
        %3107 = vst.msk [vmem:[%s616 + $0x70] sm:$0xff] %vm223, %v3075
        %3108 = vst.msk [vmem:[%s616 + $0x88] sm:$0xff] %vm223, %v3076
        %3109 = vst.msk [vmem:[%s616 + $0x90] sm:$0xff] %vm223, %v3077
        %3110 = vst.msk [vmem:[%s616 + $0xa8] sm:$0xff] %vm223, %v3078
        %3111 = vst.msk [vmem:[%s616 + $0xb0] sm:$0xff] %vm223, %v3079
        %3112 = vst.msk [vmem:[%s616 + $0xc8] sm:$0xff] %vm223, %v3080
        %3113 = vst.msk [vmem:[%s616 + $0xd0] sm:$0xff] %vm223, %v3081
        %3114 = vst.msk [vmem:[%s616 + $0xe8] sm:$0xff] %vm223, %v3082
        %3115 = vst.msk [vmem:[%s616 + $0xf0] sm:$0xff] %vm223, %v3083
        %3116 = vst.msk [vmem:[%s616 + $0x108] sm:$0xff] %vm223, %v3084
        %3117 = vst.msk [vmem:[%s616 + $0x110] sm:$0xff] %vm223, %v3085
        %3118 = vst.msk [vmem:[%s616 + $0x128] sm:$0xff] %vm223, %v3086
        %3119 = vst.msk [vmem:[%s616 + $0x130] sm:$0xff] %vm223, %v3087
        %3120 = vst.msk [vmem:[%s616 + $0x148] sm:$0xff] %vm223, %v3088
        %3121 = vst.msk [vmem:[%s616 + $0x150] sm:$0xff] %vm223, %v3089
        %3122 = vst.msk [vmem:[%s616 + $0x168] sm:$0xff] %vm223, %v3090
        %3123 = vst.msk [vmem:[%s616 + $0x170] sm:$0xff] %vm223, %v3091
        %3124 = vst.msk [vmem:[%s616 + $0x188] sm:$0xff] %vm223, %v3092
        %3125 = vst.msk [vmem:[%s616 + $0x190] sm:$0xff] %vm223, %v3093
        %3126 = vst.msk [vmem:[%s616 + $0x1a8] sm:$0xff] %vm223, %v3094
        %3127 = vst.msk [vmem:[%s616 + $0x1b0] sm:$0xff] %vm223, %v3095
        %3128 = vst.msk [vmem:[%s616 + $0x1c8] sm:$0xff] %vm223, %v3096
        %3129 = vst.msk [vmem:[%s616 + $0x1d0] sm:$0xff] %vm223, %v3097
        %3130 = vst.msk [vmem:[%s616 + $0x1e8] sm:$0xff] %vm223, %v3098
        %3131 = vst.msk [vmem:[%s616 + $0x1f0] sm:$0xff] %vm223, %v3099
        %v3132 = vld [vmem:[#allocation2 + $0x7] sm:$0xff]
        %v3133 = vld [vmem:[#allocation2 + $0xf] sm:$0xff]
        %v3134 = vld [vmem:[#allocation2 + $0x27] sm:$0xff]
        %v3135 = vld [vmem:[#allocation2 + $0x2f] sm:$0xff]
        %v3136 = vld [vmem:[#allocation2 + $0x47] sm:$0xff]
        %v3137 = vld [vmem:[#allocation2 + $0x4f] sm:$0xff]
        %v3138 = vld [vmem:[#allocation2 + $0x67] sm:$0xff]
        %v3139 = vld [vmem:[#allocation2 + $0x6f] sm:$0xff]
        %v3140 = vld [vmem:[#allocation2 + $0x87] sm:$0xff]
        %v3141 = vld [vmem:[#allocation2 + $0x8f] sm:$0xff]
        %v3142 = vld [vmem:[#allocation2 + $0xa7] sm:$0xff]
        %v3143 = vld [vmem:[#allocation2 + $0xaf] sm:$0xff]
        %v3144 = vld [vmem:[#allocation2 + $0xc7] sm:$0xff]
        %v3145 = vld [vmem:[#allocation2 + $0xcf] sm:$0xff]
        %v3146 = vld [vmem:[#allocation2 + $0xe7] sm:$0xff]
        %v3147 = vld [vmem:[#allocation2 + $0xef] sm:$0xff]
        %v3148 = vld [vmem:[#allocation2 + $0x107] sm:$0xff]
        %v3149 = vld [vmem:[#allocation2 + $0x10f] sm:$0xff]
        %v3150 = vld [vmem:[#allocation2 + $0x127] sm:$0xff]
        %v3151 = vld [vmem:[#allocation2 + $0x12f] sm:$0xff]
        %v3152 = vld [vmem:[#allocation2 + $0x147] sm:$0xff]
        %v3153 = vld [vmem:[#allocation2 + $0x14f] sm:$0xff]
        %v3154 = vld [vmem:[#allocation2 + $0x167] sm:$0xff]
        %v3155 = vld [vmem:[#allocation2 + $0x16f] sm:$0xff]
        %v3156 = vld [vmem:[#allocation2 + $0x187] sm:$0xff]
        %v3157 = vld [vmem:[#allocation2 + $0x18f] sm:$0xff]
        %v3158 = vld [vmem:[#allocation2 + $0x1a7] sm:$0xff]
        %v3159 = vld [vmem:[#allocation2 + $0x1af] sm:$0xff]
        %v3160 = vld [vmem:[#allocation2 + $0x1c7] sm:$0xff]
        %v3161 = vld [vmem:[#allocation2 + $0x1cf] sm:$0xff]
        %v3162 = vld [vmem:[#allocation2 + $0x1e7] sm:$0xff]
        %v3163 = vld [vmem:[#allocation2 + $0x1ef] sm:$0xff]
        %3164 = vst.msk [vmem:[#allocation3] sm:$0xff] %vm223, %v3132
        %3165 = vst.msk [vmem:[#allocation3 + $0x48] sm:$0xff] %vm223, %v3133
        %3166 = vst.msk [vmem:[#allocation3 + $0x90] sm:$0xff] %vm223, %v3134
        %3167 = vst.msk [vmem:[#allocation3 + $0xd8] sm:$0xff] %vm223, %v3135
        %3168 = vst.msk [vmem:[#allocation3 + $0x120] sm:$0xff] %vm223, %v3136
        %3169 = vst.msk [vmem:[#allocation3 + $0x168] sm:$0xff] %vm223, %v3137
        %3170 = vst.msk [vmem:[#allocation3 + $0x1b0] sm:$0xff] %vm223, %v3138
        %3171 = vst.msk [vmem:[#allocation3 + $0x1f8] sm:$0xff] %vm223, %v3139
        %3172 = vst.msk [vmem:[#allocation3 + $0x240] sm:$0xff] %vm223, %v3140
        %3173 = vst.msk [vmem:[#allocation3 + $0x288] sm:$0xff] %vm223, %v3141
        %3174 = vst.msk [vmem:[#allocation3 + $0x2d0] sm:$0xff] %vm223, %v3142
        %3175 = vst.msk [vmem:[#allocation3 + $0x318] sm:$0xff] %vm223, %v3143
        %3176 = vst.msk [vmem:[#allocation3 + $0x360] sm:$0xff] %vm223, %v3144
        %3177 = vst.msk [vmem:[#allocation3 + $0x3a8] sm:$0xff] %vm223, %v3145
        %3178 = vst.msk [vmem:[#allocation3 + $0x3f0] sm:$0xff] %vm223, %v3146
        %3179 = vst.msk [vmem:[#allocation3 + $0x438] sm:$0xff] %vm223, %v3147
        %3180 = vst.msk [vmem:[#allocation3 + $0x480] sm:$0xff] %vm223, %v3148
        %3181 = vst.msk [vmem:[#allocation3 + $0x4c8] sm:$0xff] %vm223, %v3149
        %3182 = vst.msk [vmem:[#allocation3 + $0x510] sm:$0xff] %vm223, %v3150
        %3183 = vst.msk [vmem:[#allocation3 + $0x558] sm:$0xff] %vm223, %v3151
        %3184 = vst.msk [vmem:[#allocation3 + $0x5a0] sm:$0xff] %vm223, %v3152
        %3185 = vst.msk [vmem:[#allocation3 + $0x5e8] sm:$0xff] %vm223, %v3153
        %3186 = vst.msk [vmem:[#allocation3 + $0x630] sm:$0xff] %vm223, %v3154
        %3187 = vst.msk [vmem:[#allocation3 + $0x678] sm:$0xff] %vm223, %v3155
        %3188 = vst.msk [vmem:[#allocation3 + $0x6c0] sm:$0xff] %vm223, %v3156
        %3189 = vst.msk [vmem:[#allocation3 + $0x708] sm:$0xff] %vm223, %v3157
        %3190 = vst.msk [vmem:[#allocation3 + $0x750] sm:$0xff] %vm223, %v3158
        %3191 = vst.msk [vmem:[#allocation3 + $0x798] sm:$0xff] %vm223, %v3159
        %3192 = vst.msk [vmem:[#allocation3 + $0x7e0] sm:$0xff] %vm223, %v3160
        %3193 = vst.msk [vmem:[#allocation3 + $0x828] sm:$0xff] %vm223, %v3161
        %3194 = vst.msk [vmem:[#allocation3 + $0x870] sm:$0xff] %vm223, %v3162
        %3195 = vst.msk [vmem:[#allocation3 + $0x8b8] sm:$0xff] %vm223, %v3163
        %v3196 = vld [vmem:[#allocation2 + $0x8] sm:$0xff]
        %v3197 = vld [vmem:[#allocation2 + $0x10] sm:$0xff]
        %v3198 = vld [vmem:[#allocation2 + $0x28] sm:$0xff]
        %v3199 = vld [vmem:[#allocation2 + $0x30] sm:$0xff]
        %v3200 = vld [vmem:[#allocation2 + $0x48] sm:$0xff]
        %v3201 = vld [vmem:[#allocation2 + $0x50] sm:$0xff]
        %v3202 = vld [vmem:[#allocation2 + $0x68] sm:$0xff]
        %v3203 = vld [vmem:[#allocation2 + $0x70] sm:$0xff]
        %v3204 = vld [vmem:[#allocation2 + $0x88] sm:$0xff]
        %v3205 = vld [vmem:[#allocation2 + $0x90] sm:$0xff]
        %v3206 = vld [vmem:[#allocation2 + $0xa8] sm:$0xff]
        %v3207 = vld [vmem:[#allocation2 + $0xb0] sm:$0xff]
        %v3208 = vld [vmem:[#allocation2 + $0xc8] sm:$0xff]
        %v3209 = vld [vmem:[#allocation2 + $0xd0] sm:$0xff]
        %v3210 = vld [vmem:[#allocation2 + $0xe8] sm:$0xff]
        %v3211 = vld [vmem:[#allocation2 + $0xf0] sm:$0xff]
        %v3212 = vld [vmem:[#allocation2 + $0x108] sm:$0xff]
        %v3213 = vld [vmem:[#allocation2 + $0x110] sm:$0xff]
        %v3214 = vld [vmem:[#allocation2 + $0x128] sm:$0xff]
        %v3215 = vld [vmem:[#allocation2 + $0x130] sm:$0xff]
        %v3216 = vld [vmem:[#allocation2 + $0x148] sm:$0xff]
        %v3217 = vld [vmem:[#allocation2 + $0x150] sm:$0xff]
        %v3218 = vld [vmem:[#allocation2 + $0x168] sm:$0xff]
        %v3219 = vld [vmem:[#allocation2 + $0x170] sm:$0xff]
        %v3220 = vld [vmem:[#allocation2 + $0x188] sm:$0xff]
        %v3221 = vld [vmem:[#allocation2 + $0x190] sm:$0xff]
        %v3222 = vld [vmem:[#allocation2 + $0x1a8] sm:$0xff]
        %v3223 = vld [vmem:[#allocation2 + $0x1b0] sm:$0xff]
        %v3224 = vld [vmem:[#allocation2 + $0x1c8] sm:$0xff]
        %v3225 = vld [vmem:[#allocation2 + $0x1d0] sm:$0xff]
        %v3226 = vld [vmem:[#allocation2 + $0x1e8] sm:$0xff]
        %v3227 = vld [vmem:[#allocation2 + $0x1f0] sm:$0xff]
        %3228 = vst.msk [vmem:[#allocation3 + $0x8] sm:$0xff] %vm223, %v3196
        %3229 = vst.msk [vmem:[#allocation3 + $0x50] sm:$0xff] %vm223, %v3197
        %3230 = vst.msk [vmem:[#allocation3 + $0x98] sm:$0xff] %vm223, %v3198
        %3231 = vst.msk [vmem:[#allocation3 + $0xe0] sm:$0xff] %vm223, %v3199
        %3232 = vst.msk [vmem:[#allocation3 + $0x128] sm:$0xff] %vm223, %v3200
        %3233 = vst.msk [vmem:[#allocation3 + $0x170] sm:$0xff] %vm223, %v3201
        %3234 = vst.msk [vmem:[#allocation3 + $0x1b8] sm:$0xff] %vm223, %v3202
        %3235 = vst.msk [vmem:[#allocation3 + $0x200] sm:$0xff] %vm223, %v3203
        %3236 = vst.msk [vmem:[#allocation3 + $0x248] sm:$0xff] %vm223, %v3204
        %3237 = vst.msk [vmem:[#allocation3 + $0x290] sm:$0xff] %vm223, %v3205
        %3238 = vst.msk [vmem:[#allocation3 + $0x2d8] sm:$0xff] %vm223, %v3206
        %3239 = vst.msk [vmem:[#allocation3 + $0x320] sm:$0xff] %vm223, %v3207
        %3240 = vst.msk [vmem:[#allocation3 + $0x368] sm:$0xff] %vm223, %v3208
        %3241 = vst.msk [vmem:[#allocation3 + $0x3b0] sm:$0xff] %vm223, %v3209
        %3242 = vst.msk [vmem:[#allocation3 + $0x3f8] sm:$0xff] %vm223, %v3210
        %3243 = vst.msk [vmem:[#allocation3 + $0x440] sm:$0xff] %vm223, %v3211
        %3244 = vst.msk [vmem:[#allocation3 + $0x488] sm:$0xff] %vm223, %v3212
        %3245 = vst.msk [vmem:[#allocation3 + $0x4d0] sm:$0xff] %vm223, %v3213
        %3246 = vst.msk [vmem:[#allocation3 + $0x518] sm:$0xff] %vm223, %v3214
        %3247 = vst.msk [vmem:[#allocation3 + $0x560] sm:$0xff] %vm223, %v3215
        %3248 = vst.msk [vmem:[#allocation3 + $0x5a8] sm:$0xff] %vm223, %v3216
        %3249 = vst.msk [vmem:[#allocation3 + $0x5f0] sm:$0xff] %vm223, %v3217
        %3250 = vst.msk [vmem:[#allocation3 + $0x638] sm:$0xff] %vm223, %v3218
        %3251 = vst.msk [vmem:[#allocation3 + $0x680] sm:$0xff] %vm223, %v3219
        %3252 = vst.msk [vmem:[#allocation3 + $0x6c8] sm:$0xff] %vm223, %v3220
        %3253 = vst.msk [vmem:[#allocation3 + $0x710] sm:$0xff] %vm223, %v3221
        %3254 = vst.msk [vmem:[#allocation3 + $0x758] sm:$0xff] %vm223, %v3222
        %3255 = vst.msk [vmem:[#allocation3 + $0x7a0] sm:$0xff] %vm223, %v3223
        %3256 = vst.msk [vmem:[#allocation3 + $0x7e8] sm:$0xff] %vm223, %v3224
        %3257 = vst.msk [vmem:[#allocation3 + $0x830] sm:$0xff] %vm223, %v3225
        %3258 = vst.msk [vmem:[#allocation3 + $0x878] sm:$0xff] %vm223, %v3226
        %3259 = vst.msk [vmem:[#allocation3 + $0x8c0] sm:$0xff] %vm223, %v3227
        %v3260 = vld [vmem:[#allocation2 + $0x9] sm:$0xff]
        %v3261 = vld [vmem:[#allocation2 + $0x11] sm:$0xff]
        %v3262 = vld [vmem:[#allocation2 + $0x29] sm:$0xff]
        %v3263 = vld [vmem:[#allocation2 + $0x31] sm:$0xff]
        %v3264 = vld [vmem:[#allocation2 + $0x49] sm:$0xff]
        %v3265 = vld [vmem:[#allocation2 + $0x51] sm:$0xff]
        %v3266 = vld [vmem:[#allocation2 + $0x69] sm:$0xff]
        %v3267 = vld [vmem:[#allocation2 + $0x71] sm:$0xff]
        %v3268 = vld [vmem:[#allocation2 + $0x89] sm:$0xff]
        %v3269 = vld [vmem:[#allocation2 + $0x91] sm:$0xff]
        %v3270 = vld [vmem:[#allocation2 + $0xa9] sm:$0xff]
        %v3271 = vld [vmem:[#allocation2 + $0xb1] sm:$0xff]
        %v3272 = vld [vmem:[#allocation2 + $0xc9] sm:$0xff]
        %v3273 = vld [vmem:[#allocation2 + $0xd1] sm:$0xff]
        %v3274 = vld [vmem:[#allocation2 + $0xe9] sm:$0xff]
        %v3275 = vld [vmem:[#allocation2 + $0xf1] sm:$0xff]
        %v3276 = vld [vmem:[#allocation2 + $0x109] sm:$0xff]
        %v3277 = vld [vmem:[#allocation2 + $0x111] sm:$0xff]
        %v3278 = vld [vmem:[#allocation2 + $0x129] sm:$0xff]
        %v3279 = vld [vmem:[#allocation2 + $0x131] sm:$0xff]
        %v3280 = vld [vmem:[#allocation2 + $0x149] sm:$0xff]
        %v3281 = vld [vmem:[#allocation2 + $0x151] sm:$0xff]
        %v3282 = vld [vmem:[#allocation2 + $0x169] sm:$0xff]
        %v3283 = vld [vmem:[#allocation2 + $0x171] sm:$0xff]
        %v3284 = vld [vmem:[#allocation2 + $0x189] sm:$0xff]
        %v3285 = vld [vmem:[#allocation2 + $0x191] sm:$0xff]
        %v3286 = vld [vmem:[#allocation2 + $0x1a9] sm:$0xff]
        %v3287 = vld [vmem:[#allocation2 + $0x1b1] sm:$0xff]
        %v3288 = vld [vmem:[#allocation2 + $0x1c9] sm:$0xff]
        %v3289 = vld [vmem:[#allocation2 + $0x1d1] sm:$0xff]
        %v3290 = vld [vmem:[#allocation2 + $0x1e9] sm:$0xff]
        %v3291 = vld [vmem:[#allocation2 + $0x1f1] sm:$0xff]
        %3292 = vst.msk [vmem:[#allocation3 + $0x10] sm:$0xff] %vm223, %v3260
        %3293 = vst.msk [vmem:[#allocation3 + $0x58] sm:$0xff] %vm223, %v3261
        %3294 = vst.msk [vmem:[#allocation3 + $0xa0] sm:$0xff] %vm223, %v3262
        %3295 = vst.msk [vmem:[#allocation3 + $0xe8] sm:$0xff] %vm223, %v3263
        %3296 = vst.msk [vmem:[#allocation3 + $0x130] sm:$0xff] %vm223, %v3264
        %3297 = vst.msk [vmem:[#allocation3 + $0x178] sm:$0xff] %vm223, %v3265
        %3298 = vst.msk [vmem:[#allocation3 + $0x1c0] sm:$0xff] %vm223, %v3266
        %3299 = vst.msk [vmem:[#allocation3 + $0x208] sm:$0xff] %vm223, %v3267
        %3300 = vst.msk [vmem:[#allocation3 + $0x250] sm:$0xff] %vm223, %v3268
        %3301 = vst.msk [vmem:[#allocation3 + $0x298] sm:$0xff] %vm223, %v3269
        %3302 = vst.msk [vmem:[#allocation3 + $0x2e0] sm:$0xff] %vm223, %v3270
        %3303 = vst.msk [vmem:[#allocation3 + $0x328] sm:$0xff] %vm223, %v3271
        %3304 = vst.msk [vmem:[#allocation3 + $0x370] sm:$0xff] %vm223, %v3272
        %3305 = vst.msk [vmem:[#allocation3 + $0x3b8] sm:$0xff] %vm223, %v3273
        %3306 = vst.msk [vmem:[#allocation3 + $0x400] sm:$0xff] %vm223, %v3274
        %3307 = vst.msk [vmem:[#allocation3 + $0x448] sm:$0xff] %vm223, %v3275
        %3308 = vst.msk [vmem:[#allocation3 + $0x490] sm:$0xff] %vm223, %v3276
        %3309 = vst.msk [vmem:[#allocation3 + $0x4d8] sm:$0xff] %vm223, %v3277
        %3310 = vst.msk [vmem:[#allocation3 + $0x520] sm:$0xff] %vm223, %v3278
        %3311 = vst.msk [vmem:[#allocation3 + $0x568] sm:$0xff] %vm223, %v3279
        %3312 = vst.msk [vmem:[#allocation3 + $0x5b0] sm:$0xff] %vm223, %v3280
        %3313 = vst.msk [vmem:[#allocation3 + $0x5f8] sm:$0xff] %vm223, %v3281
        %3314 = vst.msk [vmem:[#allocation3 + $0x640] sm:$0xff] %vm223, %v3282
        %3315 = vst.msk [vmem:[#allocation3 + $0x688] sm:$0xff] %vm223, %v3283
        %3316 = vst.msk [vmem:[#allocation3 + $0x6d0] sm:$0xff] %vm223, %v3284
        %3317 = vst.msk [vmem:[#allocation3 + $0x718] sm:$0xff] %vm223, %v3285
        %3318 = vst.msk [vmem:[#allocation3 + $0x760] sm:$0xff] %vm223, %v3286
        %3319 = vst.msk [vmem:[#allocation3 + $0x7a8] sm:$0xff] %vm223, %v3287
        %3320 = vst.msk [vmem:[#allocation3 + $0x7f0] sm:$0xff] %vm223, %v3288
        %3321 = vst.msk [vmem:[#allocation3 + $0x838] sm:$0xff] %vm223, %v3289
        %3322 = vst.msk [vmem:[#allocation3 + $0x880] sm:$0xff] %vm223, %v3290
        %3323 = vst.msk [vmem:[#allocation3 + $0x8c8] sm:$0xff] %vm223, %v3291
        %v3324 = vld [vmem:[%s616 + $0x7] sm:$0xff]
        %v3325 = vld [vmem:[%s616 + $0xf] sm:$0xff]
        %v3326 = vld [vmem:[%s616 + $0x27] sm:$0xff]
        %v3327 = vld [vmem:[%s616 + $0x2f] sm:$0xff]
        %v3328 = vld [vmem:[%s616 + $0x47] sm:$0xff]
        %v3329 = vld [vmem:[%s616 + $0x4f] sm:$0xff]
        %v3330 = vld [vmem:[%s616 + $0x67] sm:$0xff]
        %v3331 = vld [vmem:[%s616 + $0x6f] sm:$0xff]
        %v3332 = vld [vmem:[%s616 + $0x87] sm:$0xff]
        %v3333 = vld [vmem:[%s616 + $0x8f] sm:$0xff]
        %v3334 = vld [vmem:[%s616 + $0xa7] sm:$0xff]
        %v3335 = vld [vmem:[%s616 + $0xaf] sm:$0xff]
        %v3336 = vld [vmem:[%s616 + $0xc7] sm:$0xff]
        %v3337 = vld [vmem:[%s616 + $0xcf] sm:$0xff]
        %v3338 = vld [vmem:[%s616 + $0xe7] sm:$0xff]
        %v3339 = vld [vmem:[%s616 + $0xef] sm:$0xff]
        %v3340 = vld [vmem:[%s616 + $0x107] sm:$0xff]
        %v3341 = vld [vmem:[%s616 + $0x10f] sm:$0xff]
        %v3342 = vld [vmem:[%s616 + $0x127] sm:$0xff]
        %v3343 = vld [vmem:[%s616 + $0x12f] sm:$0xff]
        %v3344 = vld [vmem:[%s616 + $0x147] sm:$0xff]
        %v3345 = vld [vmem:[%s616 + $0x14f] sm:$0xff]
        %v3346 = vld [vmem:[%s616 + $0x167] sm:$0xff]
        %v3347 = vld [vmem:[%s616 + $0x16f] sm:$0xff]
        %v3348 = vld [vmem:[%s616 + $0x187] sm:$0xff]
        %v3349 = vld [vmem:[%s616 + $0x18f] sm:$0xff]
        %v3350 = vld [vmem:[%s616 + $0x1a7] sm:$0xff]
        %v3351 = vld [vmem:[%s616 + $0x1af] sm:$0xff]
        %v3352 = vld [vmem:[%s616 + $0x1c7] sm:$0xff]
        %v3353 = vld [vmem:[%s616 + $0x1cf] sm:$0xff]
        %v3354 = vld [vmem:[%s616 + $0x1e7] sm:$0xff]
        %v3355 = vld [vmem:[%s616 + $0x1ef] sm:$0xff]
        %3356 = vst.msk [vmem:[#allocation3 + $0x18] sm:$0xff] %vm223, %v3324
        %3357 = vst.msk [vmem:[#allocation3 + $0x60] sm:$0xff] %vm223, %v3325
        %3358 = vst.msk [vmem:[#allocation3 + $0xa8] sm:$0xff] %vm223, %v3326
        %3359 = vst.msk [vmem:[#allocation3 + $0xf0] sm:$0xff] %vm223, %v3327
        %3360 = vst.msk [vmem:[#allocation3 + $0x138] sm:$0xff] %vm223, %v3328
        %3361 = vst.msk [vmem:[#allocation3 + $0x180] sm:$0xff] %vm223, %v3329
        %3362 = vst.msk [vmem:[#allocation3 + $0x1c8] sm:$0xff] %vm223, %v3330
        %3363 = vst.msk [vmem:[#allocation3 + $0x210] sm:$0xff] %vm223, %v3331
        %3364 = vst.msk [vmem:[#allocation3 + $0x258] sm:$0xff] %vm223, %v3332
        %3365 = vst.msk [vmem:[#allocation3 + $0x2a0] sm:$0xff] %vm223, %v3333
        %3366 = vst.msk [vmem:[#allocation3 + $0x2e8] sm:$0xff] %vm223, %v3334
        %3367 = vst.msk [vmem:[#allocation3 + $0x330] sm:$0xff] %vm223, %v3335
        %3368 = vst.msk [vmem:[#allocation3 + $0x378] sm:$0xff] %vm223, %v3336
        %3369 = vst.msk [vmem:[#allocation3 + $0x3c0] sm:$0xff] %vm223, %v3337
        %3370 = vst.msk [vmem:[#allocation3 + $0x408] sm:$0xff] %vm223, %v3338
        %3371 = vst.msk [vmem:[#allocation3 + $0x450] sm:$0xff] %vm223, %v3339
        %3372 = vst.msk [vmem:[#allocation3 + $0x498] sm:$0xff] %vm223, %v3340
        %3373 = vst.msk [vmem:[#allocation3 + $0x4e0] sm:$0xff] %vm223, %v3341
        %3374 = vst.msk [vmem:[#allocation3 + $0x528] sm:$0xff] %vm223, %v3342
        %3375 = vst.msk [vmem:[#allocation3 + $0x570] sm:$0xff] %vm223, %v3343
        %3376 = vst.msk [vmem:[#allocation3 + $0x5b8] sm:$0xff] %vm223, %v3344
        %3377 = vst.msk [vmem:[#allocation3 + $0x600] sm:$0xff] %vm223, %v3345
        %3378 = vst.msk [vmem:[#allocation3 + $0x648] sm:$0xff] %vm223, %v3346
        %3379 = vst.msk [vmem:[#allocation3 + $0x690] sm:$0xff] %vm223, %v3347
        %3380 = vst.msk [vmem:[#allocation3 + $0x6d8] sm:$0xff] %vm223, %v3348
        %3381 = vst.msk [vmem:[#allocation3 + $0x720] sm:$0xff] %vm223, %v3349
        %3382 = vst.msk [vmem:[#allocation3 + $0x768] sm:$0xff] %vm223, %v3350
        %3383 = vst.msk [vmem:[#allocation3 + $0x7b0] sm:$0xff] %vm223, %v3351
        %3384 = vst.msk [vmem:[#allocation3 + $0x7f8] sm:$0xff] %vm223, %v3352
        %3385 = vst.msk [vmem:[#allocation3 + $0x840] sm:$0xff] %vm223, %v3353
        %3386 = vst.msk [vmem:[#allocation3 + $0x888] sm:$0xff] %vm223, %v3354
        %3387 = vst.msk [vmem:[#allocation3 + $0x8d0] sm:$0xff] %vm223, %v3355
        %v3388 = vld [vmem:[%s616 + $0x8] sm:$0xff]
        %v3389 = vld [vmem:[%s616 + $0x10] sm:$0xff]
        %v3390 = vld [vmem:[%s616 + $0x28] sm:$0xff]
        %v3391 = vld [vmem:[%s616 + $0x30] sm:$0xff]
        %v3392 = vld [vmem:[%s616 + $0x48] sm:$0xff]
        %v3393 = vld [vmem:[%s616 + $0x50] sm:$0xff]
        %v3394 = vld [vmem:[%s616 + $0x68] sm:$0xff]
        %v3395 = vld [vmem:[%s616 + $0x70] sm:$0xff]
        %v3396 = vld [vmem:[%s616 + $0x88] sm:$0xff]
        %v3397 = vld [vmem:[%s616 + $0x90] sm:$0xff]
        %v3398 = vld [vmem:[%s616 + $0xa8] sm:$0xff]
        %v3399 = vld [vmem:[%s616 + $0xb0] sm:$0xff]
        %v3400 = vld [vmem:[%s616 + $0xc8] sm:$0xff]
        %v3401 = vld [vmem:[%s616 + $0xd0] sm:$0xff]
        %v3402 = vld [vmem:[%s616 + $0xe8] sm:$0xff]
        %v3403 = vld [vmem:[%s616 + $0xf0] sm:$0xff]
        %v3404 = vld [vmem:[%s616 + $0x108] sm:$0xff]
        %v3405 = vld [vmem:[%s616 + $0x110] sm:$0xff]
        %v3406 = vld [vmem:[%s616 + $0x128] sm:$0xff]
        %v3407 = vld [vmem:[%s616 + $0x130] sm:$0xff]
        %v3408 = vld [vmem:[%s616 + $0x148] sm:$0xff]
        %v3409 = vld [vmem:[%s616 + $0x150] sm:$0xff]
        %v3410 = vld [vmem:[%s616 + $0x168] sm:$0xff]
        %v3411 = vld [vmem:[%s616 + $0x170] sm:$0xff]
        %v3412 = vld [vmem:[%s616 + $0x188] sm:$0xff]
        %v3413 = vld [vmem:[%s616 + $0x190] sm:$0xff]
        %v3414 = vld [vmem:[%s616 + $0x1a8] sm:$0xff]
        %v3415 = vld [vmem:[%s616 + $0x1b0] sm:$0xff]
        %v3416 = vld [vmem:[%s616 + $0x1c8] sm:$0xff]
        %v3417 = vld [vmem:[%s616 + $0x1d0] sm:$0xff]
        %v3418 = vld [vmem:[%s616 + $0x1e8] sm:$0xff]
        %v3419 = vld [vmem:[%s616 + $0x1f0] sm:$0xff]
        %3420 = vst.msk [vmem:[#allocation3 + $0x20] sm:$0xff] %vm223, %v3388
        %3421 = vst.msk [vmem:[#allocation3 + $0x68] sm:$0xff] %vm223, %v3389
        %3422 = vst.msk [vmem:[#allocation3 + $0xb0] sm:$0xff] %vm223, %v3390
        %3423 = vst.msk [vmem:[#allocation3 + $0xf8] sm:$0xff] %vm223, %v3391
        %3424 = vst.msk [vmem:[#allocation3 + $0x140] sm:$0xff] %vm223, %v3392
        %3425 = vst.msk [vmem:[#allocation3 + $0x188] sm:$0xff] %vm223, %v3393
        %3426 = vst.msk [vmem:[#allocation3 + $0x1d0] sm:$0xff] %vm223, %v3394
        %3427 = vst.msk [vmem:[#allocation3 + $0x218] sm:$0xff] %vm223, %v3395
        %3428 = vst.msk [vmem:[#allocation3 + $0x260] sm:$0xff] %vm223, %v3396
        %3429 = vst.msk [vmem:[#allocation3 + $0x2a8] sm:$0xff] %vm223, %v3397
        %3430 = vst.msk [vmem:[#allocation3 + $0x2f0] sm:$0xff] %vm223, %v3398
        %3431 = vst.msk [vmem:[#allocation3 + $0x338] sm:$0xff] %vm223, %v3399
        %3432 = vst.msk [vmem:[#allocation3 + $0x380] sm:$0xff] %vm223, %v3400
        %3433 = vst.msk [vmem:[#allocation3 + $0x3c8] sm:$0xff] %vm223, %v3401
        %3434 = vst.msk [vmem:[#allocation3 + $0x410] sm:$0xff] %vm223, %v3402
        %3435 = vst.msk [vmem:[#allocation3 + $0x458] sm:$0xff] %vm223, %v3403
        %3436 = vst.msk [vmem:[#allocation3 + $0x4a0] sm:$0xff] %vm223, %v3404
        %3437 = vst.msk [vmem:[#allocation3 + $0x4e8] sm:$0xff] %vm223, %v3405
        %3438 = vst.msk [vmem:[#allocation3 + $0x530] sm:$0xff] %vm223, %v3406
        %3439 = vst.msk [vmem:[#allocation3 + $0x578] sm:$0xff] %vm223, %v3407
        %3440 = vst.msk [vmem:[#allocation3 + $0x5c0] sm:$0xff] %vm223, %v3408
        %3441 = vst.msk [vmem:[#allocation3 + $0x608] sm:$0xff] %vm223, %v3409
        %3442 = vst.msk [vmem:[#allocation3 + $0x650] sm:$0xff] %vm223, %v3410
        %3443 = vst.msk [vmem:[#allocation3 + $0x698] sm:$0xff] %vm223, %v3411
        %3444 = vst.msk [vmem:[#allocation3 + $0x6e0] sm:$0xff] %vm223, %v3412
        %3445 = vst.msk [vmem:[#allocation3 + $0x728] sm:$0xff] %vm223, %v3413
        %3446 = vst.msk [vmem:[#allocation3 + $0x770] sm:$0xff] %vm223, %v3414
        %3447 = vst.msk [vmem:[#allocation3 + $0x7b8] sm:$0xff] %vm223, %v3415
        %3448 = vst.msk [vmem:[#allocation3 + $0x800] sm:$0xff] %vm223, %v3416
        %3449 = vst.msk [vmem:[#allocation3 + $0x848] sm:$0xff] %vm223, %v3417
        %3450 = vst.msk [vmem:[#allocation3 + $0x890] sm:$0xff] %vm223, %v3418
        %3451 = vst.msk [vmem:[#allocation3 + $0x8d8] sm:$0xff] %vm223, %v3419
        %v3452 = vld [vmem:[%s616 + $0x9] sm:$0xff]
        %v3453 = vld [vmem:[%s616 + $0x11] sm:$0xff]
        %v3454 = vld [vmem:[%s616 + $0x29] sm:$0xff]
        %v3455 = vld [vmem:[%s616 + $0x31] sm:$0xff]
        %v3456 = vld [vmem:[%s616 + $0x49] sm:$0xff]
        %v3457 = vld [vmem:[%s616 + $0x51] sm:$0xff]
        %v3458 = vld [vmem:[%s616 + $0x69] sm:$0xff]
        %v3459 = vld [vmem:[%s616 + $0x71] sm:$0xff]
        %v3460 = vld [vmem:[%s616 + $0x89] sm:$0xff]
        %v3461 = vld [vmem:[%s616 + $0x91] sm:$0xff]
        %v3462 = vld [vmem:[%s616 + $0xa9] sm:$0xff]
        %v3463 = vld [vmem:[%s616 + $0xb1] sm:$0xff]
        %v3464 = vld [vmem:[%s616 + $0xc9] sm:$0xff]
        %v3465 = vld [vmem:[%s616 + $0xd1] sm:$0xff]
        %v3466 = vld [vmem:[%s616 + $0xe9] sm:$0xff]
        %v3467 = vld [vmem:[%s616 + $0xf1] sm:$0xff]
        %v3468 = vld [vmem:[%s616 + $0x109] sm:$0xff]
        %v3469 = vld [vmem:[%s616 + $0x111] sm:$0xff]
        %v3470 = vld [vmem:[%s616 + $0x129] sm:$0xff]
        %v3471 = vld [vmem:[%s616 + $0x131] sm:$0xff]
        %v3472 = vld [vmem:[%s616 + $0x149] sm:$0xff]
        %v3473 = vld [vmem:[%s616 + $0x151] sm:$0xff]
        %v3474 = vld [vmem:[%s616 + $0x169] sm:$0xff]
        %v3475 = vld [vmem:[%s616 + $0x171] sm:$0xff]
        %v3476 = vld [vmem:[%s616 + $0x189] sm:$0xff]
        %v3477 = vld [vmem:[%s616 + $0x191] sm:$0xff]
        %v3478 = vld [vmem:[%s616 + $0x1a9] sm:$0xff]
        %v3479 = vld [vmem:[%s616 + $0x1b1] sm:$0xff]
        %v3480 = vld [vmem:[%s616 + $0x1c9] sm:$0xff]
        %v3481 = vld [vmem:[%s616 + $0x1d1] sm:$0xff]
        %v3482 = vld [vmem:[%s616 + $0x1e9] sm:$0xff]
        %v3483 = vld [vmem:[%s616 + $0x1f1] sm:$0xff]
        %3484 = vst.msk [vmem:[#allocation3 + $0x28] sm:$0xff] %vm223, %v3452
        %3485 = vst.msk [vmem:[#allocation3 + $0x70] sm:$0xff] %vm223, %v3453
        %3486 = vst.msk [vmem:[#allocation3 + $0xb8] sm:$0xff] %vm223, %v3454
        %3487 = vst.msk [vmem:[#allocation3 + $0x100] sm:$0xff] %vm223, %v3455
        %3488 = vst.msk [vmem:[#allocation3 + $0x148] sm:$0xff] %vm223, %v3456
        %3489 = vst.msk [vmem:[#allocation3 + $0x190] sm:$0xff] %vm223, %v3457
        %3490 = vst.msk [vmem:[#allocation3 + $0x1d8] sm:$0xff] %vm223, %v3458
        %3491 = vst.msk [vmem:[#allocation3 + $0x220] sm:$0xff] %vm223, %v3459
        %3492 = vst.msk [vmem:[#allocation3 + $0x268] sm:$0xff] %vm223, %v3460
        %3493 = vst.msk [vmem:[#allocation3 + $0x2b0] sm:$0xff] %vm223, %v3461
        %3494 = vst.msk [vmem:[#allocation3 + $0x2f8] sm:$0xff] %vm223, %v3462
        %3495 = vst.msk [vmem:[#allocation3 + $0x340] sm:$0xff] %vm223, %v3463
        %3496 = vst.msk [vmem:[#allocation3 + $0x388] sm:$0xff] %vm223, %v3464
        %3497 = vst.msk [vmem:[#allocation3 + $0x3d0] sm:$0xff] %vm223, %v3465
        %3498 = vst.msk [vmem:[#allocation3 + $0x418] sm:$0xff] %vm223, %v3466
        %3499 = vst.msk [vmem:[#allocation3 + $0x460] sm:$0xff] %vm223, %v3467
        %3500 = vst.msk [vmem:[#allocation3 + $0x4a8] sm:$0xff] %vm223, %v3468
        %3501 = vst.msk [vmem:[#allocation3 + $0x4f0] sm:$0xff] %vm223, %v3469
        %3502 = vst.msk [vmem:[#allocation3 + $0x538] sm:$0xff] %vm223, %v3470
        %3503 = vst.msk [vmem:[#allocation3 + $0x580] sm:$0xff] %vm223, %v3471
        %3504 = vst.msk [vmem:[#allocation3 + $0x5c8] sm:$0xff] %vm223, %v3472
        %3505 = vst.msk [vmem:[#allocation3 + $0x610] sm:$0xff] %vm223, %v3473
        %3506 = vst.msk [vmem:[#allocation3 + $0x658] sm:$0xff] %vm223, %v3474
        %3507 = vst.msk [vmem:[#allocation3 + $0x6a0] sm:$0xff] %vm223, %v3475
        %3508 = vst.msk [vmem:[#allocation3 + $0x6e8] sm:$0xff] %vm223, %v3476
        %3509 = vst.msk [vmem:[#allocation3 + $0x730] sm:$0xff] %vm223, %v3477
        %3510 = vst.msk [vmem:[#allocation3 + $0x778] sm:$0xff] %vm223, %v3478
        %3511 = vst.msk [vmem:[#allocation3 + $0x7c0] sm:$0xff] %vm223, %v3479
        %3512 = vst.msk [vmem:[#allocation3 + $0x808] sm:$0xff] %vm223, %v3480
        %3513 = vst.msk [vmem:[#allocation3 + $0x850] sm:$0xff] %vm223, %v3481
        %3514 = vst.msk [vmem:[#allocation3 + $0x898] sm:$0xff] %vm223, %v3482
        %3515 = vst.msk [vmem:[#allocation3 + $0x8e0] sm:$0xff] %vm223, %v3483
        %v3516 = vld [vmem:[%s1052 + $0x7] sm:$0xff]
        %v3517 = vld [vmem:[%s1052 + $0xf] sm:$0xff]
        %v3518 = vld [vmem:[%s1052 + $0x27] sm:$0xff]
        %v3519 = vld [vmem:[%s1052 + $0x2f] sm:$0xff]
        %v3520 = vld [vmem:[%s1052 + $0x47] sm:$0xff]
        %v3521 = vld [vmem:[%s1052 + $0x4f] sm:$0xff]
        %v3522 = vld [vmem:[%s1052 + $0x67] sm:$0xff]
        %v3523 = vld [vmem:[%s1052 + $0x6f] sm:$0xff]
        %v3524 = vld [vmem:[%s1052 + $0x87] sm:$0xff]
        %v3525 = vld [vmem:[%s1052 + $0x8f] sm:$0xff]
        %v3526 = vld [vmem:[%s1052 + $0xa7] sm:$0xff]
        %v3527 = vld [vmem:[%s1052 + $0xaf] sm:$0xff]
        %v3528 = vld [vmem:[%s1052 + $0xc7] sm:$0xff]
        %v3529 = vld [vmem:[%s1052 + $0xcf] sm:$0xff]
        %v3530 = vld [vmem:[%s1052 + $0xe7] sm:$0xff]
        %v3531 = vld [vmem:[%s1052 + $0xef] sm:$0xff]
        %v3532 = vld [vmem:[%s1052 + $0x107] sm:$0xff]
        %v3533 = vld [vmem:[%s1052 + $0x10f] sm:$0xff]
        %v3534 = vld [vmem:[%s1052 + $0x127] sm:$0xff]
        %v3535 = vld [vmem:[%s1052 + $0x12f] sm:$0xff]
        %v3536 = vld [vmem:[%s1052 + $0x147] sm:$0xff]
        %v3537 = vld [vmem:[%s1052 + $0x14f] sm:$0xff]
        %v3538 = vld [vmem:[%s1052 + $0x167] sm:$0xff]
        %v3539 = vld [vmem:[%s1052 + $0x16f] sm:$0xff]
        %v3540 = vld [vmem:[%s1052 + $0x187] sm:$0xff]
        %v3541 = vld [vmem:[%s1052 + $0x18f] sm:$0xff]
        %v3542 = vld [vmem:[%s1052 + $0x1a7] sm:$0xff]
        %v3543 = vld [vmem:[%s1052 + $0x1af] sm:$0xff]
        %v3544 = vld [vmem:[%s1052 + $0x1c7] sm:$0xff]
        %v3545 = vld [vmem:[%s1052 + $0x1cf] sm:$0xff]
        %v3546 = vld [vmem:[%s1052 + $0x1e7] sm:$0xff]
        %v3547 = vld [vmem:[%s1052 + $0x1ef] sm:$0xff]
        %3548 = vst.msk [vmem:[#allocation3 + $0x30] sm:$0xff] %vm223, %v3516
        %3549 = vst.msk [vmem:[#allocation3 + $0x78] sm:$0xff] %vm223, %v3517
        %3550 = vst.msk [vmem:[#allocation3 + $0xc0] sm:$0xff] %vm223, %v3518
        %3551 = vst.msk [vmem:[#allocation3 + $0x108] sm:$0xff] %vm223, %v3519
        %3552 = vst.msk [vmem:[#allocation3 + $0x150] sm:$0xff] %vm223, %v3520
        %3553 = vst.msk [vmem:[#allocation3 + $0x198] sm:$0xff] %vm223, %v3521
        %3554 = vst.msk [vmem:[#allocation3 + $0x1e0] sm:$0xff] %vm223, %v3522
        %3555 = vst.msk [vmem:[#allocation3 + $0x228] sm:$0xff] %vm223, %v3523
        %3556 = vst.msk [vmem:[#allocation3 + $0x270] sm:$0xff] %vm223, %v3524
        %3557 = vst.msk [vmem:[#allocation3 + $0x2b8] sm:$0xff] %vm223, %v3525
        %3558 = vst.msk [vmem:[#allocation3 + $0x300] sm:$0xff] %vm223, %v3526
        %3559 = vst.msk [vmem:[#allocation3 + $0x348] sm:$0xff] %vm223, %v3527
        %3560 = vst.msk [vmem:[#allocation3 + $0x390] sm:$0xff] %vm223, %v3528
        %3561 = vst.msk [vmem:[#allocation3 + $0x3d8] sm:$0xff] %vm223, %v3529
        %3562 = vst.msk [vmem:[#allocation3 + $0x420] sm:$0xff] %vm223, %v3530
        %3563 = vst.msk [vmem:[#allocation3 + $0x468] sm:$0xff] %vm223, %v3531
        %3564 = vst.msk [vmem:[#allocation3 + $0x4b0] sm:$0xff] %vm223, %v3532
        %3565 = vst.msk [vmem:[#allocation3 + $0x4f8] sm:$0xff] %vm223, %v3533
        %3566 = vst.msk [vmem:[#allocation3 + $0x540] sm:$0xff] %vm223, %v3534
        %3567 = vst.msk [vmem:[#allocation3 + $0x588] sm:$0xff] %vm223, %v3535
        %3568 = vst.msk [vmem:[#allocation3 + $0x5d0] sm:$0xff] %vm223, %v3536
        %3569 = vst.msk [vmem:[#allocation3 + $0x618] sm:$0xff] %vm223, %v3537
        %3570 = vst.msk [vmem:[#allocation3 + $0x660] sm:$0xff] %vm223, %v3538
        %3571 = vst.msk [vmem:[#allocation3 + $0x6a8] sm:$0xff] %vm223, %v3539
        %3572 = vst.msk [vmem:[#allocation3 + $0x6f0] sm:$0xff] %vm223, %v3540
        %3573 = vst.msk [vmem:[#allocation3 + $0x738] sm:$0xff] %vm223, %v3541
        %3574 = vst.msk [vmem:[#allocation3 + $0x780] sm:$0xff] %vm223, %v3542
        %3575 = vst.msk [vmem:[#allocation3 + $0x7c8] sm:$0xff] %vm223, %v3543
        %3576 = vst.msk [vmem:[#allocation3 + $0x810] sm:$0xff] %vm223, %v3544
        %3577 = vst.msk [vmem:[#allocation3 + $0x858] sm:$0xff] %vm223, %v3545
        %3578 = vst.msk [vmem:[#allocation3 + $0x8a0] sm:$0xff] %vm223, %v3546
        %3579 = vst.msk [vmem:[#allocation3 + $0x8e8] sm:$0xff] %vm223, %v3547
        %v3580 = vld [vmem:[%s1052 + $0x8] sm:$0xff]
        %v3581 = vld [vmem:[%s1052 + $0x10] sm:$0xff]
        %v3582 = vld [vmem:[%s1052 + $0x28] sm:$0xff]
        %v3583 = vld [vmem:[%s1052 + $0x30] sm:$0xff]
        %v3584 = vld [vmem:[%s1052 + $0x48] sm:$0xff]
        %v3585 = vld [vmem:[%s1052 + $0x50] sm:$0xff]
        %v3586 = vld [vmem:[%s1052 + $0x68] sm:$0xff]
        %v3587 = vld [vmem:[%s1052 + $0x70] sm:$0xff]
        %v3588 = vld [vmem:[%s1052 + $0x88] sm:$0xff]
        %v3589 = vld [vmem:[%s1052 + $0x90] sm:$0xff]
        %v3590 = vld [vmem:[%s1052 + $0xa8] sm:$0xff]
        %v3591 = vld [vmem:[%s1052 + $0xb0] sm:$0xff]
        %v3592 = vld [vmem:[%s1052 + $0xc8] sm:$0xff]
        %v3593 = vld [vmem:[%s1052 + $0xd0] sm:$0xff]
        %v3594 = vld [vmem:[%s1052 + $0xe8] sm:$0xff]
        %v3595 = vld [vmem:[%s1052 + $0xf0] sm:$0xff]
        %v3596 = vld [vmem:[%s1052 + $0x108] sm:$0xff]
        %v3597 = vld [vmem:[%s1052 + $0x110] sm:$0xff]
        %v3598 = vld [vmem:[%s1052 + $0x128] sm:$0xff]
        %v3599 = vld [vmem:[%s1052 + $0x130] sm:$0xff]
        %v3600 = vld [vmem:[%s1052 + $0x148] sm:$0xff]
        %v3601 = vld [vmem:[%s1052 + $0x150] sm:$0xff]
        %v3602 = vld [vmem:[%s1052 + $0x168] sm:$0xff]
        %v3603 = vld [vmem:[%s1052 + $0x170] sm:$0xff]
        %v3604 = vld [vmem:[%s1052 + $0x188] sm:$0xff]
        %v3605 = vld [vmem:[%s1052 + $0x190] sm:$0xff]
        %v3606 = vld [vmem:[%s1052 + $0x1a8] sm:$0xff]
        %v3607 = vld [vmem:[%s1052 + $0x1b0] sm:$0xff]
        %v3608 = vld [vmem:[%s1052 + $0x1c8] sm:$0xff]
        %v3609 = vld [vmem:[%s1052 + $0x1d0] sm:$0xff]
        %v3610 = vld [vmem:[%s1052 + $0x1e8] sm:$0xff]
        %v3611 = vld [vmem:[%s1052 + $0x1f0] sm:$0xff]
        %3612 = vst.msk [vmem:[#allocation3 + $0x38] sm:$0xff] %vm223, %v3580
        %3613 = vst.msk [vmem:[#allocation3 + $0x80] sm:$0xff] %vm223, %v3581
        %3614 = vst.msk [vmem:[#allocation3 + $0xc8] sm:$0xff] %vm223, %v3582
        %3615 = vst.msk [vmem:[#allocation3 + $0x110] sm:$0xff] %vm223, %v3583
        %3616 = vst.msk [vmem:[#allocation3 + $0x158] sm:$0xff] %vm223, %v3584
        %3617 = vst.msk [vmem:[#allocation3 + $0x1a0] sm:$0xff] %vm223, %v3585
        %3618 = vst.msk [vmem:[#allocation3 + $0x1e8] sm:$0xff] %vm223, %v3586
        %3619 = vst.msk [vmem:[#allocation3 + $0x230] sm:$0xff] %vm223, %v3587
        %3620 = vst.msk [vmem:[#allocation3 + $0x278] sm:$0xff] %vm223, %v3588
        %3621 = vst.msk [vmem:[#allocation3 + $0x2c0] sm:$0xff] %vm223, %v3589
        %3622 = vst.msk [vmem:[#allocation3 + $0x308] sm:$0xff] %vm223, %v3590
        %3623 = vst.msk [vmem:[#allocation3 + $0x350] sm:$0xff] %vm223, %v3591
        %3624 = vst.msk [vmem:[#allocation3 + $0x398] sm:$0xff] %vm223, %v3592
        %3625 = vst.msk [vmem:[#allocation3 + $0x3e0] sm:$0xff] %vm223, %v3593
        %3626 = vst.msk [vmem:[#allocation3 + $0x428] sm:$0xff] %vm223, %v3594
        %3627 = vst.msk [vmem:[#allocation3 + $0x470] sm:$0xff] %vm223, %v3595
        %3628 = vst.msk [vmem:[#allocation3 + $0x4b8] sm:$0xff] %vm223, %v3596
        %3629 = vst.msk [vmem:[#allocation3 + $0x500] sm:$0xff] %vm223, %v3597
        %3630 = vst.msk [vmem:[#allocation3 + $0x548] sm:$0xff] %vm223, %v3598
        %3631 = vst.msk [vmem:[#allocation3 + $0x590] sm:$0xff] %vm223, %v3599
        %3632 = vst.msk [vmem:[#allocation3 + $0x5d8] sm:$0xff] %vm223, %v3600
        %3633 = vst.msk [vmem:[#allocation3 + $0x620] sm:$0xff] %vm223, %v3601
        %3634 = vst.msk [vmem:[#allocation3 + $0x668] sm:$0xff] %vm223, %v3602
        %3635 = vst.msk [vmem:[#allocation3 + $0x6b0] sm:$0xff] %vm223, %v3603
        %3636 = vst.msk [vmem:[#allocation3 + $0x6f8] sm:$0xff] %vm223, %v3604
        %3637 = vst.msk [vmem:[#allocation3 + $0x740] sm:$0xff] %vm223, %v3605
        %3638 = vst.msk [vmem:[#allocation3 + $0x788] sm:$0xff] %vm223, %v3606
        %3639 = vst.msk [vmem:[#allocation3 + $0x7d0] sm:$0xff] %vm223, %v3607
        %3640 = vst.msk [vmem:[#allocation3 + $0x818] sm:$0xff] %vm223, %v3608
        %3641 = vst.msk [vmem:[#allocation3 + $0x860] sm:$0xff] %vm223, %v3609
        %3642 = vst.msk [vmem:[#allocation3 + $0x8a8] sm:$0xff] %vm223, %v3610
        %3643 = vst.msk [vmem:[#allocation3 + $0x8f0] sm:$0xff] %vm223, %v3611
        %v3644 = vld [vmem:[%s1052 + $0x9] sm:$0xff]
        %v3645 = vld [vmem:[%s1052 + $0x11] sm:$0xff]
        %v3646 = vld [vmem:[%s1052 + $0x29] sm:$0xff]
        %v3647 = vld [vmem:[%s1052 + $0x31] sm:$0xff]
        %v3648 = vld [vmem:[%s1052 + $0x49] sm:$0xff]
        %v3649 = vld [vmem:[%s1052 + $0x51] sm:$0xff]
        %v3650 = vld [vmem:[%s1052 + $0x69] sm:$0xff]
        %v3651 = vld [vmem:[%s1052 + $0x71] sm:$0xff]
        %v3652 = vld [vmem:[%s1052 + $0x89] sm:$0xff]
        %v3653 = vld [vmem:[%s1052 + $0x91] sm:$0xff]
        %v3654 = vld [vmem:[%s1052 + $0xa9] sm:$0xff]
        %v3655 = vld [vmem:[%s1052 + $0xb1] sm:$0xff]
        %v3656 = vld [vmem:[%s1052 + $0xc9] sm:$0xff]
        %v3657 = vld [vmem:[%s1052 + $0xd1] sm:$0xff]
        %v3658 = vld [vmem:[%s1052 + $0xe9] sm:$0xff]
        %v3659 = vld [vmem:[%s1052 + $0xf1] sm:$0xff]
        %v3660 = vld [vmem:[%s1052 + $0x109] sm:$0xff]
        %v3661 = vld [vmem:[%s1052 + $0x111] sm:$0xff]
        %v3662 = vld [vmem:[%s1052 + $0x129] sm:$0xff]
        %v3663 = vld [vmem:[%s1052 + $0x131] sm:$0xff]
        %v3664 = vld [vmem:[%s1052 + $0x149] sm:$0xff]
        %v3665 = vld [vmem:[%s1052 + $0x151] sm:$0xff]
        %v3666 = vld [vmem:[%s1052 + $0x169] sm:$0xff]
        %v3667 = vld [vmem:[%s1052 + $0x171] sm:$0xff]
        %v3668 = vld [vmem:[%s1052 + $0x189] sm:$0xff]
        %v3669 = vld [vmem:[%s1052 + $0x191] sm:$0xff]
        %v3670 = vld [vmem:[%s1052 + $0x1a9] sm:$0xff]
        %v3671 = vld [vmem:[%s1052 + $0x1b1] sm:$0xff]
        %v3672 = vld [vmem:[%s1052 + $0x1c9] sm:$0xff]
        %v3673 = vld [vmem:[%s1052 + $0x1d1] sm:$0xff]
        %v3674 = vld [vmem:[%s1052 + $0x1e9] sm:$0xff]
        %v3675 = vld [vmem:[%s1052 + $0x1f1] sm:$0xff]
        %3676 = vst.msk [vmem:[#allocation3 + $0x40] sm:$0xff] %vm223, %v3644
        %3677 = vst.msk [vmem:[#allocation3 + $0x88] sm:$0xff] %vm223, %v3645
        %3678 = vst.msk [vmem:[#allocation3 + $0xd0] sm:$0xff] %vm223, %v3646
        %3679 = vst.msk [vmem:[#allocation3 + $0x118] sm:$0xff] %vm223, %v3647
        %3680 = vst.msk [vmem:[#allocation3 + $0x160] sm:$0xff] %vm223, %v3648
        %3681 = vst.msk [vmem:[#allocation3 + $0x1a8] sm:$0xff] %vm223, %v3649
        %3682 = vst.msk [vmem:[#allocation3 + $0x1f0] sm:$0xff] %vm223, %v3650
        %3683 = vst.msk [vmem:[#allocation3 + $0x238] sm:$0xff] %vm223, %v3651
        %3684 = vst.msk [vmem:[#allocation3 + $0x280] sm:$0xff] %vm223, %v3652
        %3685 = vst.msk [vmem:[#allocation3 + $0x2c8] sm:$0xff] %vm223, %v3653
        %3686 = vst.msk [vmem:[#allocation3 + $0x310] sm:$0xff] %vm223, %v3654
        %3687 = vst.msk [vmem:[#allocation3 + $0x358] sm:$0xff] %vm223, %v3655
        %3688 = vst.msk [vmem:[#allocation3 + $0x3a0] sm:$0xff] %vm223, %v3656
        %3689 = vst.msk [vmem:[#allocation3 + $0x3e8] sm:$0xff] %vm223, %v3657
        %3690 = vst.msk [vmem:[#allocation3 + $0x430] sm:$0xff] %vm223, %v3658
        %3691 = vst.msk [vmem:[#allocation3 + $0x478] sm:$0xff] %vm223, %v3659
        %3692 = vst.msk [vmem:[#allocation3 + $0x4c0] sm:$0xff] %vm223, %v3660
        %3693 = vst.msk [vmem:[#allocation3 + $0x508] sm:$0xff] %vm223, %v3661
        %3694 = vst.msk [vmem:[#allocation3 + $0x550] sm:$0xff] %vm223, %v3662
        %3695 = vst.msk [vmem:[#allocation3 + $0x598] sm:$0xff] %vm223, %v3663
        %3696 = vst.msk [vmem:[#allocation3 + $0x5e0] sm:$0xff] %vm223, %v3664
        %3697 = vst.msk [vmem:[#allocation3 + $0x628] sm:$0xff] %vm223, %v3665
        %3698 = vst.msk [vmem:[#allocation3 + $0x670] sm:$0xff] %vm223, %v3666
        %3699 = vst.msk [vmem:[#allocation3 + $0x6b8] sm:$0xff] %vm223, %v3667
        %3700 = vst.msk [vmem:[#allocation3 + $0x700] sm:$0xff] %vm223, %v3668
        %3701 = vst.msk [vmem:[#allocation3 + $0x748] sm:$0xff] %vm223, %v3669
        %3702 = vst.msk [vmem:[#allocation3 + $0x790] sm:$0xff] %vm223, %v3670
        %3703 = vst.msk [vmem:[#allocation3 + $0x7d8] sm:$0xff] %vm223, %v3671
        %3704 = vst.msk [vmem:[#allocation3 + $0x820] sm:$0xff] %vm223, %v3672
        %3705 = vst.msk [vmem:[#allocation3 + $0x868] sm:$0xff] %vm223, %v3673
        %3706 = vst.msk [vmem:[#allocation3 + $0x8b0] sm:$0xff] %vm223, %v3674
        %3707 = vst.msk [vmem:[#allocation3 + $0x8f8] sm:$0xff] %vm223, %v3675
        %v3708 = vld [vmem:[#allocation3] sm:$0xff]
        %v3709 = vld [vmem:[#allocation3 + $0x8] sm:$0xff]
        %v3710 = vld [vmem:[#allocation3 + $0x10] sm:$0xff]
        %v3711 = vld [vmem:[#allocation3 + $0x18] sm:$0xff]
        %v3712 = vld [vmem:[#allocation3 + $0x20] sm:$0xff]
        %v3713 = vld [vmem:[#allocation3 + $0x28] sm:$0xff]
        %v3714 = vld [vmem:[#allocation3 + $0x30] sm:$0xff]
        %v3715 = vld [vmem:[#allocation3 + $0x38] sm:$0xff]
        %v3716 = vld [vmem:[#allocation3 + $0x40] sm:$0xff]
        %v3717 = vld [vmem:[#allocation3 + $0x48] sm:$0xff]
        %v3718 = vld [vmem:[#allocation3 + $0x50] sm:$0xff]
        %v3719 = vld [vmem:[#allocation3 + $0x58] sm:$0xff]
        %v3720 = vld [vmem:[#allocation3 + $0x60] sm:$0xff]
        %v3721 = vld [vmem:[#allocation3 + $0x68] sm:$0xff]
        %v3722 = vld [vmem:[#allocation3 + $0x70] sm:$0xff]
        %v3723 = vld [vmem:[#allocation3 + $0x78] sm:$0xff]
        %v3724 = vld [vmem:[#allocation3 + $0x80] sm:$0xff]
        %v3725 = vld [vmem:[#allocation3 + $0x88] sm:$0xff]
        %v3726 = vld [vmem:[#allocation3 + $0x90] sm:$0xff]
        %v3727 = vld [vmem:[#allocation3 + $0x98] sm:$0xff]
        %v3728 = vld [vmem:[#allocation3 + $0xa0] sm:$0xff]
        %v3729 = vld [vmem:[#allocation3 + $0xa8] sm:$0xff]
        %v3730 = vld [vmem:[#allocation3 + $0xb0] sm:$0xff]
        %v3731 = vld [vmem:[#allocation3 + $0xb8] sm:$0xff]
        %v3732 = vld [vmem:[#allocation3 + $0xc0] sm:$0xff]
        %v3733 = vld [vmem:[#allocation3 + $0xc8] sm:$0xff]
        %v3734 = vld [vmem:[#allocation3 + $0xd0] sm:$0xff]
        %v3735 = vld [vmem:[#allocation3 + $0xd8] sm:$0xff]
        %v3736 = vld [vmem:[#allocation3 + $0xe0] sm:$0xff]
        %v3737 = vld [vmem:[#allocation3 + $0xe8] sm:$0xff]
        %v3738 = vld [vmem:[#allocation3 + $0xf0] sm:$0xff]
        %v3739 = vld [vmem:[#allocation3 + $0xf8] sm:$0xff]
        %v3740 = vld [vmem:[#allocation3 + $0x100] sm:$0xff]
        %v3741 = vld [vmem:[#allocation3 + $0x108] sm:$0xff]
        %v3742 = vld [vmem:[#allocation3 + $0x110] sm:$0xff]
        %v3743 = vld [vmem:[#allocation3 + $0x118] sm:$0xff]
        %v3744 = vld [vmem:[#allocation3 + $0x120] sm:$0xff]
        %v3745 = vld [vmem:[#allocation3 + $0x128] sm:$0xff]
        %v3746 = vld [vmem:[#allocation3 + $0x130] sm:$0xff]
        %v3747 = vld [vmem:[#allocation3 + $0x138] sm:$0xff]
        %v3748 = vld [vmem:[#allocation3 + $0x140] sm:$0xff]
        %v3749 = vld [vmem:[#allocation3 + $0x148] sm:$0xff]
        %v3750 = vld [vmem:[#allocation3 + $0x150] sm:$0xff]
        %v3751 = vld [vmem:[#allocation3 + $0x158] sm:$0xff]
        %v3752 = vld [vmem:[#allocation3 + $0x160] sm:$0xff]
        %v3753 = vld [vmem:[#allocation3 + $0x168] sm:$0xff]
        %v3754 = vld [vmem:[#allocation3 + $0x170] sm:$0xff]
        %v3755 = vld [vmem:[#allocation3 + $0x178] sm:$0xff]
        %v3756 = vld [vmem:[#allocation3 + $0x180] sm:$0xff]
        %v3757 = vld [vmem:[#allocation3 + $0x188] sm:$0xff]
        %v3758 = vld [vmem:[#allocation3 + $0x190] sm:$0xff]
        %v3759 = vld [vmem:[#allocation3 + $0x198] sm:$0xff]
        %v3760 = vld [vmem:[#allocation3 + $0x1a0] sm:$0xff]
        %v3761 = vld [vmem:[#allocation3 + $0x1a8] sm:$0xff]
        %v3762 = vld [vmem:[#allocation3 + $0x1b0] sm:$0xff]
        %v3763 = vld [vmem:[#allocation3 + $0x1b8] sm:$0xff]
        %v3764 = vld [vmem:[#allocation3 + $0x1c0] sm:$0xff]
        %v3765 = vld [vmem:[#allocation3 + $0x1c8] sm:$0xff]
        %v3766 = vld [vmem:[#allocation3 + $0x1d0] sm:$0xff]
        %v3767 = vld [vmem:[#allocation3 + $0x1d8] sm:$0xff]
        %v3768 = vld [vmem:[#allocation3 + $0x1e0] sm:$0xff]
        %v3769 = vld [vmem:[#allocation3 + $0x1e8] sm:$0xff]
        %v3770 = vld [vmem:[#allocation3 + $0x1f0] sm:$0xff]
        %v3771 = vld [vmem:[#allocation3 + $0x1f8] sm:$0xff]
        %v3772 = vld [vmem:[#allocation3 + $0x200] sm:$0xff]
        %v3773 = vld [vmem:[#allocation3 + $0x208] sm:$0xff]
        %v3774 = vld [vmem:[#allocation3 + $0x210] sm:$0xff]
        %v3775 = vld [vmem:[#allocation3 + $0x218] sm:$0xff]
        %v3776 = vld [vmem:[#allocation3 + $0x220] sm:$0xff]
        %v3777 = vld [vmem:[#allocation3 + $0x228] sm:$0xff]
        %v3778 = vld [vmem:[#allocation3 + $0x230] sm:$0xff]
        %v3779 = vld [vmem:[#allocation3 + $0x238] sm:$0xff]
        %v3780 = vld [vmem:[#allocation3 + $0x240] sm:$0xff]
        %v3781 = vld [vmem:[#allocation3 + $0x248] sm:$0xff]
        %v3782 = vld [vmem:[#allocation3 + $0x250] sm:$0xff]
        %v3783 = vld [vmem:[#allocation3 + $0x258] sm:$0xff]
        %v3784 = vld [vmem:[#allocation3 + $0x260] sm:$0xff]
        %v3785 = vld [vmem:[#allocation3 + $0x268] sm:$0xff]
        %v3786 = vld [vmem:[#allocation3 + $0x270] sm:$0xff]
        %v3787 = vld [vmem:[#allocation3 + $0x278] sm:$0xff]
        %v3788 = vld [vmem:[#allocation3 + $0x280] sm:$0xff]
        %v3789 = vld [vmem:[#allocation3 + $0x288] sm:$0xff]
        %v3790 = vld [vmem:[#allocation3 + $0x290] sm:$0xff]
        %v3791 = vld [vmem:[#allocation3 + $0x298] sm:$0xff]
        %v3792 = vld [vmem:[#allocation3 + $0x2a0] sm:$0xff]
        %v3793 = vld [vmem:[#allocation3 + $0x2a8] sm:$0xff]
        %v3794 = vld [vmem:[#allocation3 + $0x2b0] sm:$0xff]
        %v3795 = vld [vmem:[#allocation3 + $0x2b8] sm:$0xff]
        %v3796 = vld [vmem:[#allocation3 + $0x2c0] sm:$0xff]
        %v3797 = vld [vmem:[#allocation3 + $0x2c8] sm:$0xff]
        %v3798 = vld [vmem:[#allocation3 + $0x2d0] sm:$0xff]
        %v3799 = vld [vmem:[#allocation3 + $0x2d8] sm:$0xff]
        %v3800 = vld [vmem:[#allocation3 + $0x2e0] sm:$0xff]
        %v3801 = vld [vmem:[#allocation3 + $0x2e8] sm:$0xff]
        %v3802 = vld [vmem:[#allocation3 + $0x2f0] sm:$0xff]
        %v3803 = vld [vmem:[#allocation3 + $0x2f8] sm:$0xff]
        %v3804 = vld [vmem:[#allocation3 + $0x300] sm:$0xff]
        %v3805 = vld [vmem:[#allocation3 + $0x308] sm:$0xff]
        %v3806 = vld [vmem:[#allocation3 + $0x310] sm:$0xff]
        %v3807 = vld [vmem:[#allocation3 + $0x318] sm:$0xff]
        %v3808 = vld [vmem:[#allocation3 + $0x320] sm:$0xff]
        %v3809 = vld [vmem:[#allocation3 + $0x328] sm:$0xff]
        %v3810 = vld [vmem:[#allocation3 + $0x330] sm:$0xff]
        %v3811 = vld [vmem:[#allocation3 + $0x338] sm:$0xff]
        %v3812 = vld [vmem:[#allocation3 + $0x340] sm:$0xff]
        %v3813 = vld [vmem:[#allocation3 + $0x348] sm:$0xff]
        %v3814 = vld [vmem:[#allocation3 + $0x350] sm:$0xff]
        %v3815 = vld [vmem:[#allocation3 + $0x358] sm:$0xff]
        %v3816 = vld [vmem:[#allocation3 + $0x360] sm:$0xff]
        %v3817 = vld [vmem:[#allocation3 + $0x368] sm:$0xff]
        %v3818 = vld [vmem:[#allocation3 + $0x370] sm:$0xff]
        %v3819 = vld [vmem:[#allocation3 + $0x378] sm:$0xff]
        %v3820 = vld [vmem:[#allocation3 + $0x380] sm:$0xff]
        %v3821 = vld [vmem:[#allocation3 + $0x388] sm:$0xff]
        %v3822 = vld [vmem:[#allocation3 + $0x390] sm:$0xff]
        %v3823 = vld [vmem:[#allocation3 + $0x398] sm:$0xff]
        %v3824 = vld [vmem:[#allocation3 + $0x3a0] sm:$0xff]
        %v3825 = vld [vmem:[#allocation3 + $0x3a8] sm:$0xff]
        %v3826 = vld [vmem:[#allocation3 + $0x3b0] sm:$0xff]
        %v3827 = vld [vmem:[#allocation3 + $0x3b8] sm:$0xff]
        %v3828 = vld [vmem:[#allocation3 + $0x3c0] sm:$0xff]
        %v3829 = vld [vmem:[#allocation3 + $0x3c8] sm:$0xff]
        %v3830 = vld [vmem:[#allocation3 + $0x3d0] sm:$0xff]
        %v3831 = vld [vmem:[#allocation3 + $0x3d8] sm:$0xff]
        %v3832 = vld [vmem:[#allocation3 + $0x3e0] sm:$0xff]
        %v3833 = vld [vmem:[#allocation3 + $0x3e8] sm:$0xff]
        %v3834 = vld [vmem:[#allocation3 + $0x3f0] sm:$0xff]
        %v3835 = vld [vmem:[#allocation3 + $0x3f8] sm:$0xff]
        %v3836 = vld [vmem:[#allocation3 + $0x400] sm:$0xff]
        %v3837 = vld [vmem:[#allocation3 + $0x408] sm:$0xff]
        %v3838 = vld [vmem:[#allocation3 + $0x410] sm:$0xff]
        %v3839 = vld [vmem:[#allocation3 + $0x418] sm:$0xff]
        %v3840 = vld [vmem:[#allocation3 + $0x420] sm:$0xff]
        %v3841 = vld [vmem:[#allocation3 + $0x428] sm:$0xff]
        %v3842 = vld [vmem:[#allocation3 + $0x430] sm:$0xff]
        %v3843 = vld [vmem:[#allocation3 + $0x438] sm:$0xff]
        %v3844 = vld [vmem:[#allocation3 + $0x440] sm:$0xff]
        %v3845 = vld [vmem:[#allocation3 + $0x448] sm:$0xff]
        %v3846 = vld [vmem:[#allocation3 + $0x450] sm:$0xff]
        %v3847 = vld [vmem:[#allocation3 + $0x458] sm:$0xff]
        %v3848 = vld [vmem:[#allocation3 + $0x460] sm:$0xff]
        %v3849 = vld [vmem:[#allocation3 + $0x468] sm:$0xff]
        %v3850 = vld [vmem:[#allocation3 + $0x470] sm:$0xff]
        %v3851 = vld [vmem:[#allocation3 + $0x478] sm:$0xff]
        %v3852 = vld [vmem:[#allocation3 + $0x480] sm:$0xff]
        %v3853 = vld [vmem:[#allocation3 + $0x488] sm:$0xff]
        %v3854 = vld [vmem:[#allocation3 + $0x490] sm:$0xff]
        %v3855 = vld [vmem:[#allocation3 + $0x498] sm:$0xff]
        %v3856 = vld [vmem:[#allocation3 + $0x4a0] sm:$0xff]
        %v3857 = vld [vmem:[#allocation3 + $0x4a8] sm:$0xff]
        %v3858 = vld [vmem:[#allocation3 + $0x4b0] sm:$0xff]
        %v3859 = vld [vmem:[#allocation3 + $0x4b8] sm:$0xff]
        %v3860 = vld [vmem:[#allocation3 + $0x4c0] sm:$0xff]
        %v3861 = vld [vmem:[#allocation3 + $0x4c8] sm:$0xff]
        %v3862 = vld [vmem:[#allocation3 + $0x4d0] sm:$0xff]
        %v3863 = vld [vmem:[#allocation3 + $0x4d8] sm:$0xff]
        %v3864 = vld [vmem:[#allocation3 + $0x4e0] sm:$0xff]
        %v3865 = vld [vmem:[#allocation3 + $0x4e8] sm:$0xff]
        %v3866 = vld [vmem:[#allocation3 + $0x4f0] sm:$0xff]
        %v3867 = vld [vmem:[#allocation3 + $0x4f8] sm:$0xff]
        %v3868 = vld [vmem:[#allocation3 + $0x500] sm:$0xff]
        %v3869 = vld [vmem:[#allocation3 + $0x508] sm:$0xff]
        %v3870 = vld [vmem:[#allocation3 + $0x510] sm:$0xff]
        %v3871 = vld [vmem:[#allocation3 + $0x518] sm:$0xff]
        %v3872 = vld [vmem:[#allocation3 + $0x520] sm:$0xff]
        %v3873 = vld [vmem:[#allocation3 + $0x528] sm:$0xff]
        %v3874 = vld [vmem:[#allocation3 + $0x530] sm:$0xff]
        %v3875 = vld [vmem:[#allocation3 + $0x538] sm:$0xff]
        %v3876 = vld [vmem:[#allocation3 + $0x540] sm:$0xff]
        %v3877 = vld [vmem:[#allocation3 + $0x548] sm:$0xff]
        %v3878 = vld [vmem:[#allocation3 + $0x550] sm:$0xff]
        %v3879 = vld [vmem:[#allocation3 + $0x558] sm:$0xff]
        %v3880 = vld [vmem:[#allocation3 + $0x560] sm:$0xff]
        %v3881 = vld [vmem:[#allocation3 + $0x568] sm:$0xff]
        %v3882 = vld [vmem:[#allocation3 + $0x570] sm:$0xff]
        %v3883 = vld [vmem:[#allocation3 + $0x578] sm:$0xff]
        %v3884 = vld [vmem:[#allocation3 + $0x580] sm:$0xff]
        %v3885 = vld [vmem:[#allocation3 + $0x588] sm:$0xff]
        %v3886 = vld [vmem:[#allocation3 + $0x590] sm:$0xff]
        %v3887 = vld [vmem:[#allocation3 + $0x598] sm:$0xff]
        %v3888 = vld [vmem:[#allocation3 + $0x5a0] sm:$0xff]
        %v3889 = vld [vmem:[#allocation3 + $0x5a8] sm:$0xff]
        %v3890 = vld [vmem:[#allocation3 + $0x5b0] sm:$0xff]
        %v3891 = vld [vmem:[#allocation3 + $0x5b8] sm:$0xff]
        %v3892 = vld [vmem:[#allocation3 + $0x5c0] sm:$0xff]
        %v3893 = vld [vmem:[#allocation3 + $0x5c8] sm:$0xff]
        %v3894 = vld [vmem:[#allocation3 + $0x5d0] sm:$0xff]
        %v3895 = vld [vmem:[#allocation3 + $0x5d8] sm:$0xff]
        %v3896 = vld [vmem:[#allocation3 + $0x5e0] sm:$0xff]
        %v3897 = vld [vmem:[#allocation3 + $0x5e8] sm:$0xff]
        %v3898 = vld [vmem:[#allocation3 + $0x5f0] sm:$0xff]
        %v3899 = vld [vmem:[#allocation3 + $0x5f8] sm:$0xff]
        %v3900 = vld [vmem:[#allocation3 + $0x600] sm:$0xff]
        %v3901 = vld [vmem:[#allocation3 + $0x608] sm:$0xff]
        %v3902 = vld [vmem:[#allocation3 + $0x610] sm:$0xff]
        %v3903 = vld [vmem:[#allocation3 + $0x618] sm:$0xff]
        %v3904 = vld [vmem:[#allocation3 + $0x620] sm:$0xff]
        %v3905 = vld [vmem:[#allocation3 + $0x628] sm:$0xff]
        %v3906 = vld [vmem:[#allocation3 + $0x630] sm:$0xff]
        %v3907 = vld [vmem:[#allocation3 + $0x638] sm:$0xff]
        %v3908 = vld [vmem:[#allocation3 + $0x640] sm:$0xff]
        %v3909 = vld [vmem:[#allocation3 + $0x648] sm:$0xff]
        %v3910 = vld [vmem:[#allocation3 + $0x650] sm:$0xff]
        %v3911 = vld [vmem:[#allocation3 + $0x658] sm:$0xff]
        %v3912 = vld [vmem:[#allocation3 + $0x660] sm:$0xff]
        %v3913 = vld [vmem:[#allocation3 + $0x668] sm:$0xff]
        %v3914 = vld [vmem:[#allocation3 + $0x670] sm:$0xff]
        %v3915 = vld [vmem:[#allocation3 + $0x678] sm:$0xff]
        %v3916 = vld [vmem:[#allocation3 + $0x680] sm:$0xff]
        %v3917 = vld [vmem:[#allocation3 + $0x688] sm:$0xff]
        %v3918 = vld [vmem:[#allocation3 + $0x690] sm:$0xff]
        %v3919 = vld [vmem:[#allocation3 + $0x698] sm:$0xff]
        %v3920 = vld [vmem:[#allocation3 + $0x6a0] sm:$0xff]
        %v3921 = vld [vmem:[#allocation3 + $0x6a8] sm:$0xff]
        %v3922 = vld [vmem:[#allocation3 + $0x6b0] sm:$0xff]
        %v3923 = vld [vmem:[#allocation3 + $0x6b8] sm:$0xff]
        %v3924 = vld [vmem:[#allocation3 + $0x6c0] sm:$0xff]
        %v3925 = vld [vmem:[#allocation3 + $0x6c8] sm:$0xff]
        %v3926 = vld [vmem:[#allocation3 + $0x6d0] sm:$0xff]
        %v3927 = vld [vmem:[#allocation3 + $0x6d8] sm:$0xff]
        %v3928 = vld [vmem:[#allocation3 + $0x6e0] sm:$0xff]
        %v3929 = vld [vmem:[#allocation3 + $0x6e8] sm:$0xff]
        %v3930 = vld [vmem:[#allocation3 + $0x6f0] sm:$0xff]
        %v3931 = vld [vmem:[#allocation3 + $0x6f8] sm:$0xff]
        %v3932 = vld [vmem:[#allocation3 + $0x700] sm:$0xff]
        %v3933 = vld [vmem:[#allocation3 + $0x708] sm:$0xff]
        %v3934 = vld [vmem:[#allocation3 + $0x710] sm:$0xff]
        %v3935 = vld [vmem:[#allocation3 + $0x718] sm:$0xff]
        %v3936 = vld [vmem:[#allocation3 + $0x720] sm:$0xff]
        %v3937 = vld [vmem:[#allocation3 + $0x728] sm:$0xff]
        %v3938 = vld [vmem:[#allocation3 + $0x730] sm:$0xff]
        %v3939 = vld [vmem:[#allocation3 + $0x738] sm:$0xff]
        %v3940 = vld [vmem:[#allocation3 + $0x740] sm:$0xff]
        %v3941 = vld [vmem:[#allocation3 + $0x748] sm:$0xff]
        %v3942 = vld [vmem:[#allocation3 + $0x750] sm:$0xff]
        %v3943 = vld [vmem:[#allocation3 + $0x758] sm:$0xff]
        %v3944 = vld [vmem:[#allocation3 + $0x760] sm:$0xff]
        %v3945 = vld [vmem:[#allocation3 + $0x768] sm:$0xff]
        %v3946 = vld [vmem:[#allocation3 + $0x770] sm:$0xff]
        %v3947 = vld [vmem:[#allocation3 + $0x778] sm:$0xff]
        %v3948 = vld [vmem:[#allocation3 + $0x780] sm:$0xff]
        %v3949 = vld [vmem:[#allocation3 + $0x788] sm:$0xff]
        %v3950 = vld [vmem:[#allocation3 + $0x790] sm:$0xff]
        %v3951 = vld [vmem:[#allocation3 + $0x798] sm:$0xff]
        %v3952 = vld [vmem:[#allocation3 + $0x7a0] sm:$0xff]
        %v3953 = vld [vmem:[#allocation3 + $0x7a8] sm:$0xff]
        %v3954 = vld [vmem:[#allocation3 + $0x7b0] sm:$0xff]
        %v3955 = vld [vmem:[#allocation3 + $0x7b8] sm:$0xff]
        %v3956 = vld [vmem:[#allocation3 + $0x7c0] sm:$0xff]
        %v3957 = vld [vmem:[#allocation3 + $0x7c8] sm:$0xff]
        %v3958 = vld [vmem:[#allocation3 + $0x7d0] sm:$0xff]
        %v3959 = vld [vmem:[#allocation3 + $0x7d8] sm:$0xff]
        %v3960 = vld [vmem:[#allocation3 + $0x7e0] sm:$0xff]
        %v3961 = vld [vmem:[#allocation3 + $0x7e8] sm:$0xff]
        %v3962 = vld [vmem:[#allocation3 + $0x7f0] sm:$0xff]
        %v3963 = vld [vmem:[#allocation3 + $0x7f8] sm:$0xff]
        %v3964 = vld [vmem:[#allocation3 + $0x800] sm:$0xff]
        %v3965 = vld [vmem:[#allocation3 + $0x808] sm:$0xff]
        %v3966 = vld [vmem:[#allocation3 + $0x810] sm:$0xff]
        %v3967 = vld [vmem:[#allocation3 + $0x818] sm:$0xff]
        %v3968 = vld [vmem:[#allocation3 + $0x820] sm:$0xff]
        %v3969 = vld [vmem:[#allocation3 + $0x828] sm:$0xff]
        %v3970 = vld [vmem:[#allocation3 + $0x830] sm:$0xff]
        %v3971 = vld [vmem:[#allocation3 + $0x838] sm:$0xff]
        %v3972 = vld [vmem:[#allocation3 + $0x840] sm:$0xff]
        %v3973 = vld [vmem:[#allocation3 + $0x848] sm:$0xff]
        %v3974 = vld [vmem:[#allocation3 + $0x850] sm:$0xff]
        %v3975 = vld [vmem:[#allocation3 + $0x858] sm:$0xff]
        %v3976 = vld [vmem:[#allocation3 + $0x860] sm:$0xff]
        %v3977 = vld [vmem:[#allocation3 + $0x868] sm:$0xff]
        %v3978 = vld [vmem:[#allocation3 + $0x870] sm:$0xff]
        %v3979 = vld [vmem:[#allocation3 + $0x878] sm:$0xff]
        %v3980 = vld [vmem:[#allocation3 + $0x880] sm:$0xff]
        %v3981 = vld [vmem:[#allocation3 + $0x888] sm:$0xff]
        %v3982 = vld [vmem:[#allocation3 + $0x890] sm:$0xff]
        %v3983 = vld [vmem:[#allocation3 + $0x898] sm:$0xff]
        %v3984 = vld [vmem:[#allocation3 + $0x8a0] sm:$0xff]
        %v3985 = vld [vmem:[#allocation3 + $0x8a8] sm:$0xff]
        %v3986 = vld [vmem:[#allocation3 + $0x8b0] sm:$0xff]
        %v3987 = vld [vmem:[#allocation3 + $0x8b8] sm:$0xff]
        %v3988 = vld [vmem:[#allocation3 + $0x8c0] sm:$0xff]
        %v3989 = vld [vmem:[#allocation3 + $0x8c8] sm:$0xff]
        %v3990 = vld [vmem:[#allocation3 + $0x8d0] sm:$0xff]
        %v3991 = vld [vmem:[#allocation3 + $0x8d8] sm:$0xff]
        %v3992 = vld [vmem:[#allocation3 + $0x8e0] sm:$0xff]
        %v3993 = vld [vmem:[#allocation3 + $0x8e8] sm:$0xff]
        %v3994 = vld [vmem:[#allocation3 + $0x8f0] sm:$0xff]
        %v3995 = vld [vmem:[#allocation3 + $0x8f8] sm:$0xff]
        %s3996 = scalar_lea.vmem %s1, 1152
        %v3997 = vld [vmem:[%s3996] sm:$0xff]
        %v3998 = vld [vmem:[%s3996 + $0x8] sm:$0xff]
        %v3999 = vld [vmem:[%s3996 + $0x10] sm:$0xff]
        %v4000 = vld [vmem:[%s3996 + $0x18] sm:$0xff]
        %v4001 = vld [vmem:[%s3996 + $0x20] sm:$0xff]
        %v4002 = vld [vmem:[%s3996 + $0x28] sm:$0xff]
        %v4003 = vld [vmem:[%s3996 + $0x30] sm:$0xff]
        %v4004 = vld [vmem:[%s3996 + $0x38] sm:$0xff]
        %v4005 = vld [vmem:[%s3996 + $0x40] sm:$0xff]
        %v4006 = vld [vmem:[%s3996 + $0x48] sm:$0xff]
        %v4007 = vld [vmem:[%s3996 + $0x50] sm:$0xff]
        %v4008 = vld [vmem:[%s3996 + $0x58] sm:$0xff]
        %v4009 = vld [vmem:[%s3996 + $0x60] sm:$0xff]
        %v4010 = vld [vmem:[%s3996 + $0x68] sm:$0xff]
        %v4011 = vld [vmem:[%s3996 + $0x70] sm:$0xff]
        %v4012 = vld [vmem:[%s3996 + $0x78] sm:$0xff]
        %v4013 = vld [vmem:[%s3996 + $0x80] sm:$0xff]
        %v4014 = vld [vmem:[%s3996 + $0x88] sm:$0xff]
        %v4015 = vld [vmem:[%s3996 + $0x90] sm:$0xff]
        %v4016 = vld [vmem:[%s3996 + $0x98] sm:$0xff]
        %v4017 = vld [vmem:[%s3996 + $0xa0] sm:$0xff]
        %v4018 = vld [vmem:[%s3996 + $0xa8] sm:$0xff]
        %v4019 = vld [vmem:[%s3996 + $0xb0] sm:$0xff]
        %v4020 = vld [vmem:[%s3996 + $0xb8] sm:$0xff]
        %v4021 = vld [vmem:[%s3996 + $0xc0] sm:$0xff]
        %v4022 = vld [vmem:[%s3996 + $0xc8] sm:$0xff]
        %v4023 = vld [vmem:[%s3996 + $0xd0] sm:$0xff]
        %v4024 = vld [vmem:[%s3996 + $0xd8] sm:$0xff]
        %v4025 = vld [vmem:[%s3996 + $0xe0] sm:$0xff]
        %v4026 = vld [vmem:[%s3996 + $0xe8] sm:$0xff]
        %v4027 = vld [vmem:[%s3996 + $0xf0] sm:$0xff]
        %v4028 = vld [vmem:[%s3996 + $0xf8] sm:$0xff]
        %v4029 = vld [vmem:[%s3996 + $0x100] sm:$0xff]
        %v4030 = vld [vmem:[%s3996 + $0x108] sm:$0xff]
        %v4031 = vld [vmem:[%s3996 + $0x110] sm:$0xff]
        %v4032 = vld [vmem:[%s3996 + $0x118] sm:$0xff]
        %v4033 = vld [vmem:[%s3996 + $0x120] sm:$0xff]
        %v4034 = vld [vmem:[%s3996 + $0x128] sm:$0xff]
        %v4035 = vld [vmem:[%s3996 + $0x130] sm:$0xff]
        %v4036 = vld [vmem:[%s3996 + $0x138] sm:$0xff]
        %v4037 = vld [vmem:[%s3996 + $0x140] sm:$0xff]
        %v4038 = vld [vmem:[%s3996 + $0x148] sm:$0xff]
        %v4039 = vld [vmem:[%s3996 + $0x150] sm:$0xff]
        %v4040 = vld [vmem:[%s3996 + $0x158] sm:$0xff]
        %v4041 = vld [vmem:[%s3996 + $0x160] sm:$0xff]
        %v4042 = vld [vmem:[%s3996 + $0x168] sm:$0xff]
        %v4043 = vld [vmem:[%s3996 + $0x170] sm:$0xff]
        %v4044 = vld [vmem:[%s3996 + $0x178] sm:$0xff]
        %v4045 = vld [vmem:[%s3996 + $0x180] sm:$0xff]
        %v4046 = vld [vmem:[%s3996 + $0x188] sm:$0xff]
        %v4047 = vld [vmem:[%s3996 + $0x190] sm:$0xff]
        %v4048 = vld [vmem:[%s3996 + $0x198] sm:$0xff]
        %v4049 = vld [vmem:[%s3996 + $0x1a0] sm:$0xff]
        %v4050 = vld [vmem:[%s3996 + $0x1a8] sm:$0xff]
        %v4051 = vld [vmem:[%s3996 + $0x1b0] sm:$0xff]
        %v4052 = vld [vmem:[%s3996 + $0x1b8] sm:$0xff]
        %v4053 = vld [vmem:[%s3996 + $0x1c0] sm:$0xff]
        %v4054 = vld [vmem:[%s3996 + $0x1c8] sm:$0xff]
        %v4055 = vld [vmem:[%s3996 + $0x1d0] sm:$0xff]
        %v4056 = vld [vmem:[%s3996 + $0x1d8] sm:$0xff]
        %v4057 = vld [vmem:[%s3996 + $0x1e0] sm:$0xff]
        %v4058 = vld [vmem:[%s3996 + $0x1e8] sm:$0xff]
        %v4059 = vld [vmem:[%s3996 + $0x1f0] sm:$0xff]
        %v4060 = vld [vmem:[%s3996 + $0x1f8] sm:$0xff]
        %v4061 = vld [vmem:[%s3996 + $0x200] sm:$0xff]
        %v4062 = vld [vmem:[%s3996 + $0x208] sm:$0xff]
        %v4063 = vld [vmem:[%s3996 + $0x210] sm:$0xff]
        %v4064 = vld [vmem:[%s3996 + $0x218] sm:$0xff]
        %v4065 = vld [vmem:[%s3996 + $0x220] sm:$0xff]
        %v4066 = vld [vmem:[%s3996 + $0x228] sm:$0xff]
        %v4067 = vld [vmem:[%s3996 + $0x230] sm:$0xff]
        %v4068 = vld [vmem:[%s3996 + $0x238] sm:$0xff]
        %v4069 = vld [vmem:[%s3996 + $0x240] sm:$0xff]
        %v4070 = vld [vmem:[%s3996 + $0x248] sm:$0xff]
        %v4071 = vld [vmem:[%s3996 + $0x250] sm:$0xff]
        %v4072 = vld [vmem:[%s3996 + $0x258] sm:$0xff]
        %v4073 = vld [vmem:[%s3996 + $0x260] sm:$0xff]
        %v4074 = vld [vmem:[%s3996 + $0x268] sm:$0xff]
        %v4075 = vld [vmem:[%s3996 + $0x270] sm:$0xff]
        %v4076 = vld [vmem:[%s3996 + $0x278] sm:$0xff]
        %v4077 = vld [vmem:[%s3996 + $0x280] sm:$0xff]
        %v4078 = vld [vmem:[%s3996 + $0x288] sm:$0xff]
        %v4079 = vld [vmem:[%s3996 + $0x290] sm:$0xff]
        %v4080 = vld [vmem:[%s3996 + $0x298] sm:$0xff]
        %v4081 = vld [vmem:[%s3996 + $0x2a0] sm:$0xff]
        %v4082 = vld [vmem:[%s3996 + $0x2a8] sm:$0xff]
        %v4083 = vld [vmem:[%s3996 + $0x2b0] sm:$0xff]
        %v4084 = vld [vmem:[%s3996 + $0x2b8] sm:$0xff]
        %v4085 = vld [vmem:[%s3996 + $0x2c0] sm:$0xff]
        %v4086 = vld [vmem:[%s3996 + $0x2c8] sm:$0xff]
        %v4087 = vld [vmem:[%s3996 + $0x2d0] sm:$0xff]
        %v4088 = vld [vmem:[%s3996 + $0x2d8] sm:$0xff]
        %v4089 = vld [vmem:[%s3996 + $0x2e0] sm:$0xff]
        %v4090 = vld [vmem:[%s3996 + $0x2e8] sm:$0xff]
        %v4091 = vld [vmem:[%s3996 + $0x2f0] sm:$0xff]
        %v4092 = vld [vmem:[%s3996 + $0x2f8] sm:$0xff]
        %v4093 = vld [vmem:[%s3996 + $0x300] sm:$0xff]
        %v4094 = vld [vmem:[%s3996 + $0x308] sm:$0xff]
        %v4095 = vld [vmem:[%s3996 + $0x310] sm:$0xff]
        %v4096 = vld [vmem:[%s3996 + $0x318] sm:$0xff]
        %v4097 = vld [vmem:[%s3996 + $0x320] sm:$0xff]
        %v4098 = vld [vmem:[%s3996 + $0x328] sm:$0xff]
        %v4099 = vld [vmem:[%s3996 + $0x330] sm:$0xff]
        %v4100 = vld [vmem:[%s3996 + $0x338] sm:$0xff]
        %v4101 = vld [vmem:[%s3996 + $0x340] sm:$0xff]
        %v4102 = vld [vmem:[%s3996 + $0x348] sm:$0xff]
        %v4103 = vld [vmem:[%s3996 + $0x350] sm:$0xff]
        %v4104 = vld [vmem:[%s3996 + $0x358] sm:$0xff]
        %v4105 = vld [vmem:[%s3996 + $0x360] sm:$0xff]
        %v4106 = vld [vmem:[%s3996 + $0x368] sm:$0xff]
        %v4107 = vld [vmem:[%s3996 + $0x370] sm:$0xff]
        %v4108 = vld [vmem:[%s3996 + $0x378] sm:$0xff]
        %v4109 = vld [vmem:[%s3996 + $0x380] sm:$0xff]
        %v4110 = vld [vmem:[%s3996 + $0x388] sm:$0xff]
        %v4111 = vld [vmem:[%s3996 + $0x390] sm:$0xff]
        %v4112 = vld [vmem:[%s3996 + $0x398] sm:$0xff]
        %v4113 = vld [vmem:[%s3996 + $0x3a0] sm:$0xff]
        %v4114 = vld [vmem:[%s3996 + $0x3a8] sm:$0xff]
        %v4115 = vld [vmem:[%s3996 + $0x3b0] sm:$0xff]
        %v4116 = vld [vmem:[%s3996 + $0x3b8] sm:$0xff]
        %v4117 = vld [vmem:[%s3996 + $0x3c0] sm:$0xff]
        %v4118 = vld [vmem:[%s3996 + $0x3c8] sm:$0xff]
        %v4119 = vld [vmem:[%s3996 + $0x3d0] sm:$0xff]
        %v4120 = vld [vmem:[%s3996 + $0x3d8] sm:$0xff]
        %v4121 = vld [vmem:[%s3996 + $0x3e0] sm:$0xff]
        %v4122 = vld [vmem:[%s3996 + $0x3e8] sm:$0xff]
        %v4123 = vld [vmem:[%s3996 + $0x3f0] sm:$0xff]
        %v4124 = vld [vmem:[%s3996 + $0x3f8] sm:$0xff]
        %v4125 = vld [vmem:[%s3996 + $0x400] sm:$0xff]
        %v4126 = vld [vmem:[%s3996 + $0x408] sm:$0xff]
        %v4127 = vld [vmem:[%s3996 + $0x410] sm:$0xff]
        %v4128 = vld [vmem:[%s3996 + $0x418] sm:$0xff]
        %v4129 = vld [vmem:[%s3996 + $0x420] sm:$0xff]
        %v4130 = vld [vmem:[%s3996 + $0x428] sm:$0xff]
        %v4131 = vld [vmem:[%s3996 + $0x430] sm:$0xff]
        %v4132 = vld [vmem:[%s3996 + $0x438] sm:$0xff]
        %v4133 = vld [vmem:[%s3996 + $0x440] sm:$0xff]
        %v4134 = vld [vmem:[%s3996 + $0x448] sm:$0xff]
        %v4135 = vld [vmem:[%s3996 + $0x450] sm:$0xff]
        %v4136 = vld [vmem:[%s3996 + $0x458] sm:$0xff]
        %v4137 = vld [vmem:[%s3996 + $0x460] sm:$0xff]
        %v4138 = vld [vmem:[%s3996 + $0x468] sm:$0xff]
        %v4139 = vld [vmem:[%s3996 + $0x470] sm:$0xff]
        %v4140 = vld [vmem:[%s3996 + $0x478] sm:$0xff]
        %4141 = vmatprep.subr.mxu0 0.0
        %4142 = vmatpush1.msra.mxu0 %v4012
        %4143 = vmatprep.subr.mxu0 0.0
        %4144 = vmatpush1.msra.mxu0 %v4011
        %4145 = vmatprep.subr.mxu0 0.0
        %4146 = vmatpush1.msra.mxu0 %v4010
        %4147 = vmatprep.subr.mxu0 0.0
        %4148 = vmatpush1.msra.mxu0 %v4009
        %4149 = vmatprep.subr.mxu0 0.0
        %4150 = vmatpush1.msra.mxu0 %v4008
        %4151 = vmatprep.subr.mxu0 0.0
        %4152 = vmatpush1.msra.mxu0 %v4007
        %4153 = vmatprep.subr.mxu0 0.0
        %4154 = vmatpush1.msra.mxu0 %v4006
        %4155 = vmatprep.subr.mxu0 0.0
        %4156 = vmatpush1.msra.mxu0 %v4005
        %4157 = vmatprep.subr.mxu0 0.0
        %4158 = vmatpush1.msra.mxu0 %v4004
        %4159 = vmatprep.subr.mxu0 0.0
        %4160 = vmatpush1.msra.mxu0 %v4003
        %4161 = vmatprep.subr.mxu0 0.0
        %4162 = vmatpush1.msra.mxu0 %v4002
        %4163 = vmatprep.subr.mxu0 0.0
        %4164 = vmatpush1.msra.mxu0 %v4001
        %4165 = vmatprep.subr.mxu0 0.0
        %4166 = vmatpush1.msra.mxu0 %v4000
        %4167 = vmatprep.subr.mxu0 0.0
        %4168 = vmatpush1.msra.mxu0 %v3999
        %4169 = vmatprep.subr.mxu0 0.0
        %4170 = vmatpush1.msra.mxu0 %v3998
        %4171 = vmatprep.subr.mxu0 0.0
        %4172 = vmatpush1.msra.mxu0 %v3997
        %4173 = vmatprep.subr.mxu0 0.0
        %4174 = vmatpush2.msra.mxu0 %v4028
        %4175 = vmatprep.subr.mxu0 0.0
        %4176 = vmatpush2.msra.mxu0 %v4027
        %4177 = vmatprep.subr.mxu0 0.0
        %4178 = vmatpush2.msra.mxu0 %v4026
        %4179 = vmatprep.subr.mxu0 0.0
        %4180 = vmatpush2.msra.mxu0 %v4025
        %4181 = vmatprep.subr.mxu0 0.0
        %4182 = vmatpush2.msra.mxu0 %v4024
        %4183 = vmatprep.subr.mxu0 0.0
        %4184 = vmatpush2.msra.mxu0 %v4023
        %4185 = vmatprep.subr.mxu0 0.0
        %4186 = vmatpush2.msra.mxu0 %v4022
        %4187 = vmatprep.subr.mxu0 0.0
        %4188 = vmatpush2.msra.mxu0 %v4021
        %4189 = vmatprep.subr.mxu0 0.0
        %4190 = vmatpush2.msra.mxu0 %v4020
        %4191 = vmatprep.subr.mxu0 0.0
        %4192 = vmatpush2.msra.mxu0 %v4019
        %4193 = vmatprep.subr.mxu0 0.0
        %4194 = vmatpush2.msra.mxu0 %v4018
        %4195 = vmatprep.subr.mxu0 0.0
        %4196 = vmatpush2.msra.mxu0 %v4017
        %4197 = vmatprep.subr.mxu0 0.0
        %4198 = vmatpush2.msra.mxu0 %v4016
        %4199 = vmatprep.subr.mxu0 0.0
        %4200 = vmatpush2.msra.mxu0 %v4015
        %4201 = vmatprep.subr.mxu0 0.0
        %4202 = vmatpush2.msra.mxu0 %v4014
        %4203 = vmatprep.subr.mxu0 0.0
        %4204 = vmatpush2.msra.mxu0 %v4013
        %4205 = vmatprep.mubr.f32.mxu0 %v3709
        %4206 = vmatmul.mubr.f32.gmra.mxu0 %v3708
        %v4207 = vpop.f32.mrf.mxu0
        %v4208 = vadd.f32 0.0, %v4207
        %v4209 = vpop.f32.mrf.mxu0
        %4210 = vmatprep.mubr.f32.mxu0 %v3718
        %4211 = vmatmul.mubr.f32.gmra.mxu0 %v3717
        %v4212 = vpop.f32.mrf.mxu0
        %v4213 = vadd.f32 0.0, %v4212
        %v4214 = vpop.f32.mrf.mxu0
        %4215 = vmatprep.mubr.f32.mxu0 %v3727
        %4216 = vmatmul.mubr.f32.gmra.mxu0 %v3726
        %v4217 = vpop.f32.mrf.mxu0
        %v4218 = vadd.f32 0.0, %v4217
        %v4219 = vpop.f32.mrf.mxu0
        %4220 = vmatprep.mubr.f32.mxu0 %v3736
        %4221 = vmatmul.mubr.f32.gmra.mxu0 %v3735
        %v4222 = vpop.f32.mrf.mxu0
        %v4223 = vadd.f32 0.0, %v4222
        %v4224 = vpop.f32.mrf.mxu0
        %4225 = vmatprep.mubr.f32.mxu0 %v3745
        %4226 = vmatmul.mubr.f32.gmra.mxu0 %v3744
        %v4227 = vpop.f32.mrf.mxu0
        %v4228 = vadd.f32 0.0, %v4227
        %v4229 = vpop.f32.mrf.mxu0
        %4230 = vmatprep.mubr.f32.mxu0 %v3754
        %4231 = vmatmul.mubr.f32.gmra.mxu0 %v3753
        %v4232 = vpop.f32.mrf.mxu0
        %v4233 = vadd.f32 0.0, %v4232
        %v4234 = vpop.f32.mrf.mxu0
        %4235 = vmatprep.mubr.f32.mxu0 %v3763
        %4236 = vmatmul.mubr.f32.gmra.mxu0 %v3762
        %v4237 = vpop.f32.mrf.mxu0
        %v4238 = vadd.f32 0.0, %v4237
        %v4239 = vpop.f32.mrf.mxu0
        %4240 = vmatprep.mubr.f32.mxu0 %v3772
        %4241 = vmatmul.mubr.f32.gmra.mxu0 %v3771
        %v4242 = vpop.f32.mrf.mxu0
        %v4243 = vadd.f32 0.0, %v4242
        %v4244 = vpop.f32.mrf.mxu0
        %4245 = vmatprep.mubr.f32.mxu0 %v3781
        %4246 = vmatmul.mubr.f32.gmra.mxu0 %v3780
        %v4247 = vpop.f32.mrf.mxu0
        %v4248 = vadd.f32 0.0, %v4247
        %v4249 = vpop.f32.mrf.mxu0
        %4250 = vmatprep.mubr.f32.mxu0 %v3790
        %4251 = vmatmul.mubr.f32.gmra.mxu0 %v3789
        %v4252 = vpop.f32.mrf.mxu0
        %v4253 = vadd.f32 0.0, %v4252
        %v4254 = vpop.f32.mrf.mxu0
        %4255 = vmatprep.mubr.f32.mxu0 %v3799
        %4256 = vmatmul.mubr.f32.gmra.mxu0 %v3798
        %v4257 = vpop.f32.mrf.mxu0
        %v4258 = vadd.f32 0.0, %v4257
        %v4259 = vpop.f32.mrf.mxu0
        %4260 = vmatprep.mubr.f32.mxu0 %v3808
        %4261 = vmatmul.mubr.f32.gmra.mxu0 %v3807
        %v4262 = vpop.f32.mrf.mxu0
        %v4263 = vadd.f32 0.0, %v4262
        %v4264 = vpop.f32.mrf.mxu0
        %4265 = vmatprep.mubr.f32.mxu0 %v3817
        %4266 = vmatmul.mubr.f32.gmra.mxu0 %v3816
        %v4267 = vpop.f32.mrf.mxu0
        %v4268 = vadd.f32 0.0, %v4267
        %v4269 = vpop.f32.mrf.mxu0
        %4270 = vmatprep.mubr.f32.mxu0 %v3826
        %4271 = vmatmul.mubr.f32.gmra.mxu0 %v3825
        %v4272 = vpop.f32.mrf.mxu0
        %v4273 = vadd.f32 0.0, %v4272
        %v4274 = vpop.f32.mrf.mxu0
        %4275 = vmatprep.mubr.f32.mxu0 %v3835
        %4276 = vmatmul.mubr.f32.gmra.mxu0 %v3834
        %v4277 = vpop.f32.mrf.mxu0
        %v4278 = vadd.f32 0.0, %v4277
        %v4279 = vpop.f32.mrf.mxu0
        %4280 = vmatprep.mubr.f32.mxu0 %v3844
        %4281 = vmatmul.mubr.f32.gmra.mxu0 %v3843
        %v4282 = vpop.f32.mrf.mxu0
        %v4283 = vadd.f32 0.0, %v4282
        %v4284 = vpop.f32.mrf.mxu0
        %4285 = vmatprep.mubr.f32.mxu0 %v3853
        %4286 = vmatmul.mubr.f32.gmra.mxu0 %v3852
        %v4287 = vpop.f32.mrf.mxu0
        %v4288 = vadd.f32 0.0, %v4287
        %v4289 = vpop.f32.mrf.mxu0
        %4290 = vmatprep.mubr.f32.mxu0 %v3862
        %4291 = vmatmul.mubr.f32.gmra.mxu0 %v3861
        %v4292 = vpop.f32.mrf.mxu0
        %v4293 = vadd.f32 0.0, %v4292
        %v4294 = vpop.f32.mrf.mxu0
        %4295 = vmatprep.mubr.f32.mxu0 %v3871
        %4296 = vmatmul.mubr.f32.gmra.mxu0 %v3870
        %v4297 = vpop.f32.mrf.mxu0
        %v4298 = vadd.f32 0.0, %v4297
        %v4299 = vpop.f32.mrf.mxu0
        %4300 = vmatprep.mubr.f32.mxu0 %v3880
        %4301 = vmatmul.mubr.f32.gmra.mxu0 %v3879
        %v4302 = vpop.f32.mrf.mxu0
        %v4303 = vadd.f32 0.0, %v4302
        %v4304 = vpop.f32.mrf.mxu0
        %4305 = vmatprep.mubr.f32.mxu0 %v3889
        %4306 = vmatmul.mubr.f32.gmra.mxu0 %v3888
        %v4307 = vpop.f32.mrf.mxu0
        %v4308 = vadd.f32 0.0, %v4307
        %v4309 = vpop.f32.mrf.mxu0
        %4310 = vmatprep.mubr.f32.mxu0 %v3898
        %4311 = vmatmul.mubr.f32.gmra.mxu0 %v3897
        %v4312 = vpop.f32.mrf.mxu0
        %v4313 = vadd.f32 0.0, %v4312
        %v4314 = vpop.f32.mrf.mxu0
        %4315 = vmatprep.mubr.f32.mxu0 %v3907
        %4316 = vmatmul.mubr.f32.gmra.mxu0 %v3906
        %v4317 = vpop.f32.mrf.mxu0
        %v4318 = vadd.f32 0.0, %v4317
        %v4319 = vpop.f32.mrf.mxu0
        %4320 = vmatprep.mubr.f32.mxu0 %v3916
        %4321 = vmatmul.mubr.f32.gmra.mxu0 %v3915
        %v4322 = vpop.f32.mrf.mxu0
        %v4323 = vadd.f32 0.0, %v4322
        %v4324 = vpop.f32.mrf.mxu0
        %4325 = vmatprep.mubr.f32.mxu0 %v3925
        %4326 = vmatmul.mubr.f32.gmra.mxu0 %v3924
        %v4327 = vpop.f32.mrf.mxu0
        %v4328 = vadd.f32 0.0, %v4327
        %v4329 = vpop.f32.mrf.mxu0
        %4330 = vmatprep.mubr.f32.mxu0 %v3934
        %4331 = vmatmul.mubr.f32.gmra.mxu0 %v3933
        %v4332 = vpop.f32.mrf.mxu0
        %v4333 = vadd.f32 0.0, %v4332
        %v4334 = vpop.f32.mrf.mxu0
        %4335 = vmatprep.mubr.f32.mxu0 %v3943
        %4336 = vmatmul.mubr.f32.gmra.mxu0 %v3942
        %v4337 = vpop.f32.mrf.mxu0
        %v4338 = vadd.f32 0.0, %v4337
        %v4339 = vpop.f32.mrf.mxu0
        %4340 = vmatprep.mubr.f32.mxu0 %v3952
        %4341 = vmatmul.mubr.f32.gmra.mxu0 %v3951
        %v4342 = vpop.f32.mrf.mxu0
        %v4343 = vadd.f32 0.0, %v4342
        %v4344 = vpop.f32.mrf.mxu0
        %4345 = vmatprep.mubr.f32.mxu0 %v3961
        %4346 = vmatmul.mubr.f32.gmra.mxu0 %v3960
        %v4347 = vpop.f32.mrf.mxu0
        %v4348 = vadd.f32 0.0, %v4347
        %v4349 = vpop.f32.mrf.mxu0
        %4350 = vmatprep.mubr.f32.mxu0 %v3970
        %4351 = vmatmul.mubr.f32.gmra.mxu0 %v3969
        %v4352 = vpop.f32.mrf.mxu0
        %v4353 = vadd.f32 0.0, %v4352
        %v4354 = vpop.f32.mrf.mxu0
        %4355 = vmatprep.mubr.f32.mxu0 %v3979
        %4356 = vmatmul.mubr.f32.gmra.mxu0 %v3978
        %v4357 = vpop.f32.mrf.mxu0
        %v4358 = vadd.f32 0.0, %v4357
        %v4359 = vpop.f32.mrf.mxu0
        %4360 = vmatprep.mubr.f32.mxu0 %v3988
        %4361 = vmatmul.mubr.f32.gmra.mxu0 %v3987
        %v4362 = vpop.f32.mrf.mxu0
        %v4363 = vadd.f32 0.0, %v4362
        %v4364 = vpop.f32.mrf.mxu0
        %4365 = vdwg.mxu0
        %4366 = vmatprep.subr.mxu0 0.0
        %4367 = vmatpush1.msra.mxu0 %v4044
        %4368 = vmatprep.subr.mxu0 0.0
        %4369 = vmatpush1.msra.mxu0 %v4043
        %4370 = vmatprep.subr.mxu0 0.0
        %4371 = vmatpush1.msra.mxu0 %v4042
        %4372 = vmatprep.subr.mxu0 0.0
        %4373 = vmatpush1.msra.mxu0 %v4041
        %4374 = vmatprep.subr.mxu0 0.0
        %4375 = vmatpush1.msra.mxu0 %v4040
        %4376 = vmatprep.subr.mxu0 0.0
        %4377 = vmatpush1.msra.mxu0 %v4039
        %4378 = vmatprep.subr.mxu0 0.0
        %4379 = vmatpush1.msra.mxu0 %v4038
        %4380 = vmatprep.subr.mxu0 0.0
        %4381 = vmatpush1.msra.mxu0 %v4037
        %4382 = vmatprep.subr.mxu0 0.0
        %4383 = vmatpush1.msra.mxu0 %v4036
        %4384 = vmatprep.subr.mxu0 0.0
        %4385 = vmatpush1.msra.mxu0 %v4035
        %4386 = vmatprep.subr.mxu0 0.0
        %4387 = vmatpush1.msra.mxu0 %v4034
        %4388 = vmatprep.subr.mxu0 0.0
        %4389 = vmatpush1.msra.mxu0 %v4033
        %4390 = vmatprep.subr.mxu0 0.0
        %4391 = vmatpush1.msra.mxu0 %v4032
        %4392 = vmatprep.subr.mxu0 0.0
        %4393 = vmatpush1.msra.mxu0 %v4031
        %4394 = vmatprep.subr.mxu0 0.0
        %4395 = vmatpush1.msra.mxu0 %v4030
        %4396 = vmatprep.subr.mxu0 0.0
        %4397 = vmatpush1.msra.mxu0 %v4029
        %4398 = vmatprep.subr.mxu0 0.0
        %4399 = vmatpush2.msra.mxu0 %v4060
        %4400 = vmatprep.subr.mxu0 0.0
        %4401 = vmatpush2.msra.mxu0 %v4059
        %4402 = vmatprep.subr.mxu0 0.0
        %4403 = vmatpush2.msra.mxu0 %v4058
        %4404 = vmatprep.subr.mxu0 0.0
        %4405 = vmatpush2.msra.mxu0 %v4057
        %4406 = vmatprep.subr.mxu0 0.0
        %4407 = vmatpush2.msra.mxu0 %v4056
        %4408 = vmatprep.subr.mxu0 0.0
        %4409 = vmatpush2.msra.mxu0 %v4055
        %4410 = vmatprep.subr.mxu0 0.0
        %4411 = vmatpush2.msra.mxu0 %v4054
        %4412 = vmatprep.subr.mxu0 0.0
        %4413 = vmatpush2.msra.mxu0 %v4053
        %4414 = vmatprep.subr.mxu0 0.0
        %4415 = vmatpush2.msra.mxu0 %v4052
        %4416 = vmatprep.subr.mxu0 0.0
        %4417 = vmatpush2.msra.mxu0 %v4051
        %4418 = vmatprep.subr.mxu0 0.0
        %4419 = vmatpush2.msra.mxu0 %v4050
        %4420 = vmatprep.subr.mxu0 0.0
        %4421 = vmatpush2.msra.mxu0 %v4049
        %4422 = vmatprep.subr.mxu0 0.0
        %4423 = vmatpush2.msra.mxu0 %v4048
        %4424 = vmatprep.subr.mxu0 0.0
        %4425 = vmatpush2.msra.mxu0 %v4047
        %4426 = vmatprep.subr.mxu0 0.0
        %4427 = vmatpush2.msra.mxu0 %v4046
        %4428 = vmatprep.subr.mxu0 0.0
        %4429 = vmatpush2.msra.mxu0 %v4045
        %4430 = vmatprep.mubr.f32.mxu0 %v3711
        %4431 = vmatmul.mubr.f32.gmra.mxu0 %v3710
        %v4432 = vpop.f32.mrf.mxu0
        %v4433 = vadd.f32 %v4208, %v4432
        %v4434 = vpop.f32.mrf.mxu0
        %4435 = vmatprep.mubr.f32.mxu0 %v3720
        %4436 = vmatmul.mubr.f32.gmra.mxu0 %v3719
        %v4437 = vpop.f32.mrf.mxu0
        %v4438 = vadd.f32 %v4213, %v4437
        %v4439 = vpop.f32.mrf.mxu0
        %4440 = vmatprep.mubr.f32.mxu0 %v3729
        %4441 = vmatmul.mubr.f32.gmra.mxu0 %v3728
        %v4442 = vpop.f32.mrf.mxu0
        %v4443 = vadd.f32 %v4218, %v4442
        %v4444 = vpop.f32.mrf.mxu0
        %4445 = vmatprep.mubr.f32.mxu0 %v3738
        %4446 = vmatmul.mubr.f32.gmra.mxu0 %v3737
        %v4447 = vpop.f32.mrf.mxu0
        %v4448 = vadd.f32 %v4223, %v4447
        %v4449 = vpop.f32.mrf.mxu0
        %4450 = vmatprep.mubr.f32.mxu0 %v3747
        %4451 = vmatmul.mubr.f32.gmra.mxu0 %v3746
        %v4452 = vpop.f32.mrf.mxu0
        %v4453 = vadd.f32 %v4228, %v4452
        %v4454 = vpop.f32.mrf.mxu0
        %4455 = vmatprep.mubr.f32.mxu0 %v3756
        %4456 = vmatmul.mubr.f32.gmra.mxu0 %v3755
        %v4457 = vpop.f32.mrf.mxu0
        %v4458 = vadd.f32 %v4233, %v4457
        %v4459 = vpop.f32.mrf.mxu0
        %4460 = vmatprep.mubr.f32.mxu0 %v3765
        %4461 = vmatmul.mubr.f32.gmra.mxu0 %v3764
        %v4462 = vpop.f32.mrf.mxu0
        %v4463 = vadd.f32 %v4238, %v4462
        %v4464 = vpop.f32.mrf.mxu0
        %4465 = vmatprep.mubr.f32.mxu0 %v3774
        %4466 = vmatmul.mubr.f32.gmra.mxu0 %v3773
        %v4467 = vpop.f32.mrf.mxu0
        %v4468 = vadd.f32 %v4243, %v4467
        %v4469 = vpop.f32.mrf.mxu0
        %4470 = vmatprep.mubr.f32.mxu0 %v3783
        %4471 = vmatmul.mubr.f32.gmra.mxu0 %v3782
        %v4472 = vpop.f32.mrf.mxu0
        %v4473 = vadd.f32 %v4248, %v4472
        %v4474 = vpop.f32.mrf.mxu0
        %4475 = vmatprep.mubr.f32.mxu0 %v3792
        %4476 = vmatmul.mubr.f32.gmra.mxu0 %v3791
        %v4477 = vpop.f32.mrf.mxu0
        %v4478 = vadd.f32 %v4253, %v4477
        %v4479 = vpop.f32.mrf.mxu0
        %4480 = vmatprep.mubr.f32.mxu0 %v3801
        %4481 = vmatmul.mubr.f32.gmra.mxu0 %v3800
        %v4482 = vpop.f32.mrf.mxu0
        %v4483 = vadd.f32 %v4258, %v4482
        %v4484 = vpop.f32.mrf.mxu0
        %4485 = vmatprep.mubr.f32.mxu0 %v3810
        %4486 = vmatmul.mubr.f32.gmra.mxu0 %v3809
        %v4487 = vpop.f32.mrf.mxu0
        %v4488 = vadd.f32 %v4263, %v4487
        %v4489 = vpop.f32.mrf.mxu0
        %4490 = vmatprep.mubr.f32.mxu0 %v3819
        %4491 = vmatmul.mubr.f32.gmra.mxu0 %v3818
        %v4492 = vpop.f32.mrf.mxu0
        %v4493 = vadd.f32 %v4268, %v4492
        %v4494 = vpop.f32.mrf.mxu0
        %4495 = vmatprep.mubr.f32.mxu0 %v3828
        %4496 = vmatmul.mubr.f32.gmra.mxu0 %v3827
        %v4497 = vpop.f32.mrf.mxu0
        %v4498 = vadd.f32 %v4273, %v4497
        %v4499 = vpop.f32.mrf.mxu0
        %4500 = vmatprep.mubr.f32.mxu0 %v3837
        %4501 = vmatmul.mubr.f32.gmra.mxu0 %v3836
        %v4502 = vpop.f32.mrf.mxu0
        %v4503 = vadd.f32 %v4278, %v4502
        %v4504 = vpop.f32.mrf.mxu0
        %4505 = vmatprep.mubr.f32.mxu0 %v3846
        %4506 = vmatmul.mubr.f32.gmra.mxu0 %v3845
        %v4507 = vpop.f32.mrf.mxu0
        %v4508 = vadd.f32 %v4283, %v4507
        %v4509 = vpop.f32.mrf.mxu0
        %4510 = vmatprep.mubr.f32.mxu0 %v3855
        %4511 = vmatmul.mubr.f32.gmra.mxu0 %v3854
        %v4512 = vpop.f32.mrf.mxu0
        %v4513 = vadd.f32 %v4288, %v4512
        %v4514 = vpop.f32.mrf.mxu0
        %4515 = vmatprep.mubr.f32.mxu0 %v3864
        %4516 = vmatmul.mubr.f32.gmra.mxu0 %v3863
        %v4517 = vpop.f32.mrf.mxu0
        %v4518 = vadd.f32 %v4293, %v4517
        %v4519 = vpop.f32.mrf.mxu0
        %4520 = vmatprep.mubr.f32.mxu0 %v3873
        %4521 = vmatmul.mubr.f32.gmra.mxu0 %v3872
        %v4522 = vpop.f32.mrf.mxu0
        %v4523 = vadd.f32 %v4298, %v4522
        %v4524 = vpop.f32.mrf.mxu0
        %4525 = vmatprep.mubr.f32.mxu0 %v3882
        %4526 = vmatmul.mubr.f32.gmra.mxu0 %v3881
        %v4527 = vpop.f32.mrf.mxu0
        %v4528 = vadd.f32 %v4303, %v4527
        %v4529 = vpop.f32.mrf.mxu0
        %4530 = vmatprep.mubr.f32.mxu0 %v3891
        %4531 = vmatmul.mubr.f32.gmra.mxu0 %v3890
        %v4532 = vpop.f32.mrf.mxu0
        %v4533 = vadd.f32 %v4308, %v4532
        %v4534 = vpop.f32.mrf.mxu0
        %4535 = vmatprep.mubr.f32.mxu0 %v3900
        %4536 = vmatmul.mubr.f32.gmra.mxu0 %v3899
        %v4537 = vpop.f32.mrf.mxu0
        %v4538 = vadd.f32 %v4313, %v4537
        %v4539 = vpop.f32.mrf.mxu0
        %4540 = vmatprep.mubr.f32.mxu0 %v3909
        %4541 = vmatmul.mubr.f32.gmra.mxu0 %v3908
        %v4542 = vpop.f32.mrf.mxu0
        %v4543 = vadd.f32 %v4318, %v4542
        %v4544 = vpop.f32.mrf.mxu0
        %4545 = vmatprep.mubr.f32.mxu0 %v3918
        %4546 = vmatmul.mubr.f32.gmra.mxu0 %v3917
        %v4547 = vpop.f32.mrf.mxu0
        %v4548 = vadd.f32 %v4323, %v4547
        %v4549 = vpop.f32.mrf.mxu0
        %4550 = vmatprep.mubr.f32.mxu0 %v3927
        %4551 = vmatmul.mubr.f32.gmra.mxu0 %v3926
        %v4552 = vpop.f32.mrf.mxu0
        %v4553 = vadd.f32 %v4328, %v4552
        %v4554 = vpop.f32.mrf.mxu0
        %4555 = vmatprep.mubr.f32.mxu0 %v3936
        %4556 = vmatmul.mubr.f32.gmra.mxu0 %v3935
        %v4557 = vpop.f32.mrf.mxu0
        %v4558 = vadd.f32 %v4333, %v4557
        %v4559 = vpop.f32.mrf.mxu0
        %4560 = vmatprep.mubr.f32.mxu0 %v3945
        %4561 = vmatmul.mubr.f32.gmra.mxu0 %v3944
        %v4562 = vpop.f32.mrf.mxu0
        %v4563 = vadd.f32 %v4338, %v4562
        %v4564 = vpop.f32.mrf.mxu0
        %4565 = vmatprep.mubr.f32.mxu0 %v3954
        %4566 = vmatmul.mubr.f32.gmra.mxu0 %v3953
        %v4567 = vpop.f32.mrf.mxu0
        %v4568 = vadd.f32 %v4343, %v4567
        %v4569 = vpop.f32.mrf.mxu0
        %4570 = vmatprep.mubr.f32.mxu0 %v3963
        %4571 = vmatmul.mubr.f32.gmra.mxu0 %v3962
        %v4572 = vpop.f32.mrf.mxu0
        %v4573 = vadd.f32 %v4348, %v4572
        %v4574 = vpop.f32.mrf.mxu0
        %4575 = vmatprep.mubr.f32.mxu0 %v3972
        %4576 = vmatmul.mubr.f32.gmra.mxu0 %v3971
        %v4577 = vpop.f32.mrf.mxu0
        %v4578 = vadd.f32 %v4353, %v4577
        %v4579 = vpop.f32.mrf.mxu0
        %4580 = vmatprep.mubr.f32.mxu0 %v3981
        %4581 = vmatmul.mubr.f32.gmra.mxu0 %v3980
        %v4582 = vpop.f32.mrf.mxu0
        %v4583 = vadd.f32 %v4358, %v4582
        %v4584 = vpop.f32.mrf.mxu0
        %4585 = vmatprep.mubr.f32.mxu0 %v3990
        %4586 = vmatmul.mubr.f32.gmra.mxu0 %v3989
        %v4587 = vpop.f32.mrf.mxu0
        %v4588 = vadd.f32 %v4363, %v4587
        %v4589 = vpop.f32.mrf.mxu0
        %4590 = vdwg.mxu0
        %4591 = vmatprep.subr.mxu0 0.0
        %4592 = vmatpush1.msra.mxu0 %v4076
        %4593 = vmatprep.subr.mxu0 0.0
        %4594 = vmatpush1.msra.mxu0 %v4075
        %4595 = vmatprep.subr.mxu0 0.0
        %4596 = vmatpush1.msra.mxu0 %v4074
        %4597 = vmatprep.subr.mxu0 0.0
        %4598 = vmatpush1.msra.mxu0 %v4073
        %4599 = vmatprep.subr.mxu0 0.0
        %4600 = vmatpush1.msra.mxu0 %v4072
        %4601 = vmatprep.subr.mxu0 0.0
        %4602 = vmatpush1.msra.mxu0 %v4071
        %4603 = vmatprep.subr.mxu0 0.0
        %4604 = vmatpush1.msra.mxu0 %v4070
        %4605 = vmatprep.subr.mxu0 0.0
        %4606 = vmatpush1.msra.mxu0 %v4069
        %4607 = vmatprep.subr.mxu0 0.0
        %4608 = vmatpush1.msra.mxu0 %v4068
        %4609 = vmatprep.subr.mxu0 0.0
        %4610 = vmatpush1.msra.mxu0 %v4067
        %4611 = vmatprep.subr.mxu0 0.0
        %4612 = vmatpush1.msra.mxu0 %v4066
        %4613 = vmatprep.subr.mxu0 0.0
        %4614 = vmatpush1.msra.mxu0 %v4065
        %4615 = vmatprep.subr.mxu0 0.0
        %4616 = vmatpush1.msra.mxu0 %v4064
        %4617 = vmatprep.subr.mxu0 0.0
        %4618 = vmatpush1.msra.mxu0 %v4063
        %4619 = vmatprep.subr.mxu0 0.0
        %4620 = vmatpush1.msra.mxu0 %v4062
        %4621 = vmatprep.subr.mxu0 0.0
        %4622 = vmatpush1.msra.mxu0 %v4061
        %4623 = vmatprep.subr.mxu0 0.0
        %4624 = vmatpush2.msra.mxu0 %v4092
        %4625 = vmatprep.subr.mxu0 0.0
        %4626 = vmatpush2.msra.mxu0 %v4091
        %4627 = vmatprep.subr.mxu0 0.0
        %4628 = vmatpush2.msra.mxu0 %v4090
        %4629 = vmatprep.subr.mxu0 0.0
        %4630 = vmatpush2.msra.mxu0 %v4089
        %4631 = vmatprep.subr.mxu0 0.0
        %4632 = vmatpush2.msra.mxu0 %v4088
        %4633 = vmatprep.subr.mxu0 0.0
        %4634 = vmatpush2.msra.mxu0 %v4087
        %4635 = vmatprep.subr.mxu0 0.0
        %4636 = vmatpush2.msra.mxu0 %v4086
        %4637 = vmatprep.subr.mxu0 0.0
        %4638 = vmatpush2.msra.mxu0 %v4085
        %4639 = vmatprep.subr.mxu0 0.0
        %4640 = vmatpush2.msra.mxu0 %v4084
        %4641 = vmatprep.subr.mxu0 0.0
        %4642 = vmatpush2.msra.mxu0 %v4083
        %4643 = vmatprep.subr.mxu0 0.0
        %4644 = vmatpush2.msra.mxu0 %v4082
        %4645 = vmatprep.subr.mxu0 0.0
        %4646 = vmatpush2.msra.mxu0 %v4081
        %4647 = vmatprep.subr.mxu0 0.0
        %4648 = vmatpush2.msra.mxu0 %v4080
        %4649 = vmatprep.subr.mxu0 0.0
        %4650 = vmatpush2.msra.mxu0 %v4079
        %4651 = vmatprep.subr.mxu0 0.0
        %4652 = vmatpush2.msra.mxu0 %v4078
        %4653 = vmatprep.subr.mxu0 0.0
        %4654 = vmatpush2.msra.mxu0 %v4077
        %4655 = vmatprep.mubr.f32.mxu0 %v3713
        %4656 = vmatmul.mubr.f32.gmra.mxu0 %v3712
        %v4657 = vpop.f32.mrf.mxu0
        %v4658 = vadd.f32 %v4433, %v4657
        %v4659 = vpop.f32.mrf.mxu0
        %4660 = vmatprep.mubr.f32.mxu0 %v3722
        %4661 = vmatmul.mubr.f32.gmra.mxu0 %v3721
        %v4662 = vpop.f32.mrf.mxu0
        %v4663 = vadd.f32 %v4438, %v4662
        %v4664 = vpop.f32.mrf.mxu0
        %4665 = vmatprep.mubr.f32.mxu0 %v3731
        %4666 = vmatmul.mubr.f32.gmra.mxu0 %v3730
        %v4667 = vpop.f32.mrf.mxu0
        %v4668 = vadd.f32 %v4443, %v4667
        %v4669 = vpop.f32.mrf.mxu0
        %4670 = vmatprep.mubr.f32.mxu0 %v3740
        %4671 = vmatmul.mubr.f32.gmra.mxu0 %v3739
        %v4672 = vpop.f32.mrf.mxu0
        %v4673 = vadd.f32 %v4448, %v4672
        %v4674 = vpop.f32.mrf.mxu0
        %4675 = vmatprep.mubr.f32.mxu0 %v3749
        %4676 = vmatmul.mubr.f32.gmra.mxu0 %v3748
        %v4677 = vpop.f32.mrf.mxu0
        %v4678 = vadd.f32 %v4453, %v4677
        %v4679 = vpop.f32.mrf.mxu0
        %4680 = vmatprep.mubr.f32.mxu0 %v3758
        %4681 = vmatmul.mubr.f32.gmra.mxu0 %v3757
        %v4682 = vpop.f32.mrf.mxu0
        %v4683 = vadd.f32 %v4458, %v4682
        %v4684 = vpop.f32.mrf.mxu0
        %4685 = vmatprep.mubr.f32.mxu0 %v3767
        %4686 = vmatmul.mubr.f32.gmra.mxu0 %v3766
        %v4687 = vpop.f32.mrf.mxu0
        %v4688 = vadd.f32 %v4463, %v4687
        %v4689 = vpop.f32.mrf.mxu0
        %4690 = vmatprep.mubr.f32.mxu0 %v3776
        %4691 = vmatmul.mubr.f32.gmra.mxu0 %v3775
        %v4692 = vpop.f32.mrf.mxu0
        %v4693 = vadd.f32 %v4468, %v4692
        %v4694 = vpop.f32.mrf.mxu0
        %4695 = vmatprep.mubr.f32.mxu0 %v3785
        %4696 = vmatmul.mubr.f32.gmra.mxu0 %v3784
        %v4697 = vpop.f32.mrf.mxu0
        %v4698 = vadd.f32 %v4473, %v4697
        %v4699 = vpop.f32.mrf.mxu0
        %4700 = vmatprep.mubr.f32.mxu0 %v3794
        %4701 = vmatmul.mubr.f32.gmra.mxu0 %v3793
        %v4702 = vpop.f32.mrf.mxu0
        %v4703 = vadd.f32 %v4478, %v4702
        %v4704 = vpop.f32.mrf.mxu0
        %4705 = vmatprep.mubr.f32.mxu0 %v3803
        %4706 = vmatmul.mubr.f32.gmra.mxu0 %v3802
        %v4707 = vpop.f32.mrf.mxu0
        %v4708 = vadd.f32 %v4483, %v4707
        %v4709 = vpop.f32.mrf.mxu0
        %4710 = vmatprep.mubr.f32.mxu0 %v3812
        %4711 = vmatmul.mubr.f32.gmra.mxu0 %v3811
        %v4712 = vpop.f32.mrf.mxu0
        %v4713 = vadd.f32 %v4488, %v4712
        %v4714 = vpop.f32.mrf.mxu0
        %4715 = vmatprep.mubr.f32.mxu0 %v3821
        %4716 = vmatmul.mubr.f32.gmra.mxu0 %v3820
        %v4717 = vpop.f32.mrf.mxu0
        %v4718 = vadd.f32 %v4493, %v4717
        %v4719 = vpop.f32.mrf.mxu0
        %4720 = vmatprep.mubr.f32.mxu0 %v3830
        %4721 = vmatmul.mubr.f32.gmra.mxu0 %v3829
        %v4722 = vpop.f32.mrf.mxu0
        %v4723 = vadd.f32 %v4498, %v4722
        %v4724 = vpop.f32.mrf.mxu0
        %4725 = vmatprep.mubr.f32.mxu0 %v3839
        %4726 = vmatmul.mubr.f32.gmra.mxu0 %v3838
        %v4727 = vpop.f32.mrf.mxu0
        %v4728 = vadd.f32 %v4503, %v4727
        %v4729 = vpop.f32.mrf.mxu0
        %4730 = vmatprep.mubr.f32.mxu0 %v3848
        %4731 = vmatmul.mubr.f32.gmra.mxu0 %v3847
        %v4732 = vpop.f32.mrf.mxu0
        %v4733 = vadd.f32 %v4508, %v4732
        %v4734 = vpop.f32.mrf.mxu0
        %4735 = vmatprep.mubr.f32.mxu0 %v3857
        %4736 = vmatmul.mubr.f32.gmra.mxu0 %v3856
        %v4737 = vpop.f32.mrf.mxu0
        %v4738 = vadd.f32 %v4513, %v4737
        %v4739 = vpop.f32.mrf.mxu0
        %4740 = vmatprep.mubr.f32.mxu0 %v3866
        %4741 = vmatmul.mubr.f32.gmra.mxu0 %v3865
        %v4742 = vpop.f32.mrf.mxu0
        %v4743 = vadd.f32 %v4518, %v4742
        %v4744 = vpop.f32.mrf.mxu0
        %4745 = vmatprep.mubr.f32.mxu0 %v3875
        %4746 = vmatmul.mubr.f32.gmra.mxu0 %v3874
        %v4747 = vpop.f32.mrf.mxu0
        %v4748 = vadd.f32 %v4523, %v4747
        %v4749 = vpop.f32.mrf.mxu0
        %4750 = vmatprep.mubr.f32.mxu0 %v3884
        %4751 = vmatmul.mubr.f32.gmra.mxu0 %v3883
        %v4752 = vpop.f32.mrf.mxu0
        %v4753 = vadd.f32 %v4528, %v4752
        %v4754 = vpop.f32.mrf.mxu0
        %4755 = vmatprep.mubr.f32.mxu0 %v3893
        %4756 = vmatmul.mubr.f32.gmra.mxu0 %v3892
        %v4757 = vpop.f32.mrf.mxu0
        %v4758 = vadd.f32 %v4533, %v4757
        %v4759 = vpop.f32.mrf.mxu0
        %4760 = vmatprep.mubr.f32.mxu0 %v3902
        %4761 = vmatmul.mubr.f32.gmra.mxu0 %v3901
        %v4762 = vpop.f32.mrf.mxu0
        %v4763 = vadd.f32 %v4538, %v4762
        %v4764 = vpop.f32.mrf.mxu0
        %4765 = vmatprep.mubr.f32.mxu0 %v3911
        %4766 = vmatmul.mubr.f32.gmra.mxu0 %v3910
        %v4767 = vpop.f32.mrf.mxu0
        %v4768 = vadd.f32 %v4543, %v4767
        %v4769 = vpop.f32.mrf.mxu0
        %4770 = vmatprep.mubr.f32.mxu0 %v3920
        %4771 = vmatmul.mubr.f32.gmra.mxu0 %v3919
        %v4772 = vpop.f32.mrf.mxu0
        %v4773 = vadd.f32 %v4548, %v4772
        %v4774 = vpop.f32.mrf.mxu0
        %4775 = vmatprep.mubr.f32.mxu0 %v3929
        %4776 = vmatmul.mubr.f32.gmra.mxu0 %v3928
        %v4777 = vpop.f32.mrf.mxu0
        %v4778 = vadd.f32 %v4553, %v4777
        %v4779 = vpop.f32.mrf.mxu0
        %4780 = vmatprep.mubr.f32.mxu0 %v3938
        %4781 = vmatmul.mubr.f32.gmra.mxu0 %v3937
        %v4782 = vpop.f32.mrf.mxu0
        %v4783 = vadd.f32 %v4558, %v4782
        %v4784 = vpop.f32.mrf.mxu0
        %4785 = vmatprep.mubr.f32.mxu0 %v3947
        %4786 = vmatmul.mubr.f32.gmra.mxu0 %v3946
        %v4787 = vpop.f32.mrf.mxu0
        %v4788 = vadd.f32 %v4563, %v4787
        %v4789 = vpop.f32.mrf.mxu0
        %4790 = vmatprep.mubr.f32.mxu0 %v3956
        %4791 = vmatmul.mubr.f32.gmra.mxu0 %v3955
        %v4792 = vpop.f32.mrf.mxu0
        %v4793 = vadd.f32 %v4568, %v4792
        %v4794 = vpop.f32.mrf.mxu0
        %4795 = vmatprep.mubr.f32.mxu0 %v3965
        %4796 = vmatmul.mubr.f32.gmra.mxu0 %v3964
        %v4797 = vpop.f32.mrf.mxu0
        %v4798 = vadd.f32 %v4573, %v4797
        %v4799 = vpop.f32.mrf.mxu0
        %4800 = vmatprep.mubr.f32.mxu0 %v3974
        %4801 = vmatmul.mubr.f32.gmra.mxu0 %v3973
        %v4802 = vpop.f32.mrf.mxu0
        %v4803 = vadd.f32 %v4578, %v4802
        %v4804 = vpop.f32.mrf.mxu0
        %4805 = vmatprep.mubr.f32.mxu0 %v3983
        %4806 = vmatmul.mubr.f32.gmra.mxu0 %v3982
        %v4807 = vpop.f32.mrf.mxu0
        %v4808 = vadd.f32 %v4583, %v4807
        %v4809 = vpop.f32.mrf.mxu0
        %4810 = vmatprep.mubr.f32.mxu0 %v3992
        %4811 = vmatmul.mubr.f32.gmra.mxu0 %v3991
        %v4812 = vpop.f32.mrf.mxu0
        %v4813 = vadd.f32 %v4588, %v4812
        %v4814 = vpop.f32.mrf.mxu0
        %4815 = vdwg.mxu0
        %4816 = vmatprep.subr.mxu0 0.0
        %4817 = vmatpush1.msra.mxu0 %v4108
        %4818 = vmatprep.subr.mxu0 0.0
        %4819 = vmatpush1.msra.mxu0 %v4107
        %4820 = vmatprep.subr.mxu0 0.0
        %4821 = vmatpush1.msra.mxu0 %v4106
        %4822 = vmatprep.subr.mxu0 0.0
        %4823 = vmatpush1.msra.mxu0 %v4105
        %4824 = vmatprep.subr.mxu0 0.0
        %4825 = vmatpush1.msra.mxu0 %v4104
        %4826 = vmatprep.subr.mxu0 0.0
        %4827 = vmatpush1.msra.mxu0 %v4103
        %4828 = vmatprep.subr.mxu0 0.0
        %4829 = vmatpush1.msra.mxu0 %v4102
        %4830 = vmatprep.subr.mxu0 0.0
        %4831 = vmatpush1.msra.mxu0 %v4101
        %4832 = vmatprep.subr.mxu0 0.0
        %4833 = vmatpush1.msra.mxu0 %v4100
        %4834 = vmatprep.subr.mxu0 0.0
        %4835 = vmatpush1.msra.mxu0 %v4099
        %4836 = vmatprep.subr.mxu0 0.0
        %4837 = vmatpush1.msra.mxu0 %v4098
        %4838 = vmatprep.subr.mxu0 0.0
        %4839 = vmatpush1.msra.mxu0 %v4097
        %4840 = vmatprep.subr.mxu0 0.0
        %4841 = vmatpush1.msra.mxu0 %v4096
        %4842 = vmatprep.subr.mxu0 0.0
        %4843 = vmatpush1.msra.mxu0 %v4095
        %4844 = vmatprep.subr.mxu0 0.0
        %4845 = vmatpush1.msra.mxu0 %v4094
        %4846 = vmatprep.subr.mxu0 0.0
        %4847 = vmatpush1.msra.mxu0 %v4093
        %4848 = vmatprep.subr.mxu0 0.0
        %4849 = vmatpush2.msra.mxu0 %v4124
        %4850 = vmatprep.subr.mxu0 0.0
        %4851 = vmatpush2.msra.mxu0 %v4123
        %4852 = vmatprep.subr.mxu0 0.0
        %4853 = vmatpush2.msra.mxu0 %v4122
        %4854 = vmatprep.subr.mxu0 0.0
        %4855 = vmatpush2.msra.mxu0 %v4121
        %4856 = vmatprep.subr.mxu0 0.0
        %4857 = vmatpush2.msra.mxu0 %v4120
        %4858 = vmatprep.subr.mxu0 0.0
        %4859 = vmatpush2.msra.mxu0 %v4119
        %4860 = vmatprep.subr.mxu0 0.0
        %4861 = vmatpush2.msra.mxu0 %v4118
        %4862 = vmatprep.subr.mxu0 0.0
        %4863 = vmatpush2.msra.mxu0 %v4117
        %4864 = vmatprep.subr.mxu0 0.0
        %4865 = vmatpush2.msra.mxu0 %v4116
        %4866 = vmatprep.subr.mxu0 0.0
        %4867 = vmatpush2.msra.mxu0 %v4115
        %4868 = vmatprep.subr.mxu0 0.0
        %4869 = vmatpush2.msra.mxu0 %v4114
        %4870 = vmatprep.subr.mxu0 0.0
        %4871 = vmatpush2.msra.mxu0 %v4113
        %4872 = vmatprep.subr.mxu0 0.0
        %4873 = vmatpush2.msra.mxu0 %v4112
        %4874 = vmatprep.subr.mxu0 0.0
        %4875 = vmatpush2.msra.mxu0 %v4111
        %4876 = vmatprep.subr.mxu0 0.0
        %4877 = vmatpush2.msra.mxu0 %v4110
        %4878 = vmatprep.subr.mxu0 0.0
        %4879 = vmatpush2.msra.mxu0 %v4109
        %4880 = vmatprep.mubr.f32.mxu0 %v3715
        %4881 = vmatmul.mubr.f32.gmra.mxu0 %v3714
        %v4882 = vpop.f32.mrf.mxu0
        %v4883 = vadd.f32 %v4658, %v4882
        %v4884 = vpop.f32.mrf.mxu0
        %4885 = vmatprep.mubr.f32.mxu0 %v3724
        %4886 = vmatmul.mubr.f32.gmra.mxu0 %v3723
        %v4887 = vpop.f32.mrf.mxu0
        %v4888 = vadd.f32 %v4663, %v4887
        %v4889 = vpop.f32.mrf.mxu0
        %4890 = vmatprep.mubr.f32.mxu0 %v3733
        %4891 = vmatmul.mubr.f32.gmra.mxu0 %v3732
        %v4892 = vpop.f32.mrf.mxu0
        %v4893 = vadd.f32 %v4668, %v4892
        %v4894 = vpop.f32.mrf.mxu0
        %4895 = vmatprep.mubr.f32.mxu0 %v3742
        %4896 = vmatmul.mubr.f32.gmra.mxu0 %v3741
        %v4897 = vpop.f32.mrf.mxu0
        %v4898 = vadd.f32 %v4673, %v4897
        %v4899 = vpop.f32.mrf.mxu0
        %4900 = vmatprep.mubr.f32.mxu0 %v3751
        %4901 = vmatmul.mubr.f32.gmra.mxu0 %v3750
        %v4902 = vpop.f32.mrf.mxu0
        %v4903 = vadd.f32 %v4678, %v4902
        %v4904 = vpop.f32.mrf.mxu0
        %4905 = vmatprep.mubr.f32.mxu0 %v3760
        %4906 = vmatmul.mubr.f32.gmra.mxu0 %v3759
        %v4907 = vpop.f32.mrf.mxu0
        %v4908 = vadd.f32 %v4683, %v4907
        %v4909 = vpop.f32.mrf.mxu0
        %4910 = vmatprep.mubr.f32.mxu0 %v3769
        %4911 = vmatmul.mubr.f32.gmra.mxu0 %v3768
        %v4912 = vpop.f32.mrf.mxu0
        %v4913 = vadd.f32 %v4688, %v4912
        %v4914 = vpop.f32.mrf.mxu0
        %4915 = vmatprep.mubr.f32.mxu0 %v3778
        %4916 = vmatmul.mubr.f32.gmra.mxu0 %v3777
        %v4917 = vpop.f32.mrf.mxu0
        %v4918 = vadd.f32 %v4693, %v4917
        %v4919 = vpop.f32.mrf.mxu0
        %4920 = vmatprep.mubr.f32.mxu0 %v3787
        %4921 = vmatmul.mubr.f32.gmra.mxu0 %v3786
        %v4922 = vpop.f32.mrf.mxu0
        %v4923 = vadd.f32 %v4698, %v4922
        %v4924 = vpop.f32.mrf.mxu0
        %4925 = vmatprep.mubr.f32.mxu0 %v3796
        %4926 = vmatmul.mubr.f32.gmra.mxu0 %v3795
        %v4927 = vpop.f32.mrf.mxu0
        %v4928 = vadd.f32 %v4703, %v4927
        %v4929 = vpop.f32.mrf.mxu0
        %4930 = vmatprep.mubr.f32.mxu0 %v3805
        %4931 = vmatmul.mubr.f32.gmra.mxu0 %v3804
        %v4932 = vpop.f32.mrf.mxu0
        %v4933 = vadd.f32 %v4708, %v4932
        %v4934 = vpop.f32.mrf.mxu0
        %4935 = vmatprep.mubr.f32.mxu0 %v3814
        %4936 = vmatmul.mubr.f32.gmra.mxu0 %v3813
        %v4937 = vpop.f32.mrf.mxu0
        %v4938 = vadd.f32 %v4713, %v4937
        %v4939 = vpop.f32.mrf.mxu0
        %4940 = vmatprep.mubr.f32.mxu0 %v3823
        %4941 = vmatmul.mubr.f32.gmra.mxu0 %v3822
        %v4942 = vpop.f32.mrf.mxu0
        %v4943 = vadd.f32 %v4718, %v4942
        %v4944 = vpop.f32.mrf.mxu0
        %4945 = vmatprep.mubr.f32.mxu0 %v3832
        %4946 = vmatmul.mubr.f32.gmra.mxu0 %v3831
        %v4947 = vpop.f32.mrf.mxu0
        %v4948 = vadd.f32 %v4723, %v4947
        %v4949 = vpop.f32.mrf.mxu0
        %4950 = vmatprep.mubr.f32.mxu0 %v3841
        %4951 = vmatmul.mubr.f32.gmra.mxu0 %v3840
        %v4952 = vpop.f32.mrf.mxu0
        %v4953 = vadd.f32 %v4728, %v4952
        %v4954 = vpop.f32.mrf.mxu0
        %4955 = vmatprep.mubr.f32.mxu0 %v3850
        %4956 = vmatmul.mubr.f32.gmra.mxu0 %v3849
        %v4957 = vpop.f32.mrf.mxu0
        %v4958 = vadd.f32 %v4733, %v4957
        %v4959 = vpop.f32.mrf.mxu0
        %4960 = vmatprep.mubr.f32.mxu0 %v3859
        %4961 = vmatmul.mubr.f32.gmra.mxu0 %v3858
        %v4962 = vpop.f32.mrf.mxu0
        %v4963 = vadd.f32 %v4738, %v4962
        %v4964 = vpop.f32.mrf.mxu0
        %4965 = vmatprep.mubr.f32.mxu0 %v3868
        %4966 = vmatmul.mubr.f32.gmra.mxu0 %v3867
        %v4967 = vpop.f32.mrf.mxu0
        %v4968 = vadd.f32 %v4743, %v4967
        %v4969 = vpop.f32.mrf.mxu0
        %4970 = vmatprep.mubr.f32.mxu0 %v3877
        %4971 = vmatmul.mubr.f32.gmra.mxu0 %v3876
        %v4972 = vpop.f32.mrf.mxu0
        %v4973 = vadd.f32 %v4748, %v4972
        %v4974 = vpop.f32.mrf.mxu0
        %4975 = vmatprep.mubr.f32.mxu0 %v3886
        %4976 = vmatmul.mubr.f32.gmra.mxu0 %v3885
        %v4977 = vpop.f32.mrf.mxu0
        %v4978 = vadd.f32 %v4753, %v4977
        %v4979 = vpop.f32.mrf.mxu0
        %4980 = vmatprep.mubr.f32.mxu0 %v3895
        %4981 = vmatmul.mubr.f32.gmra.mxu0 %v3894
        %v4982 = vpop.f32.mrf.mxu0
        %v4983 = vadd.f32 %v4758, %v4982
        %v4984 = vpop.f32.mrf.mxu0
        %4985 = vmatprep.mubr.f32.mxu0 %v3904
        %4986 = vmatmul.mubr.f32.gmra.mxu0 %v3903
        %v4987 = vpop.f32.mrf.mxu0
        %v4988 = vadd.f32 %v4763, %v4987
        %v4989 = vpop.f32.mrf.mxu0
        %4990 = vmatprep.mubr.f32.mxu0 %v3913
        %4991 = vmatmul.mubr.f32.gmra.mxu0 %v3912
        %v4992 = vpop.f32.mrf.mxu0
        %v4993 = vadd.f32 %v4768, %v4992
        %v4994 = vpop.f32.mrf.mxu0
        %4995 = vmatprep.mubr.f32.mxu0 %v3922
        %4996 = vmatmul.mubr.f32.gmra.mxu0 %v3921
        %v4997 = vpop.f32.mrf.mxu0
        %v4998 = vadd.f32 %v4773, %v4997
        %v4999 = vpop.f32.mrf.mxu0
        %5000 = vmatprep.mubr.f32.mxu0 %v3931
        %5001 = vmatmul.mubr.f32.gmra.mxu0 %v3930
        %v5002 = vpop.f32.mrf.mxu0
        %v5003 = vadd.f32 %v4778, %v5002
        %v5004 = vpop.f32.mrf.mxu0
        %5005 = vmatprep.mubr.f32.mxu0 %v3940
        %5006 = vmatmul.mubr.f32.gmra.mxu0 %v3939
        %v5007 = vpop.f32.mrf.mxu0
        %v5008 = vadd.f32 %v4783, %v5007
        %v5009 = vpop.f32.mrf.mxu0
        %5010 = vmatprep.mubr.f32.mxu0 %v3949
        %5011 = vmatmul.mubr.f32.gmra.mxu0 %v3948
        %v5012 = vpop.f32.mrf.mxu0
        %v5013 = vadd.f32 %v4788, %v5012
        %v5014 = vpop.f32.mrf.mxu0
        %5015 = vmatprep.mubr.f32.mxu0 %v3958
        %5016 = vmatmul.mubr.f32.gmra.mxu0 %v3957
        %v5017 = vpop.f32.mrf.mxu0
        %v5018 = vadd.f32 %v4793, %v5017
        %v5019 = vpop.f32.mrf.mxu0
        %5020 = vmatprep.mubr.f32.mxu0 %v3967
        %5021 = vmatmul.mubr.f32.gmra.mxu0 %v3966
        %v5022 = vpop.f32.mrf.mxu0
        %v5023 = vadd.f32 %v4798, %v5022
        %v5024 = vpop.f32.mrf.mxu0
        %5025 = vmatprep.mubr.f32.mxu0 %v3976
        %5026 = vmatmul.mubr.f32.gmra.mxu0 %v3975
        %v5027 = vpop.f32.mrf.mxu0
        %v5028 = vadd.f32 %v4803, %v5027
        %v5029 = vpop.f32.mrf.mxu0
        %5030 = vmatprep.mubr.f32.mxu0 %v3985
        %5031 = vmatmul.mubr.f32.gmra.mxu0 %v3984
        %v5032 = vpop.f32.mrf.mxu0
        %v5033 = vadd.f32 %v4808, %v5032
        %v5034 = vpop.f32.mrf.mxu0
        %5035 = vmatprep.mubr.f32.mxu0 %v3994
        %5036 = vmatmul.mubr.f32.gmra.mxu0 %v3993
        %v5037 = vpop.f32.mrf.mxu0
        %v5038 = vadd.f32 %v4813, %v5037
        %v5039 = vpop.f32.mrf.mxu0
        %5040 = vdwg.mxu0
        %5041 = vmatprep.subr.mxu0 0.0
        %5042 = vmatpush1.msra.mxu0 %v4140
        %5043 = vmatprep.subr.mxu0 0.0
        %5044 = vmatpush1.msra.mxu0 %v4139
        %5045 = vmatprep.subr.mxu0 0.0
        %5046 = vmatpush1.msra.mxu0 %v4138
        %5047 = vmatprep.subr.mxu0 0.0
        %5048 = vmatpush1.msra.mxu0 %v4137
        %5049 = vmatprep.subr.mxu0 0.0
        %5050 = vmatpush1.msra.mxu0 %v4136
        %5051 = vmatprep.subr.mxu0 0.0
        %5052 = vmatpush1.msra.mxu0 %v4135
        %5053 = vmatprep.subr.mxu0 0.0
        %5054 = vmatpush1.msra.mxu0 %v4134
        %5055 = vmatprep.subr.mxu0 0.0
        %5056 = vmatpush1.msra.mxu0 %v4133
        %5057 = vmatprep.subr.mxu0 0.0
        %5058 = vmatpush1.msra.mxu0 %v4132
        %5059 = vmatprep.subr.mxu0 0.0
        %5060 = vmatpush1.msra.mxu0 %v4131
        %5061 = vmatprep.subr.mxu0 0.0
        %5062 = vmatpush1.msra.mxu0 %v4130
        %5063 = vmatprep.subr.mxu0 0.0
        %5064 = vmatpush1.msra.mxu0 %v4129
        %5065 = vmatprep.subr.mxu0 0.0
        %5066 = vmatpush1.msra.mxu0 %v4128
        %5067 = vmatprep.subr.mxu0 0.0
        %5068 = vmatpush1.msra.mxu0 %v4127
        %5069 = vmatprep.subr.mxu0 0.0
        %5070 = vmatpush1.msra.mxu0 %v4126
        %5071 = vmatprep.subr.mxu0 0.0
        %5072 = vmatpush1.msra.mxu0 %v4125
        %5073 = vmatprep.subr.mxu0 0.0
        %5074 = vmatpush2.msra.mxu0 0.0
        %5075 = vmatprep.subr.mxu0 0.0
        %5076 = vmatpush2.msra.mxu0 0.0
        %5077 = vmatprep.subr.mxu0 0.0
        %5078 = vmatpush2.msra.mxu0 0.0
        %5079 = vmatprep.subr.mxu0 0.0
        %5080 = vmatpush2.msra.mxu0 0.0
        %5081 = vmatprep.subr.mxu0 0.0
        %5082 = vmatpush2.msra.mxu0 0.0
        %5083 = vmatprep.subr.mxu0 0.0
        %5084 = vmatpush2.msra.mxu0 0.0
        %5085 = vmatprep.subr.mxu0 0.0
        %5086 = vmatpush2.msra.mxu0 0.0
        %5087 = vmatprep.subr.mxu0 0.0
        %5088 = vmatpush2.msra.mxu0 0.0
        %5089 = vmatprep.subr.mxu0 0.0
        %5090 = vmatpush2.msra.mxu0 0.0
        %5091 = vmatprep.subr.mxu0 0.0
        %5092 = vmatpush2.msra.mxu0 0.0
        %5093 = vmatprep.subr.mxu0 0.0
        %5094 = vmatpush2.msra.mxu0 0.0
        %5095 = vmatprep.subr.mxu0 0.0
        %5096 = vmatpush2.msra.mxu0 0.0
        %5097 = vmatprep.subr.mxu0 0.0
        %5098 = vmatpush2.msra.mxu0 0.0
        %5099 = vmatprep.subr.mxu0 0.0
        %5100 = vmatpush2.msra.mxu0 0.0
        %5101 = vmatprep.subr.mxu0 0.0
        %5102 = vmatpush2.msra.mxu0 0.0
        %5103 = vmatprep.subr.mxu0 0.0
        %5104 = vmatpush2.msra.mxu0 0.0
        %5105 = vmatprep.mubr.f32.mxu0 0.0
        %5106 = vmatmul.mubr.f32.gmra.mxu0 %v3716
        %v5107 = vpop.f32.mrf.mxu0
        %v5108 = vadd.f32 %v4883, %v5107
        %v5109 = vpop.f32.mrf.mxu0
        %5110 = vmatprep.mubr.f32.mxu0 0.0
        %5111 = vmatmul.mubr.f32.gmra.mxu0 %v3725
        %v5112 = vpop.f32.mrf.mxu0
        %v5113 = vadd.f32 %v4888, %v5112
        %v5114 = vpop.f32.mrf.mxu0
        %5115 = vmatprep.mubr.f32.mxu0 0.0
        %5116 = vmatmul.mubr.f32.gmra.mxu0 %v3734
        %v5117 = vpop.f32.mrf.mxu0
        %v5118 = vadd.f32 %v4893, %v5117
        %v5119 = vpop.f32.mrf.mxu0
        %5120 = vmatprep.mubr.f32.mxu0 0.0
        %5121 = vmatmul.mubr.f32.gmra.mxu0 %v3743
        %v5122 = vpop.f32.mrf.mxu0
        %v5123 = vadd.f32 %v4898, %v5122
        %v5124 = vpop.f32.mrf.mxu0
        %5125 = vmatprep.mubr.f32.mxu0 0.0
        %5126 = vmatmul.mubr.f32.gmra.mxu0 %v3752
        %v5127 = vpop.f32.mrf.mxu0
        %v5128 = vadd.f32 %v4903, %v5127
        %v5129 = vpop.f32.mrf.mxu0
        %5130 = vmatprep.mubr.f32.mxu0 0.0
        %5131 = vmatmul.mubr.f32.gmra.mxu0 %v3761
        %v5132 = vpop.f32.mrf.mxu0
        %v5133 = vadd.f32 %v4908, %v5132
        %v5134 = vpop.f32.mrf.mxu0
        %5135 = vmatprep.mubr.f32.mxu0 0.0
        %5136 = vmatmul.mubr.f32.gmra.mxu0 %v3770
        %v5137 = vpop.f32.mrf.mxu0
        %v5138 = vadd.f32 %v4913, %v5137
        %v5139 = vpop.f32.mrf.mxu0
        %5140 = vmatprep.mubr.f32.mxu0 0.0
        %5141 = vmatmul.mubr.f32.gmra.mxu0 %v3779
        %v5142 = vpop.f32.mrf.mxu0
        %v5143 = vadd.f32 %v4918, %v5142
        %v5144 = vpop.f32.mrf.mxu0
        %5145 = vmatprep.mubr.f32.mxu0 0.0
        %5146 = vmatmul.mubr.f32.gmra.mxu0 %v3788
        %v5147 = vpop.f32.mrf.mxu0
        %v5148 = vadd.f32 %v4923, %v5147
        %v5149 = vpop.f32.mrf.mxu0
        %5150 = vmatprep.mubr.f32.mxu0 0.0
        %5151 = vmatmul.mubr.f32.gmra.mxu0 %v3797
        %v5152 = vpop.f32.mrf.mxu0
        %v5153 = vadd.f32 %v4928, %v5152
        %v5154 = vpop.f32.mrf.mxu0
        %5155 = vmatprep.mubr.f32.mxu0 0.0
        %5156 = vmatmul.mubr.f32.gmra.mxu0 %v3806
        %v5157 = vpop.f32.mrf.mxu0
        %v5158 = vadd.f32 %v4933, %v5157
        %v5159 = vpop.f32.mrf.mxu0
        %5160 = vmatprep.mubr.f32.mxu0 0.0
        %5161 = vmatmul.mubr.f32.gmra.mxu0 %v3815
        %v5162 = vpop.f32.mrf.mxu0
        %v5163 = vadd.f32 %v4938, %v5162
        %v5164 = vpop.f32.mrf.mxu0
        %5165 = vmatprep.mubr.f32.mxu0 0.0
        %5166 = vmatmul.mubr.f32.gmra.mxu0 %v3824
        %v5167 = vpop.f32.mrf.mxu0
        %v5168 = vadd.f32 %v4943, %v5167
        %v5169 = vpop.f32.mrf.mxu0
        %5170 = vmatprep.mubr.f32.mxu0 0.0
        %5171 = vmatmul.mubr.f32.gmra.mxu0 %v3833
        %v5172 = vpop.f32.mrf.mxu0
        %v5173 = vadd.f32 %v4948, %v5172
        %v5174 = vpop.f32.mrf.mxu0
        %5175 = vmatprep.mubr.f32.mxu0 0.0
        %5176 = vmatmul.mubr.f32.gmra.mxu0 %v3842
        %v5177 = vpop.f32.mrf.mxu0
        %v5178 = vadd.f32 %v4953, %v5177
        %v5179 = vpop.f32.mrf.mxu0
        %5180 = vmatprep.mubr.f32.mxu0 0.0
        %5181 = vmatmul.mubr.f32.gmra.mxu0 %v3851
        %v5182 = vpop.f32.mrf.mxu0
        %v5183 = vadd.f32 %v4958, %v5182
        %v5184 = vpop.f32.mrf.mxu0
        %5185 = vmatprep.mubr.f32.mxu0 0.0
        %5186 = vmatmul.mubr.f32.gmra.mxu0 %v3860
        %v5187 = vpop.f32.mrf.mxu0
        %v5188 = vadd.f32 %v4963, %v5187
        %v5189 = vpop.f32.mrf.mxu0
        %5190 = vmatprep.mubr.f32.mxu0 0.0
        %5191 = vmatmul.mubr.f32.gmra.mxu0 %v3869
        %v5192 = vpop.f32.mrf.mxu0
        %v5193 = vadd.f32 %v4968, %v5192
        %v5194 = vpop.f32.mrf.mxu0
        %5195 = vmatprep.mubr.f32.mxu0 0.0
        %5196 = vmatmul.mubr.f32.gmra.mxu0 %v3878
        %v5197 = vpop.f32.mrf.mxu0
        %v5198 = vadd.f32 %v4973, %v5197
        %v5199 = vpop.f32.mrf.mxu0
        %5200 = vmatprep.mubr.f32.mxu0 0.0
        %5201 = vmatmul.mubr.f32.gmra.mxu0 %v3887
        %v5202 = vpop.f32.mrf.mxu0
        %v5203 = vadd.f32 %v4978, %v5202
        %v5204 = vpop.f32.mrf.mxu0
        %5205 = vmatprep.mubr.f32.mxu0 0.0
        %5206 = vmatmul.mubr.f32.gmra.mxu0 %v3896
        %v5207 = vpop.f32.mrf.mxu0
        %v5208 = vadd.f32 %v4983, %v5207
        %v5209 = vpop.f32.mrf.mxu0
        %5210 = vmatprep.mubr.f32.mxu0 0.0
        %5211 = vmatmul.mubr.f32.gmra.mxu0 %v3905
        %v5212 = vpop.f32.mrf.mxu0
        %v5213 = vadd.f32 %v4988, %v5212
        %v5214 = vpop.f32.mrf.mxu0
        %5215 = vmatprep.mubr.f32.mxu0 0.0
        %5216 = vmatmul.mubr.f32.gmra.mxu0 %v3914
        %v5217 = vpop.f32.mrf.mxu0
        %v5218 = vadd.f32 %v4993, %v5217
        %v5219 = vpop.f32.mrf.mxu0
        %5220 = vmatprep.mubr.f32.mxu0 0.0
        %5221 = vmatmul.mubr.f32.gmra.mxu0 %v3923
        %v5222 = vpop.f32.mrf.mxu0
        %v5223 = vadd.f32 %v4998, %v5222
        %v5224 = vpop.f32.mrf.mxu0
        %5225 = vmatprep.mubr.f32.mxu0 0.0
        %5226 = vmatmul.mubr.f32.gmra.mxu0 %v3932
        %v5227 = vpop.f32.mrf.mxu0
        %v5228 = vadd.f32 %v5003, %v5227
        %v5229 = vpop.f32.mrf.mxu0
        %5230 = vmatprep.mubr.f32.mxu0 0.0
        %5231 = vmatmul.mubr.f32.gmra.mxu0 %v3941
        %v5232 = vpop.f32.mrf.mxu0
        %v5233 = vadd.f32 %v5008, %v5232
        %v5234 = vpop.f32.mrf.mxu0
        %5235 = vmatprep.mubr.f32.mxu0 0.0
        %5236 = vmatmul.mubr.f32.gmra.mxu0 %v3950
        %v5237 = vpop.f32.mrf.mxu0
        %v5238 = vadd.f32 %v5013, %v5237
        %v5239 = vpop.f32.mrf.mxu0
        %5240 = vmatprep.mubr.f32.mxu0 0.0
        %5241 = vmatmul.mubr.f32.gmra.mxu0 %v3959
        %v5242 = vpop.f32.mrf.mxu0
        %v5243 = vadd.f32 %v5018, %v5242
        %v5244 = vpop.f32.mrf.mxu0
        %5245 = vmatprep.mubr.f32.mxu0 0.0
        %5246 = vmatmul.mubr.f32.gmra.mxu0 %v3968
        %v5247 = vpop.f32.mrf.mxu0
        %v5248 = vadd.f32 %v5023, %v5247
        %v5249 = vpop.f32.mrf.mxu0
        %5250 = vmatprep.mubr.f32.mxu0 0.0
        %5251 = vmatmul.mubr.f32.gmra.mxu0 %v3977
        %v5252 = vpop.f32.mrf.mxu0
        %v5253 = vadd.f32 %v5028, %v5252
        %v5254 = vpop.f32.mrf.mxu0
        %5255 = vmatprep.mubr.f32.mxu0 0.0
        %5256 = vmatmul.mubr.f32.gmra.mxu0 %v3986
        %v5257 = vpop.f32.mrf.mxu0
        %v5258 = vadd.f32 %v5033, %v5257
        %v5259 = vpop.f32.mrf.mxu0
        %5260 = vmatprep.mubr.f32.mxu0 0.0
        %5261 = vmatmul.mubr.f32.gmra.mxu0 %v3995
        %v5262 = vpop.f32.mrf.mxu0
        %v5263 = vadd.f32 %v5038, %v5262
        %v5264 = vpop.f32.mrf.mxu0
        %5265 = vdwg.mxu0
        %s5266 = scalar_lea.vmem %s2, 1
        %v5267 = vld [vmem:[%s5266] sm:$0x1]
        %s5268 = scalar_lea.vmem %s3, 1
        %v5269 = vld [vmem:[%s5268] sm:$0x1]
        %s5270 = scalar_lea.vmem %s4, 1
        %v5271 = vld [vmem:[%s5270] sm:$0x1]
        %v5272 = vsel %vm223, %v5108, 0.0
        %v5273 = vsel %vm223, %v5113, 0.0
        %v5274 = vadd.f32 %v5272, %v5273
        %v5275 = vsel %vm223, %v5118, 0.0
        %v5276 = vadd.f32 %v5274, %v5275
        %v5277 = vsel %vm223, %v5123, 0.0
        %v5278 = vadd.f32 %v5276, %v5277
        %v5279 = vsel %vm223, %v5128, 0.0
        %v5280 = vadd.f32 %v5278, %v5279
        %v5281 = vsel %vm223, %v5133, 0.0
        %v5282 = vadd.f32 %v5280, %v5281
        %v5283 = vsel %vm223, %v5138, 0.0
        %v5284 = vadd.f32 %v5282, %v5283
        %v5285 = vsel %vm223, %v5143, 0.0
        %v5286 = vadd.f32 %v5284, %v5285
        %v5287 = vsel %vm223, %v5148, 0.0
        %v5288 = vadd.f32 %v5286, %v5287
        %v5289 = vsel %vm223, %v5153, 0.0
        %v5290 = vadd.f32 %v5288, %v5289
        %v5291 = vsel %vm223, %v5158, 0.0
        %v5292 = vadd.f32 %v5290, %v5291
        %v5293 = vsel %vm223, %v5163, 0.0
        %v5294 = vadd.f32 %v5292, %v5293
        %v5295 = vsel %vm223, %v5168, 0.0
        %v5296 = vadd.f32 %v5294, %v5295
        %v5297 = vsel %vm223, %v5173, 0.0
        %v5298 = vadd.f32 %v5296, %v5297
        %v5299 = vsel %vm223, %v5178, 0.0
        %v5300 = vadd.f32 %v5298, %v5299
        %v5301 = vsel %vm223, %v5183, 0.0
        %v5302 = vadd.f32 %v5300, %v5301
        %v5303 = vsel %vm223, %v5188, 0.0
        %v5304 = vadd.f32 %v5302, %v5303
        %v5305 = vsel %vm223, %v5193, 0.0
        %v5306 = vadd.f32 %v5304, %v5305
        %v5307 = vsel %vm223, %v5198, 0.0
        %v5308 = vadd.f32 %v5306, %v5307
        %v5309 = vsel %vm223, %v5203, 0.0
        %v5310 = vadd.f32 %v5308, %v5309
        %v5311 = vsel %vm223, %v5208, 0.0
        %v5312 = vadd.f32 %v5310, %v5311
        %v5313 = vsel %vm223, %v5213, 0.0
        %v5314 = vadd.f32 %v5312, %v5313
        %v5315 = vsel %vm223, %v5218, 0.0
        %v5316 = vadd.f32 %v5314, %v5315
        %v5317 = vsel %vm223, %v5223, 0.0
        %v5318 = vadd.f32 %v5316, %v5317
        %v5319 = vsel %vm223, %v5228, 0.0
        %v5320 = vadd.f32 %v5318, %v5319
        %v5321 = vsel %vm223, %v5233, 0.0
        %v5322 = vadd.f32 %v5320, %v5321
        %v5323 = vsel %vm223, %v5238, 0.0
        %v5324 = vadd.f32 %v5322, %v5323
        %v5325 = vsel %vm223, %v5243, 0.0
        %v5326 = vadd.f32 %v5324, %v5325
        %v5327 = vsel %vm223, %v5248, 0.0
        %v5328 = vadd.f32 %v5326, %v5327
        %v5329 = vsel %vm223, %v5253, 0.0
        %v5330 = vadd.f32 %v5328, %v5329
        %v5331 = vsel %vm223, %v5258, 0.0
        %v5332 = vadd.f32 %v5330, %v5331
        %v5333 = vsel %vm223, %v5263, 0.0
        %v5334 = vadd.f32 %v5332, %v5333
        %v5335 = vrot.slane %v5334, 4
        %v5336 = vadd.f32 %v5334, %v5335
        %v5337 = vrot.slane %v5336, 2
        %v5338 = vadd.f32 %v5336, %v5337
        %v5339 = vrot.slane %v5338, 1
        %v5340 = vadd.f32 %v5338, %v5339
        %v5341 = vmul.f32 %v5108, %v5108
        %v5342 = vmul.f32 %v5113, %v5113
        %v5343 = vmul.f32 %v5118, %v5118
        %v5344 = vmul.f32 %v5123, %v5123
        %v5345 = vmul.f32 %v5128, %v5128
        %v5346 = vmul.f32 %v5133, %v5133
        %v5347 = vmul.f32 %v5138, %v5138
        %v5348 = vmul.f32 %v5143, %v5143
        %v5349 = vmul.f32 %v5148, %v5148
        %v5350 = vmul.f32 %v5153, %v5153
        %v5351 = vmul.f32 %v5158, %v5158
        %v5352 = vmul.f32 %v5163, %v5163
        %v5353 = vmul.f32 %v5168, %v5168
        %v5354 = vmul.f32 %v5173, %v5173
        %v5355 = vmul.f32 %v5178, %v5178
        %v5356 = vmul.f32 %v5183, %v5183
        %v5357 = vmul.f32 %v5188, %v5188
        %v5358 = vmul.f32 %v5193, %v5193
        %v5359 = vmul.f32 %v5198, %v5198
        %v5360 = vmul.f32 %v5203, %v5203
        %v5361 = vmul.f32 %v5208, %v5208
        %v5362 = vmul.f32 %v5213, %v5213
        %v5363 = vmul.f32 %v5218, %v5218
        %v5364 = vmul.f32 %v5223, %v5223
        %v5365 = vmul.f32 %v5228, %v5228
        %v5366 = vmul.f32 %v5233, %v5233
        %v5367 = vmul.f32 %v5238, %v5238
        %v5368 = vmul.f32 %v5243, %v5243
        %v5369 = vmul.f32 %v5248, %v5248
        %v5370 = vmul.f32 %v5253, %v5253
        %v5371 = vmul.f32 %v5258, %v5258
        %v5372 = vmul.f32 %v5263, %v5263
        %v5373 = vsel %vm223, %v5341, 0.0
        %v5374 = vsel %vm223, %v5342, 0.0
        %v5375 = vadd.f32 %v5373, %v5374
        %v5376 = vsel %vm223, %v5343, 0.0
        %v5377 = vadd.f32 %v5375, %v5376
        %v5378 = vsel %vm223, %v5344, 0.0
        %v5379 = vadd.f32 %v5377, %v5378
        %v5380 = vsel %vm223, %v5345, 0.0
        %v5381 = vadd.f32 %v5379, %v5380
        %v5382 = vsel %vm223, %v5346, 0.0
        %v5383 = vadd.f32 %v5381, %v5382
        %v5384 = vsel %vm223, %v5347, 0.0
        %v5385 = vadd.f32 %v5383, %v5384
        %v5386 = vsel %vm223, %v5348, 0.0
        %v5387 = vadd.f32 %v5385, %v5386
        %v5388 = vsel %vm223, %v5349, 0.0
        %v5389 = vadd.f32 %v5387, %v5388
        %v5390 = vsel %vm223, %v5350, 0.0
        %v5391 = vadd.f32 %v5389, %v5390
        %v5392 = vsel %vm223, %v5351, 0.0
        %v5393 = vadd.f32 %v5391, %v5392
        %v5394 = vsel %vm223, %v5352, 0.0
        %v5395 = vadd.f32 %v5393, %v5394
        %v5396 = vsel %vm223, %v5353, 0.0
        %v5397 = vadd.f32 %v5395, %v5396
        %v5398 = vsel %vm223, %v5354, 0.0
        %v5399 = vadd.f32 %v5397, %v5398
        %v5400 = vsel %vm223, %v5355, 0.0
        %v5401 = vadd.f32 %v5399, %v5400
        %v5402 = vsel %vm223, %v5356, 0.0
        %v5403 = vadd.f32 %v5401, %v5402
        %v5404 = vsel %vm223, %v5357, 0.0
        %v5405 = vadd.f32 %v5403, %v5404
        %v5406 = vsel %vm223, %v5358, 0.0
        %v5407 = vadd.f32 %v5405, %v5406
        %v5408 = vsel %vm223, %v5359, 0.0
        %v5409 = vadd.f32 %v5407, %v5408
        %v5410 = vsel %vm223, %v5360, 0.0
        %v5411 = vadd.f32 %v5409, %v5410
        %v5412 = vsel %vm223, %v5361, 0.0
        %v5413 = vadd.f32 %v5411, %v5412
        %v5414 = vsel %vm223, %v5362, 0.0
        %v5415 = vadd.f32 %v5413, %v5414
        %v5416 = vsel %vm223, %v5363, 0.0
        %v5417 = vadd.f32 %v5415, %v5416
        %v5418 = vsel %vm223, %v5364, 0.0
        %v5419 = vadd.f32 %v5417, %v5418
        %v5420 = vsel %vm223, %v5365, 0.0
        %v5421 = vadd.f32 %v5419, %v5420
        %v5422 = vsel %vm223, %v5366, 0.0
        %v5423 = vadd.f32 %v5421, %v5422
        %v5424 = vsel %vm223, %v5367, 0.0
        %v5425 = vadd.f32 %v5423, %v5424
        %v5426 = vsel %vm223, %v5368, 0.0
        %v5427 = vadd.f32 %v5425, %v5426
        %v5428 = vsel %vm223, %v5369, 0.0
        %v5429 = vadd.f32 %v5427, %v5428
        %v5430 = vsel %vm223, %v5370, 0.0
        %v5431 = vadd.f32 %v5429, %v5430
        %v5432 = vsel %vm223, %v5371, 0.0
        %v5433 = vadd.f32 %v5431, %v5432
        %v5434 = vsel %vm223, %v5372, 0.0
        %v5435 = vadd.f32 %v5433, %v5434
        %v5436 = vrot.slane %v5435, 4
        %v5437 = vadd.f32 %v5435, %v5436
        %v5438 = vrot.slane %v5437, 2
        %v5439 = vadd.f32 %v5437, %v5438
        %v5440 = vrot.slane %v5439, 1
        %v5441 = vadd.f32 %v5439, %v5440
        %v5442 = vmul.f32 %v5267, 256.0
        %v5443 = vadd.f32 %v5340, %v5442
        %v5444 = vmul.f32 %v5267, 2.0
        %v5445 = vmul.f32 %v5444, %v5340
        %v5446 = vadd.f32 %v5441, %v5445
        %v5447 = vmul.f32 %v5442, %v5267
        %v5448 = vadd.f32 %v5446, %v5447
        %v5449 = vmul.f32 %v5443, %v2982
        %v5450 = vmul.f32 %v5448, %v2982
        %v5451 = vmul.f32 %v5449, %v5449
        %v5452 = vsub.f32 %v5450, %v5451
        %v5453 = vmax.f32 %v5452, 0.0
        %v5454 = vadd.f32 %v5453, 1e-05
        %v5455 = vrsqrt.pop %v5454
        %v5456 = vmul.f32 %v5455, %v5269
        %v5457 = vsub.f32 %v5267, %v5449
        %v5458 = vmul.f32 %v5457, %v5456
        %v5459 = vadd.f32 %v5458, %v5271
        %v5460 = vlaneseq
        %v5461 = vshrl.u32 %v5460, 7
        %v5462 = vsub.s32 0, %v5461
        %v5463 = vrot.slane %v5456, %v5462
        %v5464 = vmul.f32 %v5108, %v5463
        %v5465 = vmul.f32 %v5113, %v5463
        %v5466 = vmul.f32 %v5118, %v5463
        %v5467 = vmul.f32 %v5123, %v5463
        %v5468 = vmul.f32 %v5128, %v5463
        %v5469 = vmul.f32 %v5133, %v5463
        %v5470 = vmul.f32 %v5138, %v5463
        %v5471 = vmul.f32 %v5143, %v5463
        %v5472 = vmul.f32 %v5148, %v5463
        %v5473 = vmul.f32 %v5153, %v5463
        %v5474 = vmul.f32 %v5158, %v5463
        %v5475 = vmul.f32 %v5163, %v5463
        %v5476 = vmul.f32 %v5168, %v5463
        %v5477 = vmul.f32 %v5173, %v5463
        %v5478 = vmul.f32 %v5178, %v5463
        %v5479 = vmul.f32 %v5183, %v5463
        %v5480 = vmul.f32 %v5188, %v5463
        %v5481 = vmul.f32 %v5193, %v5463
        %v5482 = vmul.f32 %v5198, %v5463
        %v5483 = vmul.f32 %v5203, %v5463
        %v5484 = vmul.f32 %v5208, %v5463
        %v5485 = vmul.f32 %v5213, %v5463
        %v5486 = vmul.f32 %v5218, %v5463
        %v5487 = vmul.f32 %v5223, %v5463
        %v5488 = vmul.f32 %v5228, %v5463
        %v5489 = vmul.f32 %v5233, %v5463
        %v5490 = vmul.f32 %v5238, %v5463
        %v5491 = vmul.f32 %v5243, %v5463
        %v5492 = vmul.f32 %v5248, %v5463
        %v5493 = vmul.f32 %v5253, %v5463
        %v5494 = vmul.f32 %v5258, %v5463
        %v5495 = vmul.f32 %v5263, %v5463
        %v5497 = vlaneseq
        %v5498 = vshrl.u32 %v5497, 7
        %v5499 = vsub.s32 0, %v5498
        %v5500 = vrot.slane %v5459, %v5499
        %v5502 = vadd.f32 %v5464, %v5500
        %v5503 = vadd.f32 %v5465, %v5500
        %v5504 = vadd.f32 %v5466, %v5500
        %v5505 = vadd.f32 %v5467, %v5500
        %v5506 = vadd.f32 %v5468, %v5500
        %v5507 = vadd.f32 %v5469, %v5500
        %v5508 = vadd.f32 %v5470, %v5500
        %v5509 = vadd.f32 %v5471, %v5500
        %v5510 = vadd.f32 %v5472, %v5500
        %v5511 = vadd.f32 %v5473, %v5500
        %v5512 = vadd.f32 %v5474, %v5500
        %v5513 = vadd.f32 %v5475, %v5500
        %v5514 = vadd.f32 %v5476, %v5500
        %v5515 = vadd.f32 %v5477, %v5500
        %v5516 = vadd.f32 %v5478, %v5500
        %v5517 = vadd.f32 %v5479, %v5500
        %v5518 = vadd.f32 %v5480, %v5500
        %v5519 = vadd.f32 %v5481, %v5500
        %v5520 = vadd.f32 %v5482, %v5500
        %v5521 = vadd.f32 %v5483, %v5500
        %v5522 = vadd.f32 %v5484, %v5500
        %v5523 = vadd.f32 %v5485, %v5500
        %v5524 = vadd.f32 %v5486, %v5500
        %v5525 = vadd.f32 %v5487, %v5500
        %v5526 = vadd.f32 %v5488, %v5500
        %v5527 = vadd.f32 %v5489, %v5500
        %v5528 = vadd.f32 %v5490, %v5500
        %v5529 = vadd.f32 %v5491, %v5500
        %v5530 = vadd.f32 %v5492, %v5500
        %v5531 = vadd.f32 %v5493, %v5500
        %v5532 = vadd.f32 %v5494, %v5500
        %v5533 = vadd.f32 %v5495, %v5500
        %v5534 = vmax.f32 %v5502, 0.0
        %v5535 = vmax.f32 %v5503, 0.0
        %v5536 = vmax.f32 %v5504, 0.0
        %v5537 = vmax.f32 %v5505, 0.0
        %v5538 = vmax.f32 %v5506, 0.0
        %v5539 = vmax.f32 %v5507, 0.0
        %v5540 = vmax.f32 %v5508, 0.0
        %v5541 = vmax.f32 %v5509, 0.0
        %v5542 = vmax.f32 %v5510, 0.0
        %v5543 = vmax.f32 %v5511, 0.0
        %v5544 = vmax.f32 %v5512, 0.0
        %v5545 = vmax.f32 %v5513, 0.0
        %v5546 = vmax.f32 %v5514, 0.0
        %v5547 = vmax.f32 %v5515, 0.0
        %v5548 = vmax.f32 %v5516, 0.0
        %v5549 = vmax.f32 %v5517, 0.0
        %v5550 = vmax.f32 %v5518, 0.0
        %v5551 = vmax.f32 %v5519, 0.0
        %v5552 = vmax.f32 %v5520, 0.0
        %v5553 = vmax.f32 %v5521, 0.0
        %v5554 = vmax.f32 %v5522, 0.0
        %v5555 = vmax.f32 %v5523, 0.0
        %v5556 = vmax.f32 %v5524, 0.0
        %v5557 = vmax.f32 %v5525, 0.0
        %v5558 = vmax.f32 %v5526, 0.0
        %v5559 = vmax.f32 %v5527, 0.0
        %v5560 = vmax.f32 %v5528, 0.0
        %v5561 = vmax.f32 %v5529, 0.0
        %v5562 = vmax.f32 %v5530, 0.0
        %v5563 = vmax.f32 %v5531, 0.0
        %v5564 = vmax.f32 %v5532, 0.0
        %v5565 = vmax.f32 %v5533, 0.0
        %v5567 = vsel %vm223, %v664, 0
        %v5570 = vsel %vm223, %v665, 0
        %v5573 = vsel %vm223, %v666, 0
        %v5576 = vsel %vm223, %v667, 0
        %v5579 = vsel %vm223, %v5534, 0
        %v5582 = vsel %vm223, %v5535, 0
        %v5585 = vsel %vm223, %v5536, 0
        %v5588 = vsel %vm223, %v5537, 0
        %v5591 = vsel %vm223, %v5538, 0
        %v5594 = vsel %vm223, %v5539, 0
        %v5597 = vsel %vm223, %v5540, 0
        %v5600 = vsel %vm223, %v5541, 0
        %v5603 = vsel %vm223, %v5542, 0
        %v5606 = vsel %vm223, %v5543, 0
        %v5609 = vsel %vm223, %v5544, 0
        %v5612 = vsel %vm223, %v5545, 0
        %v5615 = vsel %vm223, %v5546, 0
        %v5618 = vsel %vm223, %v5547, 0
        %v5621 = vsel %vm223, %v5548, 0
        %v5624 = vsel %vm223, %v5549, 0
        %v5627 = vsel %vm223, %v5550, 0
        %v5630 = vsel %vm223, %v5551, 0
        %v5633 = vsel %vm223, %v5552, 0
        %v5636 = vsel %vm223, %v5553, 0
        %v5639 = vsel %vm223, %v5554, 0
        %v5642 = vsel %vm223, %v5555, 0
        %v5645 = vsel %vm223, %v5556, 0
        %v5648 = vsel %vm223, %v5557, 0
        %v5651 = vsel %vm223, %v5558, 0
        %v5654 = vsel %vm223, %v5559, 0
        %v5657 = vsel %vm223, %v5560, 0
        %v5660 = vsel %vm223, %v5561, 0
        %v5663 = vsel %vm223, %v5562, 0
        %v5666 = vsel %vm223, %v5563, 0
        %v5669 = vsel %vm223, %v5564, 0
        %v5672 = vsel %vm223, %v5565, 0
        %5674 = vmatprep.subr.mxu0 0.0
        %5675 = vmatpush1.xpose.msra.mxu0 %v5624
        %5676 = vmatprep.subr.mxu0 0.0
        %5677 = vmatpush1.xpose.msra.mxu0 %v5621
        %5678 = vmatprep.subr.mxu0 0.0
        %5679 = vmatpush1.xpose.msra.mxu0 %v5618
        %5680 = vmatprep.subr.mxu0 0.0
        %5681 = vmatpush1.xpose.msra.mxu0 %v5615
        %5682 = vmatprep.subr.mxu0 0.0
        %5683 = vmatpush1.xpose.msra.mxu0 %v5612
        %5684 = vmatprep.subr.mxu0 0.0
        %5685 = vmatpush1.xpose.msra.mxu0 %v5609
        %5686 = vmatprep.subr.mxu0 0.0
        %5687 = vmatpush1.xpose.msra.mxu0 %v5606
        %5688 = vmatprep.subr.mxu0 0.0
        %5689 = vmatpush1.xpose.msra.mxu0 %v5603
        %5690 = vmatprep.subr.mxu0 0.0
        %5691 = vmatpush1.xpose.msra.mxu0 %v5600
        %5692 = vmatprep.subr.mxu0 0.0
        %5693 = vmatpush1.xpose.msra.mxu0 %v5597
        %5694 = vmatprep.subr.mxu0 0.0
        %5695 = vmatpush1.xpose.msra.mxu0 %v5594
        %5696 = vmatprep.subr.mxu0 0.0
        %5697 = vmatpush1.xpose.msra.mxu0 %v5591
        %5698 = vmatprep.subr.mxu0 0.0
        %5699 = vmatpush1.xpose.msra.mxu0 %v5588
        %5700 = vmatprep.subr.mxu0 0.0
        %5701 = vmatpush1.xpose.msra.mxu0 %v5585
        %5702 = vmatprep.subr.mxu0 0.0
        %5703 = vmatpush1.xpose.msra.mxu0 %v5582
        %5704 = vmatprep.subr.mxu0 0.0
        %5705 = vmatpush1.xpose.msra.mxu0 %v5579
        %5706 = vmatprep.subr.mxu0 0.0
        %5707 = vmatpush2.xpose.msra.mxu0 %v5672
        %5708 = vmatprep.subr.mxu0 0.0
        %5709 = vmatpush2.xpose.msra.mxu0 %v5669
        %5710 = vmatprep.subr.mxu0 0.0
        %5711 = vmatpush2.xpose.msra.mxu0 %v5666
        %5712 = vmatprep.subr.mxu0 0.0
        %5713 = vmatpush2.xpose.msra.mxu0 %v5663
        %5714 = vmatprep.subr.mxu0 0.0
        %5715 = vmatpush2.xpose.msra.mxu0 %v5660
        %5716 = vmatprep.subr.mxu0 0.0
        %5717 = vmatpush2.xpose.msra.mxu0 %v5657
        %5718 = vmatprep.subr.mxu0 0.0
        %5719 = vmatpush2.xpose.msra.mxu0 %v5654
        %5720 = vmatprep.subr.mxu0 0.0
        %5721 = vmatpush2.xpose.msra.mxu0 %v5651
        %5722 = vmatprep.subr.mxu0 0.0
        %5723 = vmatpush2.xpose.msra.mxu0 %v5648
        %5724 = vmatprep.subr.mxu0 0.0
        %5725 = vmatpush2.xpose.msra.mxu0 %v5645
        %5726 = vmatprep.subr.mxu0 0.0
        %5727 = vmatpush2.xpose.msra.mxu0 %v5642
        %5728 = vmatprep.subr.mxu0 0.0
        %5729 = vmatpush2.xpose.msra.mxu0 %v5639
        %5730 = vmatprep.subr.mxu0 0.0
        %5731 = vmatpush2.xpose.msra.mxu0 %v5636
        %5732 = vmatprep.subr.mxu0 0.0
        %5733 = vmatpush2.xpose.msra.mxu0 %v5633
        %5734 = vmatprep.subr.mxu0 0.0
        %5735 = vmatpush2.xpose.msra.mxu0 %v5630
        %5736 = vmatprep.subr.mxu0 0.0
        %5737 = vmatpush2.xpose.msra.mxu0 %v5627
        %5738 = vmatprep.mubr.f32.mxu0 0.0
        %5739 = vmatmul.mubr.f32.gmra.mxu0 %v5567
        %v5740 = vpop.f32.mrf.mxu0
        %v5741 = vadd.f32 0.0, %v5740
        %v5742 = vpop.f32.mrf.mxu0
        %v5743 = vadd.f32 0.0, %v5742
        %5744 = vmatprep.mubr.f32.mxu0 0.0
        %5745 = vmatmul.mubr.f32.gmra.mxu0 %v5570
        %v5746 = vpop.f32.mrf.mxu0
        %v5747 = vadd.f32 0.0, %v5746
        %v5748 = vpop.f32.mrf.mxu0
        %v5749 = vadd.f32 0.0, %v5748
        %5750 = vmatprep.mubr.f32.mxu0 0.0
        %5751 = vmatmul.mubr.f32.gmra.mxu0 %v5573
        %v5752 = vpop.f32.mrf.mxu0
        %v5753 = vadd.f32 0.0, %v5752
        %v5754 = vpop.f32.mrf.mxu0
        %v5755 = vadd.f32 0.0, %v5754
        %5756 = vmatprep.mubr.f32.mxu0 0.0
        %5757 = vmatmul.mubr.f32.gmra.mxu0 %v5576
        %v5758 = vpop.f32.mrf.mxu0
        %v5759 = vadd.f32 0.0, %v5758
        %v5760 = vpop.f32.mrf.mxu0
        %v5761 = vadd.f32 0.0, %v5760
        %5762 = vdwg.mxu0
        %5763 = vst [vmem:[%s217] sm:$0xff] %v5741
        %5764 = vst [vmem:[%s217 + $0x8] sm:$0xff] %v5743
        %5765 = vst [vmem:[%s217 + $0x10] sm:$0xff] %v5747
        %5766 = vst [vmem:[%s217 + $0x18] sm:$0xff] %v5749
        %5767 = vst [vmem:[%s217 + $0x20] sm:$0xff] %v5753
        %5768 = vst [vmem:[%s217 + $0x28] sm:$0xff] %v5755
        %5769 = vst [vmem:[%s217 + $0x30] sm:$0xff] %v5759
        %5770 = vst [vmem:[%s217 + $0x38] sm:$0xff] %v5761
        %s5771 = sand.u32 %s137, 1
        %s5772 = scalar_lea.sflag [#allocation5], %s5771
        %s5773 = sand.u32 %s137, 1
        %s5774 = smul.addr %s5773, 64
        %s5775 = scalar_lea.vmem [#allocation4], %s5774
        // Predicated region
        $region41: #{tpu_custom_call.1} parent=39 // pred_check
          %p5776 = pneg %p147
        $region42: #{tpu_custom_call.1} parent=39 // pred_check_branch
          %5778 = sbr.rel (%p5776) target = $region44
        $region43: #{tpu_custom_call.1} parent=39 // pred_region
          %s5780 = ssub.s32 1024, 1024
          %5781 = vsyncadd %s5772, %s5780
          %s5782 = smul.addr %s19, 8
          %s5783 = smul.addr %s5782, 128
          %s5784 = scalar_lea.hbm %s5, %s5783
          %s5785 = sshll.u32 %s5775, 4
          %s5786 = int_to_ptr.vmem [resolvable:$true] %s5785
          %5791 = dma.vmem_to_hbm [thread:$0]  %s5786, 1024, %s5784, %s5772, 256, 256, 16
        $region44: #{tpu_custom_call.1} parent=39 // pred_fallthru
          _
      $region40: #{tpu_custom_call.1} parent=5 // pred_fallthru
        _
      %p5792 = scmp.le.s32.totalorder 2, %s14
      // Predicated region
      $region45: #{tpu_custom_call.1} parent=5 // pred_check
        %p5793 = pneg %p5792
      $region46: #{tpu_custom_call.1} parent=5 // pred_check_branch
        %5795 = sbr.rel (%p5793) target = $region48
      $region47: #{tpu_custom_call.1} parent=5 // pred_region
        %s5796 = ssub.s32 %s14, 2
        // Predicated region
        $region49: #{tpu_custom_call.1} parent=47 // pred_check
          %p5797 = pneg %p153
        $region50: #{tpu_custom_call.1} parent=47 // pred_check_branch
          %5799 = sbr.rel (%p5797) target = $region52
        $region51: #{tpu_custom_call.1} parent=47 // pred_region
          %s5800 = sand.u32 %s138, 1
          %s5801 = scalar_lea.sflag [#allocation5], %s5800
          %s5802 = sand.u32 %s138, 1
          %s5803 = smul.addr %s5802, 64
          %s5804 = scalar_lea.vmem [#allocation4], %s5803
          %5805 = dma.done %s5801, 1024
        $region52: #{tpu_custom_call.1} parent=47 // pred_fallthru
          _
      $region48: #{tpu_custom_call.1} parent=5 // pred_fallthru
        _
    $region6: #{tpu_custom_call.1} parent=1 // loop_footer
      %s18 = sadd.s32 1, %s14
    $region7: #{tpu_custom_call.1} parent=1 // loop_footer_branch
      %13 = sbr.rel target = $region3
    $region8: #{tpu_custom_call.1} parent=1 // loop_exit
      _
    %5806 = vsyncpa [#allocation5], 1
    %s5807 = scalar_lea.sflag [#allocation5], 1
    %5808 = vsyncpa %s5807, 1

</llo_original>
